<compile_context>
chip_gen: v6e
topology: v6e:2x2x1
jax: 0.10.0
libtpu: 0.0.40
codegen_flags: <defaults>
</compile_context>

<pallas_src>
import functools

import numpy as np

import jax
import jax.numpy as jnp
from jax.experimental import pallas as pl
from jax.experimental.pallas import tpu as pltpu

EPS = 1e-5  # nn.LayerNorm default eps


# ----------------------- host-side constant builders -----------------------

def _conv_tap_matrix(T, H, W):
    """0/1 matrix A of shape (27*L, L): row tap*L + l_out selects the input token
    feeding output token l_out at tap (dt,dh,dw) of a 3x3x3 / stride-1 / pad-1
    conv (an all-zero row realizes the zero padding)."""
    L = T * H * W
    A = np.zeros((27 * L, L), np.float32)
    tap = 0
    for dt in range(3):
        for dh in range(3):
            for dw in range(3):
                for t in range(T):
                    for h in range(H):
                        for w in range(W):
                            ti, hi, wi = t + dt - 1, h + dh - 1, w + dw - 1
                            if 0 <= ti < T and 0 <= hi < H and 0 <= wi < W:
                                lo = (t * H + h) * W + w
                                li = (ti * H + hi) * W + wi
                                A[tap * L + lo, li] = 1.0
                tap += 1
    return jnp.asarray(A)


def _group_mean_matrix(dim, head_dim):
    """Block-diagonal (dim, dim) matrix: x @ P broadcasts the per-head (group of
    head_dim channels) mean back to every channel of that head."""
    P = np.zeros((dim, dim), np.float32)
    for i in range(dim):
        for j in range(dim):
            if i // head_dim == j // head_dim:
                P[i, j] = 1.0 / head_dim
    return jnp.asarray(P)


# ------------------------------ fused kernel --------------------------------

def _fused_block_kernel(x_ref, A_ref, P_ref,
                        ln1_g_ref, ln1_b_ref, wqkv_ref, bqkv_ref, w27_ref,
                        ng_ref, nb_ref, wproj_ref, bproj_ref,
                        ln2_g_ref, ln2_b_ref, w1_ref, b1_ref, w2_ref, b2_ref,
                        o_ref, *, B, N, nh, hd, L, scale):
    D = x_ref.shape[-1]

    x = x_ref[...]                           # (B*N, D)  batch-flattened tokens
    A = A_ref[...]                           # (27*L, L) conv tap-gather matrix
    P = P_ref[...]                           # (D, D)    per-head group-mean matrix
    ln1_g = ln1_g_ref[...]; ln1_b = ln1_b_ref[...]
    wproj = wproj_ref[...]; bproj = bproj_ref[...]
    ln2_g = ln2_g_ref[...]; ln2_b = ln2_b_ref[...]
    w1 = w1_ref[...]; b1 = b1_ref[...]
    w2 = w2_ref[...]; b2 = b2_ref[...]

    # Per-head channel masks and "not the cls row" mask, built from 2-D iotas.
    chan = jax.lax.broadcasted_iota(jnp.int32, (1, D), 1)
    head_masks = [((chan >= h * hd) & (chan < (h + 1) * hd)).astype(jnp.float32)
                  for h in range(nh)]
    not_cls = (jax.lax.broadcasted_iota(jnp.int32, (N, 1), 0) >= 1).astype(jnp.float32)

    def full_ln(t, g, b):                    # LayerNorm over all D channels
        mu = jnp.mean(t, axis=-1, keepdims=True)
        var = jnp.mean((t - mu) ** 2, axis=-1, keepdims=True)
        return (t - mu) * jax.lax.rsqrt(var + EPS) * g + b

    def pool_head_ln(t, w_taps, g, b):
        # Depthwise 3x3x3 / stride 1 / pad 1 conv over (T,H,W) for all heads at
        # once (cls token passes through), then per-head LayerNorm over head_dim.
        cls = t[0:1, :]
        body = t[1:, :]                                                   # (L, D)
        shifted = jnp.dot(A, body, preferred_element_type=jnp.float32)    # (27L, D)
        conv = jnp.zeros((L, D), jnp.float32)
        for tap in range(27):                # aligned static slices, unrolled
            conv = conv + shifted[tap * L:(tap + 1) * L, :] * w_taps[tap:tap + 1, :]
        pooled = jnp.concatenate([cls, conv], axis=0)                     # (N, D)
        mu = jnp.dot(pooled, P, preferred_element_type=jnp.float32)
        var = jnp.dot((pooled - mu) ** 2, P, preferred_element_type=jnp.float32)
        return (pooled - mu) * jax.lax.rsqrt(var + EPS) * g + b

    # ---- batch-shared dense prologue: norm1 + qkv projection (one pass) ----
    xn = full_ln(x, ln1_g, ln1_b)                                         # (B*N, D)
    qkv_all = [jnp.dot(xn, wqkv_ref[i], preferred_element_type=jnp.float32)
               + bqkv_ref[i:i + 1, :] for i in range(3)]                  # 3x (B*N, D)
    w27 = [w27_ref[i] for i in range(3)]                                  # (27, D) each
    ng = [ng_ref[i:i + 1, :] for i in range(3)]
    nb = [nb_ref[i:i + 1, :] for i in range(3)]

    # ---- per-batch conv pooling + per-head LN + attention -------------------
    outs = []
    for bb in range(B):                      # B is tiny & static -> unrolled
        r0 = bb * N
        qb = pool_head_ln(qkv_all[0][r0:r0 + N, :], w27[0], ng[0], nb[0])
        kb = pool_head_ln(qkv_all[1][r0:r0 + N, :], w27[1], ng[1], nb[1])
        vb = pool_head_ln(qkv_all[2][r0:r0 + N, :], w27[2], ng[2], nb[2])

        # Multi-head attention via per-head channel masks (no lane reshuffles).
        qs = qb * scale
        attn_out = jnp.zeros((N, D), jnp.float32)
        for h in range(nh):
            m = head_masks[h]
            s = jax.lax.dot_general(qs, kb * m, (((1,), (1,)), ((), ())),
                                    preferred_element_type=jnp.float32)   # (N, N)
            s = s - jnp.max(s, axis=-1, keepdims=True)
            e = jnp.exp(s)
            p = e * pl.reciprocal(jnp.sum(e, axis=-1, keepdims=True), approx=True)
            attn_out = attn_out + jnp.dot(p, vb * m,
                                          preferred_element_type=jnp.float32)
        outs.append(attn_out + not_cls * qb)     # residual pooling (skip cls row)
    attn_all = jnp.concatenate(outs, axis=0)     # (B*N, D)

    # ---- batch-shared dense epilogue: proj + residual, norm2 + MLP + residual
    x1 = x + jnp.dot(attn_all, wproj, preferred_element_type=jnp.float32) + bproj
    xn2 = full_ln(x1, ln2_g, ln2_b)
    # TODO(synk): nn.GELU() default is the exact erf GELU; the tanh approximation
    # is used here (and in the in-script reference) — max dev ~1e-3.
    hmid = jax.nn.gelu(jnp.dot(xn2, w1, preferred_element_type=jnp.float32) + b1,
                       approximate=True)
    o_ref[...] = x1 + jnp.dot(hmid, w2, preferred_element_type=jnp.float32) + b2


# ------------------------------- the block ----------------------------------

class MultiScaleBlockPallas:
    def __init__(self, key, dim, num_heads, input_size, mlp_ratio=4.0):
        self.dim = dim
        self.num_heads = num_heads
        self.head_dim = dim // num_heads
        self.scale = float(self.head_dim) ** (-0.5)
        self.input_size = tuple(input_size)
        hidden = int(dim * mlp_ratio)
        hd = self.head_dim
        nh = num_heads

        ks = jax.random.split(key, 20)

        def nrm(k, shape, s=0.02):
            return (s * jax.random.normal(k, shape, jnp.float32)).astype(jnp.float32)

        p = {}
        # norm1
        p['ln1_g'] = 1.0 + nrm(ks[0], (dim,), 0.05)
        p['ln1_b'] = nrm(ks[1], (dim,), 0.02)
        # qkv linear (stored pre-transposed: (in, out))
        p['wqkv_t'] = nrm(ks[2], (dim, 3 * dim))
        p['bqkv'] = nrm(ks[3], (3 * dim,), 0.01)
        # depthwise conv pooling weights (kT,kH,kW,C) and per-head LayerNorms
        p['wq_conv'] = nrm(ks[4], (3, 3, 3, hd), 0.1)
        p['wk_conv'] = nrm(ks[5], (3, 3, 3, hd), 0.1)
        p['wv_conv'] = nrm(ks[6], (3, 3, 3, hd), 0.1)
        p['nq_g'] = 1.0 + nrm(ks[7], (hd,), 0.05); p['nq_b'] = nrm(ks[8], (hd,), 0.02)
        p['nk_g'] = 1.0 + nrm(ks[9], (hd,), 0.05); p['nk_b'] = nrm(ks[10], (hd,), 0.02)
        p['nv_g'] = 1.0 + nrm(ks[11], (hd,), 0.05); p['nv_b'] = nrm(ks[12], (hd,), 0.02)
        # output projection
        p['wproj_t'] = nrm(ks[13], (dim, dim))
        p['bproj'] = nrm(ks[14], (dim,), 0.01)
        # norm2 + Mlp
        p['ln2_g'] = 1.0 + nrm(ks[15], (dim,), 0.05)
        p['ln2_b'] = nrm(ks[16], (dim,), 0.02)
        p['w1_t'] = nrm(ks[17], (dim, hidden)); p['b1'] = nrm(ks[18], (hidden,), 0.01)
        p['w2_t'] = nrm(ks[19], (hidden, dim)); p['b2'] = jnp.zeros((dim,), jnp.float32)
        self.p = p

        # --- kernel-side constants / repacked weights (built once, host side) ---
        T, H, W = self.input_size
        self.L = T * H * W
        self.A = _conv_tap_matrix(T, H, W)                        # (27*L, L)
        self.P = _group_mean_matrix(dim, hd)                      # (dim, dim)
        self.wqkv_s = jnp.stack([p['wqkv_t'][:, :dim],
                                 p['wqkv_t'][:, dim:2 * dim],
                                 p['wqkv_t'][:, 2 * dim:]])       # (3, dim, dim)
        self.bqkv_s = p['bqkv'].reshape(3, dim)                   # (3, dim)
        # conv taps flattened to (27, head_dim) and tiled across heads -> (27, dim)
        self.w27_s = jnp.stack([jnp.tile(p['wq_conv'].reshape(27, hd), (1, nh)),
                                jnp.tile(p['wk_conv'].reshape(27, hd), (1, nh)),
                                jnp.tile(p['wv_conv'].reshape(27, hd), (1, nh))])
        self.ng_s = jnp.stack([jnp.tile(p['nq_g'], nh),
                               jnp.tile(p['nk_g'], nh),
                               jnp.tile(p['nv_g'], nh)])          # (3, dim)
        self.nb_s = jnp.stack([jnp.tile(p['nq_b'], nh),
                               jnp.tile(p['nk_b'], nh),
                               jnp.tile(p['nv_b'], nh)])          # (3, dim)
        self.ln1_g2 = p['ln1_g'].reshape(1, dim); self.ln1_b2 = p['ln1_b'].reshape(1, dim)
        self.ln2_g2 = p['ln2_g'].reshape(1, dim); self.ln2_b2 = p['ln2_b'].reshape(1, dim)
        self.bproj2 = p['bproj'].reshape(1, dim)
        self.b1_2 = p['b1'].reshape(1, hidden)
        self.b2_2 = p['b2'].reshape(1, dim)

    def __call__(self, x, thw_shape):
        B, N, D = x.shape
        T, H, W = thw_shape
        assert (T, H, W) == self.input_size
        assert N == 1 + self.L and D == self.dim

        kernel = functools.partial(_fused_block_kernel,
                                   B=B, N=N, nh=self.num_heads, hd=self.head_dim,
                                   L=self.L, scale=self.scale)
        out = pl.pallas_call(
            kernel,
            out_shape=jax.ShapeDtypeStruct((B * N, D), jnp.float32),
            compiler_params=pltpu.CompilerParams(vmem_limit_bytes=32 * 1024 * 1024),
        )(x.reshape(B * N, D), self.A, self.P,
          self.ln1_g2, self.ln1_b2, self.wqkv_s, self.bqkv_s, self.w27_s,
          self.ng_s, self.nb_s, self.p['wproj_t'], self.bproj2,
          self.ln2_g2, self.ln2_b2, self.p['w1_t'], self.b1_2,
          self.p['w2_t'], self.b2_2)
        return out.reshape(B, N, D), (T, H, W)   # stride_q == (1,1,1) -> unchanged


# --------------------------- pure-JAX reference -----------------------------

def reference_forward(p, x, thw_shape, num_heads):
    T, H, W = thw_shape
    B, N, D = x.shape
    nh = num_heads
    hd = D // nh
    scale = float(hd) ** (-0.5)

    def ln(t, g, b):
        mu = t.mean(-1, keepdims=True)
        var = ((t - mu) ** 2).mean(-1, keepdims=True)
        return (t - mu) / jnp.sqrt(var + EPS) * g + b

    xn = ln(x, p['ln1_g'], p['ln1_b'])
    qkv = (xn @ p['wqkv_t'] + p['bqkv']).reshape(B, N, 3, nh, hd).transpose(2, 0, 3, 1, 4)
    q, k, v = qkv[0], qkv[1], qkv[2]

    def pool(t, w, g, b):
        cls = t[:, :, :1]
        body = t[:, :, 1:].reshape(B * nh, T, H, W, hd).transpose(0, 4, 1, 2, 3)  # NCDHW
        wr = w.transpose(3, 0, 1, 2)[:, None]                                     # (C,1,3,3,3)
        out = jax.lax.conv_general_dilated(
            body, wr, window_strides=(1, 1, 1),
            padding=((1, 1), (1, 1), (1, 1)),
            dimension_numbers=('NCDHW', 'OIDHW', 'NCDHW'),
            feature_group_count=hd)
        out = out.reshape(B, nh, hd, T * H * W).transpose(0, 1, 3, 2)
        out = jnp.concatenate([cls, out], axis=2)
        return ln(out, g, b)

    qp = pool(q, p['wq_conv'], p['nq_g'], p['nq_b'])
    kp = pool(k, p['wk_conv'], p['nk_g'], p['nk_b'])
    vp = pool(v, p['wv_conv'], p['nv_g'], p['nv_b'])

    attn = (qp * scale) @ jnp.swapaxes(kp, -2, -1)
    attn = jax.nn.softmax(attn, axis=-1)
    o = attn @ vp
    o = o.at[:, :, 1:, :].add(qp[:, :, 1:, :])           # residual pooling
    o = o.transpose(0, 2, 1, 3).reshape(B, N, D)
    x1 = x + (o @ p['wproj_t'] + p['bproj'])
    xn2 = ln(x1, p['ln2_g'], p['ln2_b'])
    h = jax.nn.gelu(xn2 @ p['w1_t'] + p['b1'], approximate=True)
    return x1 + (h @ p['w2_t'] + p['b2'])


# --------------------------------- main -------------------------------------

if __name__ == "__main__":
    key = jax.random.PRNGKey(0)
    kx, kp = jax.random.split(key)

    B, T, H, W = 2, 2, 4, 4
    dim, num_heads = 32, 4
    N = 1 + T * H * W                      # 33 tokens (cls + T*H*W)

    x = jax.random.normal(kx, (B, N, dim), jnp.float32)
    block = MultiScaleBlockPallas(kp, dim=dim, num_heads=num_heads,
                                  input_size=(T, H, W))

    y, thw_new = block(x, (T, H, W))
    y = jax.block_until_ready(y)

    y_ref = reference_forward(block.p, x, (T, H, W), num_heads)
    err = float(jnp.max(jnp.abs(y - y_ref)))
    assert y.shape == (B, N, dim)
    assert tuple(thw_new) == (T, H, W)
    # approx reciprocal in the softmax is the only intended kernel/reference delta
    assert err < 5e-3, f"mismatch vs reference: {err}"

    print("KERNEL_OK")
</pallas_src>

<mosaic_0001>
module attributes {stable_mosaic.version = 11 : i64} {
  func.func @_fused_block_kernel(%arg0: memref<66x32xf32, #tpu.memory_space<vmem>>, %arg1: memref<864x32xf32, #tpu.memory_space<vmem>>, %arg2: memref<32x32xf32, #tpu.memory_space<vmem>>, %arg3: memref<1x32xf32, #tpu.memory_space<vmem>>, %arg4: memref<1x32xf32, #tpu.memory_space<vmem>>, %arg5: memref<3x32x32xf32, #tpu.memory_space<vmem>>, %arg6: memref<3x32xf32, #tpu.memory_space<vmem>>, %arg7: memref<3x27x32xf32, #tpu.memory_space<vmem>>, %arg8: memref<3x32xf32, #tpu.memory_space<vmem>>, %arg9: memref<3x32xf32, #tpu.memory_space<vmem>>, %arg10: memref<32x32xf32, #tpu.memory_space<vmem>>, %arg11: memref<1x32xf32, #tpu.memory_space<vmem>>, %arg12: memref<1x32xf32, #tpu.memory_space<vmem>>, %arg13: memref<1x32xf32, #tpu.memory_space<vmem>>, %arg14: memref<32x128xf32, #tpu.memory_space<vmem>>, %arg15: memref<1x128xf32, #tpu.memory_space<vmem>>, %arg16: memref<128x32xf32, #tpu.memory_space<vmem>>, %arg17: memref<1x32xf32, #tpu.memory_space<vmem>>, %arg18: memref<66x32xf32, #tpu.memory_space<vmem>>) attributes {dimension_semantics = [], scalar_prefetch = 0 : i64, scratch_operands = 0 : i64, tpu.core_type = #tpu.core_type<tc>} {
    %c0 = arith.constant 0 : index
    %c0_0 = arith.constant 0 : index
    %0 = vector.load %arg0[%c0, %c0_0] : memref<66x32xf32, #tpu.memory_space<vmem>>, vector<66x32xf32>
    %c0_1 = arith.constant 0 : index
    %c0_2 = arith.constant 0 : index
    %1 = vector.load %arg1[%c0_1, %c0_2] : memref<864x32xf32, #tpu.memory_space<vmem>>, vector<864x32xf32>
    %c0_3 = arith.constant 0 : index
    %c0_4 = arith.constant 0 : index
    %2 = vector.load %arg2[%c0_3, %c0_4] : memref<32x32xf32, #tpu.memory_space<vmem>>, vector<32x32xf32>
    %c0_5 = arith.constant 0 : index
    %c0_6 = arith.constant 0 : index
    %3 = vector.load %arg3[%c0_5, %c0_6] : memref<1x32xf32, #tpu.memory_space<vmem>>, vector<1x32xf32>
    %c0_7 = arith.constant 0 : index
    %c0_8 = arith.constant 0 : index
    %4 = vector.load %arg4[%c0_7, %c0_8] : memref<1x32xf32, #tpu.memory_space<vmem>>, vector<1x32xf32>
    %c0_9 = arith.constant 0 : index
    %c0_10 = arith.constant 0 : index
    %5 = vector.load %arg10[%c0_9, %c0_10] : memref<32x32xf32, #tpu.memory_space<vmem>>, vector<32x32xf32>
    %c0_11 = arith.constant 0 : index
    %c0_12 = arith.constant 0 : index
    %6 = vector.load %arg11[%c0_11, %c0_12] : memref<1x32xf32, #tpu.memory_space<vmem>>, vector<1x32xf32>
    %c0_13 = arith.constant 0 : index
    %c0_14 = arith.constant 0 : index
    %7 = vector.load %arg12[%c0_13, %c0_14] : memref<1x32xf32, #tpu.memory_space<vmem>>, vector<1x32xf32>
    %c0_15 = arith.constant 0 : index
    %c0_16 = arith.constant 0 : index
    %8 = vector.load %arg13[%c0_15, %c0_16] : memref<1x32xf32, #tpu.memory_space<vmem>>, vector<1x32xf32>
    %c0_17 = arith.constant 0 : index
    %c0_18 = arith.constant 0 : index
    %9 = vector.load %arg14[%c0_17, %c0_18] : memref<32x128xf32, #tpu.memory_space<vmem>>, vector<32x128xf32>
    %c0_19 = arith.constant 0 : index
    %c0_20 = arith.constant 0 : index
    %10 = vector.load %arg15[%c0_19, %c0_20] : memref<1x128xf32, #tpu.memory_space<vmem>>, vector<1x128xf32>
    %c0_21 = arith.constant 0 : index
    %c0_22 = arith.constant 0 : index
    %11 = vector.load %arg16[%c0_21, %c0_22] : memref<128x32xf32, #tpu.memory_space<vmem>>, vector<128x32xf32>
    %c0_23 = arith.constant 0 : index
    %c0_24 = arith.constant 0 : index
    %12 = vector.load %arg17[%c0_23, %c0_24] : memref<1x32xf32, #tpu.memory_space<vmem>>, vector<1x32xf32>
    %13 = tpu.iota {dimensions = array<i32: 1>} : vector<1x32xi32>
    %c0_i32 = arith.constant 0 : i32
    %14 = vector.broadcast %c0_i32 : i32 to vector<1x32xi32>
    %15 = arith.cmpi sge, %13, %14 : vector<1x32xi32>
    %c8_i32 = arith.constant 8 : i32
    %16 = vector.broadcast %c8_i32 : i32 to vector<1x32xi32>
    %17 = arith.cmpi slt, %13, %16 : vector<1x32xi32>
    %18 = arith.andi %15, %17 : vector<1x32xi1>
    %19 = arith.extui %18 : vector<1x32xi1> to vector<1x32xi32>
    %20 = arith.sitofp %19 : vector<1x32xi32> to vector<1x32xf32>
    %c8_i32_25 = arith.constant 8 : i32
    %21 = vector.broadcast %c8_i32_25 : i32 to vector<1x32xi32>
    %22 = arith.cmpi sge, %13, %21 : vector<1x32xi32>
    %c16_i32 = arith.constant 16 : i32
    %23 = vector.broadcast %c16_i32 : i32 to vector<1x32xi32>
    %24 = arith.cmpi slt, %13, %23 : vector<1x32xi32>
    %25 = arith.andi %22, %24 : vector<1x32xi1>
    %26 = arith.extui %25 : vector<1x32xi1> to vector<1x32xi32>
    %27 = arith.sitofp %26 : vector<1x32xi32> to vector<1x32xf32>
    %c16_i32_26 = arith.constant 16 : i32
    %28 = vector.broadcast %c16_i32_26 : i32 to vector<1x32xi32>
    %29 = arith.cmpi sge, %13, %28 : vector<1x32xi32>
    %c24_i32 = arith.constant 24 : i32
    %30 = vector.broadcast %c24_i32 : i32 to vector<1x32xi32>
    %31 = arith.cmpi slt, %13, %30 : vector<1x32xi32>
    %32 = arith.andi %29, %31 : vector<1x32xi1>
    %33 = arith.extui %32 : vector<1x32xi1> to vector<1x32xi32>
    %34 = arith.sitofp %33 : vector<1x32xi32> to vector<1x32xf32>
    %c24_i32_27 = arith.constant 24 : i32
    %35 = vector.broadcast %c24_i32_27 : i32 to vector<1x32xi32>
    %36 = arith.cmpi sge, %13, %35 : vector<1x32xi32>
    %c32_i32 = arith.constant 32 : i32
    %37 = vector.broadcast %c32_i32 : i32 to vector<1x32xi32>
    %38 = arith.cmpi slt, %13, %37 : vector<1x32xi32>
    %39 = arith.andi %36, %38 : vector<1x32xi1>
    %40 = arith.extui %39 : vector<1x32xi1> to vector<1x32xi32>
    %41 = arith.sitofp %40 : vector<1x32xi32> to vector<1x32xf32>
    %42 = tpu.iota {dimensions = array<i32: 0>} : vector<33x1xi32>
    %c1_i32 = arith.constant 1 : i32
    %43 = vector.broadcast %c1_i32 : i32 to vector<33x1xi32>
    %44 = arith.cmpi sge, %42, %43 : vector<33x1xi32>
    %45 = arith.extui %44 : vector<33x1xi1> to vector<33x1xi32>
    %46 = arith.sitofp %45 : vector<33x1xi32> to vector<33x1xf32>
    %cst = arith.constant dense<0.000000e+00> : vector<66xf32>
    %47 = vector.multi_reduction <add>, %0, %cst [1] : vector<66x32xf32> to vector<66xf32>
    %48 = vector.shape_cast %47 : vector<66xf32> to vector<66x1xf32>
    %cst_28 = arith.constant 3.200000e+01 : f32
    %49 = vector.broadcast %cst_28 : f32 to vector<66x1xf32>
    %50 = arith.divf %48, %49 : vector<66x1xf32>
    %51 = vector.broadcast %50 : vector<66x1xf32> to vector<66x32xf32>
    %52 = arith.subf %0, %51 : vector<66x32xf32>
    %53 = arith.mulf %52, %52 : vector<66x32xf32>
    %cst_29 = arith.constant dense<0.000000e+00> : vector<66xf32>
    %54 = vector.multi_reduction <add>, %53, %cst_29 [1] : vector<66x32xf32> to vector<66xf32>
    %55 = vector.shape_cast %54 : vector<66xf32> to vector<66x1xf32>
    %cst_30 = arith.constant 3.200000e+01 : f32
    %56 = vector.broadcast %cst_30 : f32 to vector<66x1xf32>
    %57 = arith.divf %55, %56 : vector<66x1xf32>
    %58 = vector.broadcast %50 : vector<66x1xf32> to vector<66x32xf32>
    %59 = arith.subf %0, %58 : vector<66x32xf32>
    %cst_31 = arith.constant 9.99999974E-6 : f32
    %60 = vector.broadcast %cst_31 : f32 to vector<66x1xf32>
    %61 = arith.addf %57, %60 : vector<66x1xf32>
    %62 = math.rsqrt %61 : vector<66x1xf32>
    %63 = vector.broadcast %62 : vector<66x1xf32> to vector<66x32xf32>
    %64 = arith.mulf %59, %63 : vector<66x32xf32>
    %65 = vector.broadcast %3 : vector<1x32xf32> to vector<66x32xf32>
    %66 = arith.mulf %64, %65 : vector<66x32xf32>
    %67 = vector.broadcast %4 : vector<1x32xf32> to vector<66x32xf32>
    %68 = arith.addf %66, %67 : vector<66x32xf32>
    %c0_32 = arith.constant 0 : index
    %c0_33 = arith.constant 0 : index
    %c0_34 = arith.constant 0 : index
    %69 = vector.load %arg5[%c0_32, %c0_33, %c0_34] : memref<3x32x32xf32, #tpu.memory_space<vmem>>, vector<1x32x32xf32>
    %70 = vector.shape_cast %69 : vector<1x32x32xf32> to vector<32x32xf32>
    %cst_35 = arith.constant dense<0.000000e+00> : vector<66x32xf32>
    %71 = tpu.matmul %68, %70, %cst_35 {dimension_numbers = #tpu.dot_dimension_numbers<[1], [0], [0], [1], [0, 0, 1, 1], [], []>} : vector<66x32xf32>, vector<32x32xf32>, vector<66x32xf32> -> vector<66x32xf32>
    %c0_36 = arith.constant 0 : index
    %c0_37 = arith.constant 0 : index
    %72 = vector.load %arg6[%c0_36, %c0_37] : memref<3x32xf32, #tpu.memory_space<vmem>>, vector<1x32xf32>
    %73 = vector.broadcast %72 : vector<1x32xf32> to vector<66x32xf32>
    %74 = arith.addf %71, %73 : vector<66x32xf32>
    %c1 = arith.constant 1 : index
    %c0_38 = arith.constant 0 : index
    %c0_39 = arith.constant 0 : index
    %75 = vector.load %arg5[%c1, %c0_38, %c0_39] : memref<3x32x32xf32, #tpu.memory_space<vmem>>, vector<1x32x32xf32>
    %76 = vector.shape_cast %75 : vector<1x32x32xf32> to vector<32x32xf32>
    %cst_40 = arith.constant dense<0.000000e+00> : vector<66x32xf32>
    %77 = tpu.matmul %68, %76, %cst_40 {dimension_numbers = #tpu.dot_dimension_numbers<[1], [0], [0], [1], [0, 0, 1, 1], [], []>} : vector<66x32xf32>, vector<32x32xf32>, vector<66x32xf32> -> vector<66x32xf32>
    %c1_41 = arith.constant 1 : index
    %c0_42 = arith.constant 0 : index
    %78 = vector.load %arg6[%c1_41, %c0_42] : memref<3x32xf32, #tpu.memory_space<vmem>>, vector<1x32xf32>
    %79 = vector.broadcast %78 : vector<1x32xf32> to vector<66x32xf32>
    %80 = arith.addf %77, %79 : vector<66x32xf32>
    %c2 = arith.constant 2 : index
    %c0_43 = arith.constant 0 : index
    %c0_44 = arith.constant 0 : index
    %81 = vector.load %arg5[%c2, %c0_43, %c0_44] : memref<3x32x32xf32, #tpu.memory_space<vmem>>, vector<1x32x32xf32>
    %82 = vector.shape_cast %81 : vector<1x32x32xf32> to vector<32x32xf32>
    %cst_45 = arith.constant dense<0.000000e+00> : vector<66x32xf32>
    %83 = tpu.matmul %68, %82, %cst_45 {dimension_numbers = #tpu.dot_dimension_numbers<[1], [0], [0], [1], [0, 0, 1, 1], [], []>} : vector<66x32xf32>, vector<32x32xf32>, vector<66x32xf32> -> vector<66x32xf32>
    %c2_46 = arith.constant 2 : index
    %c0_47 = arith.constant 0 : index
    %84 = vector.load %arg6[%c2_46, %c0_47] : memref<3x32xf32, #tpu.memory_space<vmem>>, vector<1x32xf32>
    %85 = vector.broadcast %84 : vector<1x32xf32> to vector<66x32xf32>
    %86 = arith.addf %83, %85 : vector<66x32xf32>
    %c0_48 = arith.constant 0 : index
    %c0_49 = arith.constant 0 : index
    %c0_50 = arith.constant 0 : index
    %87 = vector.load %arg7[%c0_48, %c0_49, %c0_50] : memref<3x27x32xf32, #tpu.memory_space<vmem>>, vector<1x27x32xf32>
    %88 = vector.shape_cast %87 : vector<1x27x32xf32> to vector<27x32xf32>
    %c1_51 = arith.constant 1 : index
    %c0_52 = arith.constant 0 : index
    %c0_53 = arith.constant 0 : index
    %89 = vector.load %arg7[%c1_51, %c0_52, %c0_53] : memref<3x27x32xf32, #tpu.memory_space<vmem>>, vector<1x27x32xf32>
    %90 = vector.shape_cast %89 : vector<1x27x32xf32> to vector<27x32xf32>
    %c2_54 = arith.constant 2 : index
    %c0_55 = arith.constant 0 : index
    %c0_56 = arith.constant 0 : index
    %91 = vector.load %arg7[%c2_54, %c0_55, %c0_56] : memref<3x27x32xf32, #tpu.memory_space<vmem>>, vector<1x27x32xf32>
    %92 = vector.shape_cast %91 : vector<1x27x32xf32> to vector<27x32xf32>
    %c0_57 = arith.constant 0 : index
    %c0_58 = arith.constant 0 : index
    %93 = vector.load %arg8[%c0_57, %c0_58] : memref<3x32xf32, #tpu.memory_space<vmem>>, vector<1x32xf32>
    %c1_59 = arith.constant 1 : index
    %c0_60 = arith.constant 0 : index
    %94 = vector.load %arg8[%c1_59, %c0_60] : memref<3x32xf32, #tpu.memory_space<vmem>>, vector<1x32xf32>
    %c2_61 = arith.constant 2 : index
    %c0_62 = arith.constant 0 : index
    %95 = vector.load %arg8[%c2_61, %c0_62] : memref<3x32xf32, #tpu.memory_space<vmem>>, vector<1x32xf32>
    %c0_63 = arith.constant 0 : index
    %c0_64 = arith.constant 0 : index
    %96 = vector.load %arg9[%c0_63, %c0_64] : memref<3x32xf32, #tpu.memory_space<vmem>>, vector<1x32xf32>
    %c1_65 = arith.constant 1 : index
    %c0_66 = arith.constant 0 : index
    %97 = vector.load %arg9[%c1_65, %c0_66] : memref<3x32xf32, #tpu.memory_space<vmem>>, vector<1x32xf32>
    %c2_67 = arith.constant 2 : index
    %c0_68 = arith.constant 0 : index
    %98 = vector.load %arg9[%c2_67, %c0_68] : memref<3x32xf32, #tpu.memory_space<vmem>>, vector<1x32xf32>
    %99 = vector.extract_strided_slice %74 {offsets = [0, 0], sizes = [33, 32], strides = [1, 1]} : vector<66x32xf32> to vector<33x32xf32>
    %100 = vector.extract_strided_slice %99 {offsets = [0, 0], sizes = [1, 32], strides = [1, 1]} : vector<33x32xf32> to vector<1x32xf32>
    %101 = vector.extract_strided_slice %99 {offsets = [1, 0], sizes = [32, 32], strides = [1, 1]} : vector<33x32xf32> to vector<32x32xf32>
    %cst_69 = arith.constant dense<0.000000e+00> : vector<864x32xf32>
    %102 = tpu.matmul %1, %101, %cst_69 {dimension_numbers = #tpu.dot_dimension_numbers<[1], [0], [0], [1], [0, 0, 1, 1], [], []>} : vector<864x32xf32>, vector<32x32xf32>, vector<864x32xf32> -> vector<864x32xf32>
    %cst_70 = arith.constant 0.000000e+00 : f32
    %103 = vector.broadcast %cst_70 : f32 to vector<32x32xf32>
    %104 = vector.extract_strided_slice %102 {offsets = [0, 0], sizes = [32, 32], strides = [1, 1]} : vector<864x32xf32> to vector<32x32xf32>
    %105 = vector.extract_strided_slice %88 {offsets = [0, 0], sizes = [1, 32], strides = [1, 1]} : vector<27x32xf32> to vector<1x32xf32>
    %106 = vector.broadcast %105 : vector<1x32xf32> to vector<32x32xf32>
    %107 = arith.mulf %104, %106 : vector<32x32xf32>
    %108 = arith.addf %103, %107 : vector<32x32xf32>
    %109 = vector.extract_strided_slice %102 {offsets = [32, 0], sizes = [32, 32], strides = [1, 1]} : vector<864x32xf32> to vector<32x32xf32>
    %110 = vector.extract_strided_slice %88 {offsets = [1, 0], sizes = [1, 32], strides = [1, 1]} : vector<27x32xf32> to vector<1x32xf32>
    %111 = vector.broadcast %110 : vector<1x32xf32> to vector<32x32xf32>
    %112 = arith.mulf %109, %111 : vector<32x32xf32>
    %113 = arith.addf %108, %112 : vector<32x32xf32>
    %114 = vector.extract_strided_slice %102 {offsets = [64, 0], sizes = [32, 32], strides = [1, 1]} : vector<864x32xf32> to vector<32x32xf32>
    %115 = vector.extract_strided_slice %88 {offsets = [2, 0], sizes = [1, 32], strides = [1, 1]} : vector<27x32xf32> to vector<1x32xf32>
    %116 = vector.broadcast %115 : vector<1x32xf32> to vector<32x32xf32>
    %117 = arith.mulf %114, %116 : vector<32x32xf32>
    %118 = arith.addf %113, %117 : vector<32x32xf32>
    %119 = vector.extract_strided_slice %102 {offsets = [96, 0], sizes = [32, 32], strides = [1, 1]} : vector<864x32xf32> to vector<32x32xf32>
    %120 = vector.extract_strided_slice %88 {offsets = [3, 0], sizes = [1, 32], strides = [1, 1]} : vector<27x32xf32> to vector<1x32xf32>
    %121 = vector.broadcast %120 : vector<1x32xf32> to vector<32x32xf32>
    %122 = arith.mulf %119, %121 : vector<32x32xf32>
    %123 = arith.addf %118, %122 : vector<32x32xf32>
    %124 = vector.extract_strided_slice %102 {offsets = [128, 0], sizes = [32, 32], strides = [1, 1]} : vector<864x32xf32> to vector<32x32xf32>
    %125 = vector.extract_strided_slice %88 {offsets = [4, 0], sizes = [1, 32], strides = [1, 1]} : vector<27x32xf32> to vector<1x32xf32>
    %126 = vector.broadcast %125 : vector<1x32xf32> to vector<32x32xf32>
    %127 = arith.mulf %124, %126 : vector<32x32xf32>
    %128 = arith.addf %123, %127 : vector<32x32xf32>
    %129 = vector.extract_strided_slice %102 {offsets = [160, 0], sizes = [32, 32], strides = [1, 1]} : vector<864x32xf32> to vector<32x32xf32>
    %130 = vector.extract_strided_slice %88 {offsets = [5, 0], sizes = [1, 32], strides = [1, 1]} : vector<27x32xf32> to vector<1x32xf32>
    %131 = vector.broadcast %130 : vector<1x32xf32> to vector<32x32xf32>
    %132 = arith.mulf %129, %131 : vector<32x32xf32>
    %133 = arith.addf %128, %132 : vector<32x32xf32>
    %134 = vector.extract_strided_slice %102 {offsets = [192, 0], sizes = [32, 32], strides = [1, 1]} : vector<864x32xf32> to vector<32x32xf32>
    %135 = vector.extract_strided_slice %88 {offsets = [6, 0], sizes = [1, 32], strides = [1, 1]} : vector<27x32xf32> to vector<1x32xf32>
    %136 = vector.broadcast %135 : vector<1x32xf32> to vector<32x32xf32>
    %137 = arith.mulf %134, %136 : vector<32x32xf32>
    %138 = arith.addf %133, %137 : vector<32x32xf32>
    %139 = vector.extract_strided_slice %102 {offsets = [224, 0], sizes = [32, 32], strides = [1, 1]} : vector<864x32xf32> to vector<32x32xf32>
    %140 = vector.extract_strided_slice %88 {offsets = [7, 0], sizes = [1, 32], strides = [1, 1]} : vector<27x32xf32> to vector<1x32xf32>
    %141 = vector.broadcast %140 : vector<1x32xf32> to vector<32x32xf32>
    %142 = arith.mulf %139, %141 : vector<32x32xf32>
    %143 = arith.addf %138, %142 : vector<32x32xf32>
    %144 = vector.extract_strided_slice %102 {offsets = [256, 0], sizes = [32, 32], strides = [1, 1]} : vector<864x32xf32> to vector<32x32xf32>
    %145 = vector.extract_strided_slice %88 {offsets = [8, 0], sizes = [1, 32], strides = [1, 1]} : vector<27x32xf32> to vector<1x32xf32>
    %146 = vector.broadcast %145 : vector<1x32xf32> to vector<32x32xf32>
    %147 = arith.mulf %144, %146 : vector<32x32xf32>
    %148 = arith.addf %143, %147 : vector<32x32xf32>
    %149 = vector.extract_strided_slice %102 {offsets = [288, 0], sizes = [32, 32], strides = [1, 1]} : vector<864x32xf32> to vector<32x32xf32>
    %150 = vector.extract_strided_slice %88 {offsets = [9, 0], sizes = [1, 32], strides = [1, 1]} : vector<27x32xf32> to vector<1x32xf32>
    %151 = vector.broadcast %150 : vector<1x32xf32> to vector<32x32xf32>
    %152 = arith.mulf %149, %151 : vector<32x32xf32>
    %153 = arith.addf %148, %152 : vector<32x32xf32>
    %154 = vector.extract_strided_slice %102 {offsets = [320, 0], sizes = [32, 32], strides = [1, 1]} : vector<864x32xf32> to vector<32x32xf32>
    %155 = vector.extract_strided_slice %88 {offsets = [10, 0], sizes = [1, 32], strides = [1, 1]} : vector<27x32xf32> to vector<1x32xf32>
    %156 = vector.broadcast %155 : vector<1x32xf32> to vector<32x32xf32>
    %157 = arith.mulf %154, %156 : vector<32x32xf32>
    %158 = arith.addf %153, %157 : vector<32x32xf32>
    %159 = vector.extract_strided_slice %102 {offsets = [352, 0], sizes = [32, 32], strides = [1, 1]} : vector<864x32xf32> to vector<32x32xf32>
    %160 = vector.extract_strided_slice %88 {offsets = [11, 0], sizes = [1, 32], strides = [1, 1]} : vector<27x32xf32> to vector<1x32xf32>
    %161 = vector.broadcast %160 : vector<1x32xf32> to vector<32x32xf32>
    %162 = arith.mulf %159, %161 : vector<32x32xf32>
    %163 = arith.addf %158, %162 : vector<32x32xf32>
    %164 = vector.extract_strided_slice %102 {offsets = [384, 0], sizes = [32, 32], strides = [1, 1]} : vector<864x32xf32> to vector<32x32xf32>
    %165 = vector.extract_strided_slice %88 {offsets = [12, 0], sizes = [1, 32], strides = [1, 1]} : vector<27x32xf32> to vector<1x32xf32>
    %166 = vector.broadcast %165 : vector<1x32xf32> to vector<32x32xf32>
    %167 = arith.mulf %164, %166 : vector<32x32xf32>
    %168 = arith.addf %163, %167 : vector<32x32xf32>
    %169 = vector.extract_strided_slice %102 {offsets = [416, 0], sizes = [32, 32], strides = [1, 1]} : vector<864x32xf32> to vector<32x32xf32>
    %170 = vector.extract_strided_slice %88 {offsets = [13, 0], sizes = [1, 32], strides = [1, 1]} : vector<27x32xf32> to vector<1x32xf32>
    %171 = vector.broadcast %170 : vector<1x32xf32> to vector<32x32xf32>
    %172 = arith.mulf %169, %171 : vector<32x32xf32>
    %173 = arith.addf %168, %172 : vector<32x32xf32>
    %174 = vector.extract_strided_slice %102 {offsets = [448, 0], sizes = [32, 32], strides = [1, 1]} : vector<864x32xf32> to vector<32x32xf32>
    %175 = vector.extract_strided_slice %88 {offsets = [14, 0], sizes = [1, 32], strides = [1, 1]} : vector<27x32xf32> to vector<1x32xf32>
    %176 = vector.broadcast %175 : vector<1x32xf32> to vector<32x32xf32>
    %177 = arith.mulf %174, %176 : vector<32x32xf32>
    %178 = arith.addf %173, %177 : vector<32x32xf32>
    %179 = vector.extract_strided_slice %102 {offsets = [480, 0], sizes = [32, 32], strides = [1, 1]} : vector<864x32xf32> to vector<32x32xf32>
    %180 = vector.extract_strided_slice %88 {offsets = [15, 0], sizes = [1, 32], strides = [1, 1]} : vector<27x32xf32> to vector<1x32xf32>
    %181 = vector.broadcast %180 : vector<1x32xf32> to vector<32x32xf32>
    %182 = arith.mulf %179, %181 : vector<32x32xf32>
    %183 = arith.addf %178, %182 : vector<32x32xf32>
    %184 = vector.extract_strided_slice %102 {offsets = [512, 0], sizes = [32, 32], strides = [1, 1]} : vector<864x32xf32> to vector<32x32xf32>
    %185 = vector.extract_strided_slice %88 {offsets = [16, 0], sizes = [1, 32], strides = [1, 1]} : vector<27x32xf32> to vector<1x32xf32>
    %186 = vector.broadcast %185 : vector<1x32xf32> to vector<32x32xf32>
    %187 = arith.mulf %184, %186 : vector<32x32xf32>
    %188 = arith.addf %183, %187 : vector<32x32xf32>
    %189 = vector.extract_strided_slice %102 {offsets = [544, 0], sizes = [32, 32], strides = [1, 1]} : vector<864x32xf32> to vector<32x32xf32>
    %190 = vector.extract_strided_slice %88 {offsets = [17, 0], sizes = [1, 32], strides = [1, 1]} : vector<27x32xf32> to vector<1x32xf32>
    %191 = vector.broadcast %190 : vector<1x32xf32> to vector<32x32xf32>
    %192 = arith.mulf %189, %191 : vector<32x32xf32>
    %193 = arith.addf %188, %192 : vector<32x32xf32>
    %194 = vector.extract_strided_slice %102 {offsets = [576, 0], sizes = [32, 32], strides = [1, 1]} : vector<864x32xf32> to vector<32x32xf32>
    %195 = vector.extract_strided_slice %88 {offsets = [18, 0], sizes = [1, 32], strides = [1, 1]} : vector<27x32xf32> to vector<1x32xf32>
    %196 = vector.broadcast %195 : vector<1x32xf32> to vector<32x32xf32>
    %197 = arith.mulf %194, %196 : vector<32x32xf32>
    %198 = arith.addf %193, %197 : vector<32x32xf32>
    %199 = vector.extract_strided_slice %102 {offsets = [608, 0], sizes = [32, 32], strides = [1, 1]} : vector<864x32xf32> to vector<32x32xf32>
    %200 = vector.extract_strided_slice %88 {offsets = [19, 0], sizes = [1, 32], strides = [1, 1]} : vector<27x32xf32> to vector<1x32xf32>
    %201 = vector.broadcast %200 : vector<1x32xf32> to vector<32x32xf32>
    %202 = arith.mulf %199, %201 : vector<32x32xf32>
    %203 = arith.addf %198, %202 : vector<32x32xf32>
    %204 = vector.extract_strided_slice %102 {offsets = [640, 0], sizes = [32, 32], strides = [1, 1]} : vector<864x32xf32> to vector<32x32xf32>
    %205 = vector.extract_strided_slice %88 {offsets = [20, 0], sizes = [1, 32], strides = [1, 1]} : vector<27x32xf32> to vector<1x32xf32>
    %206 = vector.broadcast %205 : vector<1x32xf32> to vector<32x32xf32>
    %207 = arith.mulf %204, %206 : vector<32x32xf32>
    %208 = arith.addf %203, %207 : vector<32x32xf32>
    %209 = vector.extract_strided_slice %102 {offsets = [672, 0], sizes = [32, 32], strides = [1, 1]} : vector<864x32xf32> to vector<32x32xf32>
    %210 = vector.extract_strided_slice %88 {offsets = [21, 0], sizes = [1, 32], strides = [1, 1]} : vector<27x32xf32> to vector<1x32xf32>
    %211 = vector.broadcast %210 : vector<1x32xf32> to vector<32x32xf32>
    %212 = arith.mulf %209, %211 : vector<32x32xf32>
    %213 = arith.addf %208, %212 : vector<32x32xf32>
    %214 = vector.extract_strided_slice %102 {offsets = [704, 0], sizes = [32, 32], strides = [1, 1]} : vector<864x32xf32> to vector<32x32xf32>
    %215 = vector.extract_strided_slice %88 {offsets = [22, 0], sizes = [1, 32], strides = [1, 1]} : vector<27x32xf32> to vector<1x32xf32>
    %216 = vector.broadcast %215 : vector<1x32xf32> to vector<32x32xf32>
    %217 = arith.mulf %214, %216 : vector<32x32xf32>
    %218 = arith.addf %213, %217 : vector<32x32xf32>
    %219 = vector.extract_strided_slice %102 {offsets = [736, 0], sizes = [32, 32], strides = [1, 1]} : vector<864x32xf32> to vector<32x32xf32>
    %220 = vector.extract_strided_slice %88 {offsets = [23, 0], sizes = [1, 32], strides = [1, 1]} : vector<27x32xf32> to vector<1x32xf32>
    %221 = vector.broadcast %220 : vector<1x32xf32> to vector<32x32xf32>
    %222 = arith.mulf %219, %221 : vector<32x32xf32>
    %223 = arith.addf %218, %222 : vector<32x32xf32>
    %224 = vector.extract_strided_slice %102 {offsets = [768, 0], sizes = [32, 32], strides = [1, 1]} : vector<864x32xf32> to vector<32x32xf32>
    %225 = vector.extract_strided_slice %88 {offsets = [24, 0], sizes = [1, 32], strides = [1, 1]} : vector<27x32xf32> to vector<1x32xf32>
    %226 = vector.broadcast %225 : vector<1x32xf32> to vector<32x32xf32>
    %227 = arith.mulf %224, %226 : vector<32x32xf32>
    %228 = arith.addf %223, %227 : vector<32x32xf32>
    %229 = vector.extract_strided_slice %102 {offsets = [800, 0], sizes = [32, 32], strides = [1, 1]} : vector<864x32xf32> to vector<32x32xf32>
    %230 = vector.extract_strided_slice %88 {offsets = [25, 0], sizes = [1, 32], strides = [1, 1]} : vector<27x32xf32> to vector<1x32xf32>
    %231 = vector.broadcast %230 : vector<1x32xf32> to vector<32x32xf32>
    %232 = arith.mulf %229, %231 : vector<32x32xf32>
    %233 = arith.addf %228, %232 : vector<32x32xf32>
    %234 = vector.extract_strided_slice %102 {offsets = [832, 0], sizes = [32, 32], strides = [1, 1]} : vector<864x32xf32> to vector<32x32xf32>
    %235 = vector.extract_strided_slice %88 {offsets = [26, 0], sizes = [1, 32], strides = [1, 1]} : vector<27x32xf32> to vector<1x32xf32>
    %236 = vector.broadcast %235 : vector<1x32xf32> to vector<32x32xf32>
    %237 = arith.mulf %234, %236 : vector<32x32xf32>
    %238 = arith.addf %233, %237 : vector<32x32xf32>
    %239 = tpu.concatenate %100, %238 in 0 : vector<1x32xf32>, vector<32x32xf32> -> vector<33x32xf32>
    %cst_71 = arith.constant dense<0.000000e+00> : vector<33x32xf32>
    %240 = tpu.matmul %239, %2, %cst_71 {dimension_numbers = #tpu.dot_dimension_numbers<[1], [0], [0], [1], [0, 0, 1, 1], [], []>} : vector<33x32xf32>, vector<32x32xf32>, vector<33x32xf32> -> vector<33x32xf32>
    %241 = arith.subf %239, %240 : vector<33x32xf32>
    %242 = arith.mulf %241, %241 : vector<33x32xf32>
    %cst_72 = arith.constant dense<0.000000e+00> : vector<33x32xf32>
    %243 = tpu.matmul %242, %2, %cst_72 {dimension_numbers = #tpu.dot_dimension_numbers<[1], [0], [0], [1], [0, 0, 1, 1], [], []>} : vector<33x32xf32>, vector<32x32xf32>, vector<33x32xf32> -> vector<33x32xf32>
    %244 = arith.subf %239, %240 : vector<33x32xf32>
    %cst_73 = arith.constant 9.99999974E-6 : f32
    %245 = vector.broadcast %cst_73 : f32 to vector<33x32xf32>
    %246 = arith.addf %243, %245 : vector<33x32xf32>
    %247 = math.rsqrt %246 : vector<33x32xf32>
    %248 = arith.mulf %244, %247 : vector<33x32xf32>
    %249 = vector.broadcast %93 : vector<1x32xf32> to vector<33x32xf32>
    %250 = arith.mulf %248, %249 : vector<33x32xf32>
    %251 = vector.broadcast %96 : vector<1x32xf32> to vector<33x32xf32>
    %252 = arith.addf %250, %251 : vector<33x32xf32>
    %253 = vector.extract_strided_slice %80 {offsets = [0, 0], sizes = [33, 32], strides = [1, 1]} : vector<66x32xf32> to vector<33x32xf32>
    %254 = vector.extract_strided_slice %253 {offsets = [0, 0], sizes = [1, 32], strides = [1, 1]} : vector<33x32xf32> to vector<1x32xf32>
    %255 = vector.extract_strided_slice %253 {offsets = [1, 0], sizes = [32, 32], strides = [1, 1]} : vector<33x32xf32> to vector<32x32xf32>
    %cst_74 = arith.constant dense<0.000000e+00> : vector<864x32xf32>
    %256 = tpu.matmul %1, %255, %cst_74 {dimension_numbers = #tpu.dot_dimension_numbers<[1], [0], [0], [1], [0, 0, 1, 1], [], []>} : vector<864x32xf32>, vector<32x32xf32>, vector<864x32xf32> -> vector<864x32xf32>
    %cst_75 = arith.constant 0.000000e+00 : f32
    %257 = vector.broadcast %cst_75 : f32 to vector<32x32xf32>
    %258 = vector.extract_strided_slice %256 {offsets = [0, 0], sizes = [32, 32], strides = [1, 1]} : vector<864x32xf32> to vector<32x32xf32>
    %259 = vector.extract_strided_slice %90 {offsets = [0, 0], sizes = [1, 32], strides = [1, 1]} : vector<27x32xf32> to vector<1x32xf32>
    %260 = vector.broadcast %259 : vector<1x32xf32> to vector<32x32xf32>
    %261 = arith.mulf %258, %260 : vector<32x32xf32>
    %262 = arith.addf %257, %261 : vector<32x32xf32>
    %263 = vector.extract_strided_slice %256 {offsets = [32, 0], sizes = [32, 32], strides = [1, 1]} : vector<864x32xf32> to vector<32x32xf32>
    %264 = vector.extract_strided_slice %90 {offsets = [1, 0], sizes = [1, 32], strides = [1, 1]} : vector<27x32xf32> to vector<1x32xf32>
    %265 = vector.broadcast %264 : vector<1x32xf32> to vector<32x32xf32>
    %266 = arith.mulf %263, %265 : vector<32x32xf32>
    %267 = arith.addf %262, %266 : vector<32x32xf32>
    %268 = vector.extract_strided_slice %256 {offsets = [64, 0], sizes = [32, 32], strides = [1, 1]} : vector<864x32xf32> to vector<32x32xf32>
    %269 = vector.extract_strided_slice %90 {offsets = [2, 0], sizes = [1, 32], strides = [1, 1]} : vector<27x32xf32> to vector<1x32xf32>
    %270 = vector.broadcast %269 : vector<1x32xf32> to vector<32x32xf32>
    %271 = arith.mulf %268, %270 : vector<32x32xf32>
    %272 = arith.addf %267, %271 : vector<32x32xf32>
    %273 = vector.extract_strided_slice %256 {offsets = [96, 0], sizes = [32, 32], strides = [1, 1]} : vector<864x32xf32> to vector<32x32xf32>
    %274 = vector.extract_strided_slice %90 {offsets = [3, 0], sizes = [1, 32], strides = [1, 1]} : vector<27x32xf32> to vector<1x32xf32>
    %275 = vector.broadcast %274 : vector<1x32xf32> to vector<32x32xf32>
    %276 = arith.mulf %273, %275 : vector<32x32xf32>
    %277 = arith.addf %272, %276 : vector<32x32xf32>
    %278 = vector.extract_strided_slice %256 {offsets = [128, 0], sizes = [32, 32], strides = [1, 1]} : vector<864x32xf32> to vector<32x32xf32>
    %279 = vector.extract_strided_slice %90 {offsets = [4, 0], sizes = [1, 32], strides = [1, 1]} : vector<27x32xf32> to vector<1x32xf32>
    %280 = vector.broadcast %279 : vector<1x32xf32> to vector<32x32xf32>
    %281 = arith.mulf %278, %280 : vector<32x32xf32>
    %282 = arith.addf %277, %281 : vector<32x32xf32>
    %283 = vector.extract_strided_slice %256 {offsets = [160, 0], sizes = [32, 32], strides = [1, 1]} : vector<864x32xf32> to vector<32x32xf32>
    %284 = vector.extract_strided_slice %90 {offsets = [5, 0], sizes = [1, 32], strides = [1, 1]} : vector<27x32xf32> to vector<1x32xf32>
    %285 = vector.broadcast %284 : vector<1x32xf32> to vector<32x32xf32>
    %286 = arith.mulf %283, %285 : vector<32x32xf32>
    %287 = arith.addf %282, %286 : vector<32x32xf32>
    %288 = vector.extract_strided_slice %256 {offsets = [192, 0], sizes = [32, 32], strides = [1, 1]} : vector<864x32xf32> to vector<32x32xf32>
    %289 = vector.extract_strided_slice %90 {offsets = [6, 0], sizes = [1, 32], strides = [1, 1]} : vector<27x32xf32> to vector<1x32xf32>
    %290 = vector.broadcast %289 : vector<1x32xf32> to vector<32x32xf32>
    %291 = arith.mulf %288, %290 : vector<32x32xf32>
    %292 = arith.addf %287, %291 : vector<32x32xf32>
    %293 = vector.extract_strided_slice %256 {offsets = [224, 0], sizes = [32, 32], strides = [1, 1]} : vector<864x32xf32> to vector<32x32xf32>
    %294 = vector.extract_strided_slice %90 {offsets = [7, 0], sizes = [1, 32], strides = [1, 1]} : vector<27x32xf32> to vector<1x32xf32>
    %295 = vector.broadcast %294 : vector<1x32xf32> to vector<32x32xf32>
    %296 = arith.mulf %293, %295 : vector<32x32xf32>
    %297 = arith.addf %292, %296 : vector<32x32xf32>
    %298 = vector.extract_strided_slice %256 {offsets = [256, 0], sizes = [32, 32], strides = [1, 1]} : vector<864x32xf32> to vector<32x32xf32>
    %299 = vector.extract_strided_slice %90 {offsets = [8, 0], sizes = [1, 32], strides = [1, 1]} : vector<27x32xf32> to vector<1x32xf32>
    %300 = vector.broadcast %299 : vector<1x32xf32> to vector<32x32xf32>
    %301 = arith.mulf %298, %300 : vector<32x32xf32>
    %302 = arith.addf %297, %301 : vector<32x32xf32>
    %303 = vector.extract_strided_slice %256 {offsets = [288, 0], sizes = [32, 32], strides = [1, 1]} : vector<864x32xf32> to vector<32x32xf32>
    %304 = vector.extract_strided_slice %90 {offsets = [9, 0], sizes = [1, 32], strides = [1, 1]} : vector<27x32xf32> to vector<1x32xf32>
    %305 = vector.broadcast %304 : vector<1x32xf32> to vector<32x32xf32>
    %306 = arith.mulf %303, %305 : vector<32x32xf32>
    %307 = arith.addf %302, %306 : vector<32x32xf32>
    %308 = vector.extract_strided_slice %256 {offsets = [320, 0], sizes = [32, 32], strides = [1, 1]} : vector<864x32xf32> to vector<32x32xf32>
    %309 = vector.extract_strided_slice %90 {offsets = [10, 0], sizes = [1, 32], strides = [1, 1]} : vector<27x32xf32> to vector<1x32xf32>
    %310 = vector.broadcast %309 : vector<1x32xf32> to vector<32x32xf32>
    %311 = arith.mulf %308, %310 : vector<32x32xf32>
    %312 = arith.addf %307, %311 : vector<32x32xf32>
    %313 = vector.extract_strided_slice %256 {offsets = [352, 0], sizes = [32, 32], strides = [1, 1]} : vector<864x32xf32> to vector<32x32xf32>
    %314 = vector.extract_strided_slice %90 {offsets = [11, 0], sizes = [1, 32], strides = [1, 1]} : vector<27x32xf32> to vector<1x32xf32>
    %315 = vector.broadcast %314 : vector<1x32xf32> to vector<32x32xf32>
    %316 = arith.mulf %313, %315 : vector<32x32xf32>
    %317 = arith.addf %312, %316 : vector<32x32xf32>
    %318 = vector.extract_strided_slice %256 {offsets = [384, 0], sizes = [32, 32], strides = [1, 1]} : vector<864x32xf32> to vector<32x32xf32>
    %319 = vector.extract_strided_slice %90 {offsets = [12, 0], sizes = [1, 32], strides = [1, 1]} : vector<27x32xf32> to vector<1x32xf32>
    %320 = vector.broadcast %319 : vector<1x32xf32> to vector<32x32xf32>
    %321 = arith.mulf %318, %320 : vector<32x32xf32>
    %322 = arith.addf %317, %321 : vector<32x32xf32>
    %323 = vector.extract_strided_slice %256 {offsets = [416, 0], sizes = [32, 32], strides = [1, 1]} : vector<864x32xf32> to vector<32x32xf32>
    %324 = vector.extract_strided_slice %90 {offsets = [13, 0], sizes = [1, 32], strides = [1, 1]} : vector<27x32xf32> to vector<1x32xf32>
    %325 = vector.broadcast %324 : vector<1x32xf32> to vector<32x32xf32>
    %326 = arith.mulf %323, %325 : vector<32x32xf32>
    %327 = arith.addf %322, %326 : vector<32x32xf32>
    %328 = vector.extract_strided_slice %256 {offsets = [448, 0], sizes = [32, 32], strides = [1, 1]} : vector<864x32xf32> to vector<32x32xf32>
    %329 = vector.extract_strided_slice %90 {offsets = [14, 0], sizes = [1, 32], strides = [1, 1]} : vector<27x32xf32> to vector<1x32xf32>
    %330 = vector.broadcast %329 : vector<1x32xf32> to vector<32x32xf32>
    %331 = arith.mulf %328, %330 : vector<32x32xf32>
    %332 = arith.addf %327, %331 : vector<32x32xf32>
    %333 = vector.extract_strided_slice %256 {offsets = [480, 0], sizes = [32, 32], strides = [1, 1]} : vector<864x32xf32> to vector<32x32xf32>
    %334 = vector.extract_strided_slice %90 {offsets = [15, 0], sizes = [1, 32], strides = [1, 1]} : vector<27x32xf32> to vector<1x32xf32>
    %335 = vector.broadcast %334 : vector<1x32xf32> to vector<32x32xf32>
    %336 = arith.mulf %333, %335 : vector<32x32xf32>
    %337 = arith.addf %332, %336 : vector<32x32xf32>
    %338 = vector.extract_strided_slice %256 {offsets = [512, 0], sizes = [32, 32], strides = [1, 1]} : vector<864x32xf32> to vector<32x32xf32>
    %339 = vector.extract_strided_slice %90 {offsets = [16, 0], sizes = [1, 32], strides = [1, 1]} : vector<27x32xf32> to vector<1x32xf32>
    %340 = vector.broadcast %339 : vector<1x32xf32> to vector<32x32xf32>
    %341 = arith.mulf %338, %340 : vector<32x32xf32>
    %342 = arith.addf %337, %341 : vector<32x32xf32>
    %343 = vector.extract_strided_slice %256 {offsets = [544, 0], sizes = [32, 32], strides = [1, 1]} : vector<864x32xf32> to vector<32x32xf32>
    %344 = vector.extract_strided_slice %90 {offsets = [17, 0], sizes = [1, 32], strides = [1, 1]} : vector<27x32xf32> to vector<1x32xf32>
    %345 = vector.broadcast %344 : vector<1x32xf32> to vector<32x32xf32>
    %346 = arith.mulf %343, %345 : vector<32x32xf32>
    %347 = arith.addf %342, %346 : vector<32x32xf32>
    %348 = vector.extract_strided_slice %256 {offsets = [576, 0], sizes = [32, 32], strides = [1, 1]} : vector<864x32xf32> to vector<32x32xf32>
    %349 = vector.extract_strided_slice %90 {offsets = [18, 0], sizes = [1, 32], strides = [1, 1]} : vector<27x32xf32> to vector<1x32xf32>
    %350 = vector.broadcast %349 : vector<1x32xf32> to vector<32x32xf32>
    %351 = arith.mulf %348, %350 : vector<32x32xf32>
    %352 = arith.addf %347, %351 : vector<32x32xf32>
    %353 = vector.extract_strided_slice %256 {offsets = [608, 0], sizes = [32, 32], strides = [1, 1]} : vector<864x32xf32> to vector<32x32xf32>
    %354 = vector.extract_strided_slice %90 {offsets = [19, 0], sizes = [1, 32], strides = [1, 1]} : vector<27x32xf32> to vector<1x32xf32>
    %355 = vector.broadcast %354 : vector<1x32xf32> to vector<32x32xf32>
    %356 = arith.mulf %353, %355 : vector<32x32xf32>
    %357 = arith.addf %352, %356 : vector<32x32xf32>
    %358 = vector.extract_strided_slice %256 {offsets = [640, 0], sizes = [32, 32], strides = [1, 1]} : vector<864x32xf32> to vector<32x32xf32>
    %359 = vector.extract_strided_slice %90 {offsets = [20, 0], sizes = [1, 32], strides = [1, 1]} : vector<27x32xf32> to vector<1x32xf32>
    %360 = vector.broadcast %359 : vector<1x32xf32> to vector<32x32xf32>
    %361 = arith.mulf %358, %360 : vector<32x32xf32>
    %362 = arith.addf %357, %361 : vector<32x32xf32>
    %363 = vector.extract_strided_slice %256 {offsets = [672, 0], sizes = [32, 32], strides = [1, 1]} : vector<864x32xf32> to vector<32x32xf32>
    %364 = vector.extract_strided_slice %90 {offsets = [21, 0], sizes = [1, 32], strides = [1, 1]} : vector<27x32xf32> to vector<1x32xf32>
    %365 = vector.broadcast %364 : vector<1x32xf32> to vector<32x32xf32>
    %366 = arith.mulf %363, %365 : vector<32x32xf32>
    %367 = arith.addf %362, %366 : vector<32x32xf32>
    %368 = vector.extract_strided_slice %256 {offsets = [704, 0], sizes = [32, 32], strides = [1, 1]} : vector<864x32xf32> to vector<32x32xf32>
    %369 = vector.extract_strided_slice %90 {offsets = [22, 0], sizes = [1, 32], strides = [1, 1]} : vector<27x32xf32> to vector<1x32xf32>
    %370 = vector.broadcast %369 : vector<1x32xf32> to vector<32x32xf32>
    %371 = arith.mulf %368, %370 : vector<32x32xf32>
    %372 = arith.addf %367, %371 : vector<32x32xf32>
    %373 = vector.extract_strided_slice %256 {offsets = [736, 0], sizes = [32, 32], strides = [1, 1]} : vector<864x32xf32> to vector<32x32xf32>
    %374 = vector.extract_strided_slice %90 {offsets = [23, 0], sizes = [1, 32], strides = [1, 1]} : vector<27x32xf32> to vector<1x32xf32>
    %375 = vector.broadcast %374 : vector<1x32xf32> to vector<32x32xf32>
    %376 = arith.mulf %373, %375 : vector<32x32xf32>
    %377 = arith.addf %372, %376 : vector<32x32xf32>
    %378 = vector.extract_strided_slice %256 {offsets = [768, 0], sizes = [32, 32], strides = [1, 1]} : vector<864x32xf32> to vector<32x32xf32>
    %379 = vector.extract_strided_slice %90 {offsets = [24, 0], sizes = [1, 32], strides = [1, 1]} : vector<27x32xf32> to vector<1x32xf32>
    %380 = vector.broadcast %379 : vector<1x32xf32> to vector<32x32xf32>
    %381 = arith.mulf %378, %380 : vector<32x32xf32>
    %382 = arith.addf %377, %381 : vector<32x32xf32>
    %383 = vector.extract_strided_slice %256 {offsets = [800, 0], sizes = [32, 32], strides = [1, 1]} : vector<864x32xf32> to vector<32x32xf32>
    %384 = vector.extract_strided_slice %90 {offsets = [25, 0], sizes = [1, 32], strides = [1, 1]} : vector<27x32xf32> to vector<1x32xf32>
    %385 = vector.broadcast %384 : vector<1x32xf32> to vector<32x32xf32>
    %386 = arith.mulf %383, %385 : vector<32x32xf32>
    %387 = arith.addf %382, %386 : vector<32x32xf32>
    %388 = vector.extract_strided_slice %256 {offsets = [832, 0], sizes = [32, 32], strides = [1, 1]} : vector<864x32xf32> to vector<32x32xf32>
    %389 = vector.extract_strided_slice %90 {offsets = [26, 0], sizes = [1, 32], strides = [1, 1]} : vector<27x32xf32> to vector<1x32xf32>
    %390 = vector.broadcast %389 : vector<1x32xf32> to vector<32x32xf32>
    %391 = arith.mulf %388, %390 : vector<32x32xf32>
    %392 = arith.addf %387, %391 : vector<32x32xf32>
    %393 = tpu.concatenate %254, %392 in 0 : vector<1x32xf32>, vector<32x32xf32> -> vector<33x32xf32>
    %cst_76 = arith.constant dense<0.000000e+00> : vector<33x32xf32>
    %394 = tpu.matmul %393, %2, %cst_76 {dimension_numbers = #tpu.dot_dimension_numbers<[1], [0], [0], [1], [0, 0, 1, 1], [], []>} : vector<33x32xf32>, vector<32x32xf32>, vector<33x32xf32> -> vector<33x32xf32>
    %395 = arith.subf %393, %394 : vector<33x32xf32>
    %396 = arith.mulf %395, %395 : vector<33x32xf32>
    %cst_77 = arith.constant dense<0.000000e+00> : vector<33x32xf32>
    %397 = tpu.matmul %396, %2, %cst_77 {dimension_numbers = #tpu.dot_dimension_numbers<[1], [0], [0], [1], [0, 0, 1, 1], [], []>} : vector<33x32xf32>, vector<32x32xf32>, vector<33x32xf32> -> vector<33x32xf32>
    %398 = arith.subf %393, %394 : vector<33x32xf32>
    %cst_78 = arith.constant 9.99999974E-6 : f32
    %399 = vector.broadcast %cst_78 : f32 to vector<33x32xf32>
    %400 = arith.addf %397, %399 : vector<33x32xf32>
    %401 = math.rsqrt %400 : vector<33x32xf32>
    %402 = arith.mulf %398, %401 : vector<33x32xf32>
    %403 = vector.broadcast %94 : vector<1x32xf32> to vector<33x32xf32>
    %404 = arith.mulf %402, %403 : vector<33x32xf32>
    %405 = vector.broadcast %97 : vector<1x32xf32> to vector<33x32xf32>
    %406 = arith.addf %404, %405 : vector<33x32xf32>
    %407 = vector.extract_strided_slice %86 {offsets = [0, 0], sizes = [33, 32], strides = [1, 1]} : vector<66x32xf32> to vector<33x32xf32>
    %408 = vector.extract_strided_slice %407 {offsets = [0, 0], sizes = [1, 32], strides = [1, 1]} : vector<33x32xf32> to vector<1x32xf32>
    %409 = vector.extract_strided_slice %407 {offsets = [1, 0], sizes = [32, 32], strides = [1, 1]} : vector<33x32xf32> to vector<32x32xf32>
    %cst_79 = arith.constant dense<0.000000e+00> : vector<864x32xf32>
    %410 = tpu.matmul %1, %409, %cst_79 {dimension_numbers = #tpu.dot_dimension_numbers<[1], [0], [0], [1], [0, 0, 1, 1], [], []>} : vector<864x32xf32>, vector<32x32xf32>, vector<864x32xf32> -> vector<864x32xf32>
    %cst_80 = arith.constant 0.000000e+00 : f32
    %411 = vector.broadcast %cst_80 : f32 to vector<32x32xf32>
    %412 = vector.extract_strided_slice %410 {offsets = [0, 0], sizes = [32, 32], strides = [1, 1]} : vector<864x32xf32> to vector<32x32xf32>
    %413 = vector.extract_strided_slice %92 {offsets = [0, 0], sizes = [1, 32], strides = [1, 1]} : vector<27x32xf32> to vector<1x32xf32>
    %414 = vector.broadcast %413 : vector<1x32xf32> to vector<32x32xf32>
    %415 = arith.mulf %412, %414 : vector<32x32xf32>
    %416 = arith.addf %411, %415 : vector<32x32xf32>
    %417 = vector.extract_strided_slice %410 {offsets = [32, 0], sizes = [32, 32], strides = [1, 1]} : vector<864x32xf32> to vector<32x32xf32>
    %418 = vector.extract_strided_slice %92 {offsets = [1, 0], sizes = [1, 32], strides = [1, 1]} : vector<27x32xf32> to vector<1x32xf32>
    %419 = vector.broadcast %418 : vector<1x32xf32> to vector<32x32xf32>
    %420 = arith.mulf %417, %419 : vector<32x32xf32>
    %421 = arith.addf %416, %420 : vector<32x32xf32>
    %422 = vector.extract_strided_slice %410 {offsets = [64, 0], sizes = [32, 32], strides = [1, 1]} : vector<864x32xf32> to vector<32x32xf32>
    %423 = vector.extract_strided_slice %92 {offsets = [2, 0], sizes = [1, 32], strides = [1, 1]} : vector<27x32xf32> to vector<1x32xf32>
    %424 = vector.broadcast %423 : vector<1x32xf32> to vector<32x32xf32>
    %425 = arith.mulf %422, %424 : vector<32x32xf32>
    %426 = arith.addf %421, %425 : vector<32x32xf32>
    %427 = vector.extract_strided_slice %410 {offsets = [96, 0], sizes = [32, 32], strides = [1, 1]} : vector<864x32xf32> to vector<32x32xf32>
    %428 = vector.extract_strided_slice %92 {offsets = [3, 0], sizes = [1, 32], strides = [1, 1]} : vector<27x32xf32> to vector<1x32xf32>
    %429 = vector.broadcast %428 : vector<1x32xf32> to vector<32x32xf32>
    %430 = arith.mulf %427, %429 : vector<32x32xf32>
    %431 = arith.addf %426, %430 : vector<32x32xf32>
    %432 = vector.extract_strided_slice %410 {offsets = [128, 0], sizes = [32, 32], strides = [1, 1]} : vector<864x32xf32> to vector<32x32xf32>
    %433 = vector.extract_strided_slice %92 {offsets = [4, 0], sizes = [1, 32], strides = [1, 1]} : vector<27x32xf32> to vector<1x32xf32>
    %434 = vector.broadcast %433 : vector<1x32xf32> to vector<32x32xf32>
    %435 = arith.mulf %432, %434 : vector<32x32xf32>
    %436 = arith.addf %431, %435 : vector<32x32xf32>
    %437 = vector.extract_strided_slice %410 {offsets = [160, 0], sizes = [32, 32], strides = [1, 1]} : vector<864x32xf32> to vector<32x32xf32>
    %438 = vector.extract_strided_slice %92 {offsets = [5, 0], sizes = [1, 32], strides = [1, 1]} : vector<27x32xf32> to vector<1x32xf32>
    %439 = vector.broadcast %438 : vector<1x32xf32> to vector<32x32xf32>
    %440 = arith.mulf %437, %439 : vector<32x32xf32>
    %441 = arith.addf %436, %440 : vector<32x32xf32>
    %442 = vector.extract_strided_slice %410 {offsets = [192, 0], sizes = [32, 32], strides = [1, 1]} : vector<864x32xf32> to vector<32x32xf32>
    %443 = vector.extract_strided_slice %92 {offsets = [6, 0], sizes = [1, 32], strides = [1, 1]} : vector<27x32xf32> to vector<1x32xf32>
    %444 = vector.broadcast %443 : vector<1x32xf32> to vector<32x32xf32>
    %445 = arith.mulf %442, %444 : vector<32x32xf32>
    %446 = arith.addf %441, %445 : vector<32x32xf32>
    %447 = vector.extract_strided_slice %410 {offsets = [224, 0], sizes = [32, 32], strides = [1, 1]} : vector<864x32xf32> to vector<32x32xf32>
    %448 = vector.extract_strided_slice %92 {offsets = [7, 0], sizes = [1, 32], strides = [1, 1]} : vector<27x32xf32> to vector<1x32xf32>
    %449 = vector.broadcast %448 : vector<1x32xf32> to vector<32x32xf32>
    %450 = arith.mulf %447, %449 : vector<32x32xf32>
    %451 = arith.addf %446, %450 : vector<32x32xf32>
    %452 = vector.extract_strided_slice %410 {offsets = [256, 0], sizes = [32, 32], strides = [1, 1]} : vector<864x32xf32> to vector<32x32xf32>
    %453 = vector.extract_strided_slice %92 {offsets = [8, 0], sizes = [1, 32], strides = [1, 1]} : vector<27x32xf32> to vector<1x32xf32>
    %454 = vector.broadcast %453 : vector<1x32xf32> to vector<32x32xf32>
    %455 = arith.mulf %452, %454 : vector<32x32xf32>
    %456 = arith.addf %451, %455 : vector<32x32xf32>
    %457 = vector.extract_strided_slice %410 {offsets = [288, 0], sizes = [32, 32], strides = [1, 1]} : vector<864x32xf32> to vector<32x32xf32>
    %458 = vector.extract_strided_slice %92 {offsets = [9, 0], sizes = [1, 32], strides = [1, 1]} : vector<27x32xf32> to vector<1x32xf32>
    %459 = vector.broadcast %458 : vector<1x32xf32> to vector<32x32xf32>
    %460 = arith.mulf %457, %459 : vector<32x32xf32>
    %461 = arith.addf %456, %460 : vector<32x32xf32>
    %462 = vector.extract_strided_slice %410 {offsets = [320, 0], sizes = [32, 32], strides = [1, 1]} : vector<864x32xf32> to vector<32x32xf32>
    %463 = vector.extract_strided_slice %92 {offsets = [10, 0], sizes = [1, 32], strides = [1, 1]} : vector<27x32xf32> to vector<1x32xf32>
    %464 = vector.broadcast %463 : vector<1x32xf32> to vector<32x32xf32>
    %465 = arith.mulf %462, %464 : vector<32x32xf32>
    %466 = arith.addf %461, %465 : vector<32x32xf32>
    %467 = vector.extract_strided_slice %410 {offsets = [352, 0], sizes = [32, 32], strides = [1, 1]} : vector<864x32xf32> to vector<32x32xf32>
    %468 = vector.extract_strided_slice %92 {offsets = [11, 0], sizes = [1, 32], strides = [1, 1]} : vector<27x32xf32> to vector<1x32xf32>
    %469 = vector.broadcast %468 : vector<1x32xf32> to vector<32x32xf32>
    %470 = arith.mulf %467, %469 : vector<32x32xf32>
    %471 = arith.addf %466, %470 : vector<32x32xf32>
    %472 = vector.extract_strided_slice %410 {offsets = [384, 0], sizes = [32, 32], strides = [1, 1]} : vector<864x32xf32> to vector<32x32xf32>
    %473 = vector.extract_strided_slice %92 {offsets = [12, 0], sizes = [1, 32], strides = [1, 1]} : vector<27x32xf32> to vector<1x32xf32>
    %474 = vector.broadcast %473 : vector<1x32xf32> to vector<32x32xf32>
    %475 = arith.mulf %472, %474 : vector<32x32xf32>
    %476 = arith.addf %471, %475 : vector<32x32xf32>
    %477 = vector.extract_strided_slice %410 {offsets = [416, 0], sizes = [32, 32], strides = [1, 1]} : vector<864x32xf32> to vector<32x32xf32>
    %478 = vector.extract_strided_slice %92 {offsets = [13, 0], sizes = [1, 32], strides = [1, 1]} : vector<27x32xf32> to vector<1x32xf32>
    %479 = vector.broadcast %478 : vector<1x32xf32> to vector<32x32xf32>
    %480 = arith.mulf %477, %479 : vector<32x32xf32>
    %481 = arith.addf %476, %480 : vector<32x32xf32>
    %482 = vector.extract_strided_slice %410 {offsets = [448, 0], sizes = [32, 32], strides = [1, 1]} : vector<864x32xf32> to vector<32x32xf32>
    %483 = vector.extract_strided_slice %92 {offsets = [14, 0], sizes = [1, 32], strides = [1, 1]} : vector<27x32xf32> to vector<1x32xf32>
    %484 = vector.broadcast %483 : vector<1x32xf32> to vector<32x32xf32>
    %485 = arith.mulf %482, %484 : vector<32x32xf32>
    %486 = arith.addf %481, %485 : vector<32x32xf32>
    %487 = vector.extract_strided_slice %410 {offsets = [480, 0], sizes = [32, 32], strides = [1, 1]} : vector<864x32xf32> to vector<32x32xf32>
    %488 = vector.extract_strided_slice %92 {offsets = [15, 0], sizes = [1, 32], strides = [1, 1]} : vector<27x32xf32> to vector<1x32xf32>
    %489 = vector.broadcast %488 : vector<1x32xf32> to vector<32x32xf32>
    %490 = arith.mulf %487, %489 : vector<32x32xf32>
    %491 = arith.addf %486, %490 : vector<32x32xf32>
    %492 = vector.extract_strided_slice %410 {offsets = [512, 0], sizes = [32, 32], strides = [1, 1]} : vector<864x32xf32> to vector<32x32xf32>
    %493 = vector.extract_strided_slice %92 {offsets = [16, 0], sizes = [1, 32], strides = [1, 1]} : vector<27x32xf32> to vector<1x32xf32>
    %494 = vector.broadcast %493 : vector<1x32xf32> to vector<32x32xf32>
    %495 = arith.mulf %492, %494 : vector<32x32xf32>
    %496 = arith.addf %491, %495 : vector<32x32xf32>
    %497 = vector.extract_strided_slice %410 {offsets = [544, 0], sizes = [32, 32], strides = [1, 1]} : vector<864x32xf32> to vector<32x32xf32>
    %498 = vector.extract_strided_slice %92 {offsets = [17, 0], sizes = [1, 32], strides = [1, 1]} : vector<27x32xf32> to vector<1x32xf32>
    %499 = vector.broadcast %498 : vector<1x32xf32> to vector<32x32xf32>
    %500 = arith.mulf %497, %499 : vector<32x32xf32>
    %501 = arith.addf %496, %500 : vector<32x32xf32>
    %502 = vector.extract_strided_slice %410 {offsets = [576, 0], sizes = [32, 32], strides = [1, 1]} : vector<864x32xf32> to vector<32x32xf32>
    %503 = vector.extract_strided_slice %92 {offsets = [18, 0], sizes = [1, 32], strides = [1, 1]} : vector<27x32xf32> to vector<1x32xf32>
    %504 = vector.broadcast %503 : vector<1x32xf32> to vector<32x32xf32>
    %505 = arith.mulf %502, %504 : vector<32x32xf32>
    %506 = arith.addf %501, %505 : vector<32x32xf32>
    %507 = vector.extract_strided_slice %410 {offsets = [608, 0], sizes = [32, 32], strides = [1, 1]} : vector<864x32xf32> to vector<32x32xf32>
    %508 = vector.extract_strided_slice %92 {offsets = [19, 0], sizes = [1, 32], strides = [1, 1]} : vector<27x32xf32> to vector<1x32xf32>
    %509 = vector.broadcast %508 : vector<1x32xf32> to vector<32x32xf32>
    %510 = arith.mulf %507, %509 : vector<32x32xf32>
    %511 = arith.addf %506, %510 : vector<32x32xf32>
    %512 = vector.extract_strided_slice %410 {offsets = [640, 0], sizes = [32, 32], strides = [1, 1]} : vector<864x32xf32> to vector<32x32xf32>
    %513 = vector.extract_strided_slice %92 {offsets = [20, 0], sizes = [1, 32], strides = [1, 1]} : vector<27x32xf32> to vector<1x32xf32>
    %514 = vector.broadcast %513 : vector<1x32xf32> to vector<32x32xf32>
    %515 = arith.mulf %512, %514 : vector<32x32xf32>
    %516 = arith.addf %511, %515 : vector<32x32xf32>
    %517 = vector.extract_strided_slice %410 {offsets = [672, 0], sizes = [32, 32], strides = [1, 1]} : vector<864x32xf32> to vector<32x32xf32>
    %518 = vector.extract_strided_slice %92 {offsets = [21, 0], sizes = [1, 32], strides = [1, 1]} : vector<27x32xf32> to vector<1x32xf32>
    %519 = vector.broadcast %518 : vector<1x32xf32> to vector<32x32xf32>
    %520 = arith.mulf %517, %519 : vector<32x32xf32>
    %521 = arith.addf %516, %520 : vector<32x32xf32>
    %522 = vector.extract_strided_slice %410 {offsets = [704, 0], sizes = [32, 32], strides = [1, 1]} : vector<864x32xf32> to vector<32x32xf32>
    %523 = vector.extract_strided_slice %92 {offsets = [22, 0], sizes = [1, 32], strides = [1, 1]} : vector<27x32xf32> to vector<1x32xf32>
    %524 = vector.broadcast %523 : vector<1x32xf32> to vector<32x32xf32>
    %525 = arith.mulf %522, %524 : vector<32x32xf32>
    %526 = arith.addf %521, %525 : vector<32x32xf32>
    %527 = vector.extract_strided_slice %410 {offsets = [736, 0], sizes = [32, 32], strides = [1, 1]} : vector<864x32xf32> to vector<32x32xf32>
    %528 = vector.extract_strided_slice %92 {offsets = [23, 0], sizes = [1, 32], strides = [1, 1]} : vector<27x32xf32> to vector<1x32xf32>
    %529 = vector.broadcast %528 : vector<1x32xf32> to vector<32x32xf32>
    %530 = arith.mulf %527, %529 : vector<32x32xf32>
    %531 = arith.addf %526, %530 : vector<32x32xf32>
    %532 = vector.extract_strided_slice %410 {offsets = [768, 0], sizes = [32, 32], strides = [1, 1]} : vector<864x32xf32> to vector<32x32xf32>
    %533 = vector.extract_strided_slice %92 {offsets = [24, 0], sizes = [1, 32], strides = [1, 1]} : vector<27x32xf32> to vector<1x32xf32>
    %534 = vector.broadcast %533 : vector<1x32xf32> to vector<32x32xf32>
    %535 = arith.mulf %532, %534 : vector<32x32xf32>
    %536 = arith.addf %531, %535 : vector<32x32xf32>
    %537 = vector.extract_strided_slice %410 {offsets = [800, 0], sizes = [32, 32], strides = [1, 1]} : vector<864x32xf32> to vector<32x32xf32>
    %538 = vector.extract_strided_slice %92 {offsets = [25, 0], sizes = [1, 32], strides = [1, 1]} : vector<27x32xf32> to vector<1x32xf32>
    %539 = vector.broadcast %538 : vector<1x32xf32> to vector<32x32xf32>
    %540 = arith.mulf %537, %539 : vector<32x32xf32>
    %541 = arith.addf %536, %540 : vector<32x32xf32>
    %542 = vector.extract_strided_slice %410 {offsets = [832, 0], sizes = [32, 32], strides = [1, 1]} : vector<864x32xf32> to vector<32x32xf32>
    %543 = vector.extract_strided_slice %92 {offsets = [26, 0], sizes = [1, 32], strides = [1, 1]} : vector<27x32xf32> to vector<1x32xf32>
    %544 = vector.broadcast %543 : vector<1x32xf32> to vector<32x32xf32>
    %545 = arith.mulf %542, %544 : vector<32x32xf32>
    %546 = arith.addf %541, %545 : vector<32x32xf32>
    %547 = tpu.concatenate %408, %546 in 0 : vector<1x32xf32>, vector<32x32xf32> -> vector<33x32xf32>
    %cst_81 = arith.constant dense<0.000000e+00> : vector<33x32xf32>
    %548 = tpu.matmul %547, %2, %cst_81 {dimension_numbers = #tpu.dot_dimension_numbers<[1], [0], [0], [1], [0, 0, 1, 1], [], []>} : vector<33x32xf32>, vector<32x32xf32>, vector<33x32xf32> -> vector<33x32xf32>
    %549 = arith.subf %547, %548 : vector<33x32xf32>
    %550 = arith.mulf %549, %549 : vector<33x32xf32>
    %cst_82 = arith.constant dense<0.000000e+00> : vector<33x32xf32>
    %551 = tpu.matmul %550, %2, %cst_82 {dimension_numbers = #tpu.dot_dimension_numbers<[1], [0], [0], [1], [0, 0, 1, 1], [], []>} : vector<33x32xf32>, vector<32x32xf32>, vector<33x32xf32> -> vector<33x32xf32>
    %552 = arith.subf %547, %548 : vector<33x32xf32>
    %cst_83 = arith.constant 9.99999974E-6 : f32
    %553 = vector.broadcast %cst_83 : f32 to vector<33x32xf32>
    %554 = arith.addf %551, %553 : vector<33x32xf32>
    %555 = math.rsqrt %554 : vector<33x32xf32>
    %556 = arith.mulf %552, %555 : vector<33x32xf32>
    %557 = vector.broadcast %95 : vector<1x32xf32> to vector<33x32xf32>
    %558 = arith.mulf %556, %557 : vector<33x32xf32>
    %559 = vector.broadcast %98 : vector<1x32xf32> to vector<33x32xf32>
    %560 = arith.addf %558, %559 : vector<33x32xf32>
    %cst_84 = arith.constant 0.353553385 : f32
    %561 = vector.broadcast %cst_84 : f32 to vector<33x32xf32>
    %562 = arith.mulf %252, %561 : vector<33x32xf32>
    %cst_85 = arith.constant 0.000000e+00 : f32
    %563 = vector.broadcast %cst_85 : f32 to vector<33x32xf32>
    %564 = vector.broadcast %20 : vector<1x32xf32> to vector<33x32xf32>
    %565 = arith.mulf %406, %564 : vector<33x32xf32>
    %cst_86 = arith.constant dense<0.000000e+00> : vector<33x33xf32>
    %566 = tpu.matmul %562, %565, %cst_86 {dimension_numbers = #tpu.dot_dimension_numbers<[1], [1], [0], [0], [0, 0, 1, 0], [], []>} : vector<33x32xf32>, vector<33x32xf32>, vector<33x33xf32> -> vector<33x33xf32>
    %cst_87 = arith.constant dense<0xFF800000> : vector<33xf32>
    %567 = vector.multi_reduction <maximumf>, %566, %cst_87 [1] : vector<33x33xf32> to vector<33xf32>
    %568 = vector.shape_cast %567 : vector<33xf32> to vector<33x1xf32>
    %569 = vector.broadcast %568 : vector<33x1xf32> to vector<33x33xf32>
    %570 = arith.subf %566, %569 : vector<33x33xf32>
    %571 = math.exp %570 : vector<33x33xf32>
    %cst_88 = arith.constant dense<0.000000e+00> : vector<33xf32>
    %572 = vector.multi_reduction <add>, %571, %cst_88 [1] : vector<33x33xf32> to vector<33xf32>
    %573 = vector.shape_cast %572 : vector<33xf32> to vector<33x1xf32>
    %574 = tpu.reciprocal %573 {approx = true} : vector<33x1xf32> -> vector<33x1xf32>
    %575 = vector.broadcast %574 : vector<33x1xf32> to vector<33x33xf32>
    %576 = arith.mulf %571, %575 : vector<33x33xf32>
    %577 = vector.broadcast %20 : vector<1x32xf32> to vector<33x32xf32>
    %578 = arith.mulf %560, %577 : vector<33x32xf32>
    %cst_89 = arith.constant dense<0.000000e+00> : vector<33x32xf32>
    %579 = tpu.matmul %576, %578, %cst_89 {dimension_numbers = #tpu.dot_dimension_numbers<[1], [0], [0], [1], [0, 0, 1, 1], [], []>} : vector<33x33xf32>, vector<33x32xf32>, vector<33x32xf32> -> vector<33x32xf32>
    %580 = arith.addf %563, %579 : vector<33x32xf32>
    %581 = vector.broadcast %27 : vector<1x32xf32> to vector<33x32xf32>
    %582 = arith.mulf %406, %581 : vector<33x32xf32>
    %cst_90 = arith.constant dense<0.000000e+00> : vector<33x33xf32>
    %583 = tpu.matmul %562, %582, %cst_90 {dimension_numbers = #tpu.dot_dimension_numbers<[1], [1], [0], [0], [0, 0, 1, 0], [], []>} : vector<33x32xf32>, vector<33x32xf32>, vector<33x33xf32> -> vector<33x33xf32>
    %cst_91 = arith.constant dense<0xFF800000> : vector<33xf32>
    %584 = vector.multi_reduction <maximumf>, %583, %cst_91 [1] : vector<33x33xf32> to vector<33xf32>
    %585 = vector.shape_cast %584 : vector<33xf32> to vector<33x1xf32>
    %586 = vector.broadcast %585 : vector<33x1xf32> to vector<33x33xf32>
    %587 = arith.subf %583, %586 : vector<33x33xf32>
    %588 = math.exp %587 : vector<33x33xf32>
    %cst_92 = arith.constant dense<0.000000e+00> : vector<33xf32>
    %589 = vector.multi_reduction <add>, %588, %cst_92 [1] : vector<33x33xf32> to vector<33xf32>
    %590 = vector.shape_cast %589 : vector<33xf32> to vector<33x1xf32>
    %591 = tpu.reciprocal %590 {approx = true} : vector<33x1xf32> -> vector<33x1xf32>
    %592 = vector.broadcast %591 : vector<33x1xf32> to vector<33x33xf32>
    %593 = arith.mulf %588, %592 : vector<33x33xf32>
    %594 = vector.broadcast %27 : vector<1x32xf32> to vector<33x32xf32>
    %595 = arith.mulf %560, %594 : vector<33x32xf32>
    %cst_93 = arith.constant dense<0.000000e+00> : vector<33x32xf32>
    %596 = tpu.matmul %593, %595, %cst_93 {dimension_numbers = #tpu.dot_dimension_numbers<[1], [0], [0], [1], [0, 0, 1, 1], [], []>} : vector<33x33xf32>, vector<33x32xf32>, vector<33x32xf32> -> vector<33x32xf32>
    %597 = arith.addf %580, %596 : vector<33x32xf32>
    %598 = vector.broadcast %34 : vector<1x32xf32> to vector<33x32xf32>
    %599 = arith.mulf %406, %598 : vector<33x32xf32>
    %cst_94 = arith.constant dense<0.000000e+00> : vector<33x33xf32>
    %600 = tpu.matmul %562, %599, %cst_94 {dimension_numbers = #tpu.dot_dimension_numbers<[1], [1], [0], [0], [0, 0, 1, 0], [], []>} : vector<33x32xf32>, vector<33x32xf32>, vector<33x33xf32> -> vector<33x33xf32>
    %cst_95 = arith.constant dense<0xFF800000> : vector<33xf32>
    %601 = vector.multi_reduction <maximumf>, %600, %cst_95 [1] : vector<33x33xf32> to vector<33xf32>
    %602 = vector.shape_cast %601 : vector<33xf32> to vector<33x1xf32>
    %603 = vector.broadcast %602 : vector<33x1xf32> to vector<33x33xf32>
    %604 = arith.subf %600, %603 : vector<33x33xf32>
    %605 = math.exp %604 : vector<33x33xf32>
    %cst_96 = arith.constant dense<0.000000e+00> : vector<33xf32>
    %606 = vector.multi_reduction <add>, %605, %cst_96 [1] : vector<33x33xf32> to vector<33xf32>
    %607 = vector.shape_cast %606 : vector<33xf32> to vector<33x1xf32>
    %608 = tpu.reciprocal %607 {approx = true} : vector<33x1xf32> -> vector<33x1xf32>
    %609 = vector.broadcast %608 : vector<33x1xf32> to vector<33x33xf32>
    %610 = arith.mulf %605, %609 : vector<33x33xf32>
    %611 = vector.broadcast %34 : vector<1x32xf32> to vector<33x32xf32>
    %612 = arith.mulf %560, %611 : vector<33x32xf32>
    %cst_97 = arith.constant dense<0.000000e+00> : vector<33x32xf32>
    %613 = tpu.matmul %610, %612, %cst_97 {dimension_numbers = #tpu.dot_dimension_numbers<[1], [0], [0], [1], [0, 0, 1, 1], [], []>} : vector<33x33xf32>, vector<33x32xf32>, vector<33x32xf32> -> vector<33x32xf32>
    %614 = arith.addf %597, %613 : vector<33x32xf32>
    %615 = vector.broadcast %41 : vector<1x32xf32> to vector<33x32xf32>
    %616 = arith.mulf %406, %615 : vector<33x32xf32>
    %cst_98 = arith.constant dense<0.000000e+00> : vector<33x33xf32>
    %617 = tpu.matmul %562, %616, %cst_98 {dimension_numbers = #tpu.dot_dimension_numbers<[1], [1], [0], [0], [0, 0, 1, 0], [], []>} : vector<33x32xf32>, vector<33x32xf32>, vector<33x33xf32> -> vector<33x33xf32>
    %cst_99 = arith.constant dense<0xFF800000> : vector<33xf32>
    %618 = vector.multi_reduction <maximumf>, %617, %cst_99 [1] : vector<33x33xf32> to vector<33xf32>
    %619 = vector.shape_cast %618 : vector<33xf32> to vector<33x1xf32>
    %620 = vector.broadcast %619 : vector<33x1xf32> to vector<33x33xf32>
    %621 = arith.subf %617, %620 : vector<33x33xf32>
    %622 = math.exp %621 : vector<33x33xf32>
    %cst_100 = arith.constant dense<0.000000e+00> : vector<33xf32>
    %623 = vector.multi_reduction <add>, %622, %cst_100 [1] : vector<33x33xf32> to vector<33xf32>
    %624 = vector.shape_cast %623 : vector<33xf32> to vector<33x1xf32>
    %625 = tpu.reciprocal %624 {approx = true} : vector<33x1xf32> -> vector<33x1xf32>
    %626 = vector.broadcast %625 : vector<33x1xf32> to vector<33x33xf32>
    %627 = arith.mulf %622, %626 : vector<33x33xf32>
    %628 = vector.broadcast %41 : vector<1x32xf32> to vector<33x32xf32>
    %629 = arith.mulf %560, %628 : vector<33x32xf32>
    %cst_101 = arith.constant dense<0.000000e+00> : vector<33x32xf32>
    %630 = tpu.matmul %627, %629, %cst_101 {dimension_numbers = #tpu.dot_dimension_numbers<[1], [0], [0], [1], [0, 0, 1, 1], [], []>} : vector<33x33xf32>, vector<33x32xf32>, vector<33x32xf32> -> vector<33x32xf32>
    %631 = arith.addf %614, %630 : vector<33x32xf32>
    %632 = vector.broadcast %46 : vector<33x1xf32> to vector<33x32xf32>
    %633 = arith.mulf %632, %252 : vector<33x32xf32>
    %634 = arith.addf %631, %633 : vector<33x32xf32>
    %635 = vector.extract_strided_slice %74 {offsets = [33, 0], sizes = [33, 32], strides = [1, 1]} : vector<66x32xf32> to vector<33x32xf32>
    %636 = vector.extract_strided_slice %635 {offsets = [0, 0], sizes = [1, 32], strides = [1, 1]} : vector<33x32xf32> to vector<1x32xf32>
    %637 = vector.extract_strided_slice %635 {offsets = [1, 0], sizes = [32, 32], strides = [1, 1]} : vector<33x32xf32> to vector<32x32xf32>
    %cst_102 = arith.constant dense<0.000000e+00> : vector<864x32xf32>
    %638 = tpu.matmul %1, %637, %cst_102 {dimension_numbers = #tpu.dot_dimension_numbers<[1], [0], [0], [1], [0, 0, 1, 1], [], []>} : vector<864x32xf32>, vector<32x32xf32>, vector<864x32xf32> -> vector<864x32xf32>
    %cst_103 = arith.constant 0.000000e+00 : f32
    %639 = vector.broadcast %cst_103 : f32 to vector<32x32xf32>
    %640 = vector.extract_strided_slice %638 {offsets = [0, 0], sizes = [32, 32], strides = [1, 1]} : vector<864x32xf32> to vector<32x32xf32>
    %641 = vector.extract_strided_slice %88 {offsets = [0, 0], sizes = [1, 32], strides = [1, 1]} : vector<27x32xf32> to vector<1x32xf32>
    %642 = vector.broadcast %641 : vector<1x32xf32> to vector<32x32xf32>
    %643 = arith.mulf %640, %642 : vector<32x32xf32>
    %644 = arith.addf %639, %643 : vector<32x32xf32>
    %645 = vector.extract_strided_slice %638 {offsets = [32, 0], sizes = [32, 32], strides = [1, 1]} : vector<864x32xf32> to vector<32x32xf32>
    %646 = vector.extract_strided_slice %88 {offsets = [1, 0], sizes = [1, 32], strides = [1, 1]} : vector<27x32xf32> to vector<1x32xf32>
    %647 = vector.broadcast %646 : vector<1x32xf32> to vector<32x32xf32>
    %648 = arith.mulf %645, %647 : vector<32x32xf32>
    %649 = arith.addf %644, %648 : vector<32x32xf32>
    %650 = vector.extract_strided_slice %638 {offsets = [64, 0], sizes = [32, 32], strides = [1, 1]} : vector<864x32xf32> to vector<32x32xf32>
    %651 = vector.extract_strided_slice %88 {offsets = [2, 0], sizes = [1, 32], strides = [1, 1]} : vector<27x32xf32> to vector<1x32xf32>
    %652 = vector.broadcast %651 : vector<1x32xf32> to vector<32x32xf32>
    %653 = arith.mulf %650, %652 : vector<32x32xf32>
    %654 = arith.addf %649, %653 : vector<32x32xf32>
    %655 = vector.extract_strided_slice %638 {offsets = [96, 0], sizes = [32, 32], strides = [1, 1]} : vector<864x32xf32> to vector<32x32xf32>
    %656 = vector.extract_strided_slice %88 {offsets = [3, 0], sizes = [1, 32], strides = [1, 1]} : vector<27x32xf32> to vector<1x32xf32>
    %657 = vector.broadcast %656 : vector<1x32xf32> to vector<32x32xf32>
    %658 = arith.mulf %655, %657 : vector<32x32xf32>
    %659 = arith.addf %654, %658 : vector<32x32xf32>
    %660 = vector.extract_strided_slice %638 {offsets = [128, 0], sizes = [32, 32], strides = [1, 1]} : vector<864x32xf32> to vector<32x32xf32>
    %661 = vector.extract_strided_slice %88 {offsets = [4, 0], sizes = [1, 32], strides = [1, 1]} : vector<27x32xf32> to vector<1x32xf32>
    %662 = vector.broadcast %661 : vector<1x32xf32> to vector<32x32xf32>
    %663 = arith.mulf %660, %662 : vector<32x32xf32>
    %664 = arith.addf %659, %663 : vector<32x32xf32>
    %665 = vector.extract_strided_slice %638 {offsets = [160, 0], sizes = [32, 32], strides = [1, 1]} : vector<864x32xf32> to vector<32x32xf32>
    %666 = vector.extract_strided_slice %88 {offsets = [5, 0], sizes = [1, 32], strides = [1, 1]} : vector<27x32xf32> to vector<1x32xf32>
    %667 = vector.broadcast %666 : vector<1x32xf32> to vector<32x32xf32>
    %668 = arith.mulf %665, %667 : vector<32x32xf32>
    %669 = arith.addf %664, %668 : vector<32x32xf32>
    %670 = vector.extract_strided_slice %638 {offsets = [192, 0], sizes = [32, 32], strides = [1, 1]} : vector<864x32xf32> to vector<32x32xf32>
    %671 = vector.extract_strided_slice %88 {offsets = [6, 0], sizes = [1, 32], strides = [1, 1]} : vector<27x32xf32> to vector<1x32xf32>
    %672 = vector.broadcast %671 : vector<1x32xf32> to vector<32x32xf32>
    %673 = arith.mulf %670, %672 : vector<32x32xf32>
    %674 = arith.addf %669, %673 : vector<32x32xf32>
    %675 = vector.extract_strided_slice %638 {offsets = [224, 0], sizes = [32, 32], strides = [1, 1]} : vector<864x32xf32> to vector<32x32xf32>
    %676 = vector.extract_strided_slice %88 {offsets = [7, 0], sizes = [1, 32], strides = [1, 1]} : vector<27x32xf32> to vector<1x32xf32>
    %677 = vector.broadcast %676 : vector<1x32xf32> to vector<32x32xf32>
    %678 = arith.mulf %675, %677 : vector<32x32xf32>
    %679 = arith.addf %674, %678 : vector<32x32xf32>
    %680 = vector.extract_strided_slice %638 {offsets = [256, 0], sizes = [32, 32], strides = [1, 1]} : vector<864x32xf32> to vector<32x32xf32>
    %681 = vector.extract_strided_slice %88 {offsets = [8, 0], sizes = [1, 32], strides = [1, 1]} : vector<27x32xf32> to vector<1x32xf32>
    %682 = vector.broadcast %681 : vector<1x32xf32> to vector<32x32xf32>
    %683 = arith.mulf %680, %682 : vector<32x32xf32>
    %684 = arith.addf %679, %683 : vector<32x32xf32>
    %685 = vector.extract_strided_slice %638 {offsets = [288, 0], sizes = [32, 32], strides = [1, 1]} : vector<864x32xf32> to vector<32x32xf32>
    %686 = vector.extract_strided_slice %88 {offsets = [9, 0], sizes = [1, 32], strides = [1, 1]} : vector<27x32xf32> to vector<1x32xf32>
    %687 = vector.broadcast %686 : vector<1x32xf32> to vector<32x32xf32>
    %688 = arith.mulf %685, %687 : vector<32x32xf32>
    %689 = arith.addf %684, %688 : vector<32x32xf32>
    %690 = vector.extract_strided_slice %638 {offsets = [320, 0], sizes = [32, 32], strides = [1, 1]} : vector<864x32xf32> to vector<32x32xf32>
    %691 = vector.extract_strided_slice %88 {offsets = [10, 0], sizes = [1, 32], strides = [1, 1]} : vector<27x32xf32> to vector<1x32xf32>
    %692 = vector.broadcast %691 : vector<1x32xf32> to vector<32x32xf32>
    %693 = arith.mulf %690, %692 : vector<32x32xf32>
    %694 = arith.addf %689, %693 : vector<32x32xf32>
    %695 = vector.extract_strided_slice %638 {offsets = [352, 0], sizes = [32, 32], strides = [1, 1]} : vector<864x32xf32> to vector<32x32xf32>
    %696 = vector.extract_strided_slice %88 {offsets = [11, 0], sizes = [1, 32], strides = [1, 1]} : vector<27x32xf32> to vector<1x32xf32>
    %697 = vector.broadcast %696 : vector<1x32xf32> to vector<32x32xf32>
    %698 = arith.mulf %695, %697 : vector<32x32xf32>
    %699 = arith.addf %694, %698 : vector<32x32xf32>
    %700 = vector.extract_strided_slice %638 {offsets = [384, 0], sizes = [32, 32], strides = [1, 1]} : vector<864x32xf32> to vector<32x32xf32>
    %701 = vector.extract_strided_slice %88 {offsets = [12, 0], sizes = [1, 32], strides = [1, 1]} : vector<27x32xf32> to vector<1x32xf32>
    %702 = vector.broadcast %701 : vector<1x32xf32> to vector<32x32xf32>
    %703 = arith.mulf %700, %702 : vector<32x32xf32>
    %704 = arith.addf %699, %703 : vector<32x32xf32>
    %705 = vector.extract_strided_slice %638 {offsets = [416, 0], sizes = [32, 32], strides = [1, 1]} : vector<864x32xf32> to vector<32x32xf32>
    %706 = vector.extract_strided_slice %88 {offsets = [13, 0], sizes = [1, 32], strides = [1, 1]} : vector<27x32xf32> to vector<1x32xf32>
    %707 = vector.broadcast %706 : vector<1x32xf32> to vector<32x32xf32>
    %708 = arith.mulf %705, %707 : vector<32x32xf32>
    %709 = arith.addf %704, %708 : vector<32x32xf32>
    %710 = vector.extract_strided_slice %638 {offsets = [448, 0], sizes = [32, 32], strides = [1, 1]} : vector<864x32xf32> to vector<32x32xf32>
    %711 = vector.extract_strided_slice %88 {offsets = [14, 0], sizes = [1, 32], strides = [1, 1]} : vector<27x32xf32> to vector<1x32xf32>
    %712 = vector.broadcast %711 : vector<1x32xf32> to vector<32x32xf32>
    %713 = arith.mulf %710, %712 : vector<32x32xf32>
    %714 = arith.addf %709, %713 : vector<32x32xf32>
    %715 = vector.extract_strided_slice %638 {offsets = [480, 0], sizes = [32, 32], strides = [1, 1]} : vector<864x32xf32> to vector<32x32xf32>
    %716 = vector.extract_strided_slice %88 {offsets = [15, 0], sizes = [1, 32], strides = [1, 1]} : vector<27x32xf32> to vector<1x32xf32>
    %717 = vector.broadcast %716 : vector<1x32xf32> to vector<32x32xf32>
    %718 = arith.mulf %715, %717 : vector<32x32xf32>
    %719 = arith.addf %714, %718 : vector<32x32xf32>
    %720 = vector.extract_strided_slice %638 {offsets = [512, 0], sizes = [32, 32], strides = [1, 1]} : vector<864x32xf32> to vector<32x32xf32>
    %721 = vector.extract_strided_slice %88 {offsets = [16, 0], sizes = [1, 32], strides = [1, 1]} : vector<27x32xf32> to vector<1x32xf32>
    %722 = vector.broadcast %721 : vector<1x32xf32> to vector<32x32xf32>
    %723 = arith.mulf %720, %722 : vector<32x32xf32>
    %724 = arith.addf %719, %723 : vector<32x32xf32>
    %725 = vector.extract_strided_slice %638 {offsets = [544, 0], sizes = [32, 32], strides = [1, 1]} : vector<864x32xf32> to vector<32x32xf32>
    %726 = vector.extract_strided_slice %88 {offsets = [17, 0], sizes = [1, 32], strides = [1, 1]} : vector<27x32xf32> to vector<1x32xf32>
    %727 = vector.broadcast %726 : vector<1x32xf32> to vector<32x32xf32>
    %728 = arith.mulf %725, %727 : vector<32x32xf32>
    %729 = arith.addf %724, %728 : vector<32x32xf32>
    %730 = vector.extract_strided_slice %638 {offsets = [576, 0], sizes = [32, 32], strides = [1, 1]} : vector<864x32xf32> to vector<32x32xf32>
    %731 = vector.extract_strided_slice %88 {offsets = [18, 0], sizes = [1, 32], strides = [1, 1]} : vector<27x32xf32> to vector<1x32xf32>
    %732 = vector.broadcast %731 : vector<1x32xf32> to vector<32x32xf32>
    %733 = arith.mulf %730, %732 : vector<32x32xf32>
    %734 = arith.addf %729, %733 : vector<32x32xf32>
    %735 = vector.extract_strided_slice %638 {offsets = [608, 0], sizes = [32, 32], strides = [1, 1]} : vector<864x32xf32> to vector<32x32xf32>
    %736 = vector.extract_strided_slice %88 {offsets = [19, 0], sizes = [1, 32], strides = [1, 1]} : vector<27x32xf32> to vector<1x32xf32>
    %737 = vector.broadcast %736 : vector<1x32xf32> to vector<32x32xf32>
    %738 = arith.mulf %735, %737 : vector<32x32xf32>
    %739 = arith.addf %734, %738 : vector<32x32xf32>
    %740 = vector.extract_strided_slice %638 {offsets = [640, 0], sizes = [32, 32], strides = [1, 1]} : vector<864x32xf32> to vector<32x32xf32>
    %741 = vector.extract_strided_slice %88 {offsets = [20, 0], sizes = [1, 32], strides = [1, 1]} : vector<27x32xf32> to vector<1x32xf32>
    %742 = vector.broadcast %741 : vector<1x32xf32> to vector<32x32xf32>
    %743 = arith.mulf %740, %742 : vector<32x32xf32>
    %744 = arith.addf %739, %743 : vector<32x32xf32>
    %745 = vector.extract_strided_slice %638 {offsets = [672, 0], sizes = [32, 32], strides = [1, 1]} : vector<864x32xf32> to vector<32x32xf32>
    %746 = vector.extract_strided_slice %88 {offsets = [21, 0], sizes = [1, 32], strides = [1, 1]} : vector<27x32xf32> to vector<1x32xf32>
    %747 = vector.broadcast %746 : vector<1x32xf32> to vector<32x32xf32>
    %748 = arith.mulf %745, %747 : vector<32x32xf32>
    %749 = arith.addf %744, %748 : vector<32x32xf32>
    %750 = vector.extract_strided_slice %638 {offsets = [704, 0], sizes = [32, 32], strides = [1, 1]} : vector<864x32xf32> to vector<32x32xf32>
    %751 = vector.extract_strided_slice %88 {offsets = [22, 0], sizes = [1, 32], strides = [1, 1]} : vector<27x32xf32> to vector<1x32xf32>
    %752 = vector.broadcast %751 : vector<1x32xf32> to vector<32x32xf32>
    %753 = arith.mulf %750, %752 : vector<32x32xf32>
    %754 = arith.addf %749, %753 : vector<32x32xf32>
    %755 = vector.extract_strided_slice %638 {offsets = [736, 0], sizes = [32, 32], strides = [1, 1]} : vector<864x32xf32> to vector<32x32xf32>
    %756 = vector.extract_strided_slice %88 {offsets = [23, 0], sizes = [1, 32], strides = [1, 1]} : vector<27x32xf32> to vector<1x32xf32>
    %757 = vector.broadcast %756 : vector<1x32xf32> to vector<32x32xf32>
    %758 = arith.mulf %755, %757 : vector<32x32xf32>
    %759 = arith.addf %754, %758 : vector<32x32xf32>
    %760 = vector.extract_strided_slice %638 {offsets = [768, 0], sizes = [32, 32], strides = [1, 1]} : vector<864x32xf32> to vector<32x32xf32>
    %761 = vector.extract_strided_slice %88 {offsets = [24, 0], sizes = [1, 32], strides = [1, 1]} : vector<27x32xf32> to vector<1x32xf32>
    %762 = vector.broadcast %761 : vector<1x32xf32> to vector<32x32xf32>
    %763 = arith.mulf %760, %762 : vector<32x32xf32>
    %764 = arith.addf %759, %763 : vector<32x32xf32>
    %765 = vector.extract_strided_slice %638 {offsets = [800, 0], sizes = [32, 32], strides = [1, 1]} : vector<864x32xf32> to vector<32x32xf32>
    %766 = vector.extract_strided_slice %88 {offsets = [25, 0], sizes = [1, 32], strides = [1, 1]} : vector<27x32xf32> to vector<1x32xf32>
    %767 = vector.broadcast %766 : vector<1x32xf32> to vector<32x32xf32>
    %768 = arith.mulf %765, %767 : vector<32x32xf32>
    %769 = arith.addf %764, %768 : vector<32x32xf32>
    %770 = vector.extract_strided_slice %638 {offsets = [832, 0], sizes = [32, 32], strides = [1, 1]} : vector<864x32xf32> to vector<32x32xf32>
    %771 = vector.extract_strided_slice %88 {offsets = [26, 0], sizes = [1, 32], strides = [1, 1]} : vector<27x32xf32> to vector<1x32xf32>
    %772 = vector.broadcast %771 : vector<1x32xf32> to vector<32x32xf32>
    %773 = arith.mulf %770, %772 : vector<32x32xf32>
    %774 = arith.addf %769, %773 : vector<32x32xf32>
    %775 = tpu.concatenate %636, %774 in 0 : vector<1x32xf32>, vector<32x32xf32> -> vector<33x32xf32>
    %cst_104 = arith.constant dense<0.000000e+00> : vector<33x32xf32>
    %776 = tpu.matmul %775, %2, %cst_104 {dimension_numbers = #tpu.dot_dimension_numbers<[1], [0], [0], [1], [0, 0, 1, 1], [], []>} : vector<33x32xf32>, vector<32x32xf32>, vector<33x32xf32> -> vector<33x32xf32>
    %777 = arith.subf %775, %776 : vector<33x32xf32>
    %778 = arith.mulf %777, %777 : vector<33x32xf32>
    %cst_105 = arith.constant dense<0.000000e+00> : vector<33x32xf32>
    %779 = tpu.matmul %778, %2, %cst_105 {dimension_numbers = #tpu.dot_dimension_numbers<[1], [0], [0], [1], [0, 0, 1, 1], [], []>} : vector<33x32xf32>, vector<32x32xf32>, vector<33x32xf32> -> vector<33x32xf32>
    %780 = arith.subf %775, %776 : vector<33x32xf32>
    %cst_106 = arith.constant 9.99999974E-6 : f32
    %781 = vector.broadcast %cst_106 : f32 to vector<33x32xf32>
    %782 = arith.addf %779, %781 : vector<33x32xf32>
    %783 = math.rsqrt %782 : vector<33x32xf32>
    %784 = arith.mulf %780, %783 : vector<33x32xf32>
    %785 = vector.broadcast %93 : vector<1x32xf32> to vector<33x32xf32>
    %786 = arith.mulf %784, %785 : vector<33x32xf32>
    %787 = vector.broadcast %96 : vector<1x32xf32> to vector<33x32xf32>
    %788 = arith.addf %786, %787 : vector<33x32xf32>
    %789 = vector.extract_strided_slice %80 {offsets = [33, 0], sizes = [33, 32], strides = [1, 1]} : vector<66x32xf32> to vector<33x32xf32>
    %790 = vector.extract_strided_slice %789 {offsets = [0, 0], sizes = [1, 32], strides = [1, 1]} : vector<33x32xf32> to vector<1x32xf32>
    %791 = vector.extract_strided_slice %789 {offsets = [1, 0], sizes = [32, 32], strides = [1, 1]} : vector<33x32xf32> to vector<32x32xf32>
    %cst_107 = arith.constant dense<0.000000e+00> : vector<864x32xf32>
    %792 = tpu.matmul %1, %791, %cst_107 {dimension_numbers = #tpu.dot_dimension_numbers<[1], [0], [0], [1], [0, 0, 1, 1], [], []>} : vector<864x32xf32>, vector<32x32xf32>, vector<864x32xf32> -> vector<864x32xf32>
    %cst_108 = arith.constant 0.000000e+00 : f32
    %793 = vector.broadcast %cst_108 : f32 to vector<32x32xf32>
    %794 = vector.extract_strided_slice %792 {offsets = [0, 0], sizes = [32, 32], strides = [1, 1]} : vector<864x32xf32> to vector<32x32xf32>
    %795 = vector.extract_strided_slice %90 {offsets = [0, 0], sizes = [1, 32], strides = [1, 1]} : vector<27x32xf32> to vector<1x32xf32>
    %796 = vector.broadcast %795 : vector<1x32xf32> to vector<32x32xf32>
    %797 = arith.mulf %794, %796 : vector<32x32xf32>
    %798 = arith.addf %793, %797 : vector<32x32xf32>
    %799 = vector.extract_strided_slice %792 {offsets = [32, 0], sizes = [32, 32], strides = [1, 1]} : vector<864x32xf32> to vector<32x32xf32>
    %800 = vector.extract_strided_slice %90 {offsets = [1, 0], sizes = [1, 32], strides = [1, 1]} : vector<27x32xf32> to vector<1x32xf32>
    %801 = vector.broadcast %800 : vector<1x32xf32> to vector<32x32xf32>
    %802 = arith.mulf %799, %801 : vector<32x32xf32>
    %803 = arith.addf %798, %802 : vector<32x32xf32>
    %804 = vector.extract_strided_slice %792 {offsets = [64, 0], sizes = [32, 32], strides = [1, 1]} : vector<864x32xf32> to vector<32x32xf32>
    %805 = vector.extract_strided_slice %90 {offsets = [2, 0], sizes = [1, 32], strides = [1, 1]} : vector<27x32xf32> to vector<1x32xf32>
    %806 = vector.broadcast %805 : vector<1x32xf32> to vector<32x32xf32>
    %807 = arith.mulf %804, %806 : vector<32x32xf32>
    %808 = arith.addf %803, %807 : vector<32x32xf32>
    %809 = vector.extract_strided_slice %792 {offsets = [96, 0], sizes = [32, 32], strides = [1, 1]} : vector<864x32xf32> to vector<32x32xf32>
    %810 = vector.extract_strided_slice %90 {offsets = [3, 0], sizes = [1, 32], strides = [1, 1]} : vector<27x32xf32> to vector<1x32xf32>
    %811 = vector.broadcast %810 : vector<1x32xf32> to vector<32x32xf32>
    %812 = arith.mulf %809, %811 : vector<32x32xf32>
    %813 = arith.addf %808, %812 : vector<32x32xf32>
    %814 = vector.extract_strided_slice %792 {offsets = [128, 0], sizes = [32, 32], strides = [1, 1]} : vector<864x32xf32> to vector<32x32xf32>
    %815 = vector.extract_strided_slice %90 {offsets = [4, 0], sizes = [1, 32], strides = [1, 1]} : vector<27x32xf32> to vector<1x32xf32>
    %816 = vector.broadcast %815 : vector<1x32xf32> to vector<32x32xf32>
    %817 = arith.mulf %814, %816 : vector<32x32xf32>
    %818 = arith.addf %813, %817 : vector<32x32xf32>
    %819 = vector.extract_strided_slice %792 {offsets = [160, 0], sizes = [32, 32], strides = [1, 1]} : vector<864x32xf32> to vector<32x32xf32>
    %820 = vector.extract_strided_slice %90 {offsets = [5, 0], sizes = [1, 32], strides = [1, 1]} : vector<27x32xf32> to vector<1x32xf32>
    %821 = vector.broadcast %820 : vector<1x32xf32> to vector<32x32xf32>
    %822 = arith.mulf %819, %821 : vector<32x32xf32>
    %823 = arith.addf %818, %822 : vector<32x32xf32>
    %824 = vector.extract_strided_slice %792 {offsets = [192, 0], sizes = [32, 32], strides = [1, 1]} : vector<864x32xf32> to vector<32x32xf32>
    %825 = vector.extract_strided_slice %90 {offsets = [6, 0], sizes = [1, 32], strides = [1, 1]} : vector<27x32xf32> to vector<1x32xf32>
    %826 = vector.broadcast %825 : vector<1x32xf32> to vector<32x32xf32>
    %827 = arith.mulf %824, %826 : vector<32x32xf32>
    %828 = arith.addf %823, %827 : vector<32x32xf32>
    %829 = vector.extract_strided_slice %792 {offsets = [224, 0], sizes = [32, 32], strides = [1, 1]} : vector<864x32xf32> to vector<32x32xf32>
    %830 = vector.extract_strided_slice %90 {offsets = [7, 0], sizes = [1, 32], strides = [1, 1]} : vector<27x32xf32> to vector<1x32xf32>
    %831 = vector.broadcast %830 : vector<1x32xf32> to vector<32x32xf32>
    %832 = arith.mulf %829, %831 : vector<32x32xf32>
    %833 = arith.addf %828, %832 : vector<32x32xf32>
    %834 = vector.extract_strided_slice %792 {offsets = [256, 0], sizes = [32, 32], strides = [1, 1]} : vector<864x32xf32> to vector<32x32xf32>
    %835 = vector.extract_strided_slice %90 {offsets = [8, 0], sizes = [1, 32], strides = [1, 1]} : vector<27x32xf32> to vector<1x32xf32>
    %836 = vector.broadcast %835 : vector<1x32xf32> to vector<32x32xf32>
    %837 = arith.mulf %834, %836 : vector<32x32xf32>
    %838 = arith.addf %833, %837 : vector<32x32xf32>
    %839 = vector.extract_strided_slice %792 {offsets = [288, 0], sizes = [32, 32], strides = [1, 1]} : vector<864x32xf32> to vector<32x32xf32>
    %840 = vector.extract_strided_slice %90 {offsets = [9, 0], sizes = [1, 32], strides = [1, 1]} : vector<27x32xf32> to vector<1x32xf32>
    %841 = vector.broadcast %840 : vector<1x32xf32> to vector<32x32xf32>
    %842 = arith.mulf %839, %841 : vector<32x32xf32>
    %843 = arith.addf %838, %842 : vector<32x32xf32>
    %844 = vector.extract_strided_slice %792 {offsets = [320, 0], sizes = [32, 32], strides = [1, 1]} : vector<864x32xf32> to vector<32x32xf32>
    %845 = vector.extract_strided_slice %90 {offsets = [10, 0], sizes = [1, 32], strides = [1, 1]} : vector<27x32xf32> to vector<1x32xf32>
    %846 = vector.broadcast %845 : vector<1x32xf32> to vector<32x32xf32>
    %847 = arith.mulf %844, %846 : vector<32x32xf32>
    %848 = arith.addf %843, %847 : vector<32x32xf32>
    %849 = vector.extract_strided_slice %792 {offsets = [352, 0], sizes = [32, 32], strides = [1, 1]} : vector<864x32xf32> to vector<32x32xf32>
    %850 = vector.extract_strided_slice %90 {offsets = [11, 0], sizes = [1, 32], strides = [1, 1]} : vector<27x32xf32> to vector<1x32xf32>
    %851 = vector.broadcast %850 : vector<1x32xf32> to vector<32x32xf32>
    %852 = arith.mulf %849, %851 : vector<32x32xf32>
    %853 = arith.addf %848, %852 : vector<32x32xf32>
    %854 = vector.extract_strided_slice %792 {offsets = [384, 0], sizes = [32, 32], strides = [1, 1]} : vector<864x32xf32> to vector<32x32xf32>
    %855 = vector.extract_strided_slice %90 {offsets = [12, 0], sizes = [1, 32], strides = [1, 1]} : vector<27x32xf32> to vector<1x32xf32>
    %856 = vector.broadcast %855 : vector<1x32xf32> to vector<32x32xf32>
    %857 = arith.mulf %854, %856 : vector<32x32xf32>
    %858 = arith.addf %853, %857 : vector<32x32xf32>
    %859 = vector.extract_strided_slice %792 {offsets = [416, 0], sizes = [32, 32], strides = [1, 1]} : vector<864x32xf32> to vector<32x32xf32>
    %860 = vector.extract_strided_slice %90 {offsets = [13, 0], sizes = [1, 32], strides = [1, 1]} : vector<27x32xf32> to vector<1x32xf32>
    %861 = vector.broadcast %860 : vector<1x32xf32> to vector<32x32xf32>
    %862 = arith.mulf %859, %861 : vector<32x32xf32>
    %863 = arith.addf %858, %862 : vector<32x32xf32>
    %864 = vector.extract_strided_slice %792 {offsets = [448, 0], sizes = [32, 32], strides = [1, 1]} : vector<864x32xf32> to vector<32x32xf32>
    %865 = vector.extract_strided_slice %90 {offsets = [14, 0], sizes = [1, 32], strides = [1, 1]} : vector<27x32xf32> to vector<1x32xf32>
    %866 = vector.broadcast %865 : vector<1x32xf32> to vector<32x32xf32>
    %867 = arith.mulf %864, %866 : vector<32x32xf32>
    %868 = arith.addf %863, %867 : vector<32x32xf32>
    %869 = vector.extract_strided_slice %792 {offsets = [480, 0], sizes = [32, 32], strides = [1, 1]} : vector<864x32xf32> to vector<32x32xf32>
    %870 = vector.extract_strided_slice %90 {offsets = [15, 0], sizes = [1, 32], strides = [1, 1]} : vector<27x32xf32> to vector<1x32xf32>
    %871 = vector.broadcast %870 : vector<1x32xf32> to vector<32x32xf32>
    %872 = arith.mulf %869, %871 : vector<32x32xf32>
    %873 = arith.addf %868, %872 : vector<32x32xf32>
    %874 = vector.extract_strided_slice %792 {offsets = [512, 0], sizes = [32, 32], strides = [1, 1]} : vector<864x32xf32> to vector<32x32xf32>
    %875 = vector.extract_strided_slice %90 {offsets = [16, 0], sizes = [1, 32], strides = [1, 1]} : vector<27x32xf32> to vector<1x32xf32>
    %876 = vector.broadcast %875 : vector<1x32xf32> to vector<32x32xf32>
    %877 = arith.mulf %874, %876 : vector<32x32xf32>
    %878 = arith.addf %873, %877 : vector<32x32xf32>
    %879 = vector.extract_strided_slice %792 {offsets = [544, 0], sizes = [32, 32], strides = [1, 1]} : vector<864x32xf32> to vector<32x32xf32>
    %880 = vector.extract_strided_slice %90 {offsets = [17, 0], sizes = [1, 32], strides = [1, 1]} : vector<27x32xf32> to vector<1x32xf32>
    %881 = vector.broadcast %880 : vector<1x32xf32> to vector<32x32xf32>
    %882 = arith.mulf %879, %881 : vector<32x32xf32>
    %883 = arith.addf %878, %882 : vector<32x32xf32>
    %884 = vector.extract_strided_slice %792 {offsets = [576, 0], sizes = [32, 32], strides = [1, 1]} : vector<864x32xf32> to vector<32x32xf32>
    %885 = vector.extract_strided_slice %90 {offsets = [18, 0], sizes = [1, 32], strides = [1, 1]} : vector<27x32xf32> to vector<1x32xf32>
    %886 = vector.broadcast %885 : vector<1x32xf32> to vector<32x32xf32>
    %887 = arith.mulf %884, %886 : vector<32x32xf32>
    %888 = arith.addf %883, %887 : vector<32x32xf32>
    %889 = vector.extract_strided_slice %792 {offsets = [608, 0], sizes = [32, 32], strides = [1, 1]} : vector<864x32xf32> to vector<32x32xf32>
    %890 = vector.extract_strided_slice %90 {offsets = [19, 0], sizes = [1, 32], strides = [1, 1]} : vector<27x32xf32> to vector<1x32xf32>
    %891 = vector.broadcast %890 : vector<1x32xf32> to vector<32x32xf32>
    %892 = arith.mulf %889, %891 : vector<32x32xf32>
    %893 = arith.addf %888, %892 : vector<32x32xf32>
    %894 = vector.extract_strided_slice %792 {offsets = [640, 0], sizes = [32, 32], strides = [1, 1]} : vector<864x32xf32> to vector<32x32xf32>
    %895 = vector.extract_strided_slice %90 {offsets = [20, 0], sizes = [1, 32], strides = [1, 1]} : vector<27x32xf32> to vector<1x32xf32>
    %896 = vector.broadcast %895 : vector<1x32xf32> to vector<32x32xf32>
    %897 = arith.mulf %894, %896 : vector<32x32xf32>
    %898 = arith.addf %893, %897 : vector<32x32xf32>
    %899 = vector.extract_strided_slice %792 {offsets = [672, 0], sizes = [32, 32], strides = [1, 1]} : vector<864x32xf32> to vector<32x32xf32>
    %900 = vector.extract_strided_slice %90 {offsets = [21, 0], sizes = [1, 32], strides = [1, 1]} : vector<27x32xf32> to vector<1x32xf32>
    %901 = vector.broadcast %900 : vector<1x32xf32> to vector<32x32xf32>
    %902 = arith.mulf %899, %901 : vector<32x32xf32>
    %903 = arith.addf %898, %902 : vector<32x32xf32>
    %904 = vector.extract_strided_slice %792 {offsets = [704, 0], sizes = [32, 32], strides = [1, 1]} : vector<864x32xf32> to vector<32x32xf32>
    %905 = vector.extract_strided_slice %90 {offsets = [22, 0], sizes = [1, 32], strides = [1, 1]} : vector<27x32xf32> to vector<1x32xf32>
    %906 = vector.broadcast %905 : vector<1x32xf32> to vector<32x32xf32>
    %907 = arith.mulf %904, %906 : vector<32x32xf32>
    %908 = arith.addf %903, %907 : vector<32x32xf32>
    %909 = vector.extract_strided_slice %792 {offsets = [736, 0], sizes = [32, 32], strides = [1, 1]} : vector<864x32xf32> to vector<32x32xf32>
    %910 = vector.extract_strided_slice %90 {offsets = [23, 0], sizes = [1, 32], strides = [1, 1]} : vector<27x32xf32> to vector<1x32xf32>
    %911 = vector.broadcast %910 : vector<1x32xf32> to vector<32x32xf32>
    %912 = arith.mulf %909, %911 : vector<32x32xf32>
    %913 = arith.addf %908, %912 : vector<32x32xf32>
    %914 = vector.extract_strided_slice %792 {offsets = [768, 0], sizes = [32, 32], strides = [1, 1]} : vector<864x32xf32> to vector<32x32xf32>
    %915 = vector.extract_strided_slice %90 {offsets = [24, 0], sizes = [1, 32], strides = [1, 1]} : vector<27x32xf32> to vector<1x32xf32>
    %916 = vector.broadcast %915 : vector<1x32xf32> to vector<32x32xf32>
    %917 = arith.mulf %914, %916 : vector<32x32xf32>
    %918 = arith.addf %913, %917 : vector<32x32xf32>
    %919 = vector.extract_strided_slice %792 {offsets = [800, 0], sizes = [32, 32], strides = [1, 1]} : vector<864x32xf32> to vector<32x32xf32>
    %920 = vector.extract_strided_slice %90 {offsets = [25, 0], sizes = [1, 32], strides = [1, 1]} : vector<27x32xf32> to vector<1x32xf32>
    %921 = vector.broadcast %920 : vector<1x32xf32> to vector<32x32xf32>
    %922 = arith.mulf %919, %921 : vector<32x32xf32>
    %923 = arith.addf %918, %922 : vector<32x32xf32>
    %924 = vector.extract_strided_slice %792 {offsets = [832, 0], sizes = [32, 32], strides = [1, 1]} : vector<864x32xf32> to vector<32x32xf32>
    %925 = vector.extract_strided_slice %90 {offsets = [26, 0], sizes = [1, 32], strides = [1, 1]} : vector<27x32xf32> to vector<1x32xf32>
    %926 = vector.broadcast %925 : vector<1x32xf32> to vector<32x32xf32>
    %927 = arith.mulf %924, %926 : vector<32x32xf32>
    %928 = arith.addf %923, %927 : vector<32x32xf32>
    %929 = tpu.concatenate %790, %928 in 0 : vector<1x32xf32>, vector<32x32xf32> -> vector<33x32xf32>
    %cst_109 = arith.constant dense<0.000000e+00> : vector<33x32xf32>
    %930 = tpu.matmul %929, %2, %cst_109 {dimension_numbers = #tpu.dot_dimension_numbers<[1], [0], [0], [1], [0, 0, 1, 1], [], []>} : vector<33x32xf32>, vector<32x32xf32>, vector<33x32xf32> -> vector<33x32xf32>
    %931 = arith.subf %929, %930 : vector<33x32xf32>
    %932 = arith.mulf %931, %931 : vector<33x32xf32>
    %cst_110 = arith.constant dense<0.000000e+00> : vector<33x32xf32>
    %933 = tpu.matmul %932, %2, %cst_110 {dimension_numbers = #tpu.dot_dimension_numbers<[1], [0], [0], [1], [0, 0, 1, 1], [], []>} : vector<33x32xf32>, vector<32x32xf32>, vector<33x32xf32> -> vector<33x32xf32>
    %934 = arith.subf %929, %930 : vector<33x32xf32>
    %cst_111 = arith.constant 9.99999974E-6 : f32
    %935 = vector.broadcast %cst_111 : f32 to vector<33x32xf32>
    %936 = arith.addf %933, %935 : vector<33x32xf32>
    %937 = math.rsqrt %936 : vector<33x32xf32>
    %938 = arith.mulf %934, %937 : vector<33x32xf32>
    %939 = vector.broadcast %94 : vector<1x32xf32> to vector<33x32xf32>
    %940 = arith.mulf %938, %939 : vector<33x32xf32>
    %941 = vector.broadcast %97 : vector<1x32xf32> to vector<33x32xf32>
    %942 = arith.addf %940, %941 : vector<33x32xf32>
    %943 = vector.extract_strided_slice %86 {offsets = [33, 0], sizes = [33, 32], strides = [1, 1]} : vector<66x32xf32> to vector<33x32xf32>
    %944 = vector.extract_strided_slice %943 {offsets = [0, 0], sizes = [1, 32], strides = [1, 1]} : vector<33x32xf32> to vector<1x32xf32>
    %945 = vector.extract_strided_slice %943 {offsets = [1, 0], sizes = [32, 32], strides = [1, 1]} : vector<33x32xf32> to vector<32x32xf32>
    %cst_112 = arith.constant dense<0.000000e+00> : vector<864x32xf32>
    %946 = tpu.matmul %1, %945, %cst_112 {dimension_numbers = #tpu.dot_dimension_numbers<[1], [0], [0], [1], [0, 0, 1, 1], [], []>} : vector<864x32xf32>, vector<32x32xf32>, vector<864x32xf32> -> vector<864x32xf32>
    %cst_113 = arith.constant 0.000000e+00 : f32
    %947 = vector.broadcast %cst_113 : f32 to vector<32x32xf32>
    %948 = vector.extract_strided_slice %946 {offsets = [0, 0], sizes = [32, 32], strides = [1, 1]} : vector<864x32xf32> to vector<32x32xf32>
    %949 = vector.extract_strided_slice %92 {offsets = [0, 0], sizes = [1, 32], strides = [1, 1]} : vector<27x32xf32> to vector<1x32xf32>
    %950 = vector.broadcast %949 : vector<1x32xf32> to vector<32x32xf32>
    %951 = arith.mulf %948, %950 : vector<32x32xf32>
    %952 = arith.addf %947, %951 : vector<32x32xf32>
    %953 = vector.extract_strided_slice %946 {offsets = [32, 0], sizes = [32, 32], strides = [1, 1]} : vector<864x32xf32> to vector<32x32xf32>
    %954 = vector.extract_strided_slice %92 {offsets = [1, 0], sizes = [1, 32], strides = [1, 1]} : vector<27x32xf32> to vector<1x32xf32>
    %955 = vector.broadcast %954 : vector<1x32xf32> to vector<32x32xf32>
    %956 = arith.mulf %953, %955 : vector<32x32xf32>
    %957 = arith.addf %952, %956 : vector<32x32xf32>
    %958 = vector.extract_strided_slice %946 {offsets = [64, 0], sizes = [32, 32], strides = [1, 1]} : vector<864x32xf32> to vector<32x32xf32>
    %959 = vector.extract_strided_slice %92 {offsets = [2, 0], sizes = [1, 32], strides = [1, 1]} : vector<27x32xf32> to vector<1x32xf32>
    %960 = vector.broadcast %959 : vector<1x32xf32> to vector<32x32xf32>
    %961 = arith.mulf %958, %960 : vector<32x32xf32>
    %962 = arith.addf %957, %961 : vector<32x32xf32>
    %963 = vector.extract_strided_slice %946 {offsets = [96, 0], sizes = [32, 32], strides = [1, 1]} : vector<864x32xf32> to vector<32x32xf32>
    %964 = vector.extract_strided_slice %92 {offsets = [3, 0], sizes = [1, 32], strides = [1, 1]} : vector<27x32xf32> to vector<1x32xf32>
    %965 = vector.broadcast %964 : vector<1x32xf32> to vector<32x32xf32>
    %966 = arith.mulf %963, %965 : vector<32x32xf32>
    %967 = arith.addf %962, %966 : vector<32x32xf32>
    %968 = vector.extract_strided_slice %946 {offsets = [128, 0], sizes = [32, 32], strides = [1, 1]} : vector<864x32xf32> to vector<32x32xf32>
    %969 = vector.extract_strided_slice %92 {offsets = [4, 0], sizes = [1, 32], strides = [1, 1]} : vector<27x32xf32> to vector<1x32xf32>
    %970 = vector.broadcast %969 : vector<1x32xf32> to vector<32x32xf32>
    %971 = arith.mulf %968, %970 : vector<32x32xf32>
    %972 = arith.addf %967, %971 : vector<32x32xf32>
    %973 = vector.extract_strided_slice %946 {offsets = [160, 0], sizes = [32, 32], strides = [1, 1]} : vector<864x32xf32> to vector<32x32xf32>
    %974 = vector.extract_strided_slice %92 {offsets = [5, 0], sizes = [1, 32], strides = [1, 1]} : vector<27x32xf32> to vector<1x32xf32>
    %975 = vector.broadcast %974 : vector<1x32xf32> to vector<32x32xf32>
    %976 = arith.mulf %973, %975 : vector<32x32xf32>
    %977 = arith.addf %972, %976 : vector<32x32xf32>
    %978 = vector.extract_strided_slice %946 {offsets = [192, 0], sizes = [32, 32], strides = [1, 1]} : vector<864x32xf32> to vector<32x32xf32>
    %979 = vector.extract_strided_slice %92 {offsets = [6, 0], sizes = [1, 32], strides = [1, 1]} : vector<27x32xf32> to vector<1x32xf32>
    %980 = vector.broadcast %979 : vector<1x32xf32> to vector<32x32xf32>
    %981 = arith.mulf %978, %980 : vector<32x32xf32>
    %982 = arith.addf %977, %981 : vector<32x32xf32>
    %983 = vector.extract_strided_slice %946 {offsets = [224, 0], sizes = [32, 32], strides = [1, 1]} : vector<864x32xf32> to vector<32x32xf32>
    %984 = vector.extract_strided_slice %92 {offsets = [7, 0], sizes = [1, 32], strides = [1, 1]} : vector<27x32xf32> to vector<1x32xf32>
    %985 = vector.broadcast %984 : vector<1x32xf32> to vector<32x32xf32>
    %986 = arith.mulf %983, %985 : vector<32x32xf32>
    %987 = arith.addf %982, %986 : vector<32x32xf32>
    %988 = vector.extract_strided_slice %946 {offsets = [256, 0], sizes = [32, 32], strides = [1, 1]} : vector<864x32xf32> to vector<32x32xf32>
    %989 = vector.extract_strided_slice %92 {offsets = [8, 0], sizes = [1, 32], strides = [1, 1]} : vector<27x32xf32> to vector<1x32xf32>
    %990 = vector.broadcast %989 : vector<1x32xf32> to vector<32x32xf32>
    %991 = arith.mulf %988, %990 : vector<32x32xf32>
    %992 = arith.addf %987, %991 : vector<32x32xf32>
    %993 = vector.extract_strided_slice %946 {offsets = [288, 0], sizes = [32, 32], strides = [1, 1]} : vector<864x32xf32> to vector<32x32xf32>
    %994 = vector.extract_strided_slice %92 {offsets = [9, 0], sizes = [1, 32], strides = [1, 1]} : vector<27x32xf32> to vector<1x32xf32>
    %995 = vector.broadcast %994 : vector<1x32xf32> to vector<32x32xf32>
    %996 = arith.mulf %993, %995 : vector<32x32xf32>
    %997 = arith.addf %992, %996 : vector<32x32xf32>
    %998 = vector.extract_strided_slice %946 {offsets = [320, 0], sizes = [32, 32], strides = [1, 1]} : vector<864x32xf32> to vector<32x32xf32>
    %999 = vector.extract_strided_slice %92 {offsets = [10, 0], sizes = [1, 32], strides = [1, 1]} : vector<27x32xf32> to vector<1x32xf32>
    %1000 = vector.broadcast %999 : vector<1x32xf32> to vector<32x32xf32>
    %1001 = arith.mulf %998, %1000 : vector<32x32xf32>
    %1002 = arith.addf %997, %1001 : vector<32x32xf32>
    %1003 = vector.extract_strided_slice %946 {offsets = [352, 0], sizes = [32, 32], strides = [1, 1]} : vector<864x32xf32> to vector<32x32xf32>
    %1004 = vector.extract_strided_slice %92 {offsets = [11, 0], sizes = [1, 32], strides = [1, 1]} : vector<27x32xf32> to vector<1x32xf32>
    %1005 = vector.broadcast %1004 : vector<1x32xf32> to vector<32x32xf32>
    %1006 = arith.mulf %1003, %1005 : vector<32x32xf32>
    %1007 = arith.addf %1002, %1006 : vector<32x32xf32>
    %1008 = vector.extract_strided_slice %946 {offsets = [384, 0], sizes = [32, 32], strides = [1, 1]} : vector<864x32xf32> to vector<32x32xf32>
    %1009 = vector.extract_strided_slice %92 {offsets = [12, 0], sizes = [1, 32], strides = [1, 1]} : vector<27x32xf32> to vector<1x32xf32>
    %1010 = vector.broadcast %1009 : vector<1x32xf32> to vector<32x32xf32>
    %1011 = arith.mulf %1008, %1010 : vector<32x32xf32>
    %1012 = arith.addf %1007, %1011 : vector<32x32xf32>
    %1013 = vector.extract_strided_slice %946 {offsets = [416, 0], sizes = [32, 32], strides = [1, 1]} : vector<864x32xf32> to vector<32x32xf32>
    %1014 = vector.extract_strided_slice %92 {offsets = [13, 0], sizes = [1, 32], strides = [1, 1]} : vector<27x32xf32> to vector<1x32xf32>
    %1015 = vector.broadcast %1014 : vector<1x32xf32> to vector<32x32xf32>
    %1016 = arith.mulf %1013, %1015 : vector<32x32xf32>
    %1017 = arith.addf %1012, %1016 : vector<32x32xf32>
    %1018 = vector.extract_strided_slice %946 {offsets = [448, 0], sizes = [32, 32], strides = [1, 1]} : vector<864x32xf32> to vector<32x32xf32>
    %1019 = vector.extract_strided_slice %92 {offsets = [14, 0], sizes = [1, 32], strides = [1, 1]} : vector<27x32xf32> to vector<1x32xf32>
    %1020 = vector.broadcast %1019 : vector<1x32xf32> to vector<32x32xf32>
    %1021 = arith.mulf %1018, %1020 : vector<32x32xf32>
    %1022 = arith.addf %1017, %1021 : vector<32x32xf32>
    %1023 = vector.extract_strided_slice %946 {offsets = [480, 0], sizes = [32, 32], strides = [1, 1]} : vector<864x32xf32> to vector<32x32xf32>
    %1024 = vector.extract_strided_slice %92 {offsets = [15, 0], sizes = [1, 32], strides = [1, 1]} : vector<27x32xf32> to vector<1x32xf32>
    %1025 = vector.broadcast %1024 : vector<1x32xf32> to vector<32x32xf32>
    %1026 = arith.mulf %1023, %1025 : vector<32x32xf32>
    %1027 = arith.addf %1022, %1026 : vector<32x32xf32>
    %1028 = vector.extract_strided_slice %946 {offsets = [512, 0], sizes = [32, 32], strides = [1, 1]} : vector<864x32xf32> to vector<32x32xf32>
    %1029 = vector.extract_strided_slice %92 {offsets = [16, 0], sizes = [1, 32], strides = [1, 1]} : vector<27x32xf32> to vector<1x32xf32>
    %1030 = vector.broadcast %1029 : vector<1x32xf32> to vector<32x32xf32>
    %1031 = arith.mulf %1028, %1030 : vector<32x32xf32>
    %1032 = arith.addf %1027, %1031 : vector<32x32xf32>
    %1033 = vector.extract_strided_slice %946 {offsets = [544, 0], sizes = [32, 32], strides = [1, 1]} : vector<864x32xf32> to vector<32x32xf32>
    %1034 = vector.extract_strided_slice %92 {offsets = [17, 0], sizes = [1, 32], strides = [1, 1]} : vector<27x32xf32> to vector<1x32xf32>
    %1035 = vector.broadcast %1034 : vector<1x32xf32> to vector<32x32xf32>
    %1036 = arith.mulf %1033, %1035 : vector<32x32xf32>
    %1037 = arith.addf %1032, %1036 : vector<32x32xf32>
    %1038 = vector.extract_strided_slice %946 {offsets = [576, 0], sizes = [32, 32], strides = [1, 1]} : vector<864x32xf32> to vector<32x32xf32>
    %1039 = vector.extract_strided_slice %92 {offsets = [18, 0], sizes = [1, 32], strides = [1, 1]} : vector<27x32xf32> to vector<1x32xf32>
    %1040 = vector.broadcast %1039 : vector<1x32xf32> to vector<32x32xf32>
    %1041 = arith.mulf %1038, %1040 : vector<32x32xf32>
    %1042 = arith.addf %1037, %1041 : vector<32x32xf32>
    %1043 = vector.extract_strided_slice %946 {offsets = [608, 0], sizes = [32, 32], strides = [1, 1]} : vector<864x32xf32> to vector<32x32xf32>
    %1044 = vector.extract_strided_slice %92 {offsets = [19, 0], sizes = [1, 32], strides = [1, 1]} : vector<27x32xf32> to vector<1x32xf32>
    %1045 = vector.broadcast %1044 : vector<1x32xf32> to vector<32x32xf32>
    %1046 = arith.mulf %1043, %1045 : vector<32x32xf32>
    %1047 = arith.addf %1042, %1046 : vector<32x32xf32>
    %1048 = vector.extract_strided_slice %946 {offsets = [640, 0], sizes = [32, 32], strides = [1, 1]} : vector<864x32xf32> to vector<32x32xf32>
    %1049 = vector.extract_strided_slice %92 {offsets = [20, 0], sizes = [1, 32], strides = [1, 1]} : vector<27x32xf32> to vector<1x32xf32>
    %1050 = vector.broadcast %1049 : vector<1x32xf32> to vector<32x32xf32>
    %1051 = arith.mulf %1048, %1050 : vector<32x32xf32>
    %1052 = arith.addf %1047, %1051 : vector<32x32xf32>
    %1053 = vector.extract_strided_slice %946 {offsets = [672, 0], sizes = [32, 32], strides = [1, 1]} : vector<864x32xf32> to vector<32x32xf32>
    %1054 = vector.extract_strided_slice %92 {offsets = [21, 0], sizes = [1, 32], strides = [1, 1]} : vector<27x32xf32> to vector<1x32xf32>
    %1055 = vector.broadcast %1054 : vector<1x32xf32> to vector<32x32xf32>
    %1056 = arith.mulf %1053, %1055 : vector<32x32xf32>
    %1057 = arith.addf %1052, %1056 : vector<32x32xf32>
    %1058 = vector.extract_strided_slice %946 {offsets = [704, 0], sizes = [32, 32], strides = [1, 1]} : vector<864x32xf32> to vector<32x32xf32>
    %1059 = vector.extract_strided_slice %92 {offsets = [22, 0], sizes = [1, 32], strides = [1, 1]} : vector<27x32xf32> to vector<1x32xf32>
    %1060 = vector.broadcast %1059 : vector<1x32xf32> to vector<32x32xf32>
    %1061 = arith.mulf %1058, %1060 : vector<32x32xf32>
    %1062 = arith.addf %1057, %1061 : vector<32x32xf32>
    %1063 = vector.extract_strided_slice %946 {offsets = [736, 0], sizes = [32, 32], strides = [1, 1]} : vector<864x32xf32> to vector<32x32xf32>
    %1064 = vector.extract_strided_slice %92 {offsets = [23, 0], sizes = [1, 32], strides = [1, 1]} : vector<27x32xf32> to vector<1x32xf32>
    %1065 = vector.broadcast %1064 : vector<1x32xf32> to vector<32x32xf32>
    %1066 = arith.mulf %1063, %1065 : vector<32x32xf32>
    %1067 = arith.addf %1062, %1066 : vector<32x32xf32>
    %1068 = vector.extract_strided_slice %946 {offsets = [768, 0], sizes = [32, 32], strides = [1, 1]} : vector<864x32xf32> to vector<32x32xf32>
    %1069 = vector.extract_strided_slice %92 {offsets = [24, 0], sizes = [1, 32], strides = [1, 1]} : vector<27x32xf32> to vector<1x32xf32>
    %1070 = vector.broadcast %1069 : vector<1x32xf32> to vector<32x32xf32>
    %1071 = arith.mulf %1068, %1070 : vector<32x32xf32>
    %1072 = arith.addf %1067, %1071 : vector<32x32xf32>
    %1073 = vector.extract_strided_slice %946 {offsets = [800, 0], sizes = [32, 32], strides = [1, 1]} : vector<864x32xf32> to vector<32x32xf32>
    %1074 = vector.extract_strided_slice %92 {offsets = [25, 0], sizes = [1, 32], strides = [1, 1]} : vector<27x32xf32> to vector<1x32xf32>
    %1075 = vector.broadcast %1074 : vector<1x32xf32> to vector<32x32xf32>
    %1076 = arith.mulf %1073, %1075 : vector<32x32xf32>
    %1077 = arith.addf %1072, %1076 : vector<32x32xf32>
    %1078 = vector.extract_strided_slice %946 {offsets = [832, 0], sizes = [32, 32], strides = [1, 1]} : vector<864x32xf32> to vector<32x32xf32>
    %1079 = vector.extract_strided_slice %92 {offsets = [26, 0], sizes = [1, 32], strides = [1, 1]} : vector<27x32xf32> to vector<1x32xf32>
    %1080 = vector.broadcast %1079 : vector<1x32xf32> to vector<32x32xf32>
    %1081 = arith.mulf %1078, %1080 : vector<32x32xf32>
    %1082 = arith.addf %1077, %1081 : vector<32x32xf32>
    %1083 = tpu.concatenate %944, %1082 in 0 : vector<1x32xf32>, vector<32x32xf32> -> vector<33x32xf32>
    %cst_114 = arith.constant dense<0.000000e+00> : vector<33x32xf32>
    %1084 = tpu.matmul %1083, %2, %cst_114 {dimension_numbers = #tpu.dot_dimension_numbers<[1], [0], [0], [1], [0, 0, 1, 1], [], []>} : vector<33x32xf32>, vector<32x32xf32>, vector<33x32xf32> -> vector<33x32xf32>
    %1085 = arith.subf %1083, %1084 : vector<33x32xf32>
    %1086 = arith.mulf %1085, %1085 : vector<33x32xf32>
    %cst_115 = arith.constant dense<0.000000e+00> : vector<33x32xf32>
    %1087 = tpu.matmul %1086, %2, %cst_115 {dimension_numbers = #tpu.dot_dimension_numbers<[1], [0], [0], [1], [0, 0, 1, 1], [], []>} : vector<33x32xf32>, vector<32x32xf32>, vector<33x32xf32> -> vector<33x32xf32>
    %1088 = arith.subf %1083, %1084 : vector<33x32xf32>
    %cst_116 = arith.constant 9.99999974E-6 : f32
    %1089 = vector.broadcast %cst_116 : f32 to vector<33x32xf32>
    %1090 = arith.addf %1087, %1089 : vector<33x32xf32>
    %1091 = math.rsqrt %1090 : vector<33x32xf32>
    %1092 = arith.mulf %1088, %1091 : vector<33x32xf32>
    %1093 = vector.broadcast %95 : vector<1x32xf32> to vector<33x32xf32>
    %1094 = arith.mulf %1092, %1093 : vector<33x32xf32>
    %1095 = vector.broadcast %98 : vector<1x32xf32> to vector<33x32xf32>
    %1096 = arith.addf %1094, %1095 : vector<33x32xf32>
    %cst_117 = arith.constant 0.353553385 : f32
    %1097 = vector.broadcast %cst_117 : f32 to vector<33x32xf32>
    %1098 = arith.mulf %788, %1097 : vector<33x32xf32>
    %cst_118 = arith.constant 0.000000e+00 : f32
    %1099 = vector.broadcast %cst_118 : f32 to vector<33x32xf32>
    %1100 = vector.broadcast %20 : vector<1x32xf32> to vector<33x32xf32>
    %1101 = arith.mulf %942, %1100 : vector<33x32xf32>
    %cst_119 = arith.constant dense<0.000000e+00> : vector<33x33xf32>
    %1102 = tpu.matmul %1098, %1101, %cst_119 {dimension_numbers = #tpu.dot_dimension_numbers<[1], [1], [0], [0], [0, 0, 1, 0], [], []>} : vector<33x32xf32>, vector<33x32xf32>, vector<33x33xf32> -> vector<33x33xf32>
    %cst_120 = arith.constant dense<0xFF800000> : vector<33xf32>
    %1103 = vector.multi_reduction <maximumf>, %1102, %cst_120 [1] : vector<33x33xf32> to vector<33xf32>
    %1104 = vector.shape_cast %1103 : vector<33xf32> to vector<33x1xf32>
    %1105 = vector.broadcast %1104 : vector<33x1xf32> to vector<33x33xf32>
    %1106 = arith.subf %1102, %1105 : vector<33x33xf32>
    %1107 = math.exp %1106 : vector<33x33xf32>
    %cst_121 = arith.constant dense<0.000000e+00> : vector<33xf32>
    %1108 = vector.multi_reduction <add>, %1107, %cst_121 [1] : vector<33x33xf32> to vector<33xf32>
    %1109 = vector.shape_cast %1108 : vector<33xf32> to vector<33x1xf32>
    %1110 = tpu.reciprocal %1109 {approx = true} : vector<33x1xf32> -> vector<33x1xf32>
    %1111 = vector.broadcast %1110 : vector<33x1xf32> to vector<33x33xf32>
    %1112 = arith.mulf %1107, %1111 : vector<33x33xf32>
    %1113 = vector.broadcast %20 : vector<1x32xf32> to vector<33x32xf32>
    %1114 = arith.mulf %1096, %1113 : vector<33x32xf32>
    %cst_122 = arith.constant dense<0.000000e+00> : vector<33x32xf32>
    %1115 = tpu.matmul %1112, %1114, %cst_122 {dimension_numbers = #tpu.dot_dimension_numbers<[1], [0], [0], [1], [0, 0, 1, 1], [], []>} : vector<33x33xf32>, vector<33x32xf32>, vector<33x32xf32> -> vector<33x32xf32>
    %1116 = arith.addf %1099, %1115 : vector<33x32xf32>
    %1117 = vector.broadcast %27 : vector<1x32xf32> to vector<33x32xf32>
    %1118 = arith.mulf %942, %1117 : vector<33x32xf32>
    %cst_123 = arith.constant dense<0.000000e+00> : vector<33x33xf32>
    %1119 = tpu.matmul %1098, %1118, %cst_123 {dimension_numbers = #tpu.dot_dimension_numbers<[1], [1], [0], [0], [0, 0, 1, 0], [], []>} : vector<33x32xf32>, vector<33x32xf32>, vector<33x33xf32> -> vector<33x33xf32>
    %cst_124 = arith.constant dense<0xFF800000> : vector<33xf32>
    %1120 = vector.multi_reduction <maximumf>, %1119, %cst_124 [1] : vector<33x33xf32> to vector<33xf32>
    %1121 = vector.shape_cast %1120 : vector<33xf32> to vector<33x1xf32>
    %1122 = vector.broadcast %1121 : vector<33x1xf32> to vector<33x33xf32>
    %1123 = arith.subf %1119, %1122 : vector<33x33xf32>
    %1124 = math.exp %1123 : vector<33x33xf32>
    %cst_125 = arith.constant dense<0.000000e+00> : vector<33xf32>
    %1125 = vector.multi_reduction <add>, %1124, %cst_125 [1] : vector<33x33xf32> to vector<33xf32>
    %1126 = vector.shape_cast %1125 : vector<33xf32> to vector<33x1xf32>
    %1127 = tpu.reciprocal %1126 {approx = true} : vector<33x1xf32> -> vector<33x1xf32>
    %1128 = vector.broadcast %1127 : vector<33x1xf32> to vector<33x33xf32>
    %1129 = arith.mulf %1124, %1128 : vector<33x33xf32>
    %1130 = vector.broadcast %27 : vector<1x32xf32> to vector<33x32xf32>
    %1131 = arith.mulf %1096, %1130 : vector<33x32xf32>
    %cst_126 = arith.constant dense<0.000000e+00> : vector<33x32xf32>
    %1132 = tpu.matmul %1129, %1131, %cst_126 {dimension_numbers = #tpu.dot_dimension_numbers<[1], [0], [0], [1], [0, 0, 1, 1], [], []>} : vector<33x33xf32>, vector<33x32xf32>, vector<33x32xf32> -> vector<33x32xf32>
    %1133 = arith.addf %1116, %1132 : vector<33x32xf32>
    %1134 = vector.broadcast %34 : vector<1x32xf32> to vector<33x32xf32>
    %1135 = arith.mulf %942, %1134 : vector<33x32xf32>
    %cst_127 = arith.constant dense<0.000000e+00> : vector<33x33xf32>
    %1136 = tpu.matmul %1098, %1135, %cst_127 {dimension_numbers = #tpu.dot_dimension_numbers<[1], [1], [0], [0], [0, 0, 1, 0], [], []>} : vector<33x32xf32>, vector<33x32xf32>, vector<33x33xf32> -> vector<33x33xf32>
    %cst_128 = arith.constant dense<0xFF800000> : vector<33xf32>
    %1137 = vector.multi_reduction <maximumf>, %1136, %cst_128 [1] : vector<33x33xf32> to vector<33xf32>
    %1138 = vector.shape_cast %1137 : vector<33xf32> to vector<33x1xf32>
    %1139 = vector.broadcast %1138 : vector<33x1xf32> to vector<33x33xf32>
    %1140 = arith.subf %1136, %1139 : vector<33x33xf32>
    %1141 = math.exp %1140 : vector<33x33xf32>
    %cst_129 = arith.constant dense<0.000000e+00> : vector<33xf32>
    %1142 = vector.multi_reduction <add>, %1141, %cst_129 [1] : vector<33x33xf32> to vector<33xf32>
    %1143 = vector.shape_cast %1142 : vector<33xf32> to vector<33x1xf32>
    %1144 = tpu.reciprocal %1143 {approx = true} : vector<33x1xf32> -> vector<33x1xf32>
    %1145 = vector.broadcast %1144 : vector<33x1xf32> to vector<33x33xf32>
    %1146 = arith.mulf %1141, %1145 : vector<33x33xf32>
    %1147 = vector.broadcast %34 : vector<1x32xf32> to vector<33x32xf32>
    %1148 = arith.mulf %1096, %1147 : vector<33x32xf32>
    %cst_130 = arith.constant dense<0.000000e+00> : vector<33x32xf32>
    %1149 = tpu.matmul %1146, %1148, %cst_130 {dimension_numbers = #tpu.dot_dimension_numbers<[1], [0], [0], [1], [0, 0, 1, 1], [], []>} : vector<33x33xf32>, vector<33x32xf32>, vector<33x32xf32> -> vector<33x32xf32>
    %1150 = arith.addf %1133, %1149 : vector<33x32xf32>
    %1151 = vector.broadcast %41 : vector<1x32xf32> to vector<33x32xf32>
    %1152 = arith.mulf %942, %1151 : vector<33x32xf32>
    %cst_131 = arith.constant dense<0.000000e+00> : vector<33x33xf32>
    %1153 = tpu.matmul %1098, %1152, %cst_131 {dimension_numbers = #tpu.dot_dimension_numbers<[1], [1], [0], [0], [0, 0, 1, 0], [], []>} : vector<33x32xf32>, vector<33x32xf32>, vector<33x33xf32> -> vector<33x33xf32>
    %cst_132 = arith.constant dense<0xFF800000> : vector<33xf32>
    %1154 = vector.multi_reduction <maximumf>, %1153, %cst_132 [1] : vector<33x33xf32> to vector<33xf32>
    %1155 = vector.shape_cast %1154 : vector<33xf32> to vector<33x1xf32>
    %1156 = vector.broadcast %1155 : vector<33x1xf32> to vector<33x33xf32>
    %1157 = arith.subf %1153, %1156 : vector<33x33xf32>
    %1158 = math.exp %1157 : vector<33x33xf32>
    %cst_133 = arith.constant dense<0.000000e+00> : vector<33xf32>
    %1159 = vector.multi_reduction <add>, %1158, %cst_133 [1] : vector<33x33xf32> to vector<33xf32>
    %1160 = vector.shape_cast %1159 : vector<33xf32> to vector<33x1xf32>
    %1161 = tpu.reciprocal %1160 {approx = true} : vector<33x1xf32> -> vector<33x1xf32>
    %1162 = vector.broadcast %1161 : vector<33x1xf32> to vector<33x33xf32>
    %1163 = arith.mulf %1158, %1162 : vector<33x33xf32>
    %1164 = vector.broadcast %41 : vector<1x32xf32> to vector<33x32xf32>
    %1165 = arith.mulf %1096, %1164 : vector<33x32xf32>
    %cst_134 = arith.constant dense<0.000000e+00> : vector<33x32xf32>
    %1166 = tpu.matmul %1163, %1165, %cst_134 {dimension_numbers = #tpu.dot_dimension_numbers<[1], [0], [0], [1], [0, 0, 1, 1], [], []>} : vector<33x33xf32>, vector<33x32xf32>, vector<33x32xf32> -> vector<33x32xf32>
    %1167 = arith.addf %1150, %1166 : vector<33x32xf32>
    %1168 = vector.broadcast %46 : vector<33x1xf32> to vector<33x32xf32>
    %1169 = arith.mulf %1168, %788 : vector<33x32xf32>
    %1170 = arith.addf %1167, %1169 : vector<33x32xf32>
    %1171 = tpu.concatenate %634, %1170 in 0 : vector<33x32xf32>, vector<33x32xf32> -> vector<66x32xf32>
    %cst_135 = arith.constant dense<0.000000e+00> : vector<66x32xf32>
    %1172 = tpu.matmul %1171, %5, %cst_135 {dimension_numbers = #tpu.dot_dimension_numbers<[1], [0], [0], [1], [0, 0, 1, 1], [], []>} : vector<66x32xf32>, vector<32x32xf32>, vector<66x32xf32> -> vector<66x32xf32>
    %1173 = arith.addf %0, %1172 : vector<66x32xf32>
    %1174 = vector.broadcast %6 : vector<1x32xf32> to vector<66x32xf32>
    %1175 = arith.addf %1173, %1174 : vector<66x32xf32>
    %cst_136 = arith.constant dense<0.000000e+00> : vector<66xf32>
    %1176 = vector.multi_reduction <add>, %1175, %cst_136 [1] : vector<66x32xf32> to vector<66xf32>
    %1177 = vector.shape_cast %1176 : vector<66xf32> to vector<66x1xf32>
    %cst_137 = arith.constant 3.200000e+01 : f32
    %1178 = vector.broadcast %cst_137 : f32 to vector<66x1xf32>
    %1179 = arith.divf %1177, %1178 : vector<66x1xf32>
    %1180 = vector.broadcast %1179 : vector<66x1xf32> to vector<66x32xf32>
    %1181 = arith.subf %1175, %1180 : vector<66x32xf32>
    %1182 = arith.mulf %1181, %1181 : vector<66x32xf32>
    %cst_138 = arith.constant dense<0.000000e+00> : vector<66xf32>
    %1183 = vector.multi_reduction <add>, %1182, %cst_138 [1] : vector<66x32xf32> to vector<66xf32>
    %1184 = vector.shape_cast %1183 : vector<66xf32> to vector<66x1xf32>
    %cst_139 = arith.constant 3.200000e+01 : f32
    %1185 = vector.broadcast %cst_139 : f32 to vector<66x1xf32>
    %1186 = arith.divf %1184, %1185 : vector<66x1xf32>
    %1187 = vector.broadcast %1179 : vector<66x1xf32> to vector<66x32xf32>
    %1188 = arith.subf %1175, %1187 : vector<66x32xf32>
    %cst_140 = arith.constant 9.99999974E-6 : f32
    %1189 = vector.broadcast %cst_140 : f32 to vector<66x1xf32>
    %1190 = arith.addf %1186, %1189 : vector<66x1xf32>
    %1191 = math.rsqrt %1190 : vector<66x1xf32>
    %1192 = vector.broadcast %1191 : vector<66x1xf32> to vector<66x32xf32>
    %1193 = arith.mulf %1188, %1192 : vector<66x32xf32>
    %1194 = vector.broadcast %7 : vector<1x32xf32> to vector<66x32xf32>
    %1195 = arith.mulf %1193, %1194 : vector<66x32xf32>
    %1196 = vector.broadcast %8 : vector<1x32xf32> to vector<66x32xf32>
    %1197 = arith.addf %1195, %1196 : vector<66x32xf32>
    %cst_141 = arith.constant dense<0.000000e+00> : vector<66x128xf32>
    %1198 = tpu.matmul %1197, %9, %cst_141 {dimension_numbers = #tpu.dot_dimension_numbers<[1], [0], [0], [1], [0, 0, 1, 1], [], []>} : vector<66x32xf32>, vector<32x128xf32>, vector<66x128xf32> -> vector<66x128xf32>
    %1199 = vector.broadcast %10 : vector<1x128xf32> to vector<66x128xf32>
    %1200 = arith.addf %1198, %1199 : vector<66x128xf32>
    %1201 = arith.mulf %1200, %1200 : vector<66x128xf32>
    %1202 = arith.mulf %1200, %1201 : vector<66x128xf32>
    %cst_142 = arith.constant 4.471500e-02 : f32
    %1203 = vector.broadcast %cst_142 : f32 to vector<66x128xf32>
    %1204 = arith.mulf %1203, %1202 : vector<66x128xf32>
    %1205 = arith.addf %1200, %1204 : vector<66x128xf32>
    %cst_143 = arith.constant 0.797884583 : f32
    %1206 = vector.broadcast %cst_143 : f32 to vector<66x128xf32>
    %1207 = arith.mulf %1206, %1205 : vector<66x128xf32>
    %1208 = math.tanh %1207 : vector<66x128xf32>
    %cst_144 = arith.constant 1.000000e+00 : f32
    %1209 = vector.broadcast %cst_144 : f32 to vector<66x128xf32>
    %1210 = arith.addf %1209, %1208 : vector<66x128xf32>
    %cst_145 = arith.constant 5.000000e-01 : f32
    %1211 = vector.broadcast %cst_145 : f32 to vector<66x128xf32>
    %1212 = arith.mulf %1211, %1210 : vector<66x128xf32>
    %1213 = arith.mulf %1200, %1212 : vector<66x128xf32>
    %cst_146 = arith.constant dense<0.000000e+00> : vector<66x32xf32>
    %1214 = tpu.matmul %1213, %11, %cst_146 {dimension_numbers = #tpu.dot_dimension_numbers<[1], [0], [0], [1], [0, 0, 1, 1], [], []>} : vector<66x128xf32>, vector<128x32xf32>, vector<66x32xf32> -> vector<66x32xf32>
    %1215 = arith.addf %1175, %1214 : vector<66x32xf32>
    %1216 = vector.broadcast %12 : vector<1x32xf32> to vector<66x32xf32>
    %1217 = arith.addf %1215, %1216 : vector<66x32xf32>
    %c0_147 = arith.constant 0 : index
    %c0_148 = arith.constant 0 : index
    %1218 = vector.load %arg18[%c0_147, %c0_148] : memref<66x32xf32, #tpu.memory_space<vmem>>, vector<66x32xf32>
    tpu.vector_store %arg18[%c0_147, %c0_148], %1217 {strides = array<i32>} : memref<66x32xf32, #tpu.memory_space<vmem>>, vector<66x32xf32>,
    return
  }
}

</mosaic_0001>

<llo_original>
// kernel: tpu_custom_call.1
$region0: #{tpu_custom_call.1}
  #allocation0 [shape = 'u32[]', space=smem, size = 0x4, offset = 0x4, fixed_abs, tag = 'smem constant byte address 0x4 - core index']
  #allocation1 [shape = 'u32[144,128]{1,0:T(1,128)}', space=vmem, size = 0x12000, scoped, tag = 'internal scratch']
  %s0 = inlined_call_operand.vmem [shape: f32[66,32], index: 0, kind: input, shape index: {}]
  %s1 = inlined_call_operand.vmem [shape: f32[864,32], index: 1, kind: input, shape index: {}]
  %s2 = inlined_call_operand.vmem [shape: f32[32,32], index: 2, kind: input, shape index: {}]
  %s3 = inlined_call_operand.vmem [shape: f32[1,32], index: 3, kind: input, shape index: {}]
  %s4 = inlined_call_operand.vmem [shape: f32[1,32], index: 4, kind: input, shape index: {}]
  %s5 = inlined_call_operand.vmem [shape: f32[3,32,32], index: 5, kind: input, shape index: {}]
  %s6 = inlined_call_operand.vmem [shape: f32[3,32], index: 6, kind: input, shape index: {}]
  %s7 = inlined_call_operand.vmem [shape: f32[3,27,32], index: 7, kind: input, shape index: {}]
  %s8 = inlined_call_operand.vmem [shape: f32[3,32], index: 8, kind: input, shape index: {}]
  %s9 = inlined_call_operand.vmem [shape: f32[3,32], index: 9, kind: input, shape index: {}]
  %s10 = inlined_call_operand.vmem [shape: f32[32,32], index: 10, kind: input, shape index: {}]
  %s11 = inlined_call_operand.vmem [shape: f32[1,32], index: 11, kind: input, shape index: {}]
  %s12 = inlined_call_operand.vmem [shape: f32[1,32], index: 12, kind: input, shape index: {}]
  %s13 = inlined_call_operand.vmem [shape: f32[1,32], index: 13, kind: input, shape index: {}]
  %s14 = inlined_call_operand.vmem [shape: f32[32,128], index: 14, kind: input, shape index: {}]
  %s15 = inlined_call_operand.vmem [shape: f32[1,128], index: 15, kind: input, shape index: {}]
  %s16 = inlined_call_operand.vmem [shape: f32[128,32], index: 16, kind: input, shape index: {}]
  %s17 = inlined_call_operand.vmem [shape: f32[1,32], index: 17, kind: input, shape index: {}]
  %s18 = inlined_call_operand.vmem [shape: f32[66,32], index: 18, kind: output, shape index: {}]
  %s19 = sld [smem:[#allocation0]]
  $region82: #{tpu_custom_call.1} parent=0
    _
  %s21 = ssub.s32 1, %s19
  %s22 = scalar_select 0, %s21, %s19
  // Predicated region
  $region2: #{tpu_custom_call.1} parent=0 // pred_check
    _
  $region3: #{tpu_custom_call.1} parent=0 // pred_check_branch
    %24 = sbr.rel (0) target = $region5
  $region4: #{tpu_custom_call.1} parent=0 // pred_region
    _
  $region5: #{tpu_custom_call.1} parent=0 // pred_fallthru
    _
  // Predicated region
  $region6: #{tpu_custom_call.1} parent=0 // pred_check
    _
  $region7: #{tpu_custom_call.1} parent=0 // pred_check_branch
    %26 = sbr.rel (0) target = $region9
  $region8: #{tpu_custom_call.1} parent=0 // pred_region
    _
  $region9: #{tpu_custom_call.1} parent=0 // pred_fallthru
    _
  // Predicated region
  $region10: #{tpu_custom_call.1} parent=0 // pred_check
    _
  $region11: #{tpu_custom_call.1} parent=0 // pred_check_branch
    %28 = sbr.rel (0) target = $region13
  $region12: #{tpu_custom_call.1} parent=0 // pred_region
    _
  $region13: #{tpu_custom_call.1} parent=0 // pred_fallthru
    _
  // Predicated region
  $region14: #{tpu_custom_call.1} parent=0 // pred_check
    _
  $region15: #{tpu_custom_call.1} parent=0 // pred_check_branch
    %30 = sbr.rel (0) target = $region17
  $region16: #{tpu_custom_call.1} parent=0 // pred_region
    _
  $region17: #{tpu_custom_call.1} parent=0 // pred_fallthru
    _
  // Predicated region
  $region18: #{tpu_custom_call.1} parent=0 // pred_check
    _
  $region19: #{tpu_custom_call.1} parent=0 // pred_check_branch
    %32 = sbr.rel (0) target = $region21
  $region20: #{tpu_custom_call.1} parent=0 // pred_region
    _
  $region21: #{tpu_custom_call.1} parent=0 // pred_fallthru
    _
  // Predicated region
  $region22: #{tpu_custom_call.1} parent=0 // pred_check
    _
  $region23: #{tpu_custom_call.1} parent=0 // pred_check_branch
    %34 = sbr.rel (0) target = $region25
  $region24: #{tpu_custom_call.1} parent=0 // pred_region
    _
  $region25: #{tpu_custom_call.1} parent=0 // pred_fallthru
    _
  // Predicated region
  $region26: #{tpu_custom_call.1} parent=0 // pred_check
    _
  $region27: #{tpu_custom_call.1} parent=0 // pred_check_branch
    %36 = sbr.rel (0) target = $region29
  $region28: #{tpu_custom_call.1} parent=0 // pred_region
    _
  $region29: #{tpu_custom_call.1} parent=0 // pred_fallthru
    _
  // Predicated region
  $region30: #{tpu_custom_call.1} parent=0 // pred_check
    _
  $region31: #{tpu_custom_call.1} parent=0 // pred_check_branch
    %38 = sbr.rel (0) target = $region33
  $region32: #{tpu_custom_call.1} parent=0 // pred_region
    _
  $region33: #{tpu_custom_call.1} parent=0 // pred_fallthru
    _
  // Predicated region
  $region34: #{tpu_custom_call.1} parent=0 // pred_check
    _
  $region35: #{tpu_custom_call.1} parent=0 // pred_check_branch
    %40 = sbr.rel (0) target = $region37
  $region36: #{tpu_custom_call.1} parent=0 // pred_region
    _
  $region37: #{tpu_custom_call.1} parent=0 // pred_fallthru
    _
  // Predicated region
  $region38: #{tpu_custom_call.1} parent=0 // pred_check
    _
  $region39: #{tpu_custom_call.1} parent=0 // pred_check_branch
    %42 = sbr.rel (0) target = $region41
  $region40: #{tpu_custom_call.1} parent=0 // pred_region
    _
  $region41: #{tpu_custom_call.1} parent=0 // pred_fallthru
    _
  // Predicated region
  $region42: #{tpu_custom_call.1} parent=0 // pred_check
    _
  $region43: #{tpu_custom_call.1} parent=0 // pred_check_branch
    %44 = sbr.rel (0) target = $region45
  $region44: #{tpu_custom_call.1} parent=0 // pred_region
    _
  $region45: #{tpu_custom_call.1} parent=0 // pred_fallthru
    _
  // Predicated region
  $region46: #{tpu_custom_call.1} parent=0 // pred_check
    _
  $region47: #{tpu_custom_call.1} parent=0 // pred_check_branch
    %46 = sbr.rel (0) target = $region49
  $region48: #{tpu_custom_call.1} parent=0 // pred_region
    _
  $region49: #{tpu_custom_call.1} parent=0 // pred_fallthru
    _
  // Predicated region
  $region50: #{tpu_custom_call.1} parent=0 // pred_check
    _
  $region51: #{tpu_custom_call.1} parent=0 // pred_check_branch
    %48 = sbr.rel (0) target = $region53
  $region52: #{tpu_custom_call.1} parent=0 // pred_region
    _
  $region53: #{tpu_custom_call.1} parent=0 // pred_fallthru
    _
  // Predicated region
  $region54: #{tpu_custom_call.1} parent=0 // pred_check
    _
  $region55: #{tpu_custom_call.1} parent=0 // pred_check_branch
    %50 = sbr.rel (0) target = $region57
  $region56: #{tpu_custom_call.1} parent=0 // pred_region
    _
  $region57: #{tpu_custom_call.1} parent=0 // pred_fallthru
    _
  // Predicated region
  $region58: #{tpu_custom_call.1} parent=0 // pred_check
    _
  $region59: #{tpu_custom_call.1} parent=0 // pred_check_branch
    %52 = sbr.rel (0) target = $region61
  $region60: #{tpu_custom_call.1} parent=0 // pred_region
    _
  $region61: #{tpu_custom_call.1} parent=0 // pred_fallthru
    _
  // Predicated region
  $region62: #{tpu_custom_call.1} parent=0 // pred_check
    _
  $region63: #{tpu_custom_call.1} parent=0 // pred_check_branch
    %54 = sbr.rel (0) target = $region65
  $region64: #{tpu_custom_call.1} parent=0 // pred_region
    _
  $region65: #{tpu_custom_call.1} parent=0 // pred_fallthru
    _
  // Predicated region
  $region66: #{tpu_custom_call.1} parent=0 // pred_check
    _
  $region67: #{tpu_custom_call.1} parent=0 // pred_check_branch
    %56 = sbr.rel (0) target = $region69
  $region68: #{tpu_custom_call.1} parent=0 // pred_region
    _
  $region69: #{tpu_custom_call.1} parent=0 // pred_fallthru
    _
  // Predicated region
  $region70: #{tpu_custom_call.1} parent=0 // pred_check
    _
  $region71: #{tpu_custom_call.1} parent=0 // pred_check_branch
    %58 = sbr.rel (0) target = $region73
  $region72: #{tpu_custom_call.1} parent=0 // pred_region
    _
  $region73: #{tpu_custom_call.1} parent=0 // pred_fallthru
    _
  %v59 = vld [vmem:[%s0] sm:$0xff]
  %v60 = vld [vmem:[%s0 + $0x8] sm:$0xff]
  %v61 = vld [vmem:[%s0 + $0x10] sm:$0xff]
  %v62 = vld [vmem:[%s0 + $0x18] sm:$0xff]
  %v63 = vld [vmem:[%s0 + $0x20] sm:$0xff]
  %v64 = vld [vmem:[%s0 + $0x28] sm:$0xff]
  %v65 = vld [vmem:[%s0 + $0x30] sm:$0xff]
  %v66 = vld [vmem:[%s0 + $0x38] sm:$0xff]
  %v67 = vld [vmem:[%s0 + $0x40] sm:$0x3]
  %v68 = vld [vmem:[%s1] sm:$0xff]
  %v69 = vld [vmem:[%s1 + $0x8] sm:$0xff]
  %v70 = vld [vmem:[%s1 + $0x10] sm:$0xff]
  %v71 = vld [vmem:[%s1 + $0x18] sm:$0xff]
  %v72 = vld [vmem:[%s1 + $0x20] sm:$0xff]
  %v73 = vld [vmem:[%s1 + $0x28] sm:$0xff]
  %v74 = vld [vmem:[%s1 + $0x30] sm:$0xff]
  %v75 = vld [vmem:[%s1 + $0x38] sm:$0xff]
  %v76 = vld [vmem:[%s1 + $0x40] sm:$0xff]
  %v77 = vld [vmem:[%s1 + $0x48] sm:$0xff]
  %v78 = vld [vmem:[%s1 + $0x50] sm:$0xff]
  %v79 = vld [vmem:[%s1 + $0x58] sm:$0xff]
  %v80 = vld [vmem:[%s1 + $0x60] sm:$0xff]
  %v81 = vld [vmem:[%s1 + $0x68] sm:$0xff]
  %v82 = vld [vmem:[%s1 + $0x70] sm:$0xff]
  %v83 = vld [vmem:[%s1 + $0x78] sm:$0xff]
  %v84 = vld [vmem:[%s1 + $0x80] sm:$0xff]
  %v85 = vld [vmem:[%s1 + $0x88] sm:$0xff]
  %v86 = vld [vmem:[%s1 + $0x90] sm:$0xff]
  %v87 = vld [vmem:[%s1 + $0x98] sm:$0xff]
  %v88 = vld [vmem:[%s1 + $0xa0] sm:$0xff]
  %v89 = vld [vmem:[%s1 + $0xa8] sm:$0xff]
  %v90 = vld [vmem:[%s1 + $0xb0] sm:$0xff]
  %v91 = vld [vmem:[%s1 + $0xb8] sm:$0xff]
  %v92 = vld [vmem:[%s1 + $0xc0] sm:$0xff]
  %v93 = vld [vmem:[%s1 + $0xc8] sm:$0xff]
  %v94 = vld [vmem:[%s1 + $0xd0] sm:$0xff]
  %v95 = vld [vmem:[%s1 + $0xd8] sm:$0xff]
  %v96 = vld [vmem:[%s1 + $0xe0] sm:$0xff]
  %v97 = vld [vmem:[%s1 + $0xe8] sm:$0xff]
  %v98 = vld [vmem:[%s1 + $0xf0] sm:$0xff]
  %v99 = vld [vmem:[%s1 + $0xf8] sm:$0xff]
  %v100 = vld [vmem:[%s1 + $0x100] sm:$0xff]
  %v101 = vld [vmem:[%s1 + $0x108] sm:$0xff]
  %v102 = vld [vmem:[%s1 + $0x110] sm:$0xff]
  %v103 = vld [vmem:[%s1 + $0x118] sm:$0xff]
  %v104 = vld [vmem:[%s1 + $0x120] sm:$0xff]
  %v105 = vld [vmem:[%s1 + $0x128] sm:$0xff]
  %v106 = vld [vmem:[%s1 + $0x130] sm:$0xff]
  %v107 = vld [vmem:[%s1 + $0x138] sm:$0xff]
  %v108 = vld [vmem:[%s1 + $0x140] sm:$0xff]
  %v109 = vld [vmem:[%s1 + $0x148] sm:$0xff]
  %v110 = vld [vmem:[%s1 + $0x150] sm:$0xff]
  %v111 = vld [vmem:[%s1 + $0x158] sm:$0xff]
  %v112 = vld [vmem:[%s1 + $0x160] sm:$0xff]
  %v113 = vld [vmem:[%s1 + $0x168] sm:$0xff]
  %v114 = vld [vmem:[%s1 + $0x170] sm:$0xff]
  %v115 = vld [vmem:[%s1 + $0x178] sm:$0xff]
  %v116 = vld [vmem:[%s1 + $0x180] sm:$0xff]
  %v117 = vld [vmem:[%s1 + $0x188] sm:$0xff]
  %v118 = vld [vmem:[%s1 + $0x190] sm:$0xff]
  %v119 = vld [vmem:[%s1 + $0x198] sm:$0xff]
  %v120 = vld [vmem:[%s1 + $0x1a0] sm:$0xff]
  %v121 = vld [vmem:[%s1 + $0x1a8] sm:$0xff]
  %v122 = vld [vmem:[%s1 + $0x1b0] sm:$0xff]
  %v123 = vld [vmem:[%s1 + $0x1b8] sm:$0xff]
  %v124 = vld [vmem:[%s1 + $0x1c0] sm:$0xff]
  %v125 = vld [vmem:[%s1 + $0x1c8] sm:$0xff]
  %v126 = vld [vmem:[%s1 + $0x1d0] sm:$0xff]
  %v127 = vld [vmem:[%s1 + $0x1d8] sm:$0xff]
  %v128 = vld [vmem:[%s1 + $0x1e0] sm:$0xff]
  %v129 = vld [vmem:[%s1 + $0x1e8] sm:$0xff]
  %v130 = vld [vmem:[%s1 + $0x1f0] sm:$0xff]
  %v131 = vld [vmem:[%s1 + $0x1f8] sm:$0xff]
  %v132 = vld [vmem:[%s1 + $0x200] sm:$0xff]
  %v133 = vld [vmem:[%s1 + $0x208] sm:$0xff]
  %v134 = vld [vmem:[%s1 + $0x210] sm:$0xff]
  %v135 = vld [vmem:[%s1 + $0x218] sm:$0xff]
  %v136 = vld [vmem:[%s1 + $0x220] sm:$0xff]
  %v137 = vld [vmem:[%s1 + $0x228] sm:$0xff]
  %v138 = vld [vmem:[%s1 + $0x230] sm:$0xff]
  %v139 = vld [vmem:[%s1 + $0x238] sm:$0xff]
  %v140 = vld [vmem:[%s1 + $0x240] sm:$0xff]
  %v141 = vld [vmem:[%s1 + $0x248] sm:$0xff]
  %v142 = vld [vmem:[%s1 + $0x250] sm:$0xff]
  %v143 = vld [vmem:[%s1 + $0x258] sm:$0xff]
  %v144 = vld [vmem:[%s1 + $0x260] sm:$0xff]
  %v145 = vld [vmem:[%s1 + $0x268] sm:$0xff]
  %v146 = vld [vmem:[%s1 + $0x270] sm:$0xff]
  %v147 = vld [vmem:[%s1 + $0x278] sm:$0xff]
  %v148 = vld [vmem:[%s1 + $0x280] sm:$0xff]
  %v149 = vld [vmem:[%s1 + $0x288] sm:$0xff]
  %v150 = vld [vmem:[%s1 + $0x290] sm:$0xff]
  %v151 = vld [vmem:[%s1 + $0x298] sm:$0xff]
  %v152 = vld [vmem:[%s1 + $0x2a0] sm:$0xff]
  %v153 = vld [vmem:[%s1 + $0x2a8] sm:$0xff]
  %v154 = vld [vmem:[%s1 + $0x2b0] sm:$0xff]
  %v155 = vld [vmem:[%s1 + $0x2b8] sm:$0xff]
  %v156 = vld [vmem:[%s1 + $0x2c0] sm:$0xff]
  %v157 = vld [vmem:[%s1 + $0x2c8] sm:$0xff]
  %v158 = vld [vmem:[%s1 + $0x2d0] sm:$0xff]
  %v159 = vld [vmem:[%s1 + $0x2d8] sm:$0xff]
  %v160 = vld [vmem:[%s1 + $0x2e0] sm:$0xff]
  %v161 = vld [vmem:[%s1 + $0x2e8] sm:$0xff]
  %v162 = vld [vmem:[%s1 + $0x2f0] sm:$0xff]
  %v163 = vld [vmem:[%s1 + $0x2f8] sm:$0xff]
  %v164 = vld [vmem:[%s1 + $0x300] sm:$0xff]
  %v165 = vld [vmem:[%s1 + $0x308] sm:$0xff]
  %v166 = vld [vmem:[%s1 + $0x310] sm:$0xff]
  %v167 = vld [vmem:[%s1 + $0x318] sm:$0xff]
  %v168 = vld [vmem:[%s1 + $0x320] sm:$0xff]
  %v169 = vld [vmem:[%s1 + $0x328] sm:$0xff]
  %v170 = vld [vmem:[%s1 + $0x330] sm:$0xff]
  %v171 = vld [vmem:[%s1 + $0x338] sm:$0xff]
  %v172 = vld [vmem:[%s1 + $0x340] sm:$0xff]
  %v173 = vld [vmem:[%s1 + $0x348] sm:$0xff]
  %v174 = vld [vmem:[%s1 + $0x350] sm:$0xff]
  %v175 = vld [vmem:[%s1 + $0x358] sm:$0xff]
  %v176 = vld [vmem:[%s2] sm:$0xff]
  %v177 = vld [vmem:[%s2 + $0x8] sm:$0xff]
  %v178 = vld [vmem:[%s2 + $0x10] sm:$0xff]
  %v179 = vld [vmem:[%s2 + $0x18] sm:$0xff]
  %v180 = vld [vmem:[%s3] sm:$0x1]
  %v181 = vld [vmem:[%s4] sm:$0x1]
  %v182 = vld [vmem:[%s10] sm:$0xff]
  %v183 = vld [vmem:[%s10 + $0x8] sm:$0xff]
  %v184 = vld [vmem:[%s10 + $0x10] sm:$0xff]
  %v185 = vld [vmem:[%s10 + $0x18] sm:$0xff]
  %v186 = vld [vmem:[%s11] sm:$0x1]
  %v187 = vld [vmem:[%s12] sm:$0x1]
  %v188 = vld [vmem:[%s13] sm:$0x1]
  %v189 = vld [vmem:[%s14] sm:$0xff]
  %v190 = vld [vmem:[%s14 + $0x8] sm:$0xff]
  %v191 = vld [vmem:[%s14 + $0x10] sm:$0xff]
  %v192 = vld [vmem:[%s14 + $0x18] sm:$0xff]
  %v193 = vld [vmem:[%s15] sm:$0x1]
  %v194 = vld [vmem:[%s16] sm:$0xff]
  %v195 = vld [vmem:[%s16 + $0x8] sm:$0xff]
  %v196 = vld [vmem:[%s16 + $0x10] sm:$0xff]
  %v197 = vld [vmem:[%s16 + $0x18] sm:$0xff]
  %v198 = vld [vmem:[%s16 + $0x20] sm:$0xff]
  %v199 = vld [vmem:[%s16 + $0x28] sm:$0xff]
  %v200 = vld [vmem:[%s16 + $0x30] sm:$0xff]
  %v201 = vld [vmem:[%s16 + $0x38] sm:$0xff]
  %v202 = vld [vmem:[%s16 + $0x40] sm:$0xff]
  %v203 = vld [vmem:[%s16 + $0x48] sm:$0xff]
  %v204 = vld [vmem:[%s16 + $0x50] sm:$0xff]
  %v205 = vld [vmem:[%s16 + $0x58] sm:$0xff]
  %v206 = vld [vmem:[%s16 + $0x60] sm:$0xff]
  %v207 = vld [vmem:[%s16 + $0x68] sm:$0xff]
  %v208 = vld [vmem:[%s16 + $0x70] sm:$0xff]
  %v209 = vld [vmem:[%s16 + $0x78] sm:$0xff]
  %v210 = vld [vmem:[%s17] sm:$0x1]
  %v211 = vlaneseq
  %v212 = vand.u32 %v211, 127
  %vm213 = vcmp.ge.s32.totalorder %v212, 0
  %vm214 = vcmp.lt.s32.totalorder %v212, 8
  %vm215 = vmand %vm213, %vm214
  %v216 = vsel %vm215, 1, 0
  %v217 = vcvt.s32.f32 %v216
  %vm218 = vcmp.ge.s32.totalorder %v212, 8
  %vm219 = vcmp.lt.s32.totalorder %v212, 16
  %vm220 = vmand %vm218, %vm219
  %v221 = vsel %vm220, 1, 0
  %v222 = vcvt.s32.f32 %v221
  %vm223 = vcmp.ge.s32.totalorder %v212, 16
  %vm224 = vcmp.lt.s32.totalorder %v212, 24
  %vm225 = vmand %vm223, %vm224
  %v226 = vsel %vm225, 1, 0
  %v227 = vcvt.s32.f32 %v226
  %vm228 = vcmp.ge.s32.totalorder %v212, 24
  %vm229 = vcmp.lt.s32.totalorder %v212, 32
  %vm230 = vmand %vm228, %vm229
  %v231 = vsel %vm230, 1, 0
  %v232 = vcvt.s32.f32 %v231
  %v233 = vlaneseq
  %v234 = vshrl.u32 %v233, 7
  %v235 = vadd.s32 %v234, 8
  %v236 = vadd.s32 %v234, 16
  %v237 = vadd.s32 %v234, 24
  %v238 = vadd.s32 %v234, 32
  %vm239 = vcmp.ge.s32.totalorder %v234, 1
  %vm240 = vcmp.ge.s32.totalorder %v235, 1
  %vm241 = vcmp.ge.s32.totalorder %v236, 1
  %vm242 = vcmp.ge.s32.totalorder %v237, 1
  %vm243 = vcmp.ge.s32.totalorder %v238, 1
  %v244 = vsel %vm239, 1, 0
  %v245 = vsel %vm240, 1, 0
  %v246 = vsel %vm241, 1, 0
  %v247 = vsel %vm242, 1, 0
  %v248 = vsel %vm243, 1, 0
  %v249 = vcvt.s32.f32 %v244
  %v250 = vcvt.s32.f32 %v245
  %v251 = vcvt.s32.f32 %v246
  %v252 = vcvt.s32.f32 %v247
  %v253 = vcvt.s32.f32 %v248
  %vm254 = vcmask 261120
  %v255 = vsel %vm254, %v59, 0.0
  %256 = vadd.xlane.f32.xlu0 %v255
  %v257 = vpop.xlane.xlu0 %256
  %v258 = vsel %vm254, %v60, 0.0
  %259 = vadd.xlane.f32.xlu0 %v258
  %v260 = vpop.xlane.xlu0 %259
  %v261 = vsel %vm254, %v61, 0.0
  %262 = vadd.xlane.f32.xlu0 %v261
  %v263 = vpop.xlane.xlu0 %262
  %v264 = vsel %vm254, %v62, 0.0
  %265 = vadd.xlane.f32.xlu0 %v264
  %v266 = vpop.xlane.xlu0 %265
  %v267 = vsel %vm254, %v63, 0.0
  %268 = vadd.xlane.f32.xlu0 %v267
  %v269 = vpop.xlane.xlu0 %268
  %v270 = vsel %vm254, %v64, 0.0
  %271 = vadd.xlane.f32.xlu0 %v270
  %v272 = vpop.xlane.xlu0 %271
  %v273 = vsel %vm254, %v65, 0.0
  %274 = vadd.xlane.f32.xlu0 %v273
  %v275 = vpop.xlane.xlu0 %274
  %v276 = vsel %vm254, %v66, 0.0
  %277 = vadd.xlane.f32.xlu0 %v276
  %v278 = vpop.xlane.xlu0 %277
  %vm279 = vcmask 254976
  %v280 = vsel %vm279, %v67, 0.0
  %281 = vadd.xlane.f32.xlu0 %v280
  %v282 = vpop.xlane.xlu0 %281
  %v283 = vrcp.pop 32.0
  %v284 = vmul.f32 %v257, %v283
  %v285 = vmul.f32 %v260, %v283
  %v286 = vmul.f32 %v263, %v283
  %v287 = vmul.f32 %v266, %v283
  %v288 = vmul.f32 %v269, %v283
  %v289 = vmul.f32 %v272, %v283
  %v290 = vmul.f32 %v275, %v283
  %v291 = vmul.f32 %v278, %v283
  %v292 = vmul.f32 %v282, %v283
  %v293 = vsub.f32 %v59, %v284
  %v294 = vsub.f32 %v60, %v285
  %v295 = vsub.f32 %v61, %v286
  %v296 = vsub.f32 %v62, %v287
  %v297 = vsub.f32 %v63, %v288
  %v298 = vsub.f32 %v64, %v289
  %v299 = vsub.f32 %v65, %v290
  %v300 = vsub.f32 %v66, %v291
  %v301 = vsub.f32 %v67, %v292
  %v302 = vmul.f32 %v293, %v293
  %v303 = vmul.f32 %v294, %v294
  %v304 = vmul.f32 %v295, %v295
  %v305 = vmul.f32 %v296, %v296
  %v306 = vmul.f32 %v297, %v297
  %v307 = vmul.f32 %v298, %v298
  %v308 = vmul.f32 %v299, %v299
  %v309 = vmul.f32 %v300, %v300
  %v310 = vmul.f32 %v301, %v301
  %v311 = vsel %vm254, %v302, 0.0
  %312 = vadd.xlane.f32.xlu0 %v311
  %v313 = vpop.xlane.xlu0 %312
  %v314 = vsel %vm254, %v303, 0.0
  %315 = vadd.xlane.f32.xlu0 %v314
  %v316 = vpop.xlane.xlu0 %315
  %v317 = vsel %vm254, %v304, 0.0
  %318 = vadd.xlane.f32.xlu0 %v317
  %v319 = vpop.xlane.xlu0 %318
  %v320 = vsel %vm254, %v305, 0.0
  %321 = vadd.xlane.f32.xlu0 %v320
  %v322 = vpop.xlane.xlu0 %321
  %v323 = vsel %vm254, %v306, 0.0
  %324 = vadd.xlane.f32.xlu0 %v323
  %v325 = vpop.xlane.xlu0 %324
  %v326 = vsel %vm254, %v307, 0.0
  %327 = vadd.xlane.f32.xlu0 %v326
  %v328 = vpop.xlane.xlu0 %327
  %v329 = vsel %vm254, %v308, 0.0
  %330 = vadd.xlane.f32.xlu0 %v329
  %v331 = vpop.xlane.xlu0 %330
  %v332 = vsel %vm254, %v309, 0.0
  %333 = vadd.xlane.f32.xlu0 %v332
  %v334 = vpop.xlane.xlu0 %333
  %v335 = vsel %vm279, %v310, 0.0
  %336 = vadd.xlane.f32.xlu0 %v335
  %v337 = vpop.xlane.xlu0 %336
  %v338 = vmul.f32 %v313, %v283
  %v339 = vmul.f32 %v316, %v283
  %v340 = vmul.f32 %v319, %v283
  %v341 = vmul.f32 %v322, %v283
  %v342 = vmul.f32 %v325, %v283
  %v343 = vmul.f32 %v328, %v283
  %v344 = vmul.f32 %v331, %v283
  %v345 = vmul.f32 %v334, %v283
  %v346 = vmul.f32 %v337, %v283
  %v347 = vadd.f32 %v338, 1e-05
  %v348 = vadd.f32 %v339, 1e-05
  %v349 = vadd.f32 %v340, 1e-05
  %v350 = vadd.f32 %v341, 1e-05
  %v351 = vadd.f32 %v342, 1e-05
  %v352 = vadd.f32 %v343, 1e-05
  %v353 = vadd.f32 %v344, 1e-05
  %v354 = vadd.f32 %v345, 1e-05
  %v355 = vadd.f32 %v346, 1e-05
  %v356 = vrsqrt.pop %v347
  %v357 = vrsqrt.pop %v348
  %v358 = vrsqrt.pop %v349
  %v359 = vrsqrt.pop %v350
  %v360 = vrsqrt.pop %v351
  %v361 = vrsqrt.pop %v352
  %v362 = vrsqrt.pop %v353
  %v363 = vrsqrt.pop %v354
  %v364 = vrsqrt.pop %v355
  %v365 = vmul.f32 %v293, %v356
  %v366 = vmul.f32 %v294, %v357
  %v367 = vmul.f32 %v295, %v358
  %v368 = vmul.f32 %v296, %v359
  %v369 = vmul.f32 %v297, %v360
  %v370 = vmul.f32 %v298, %v361
  %v371 = vmul.f32 %v299, %v362
  %v372 = vmul.f32 %v300, %v363
  %v373 = vmul.f32 %v301, %v364
  %v375 = vlaneseq
  %v376 = vshrl.u32 %v375, 7
  %v377 = vsub.s32 0, %v376
  %v378 = vrot.slane %v180, %v377
  %v380 = vmul.f32 %v365, %v378
  %v381 = vmul.f32 %v366, %v378
  %v382 = vmul.f32 %v367, %v378
  %v383 = vmul.f32 %v368, %v378
  %v384 = vmul.f32 %v369, %v378
  %v385 = vmul.f32 %v370, %v378
  %v386 = vmul.f32 %v371, %v378
  %v387 = vmul.f32 %v372, %v378
  %v388 = vmul.f32 %v373, %v378
  %v390 = vlaneseq
  %v391 = vshrl.u32 %v390, 7
  %v392 = vsub.s32 0, %v391
  %v393 = vrot.slane %v181, %v392
  %v395 = vadd.f32 %v380, %v393
  %v396 = vadd.f32 %v381, %v393
  %v397 = vadd.f32 %v382, %v393
  %v398 = vadd.f32 %v383, %v393
  %v399 = vadd.f32 %v384, %v393
  %v400 = vadd.f32 %v385, %v393
  %v401 = vadd.f32 %v386, %v393
  %v402 = vadd.f32 %v387, %v393
  %v403 = vadd.f32 %v388, %v393
  %v404 = vld [vmem:[%s5] sm:$0xff]
  %v405 = vld [vmem:[%s5 + $0x8] sm:$0xff]
  %v406 = vld [vmem:[%s5 + $0x10] sm:$0xff]
  %v407 = vld [vmem:[%s5 + $0x18] sm:$0xff]
  %v408 = vld [vmem:[%s6] sm:$0x1]
  %v409 = vlaneseq
  %v410 = vshrl.u32 %v409, 7
  %v411 = vsub.s32 0, %v410
  %v412 = vrot.slane %v408, %v411
  %v414 = vsel %vm254, %v395, 0
  %v417 = vsel %vm254, %v396, 0
  %v420 = vsel %vm254, %v397, 0
  %v423 = vsel %vm254, %v398, 0
  %v426 = vsel %vm254, %v399, 0
  %v429 = vsel %vm254, %v400, 0
  %v432 = vsel %vm254, %v401, 0
  %v435 = vsel %vm254, %v402, 0
  %v438 = vsel %vm254, %v403, 0
  %440 = vmatprep.subr.mxu0 0.0
  %441 = vmatpush1.msra.mxu0 0.0
  %442 = vmatprep.subr.mxu0 0.0
  %443 = vmatpush1.msra.mxu0 0.0
  %444 = vmatprep.subr.mxu0 0.0
  %445 = vmatpush1.msra.mxu0 0.0
  %446 = vmatprep.subr.mxu0 0.0
  %447 = vmatpush1.msra.mxu0 0.0
  %448 = vmatprep.subr.mxu0 0.0
  %449 = vmatpush1.msra.mxu0 0.0
  %450 = vmatprep.subr.mxu0 0.0
  %451 = vmatpush1.msra.mxu0 0.0
  %452 = vmatprep.subr.mxu0 0.0
  %453 = vmatpush1.msra.mxu0 0.0
  %454 = vmatprep.subr.mxu0 0.0
  %455 = vmatpush1.msra.mxu0 0.0
  %456 = vmatprep.subr.mxu0 0.0
  %457 = vmatpush1.msra.mxu0 0.0
  %458 = vmatprep.subr.mxu0 0.0
  %459 = vmatpush1.msra.mxu0 0.0
  %460 = vmatprep.subr.mxu0 0.0
  %461 = vmatpush1.msra.mxu0 0.0
  %462 = vmatprep.subr.mxu0 0.0
  %463 = vmatpush1.msra.mxu0 0.0
  %464 = vmatprep.subr.mxu0 0.0
  %465 = vmatpush1.msra.mxu0 %v407
  %466 = vmatprep.subr.mxu0 0.0
  %467 = vmatpush1.msra.mxu0 %v406
  %468 = vmatprep.subr.mxu0 0.0
  %469 = vmatpush1.msra.mxu0 %v405
  %470 = vmatprep.subr.mxu0 0.0
  %471 = vmatpush1.msra.mxu0 %v404
  %472 = vmatprep.subr.mxu0 0.0
  %473 = vmatpush2.msra.mxu0 0.0
  %474 = vmatprep.subr.mxu0 0.0
  %475 = vmatpush2.msra.mxu0 0.0
  %476 = vmatprep.subr.mxu0 0.0
  %477 = vmatpush2.msra.mxu0 0.0
  %478 = vmatprep.subr.mxu0 0.0
  %479 = vmatpush2.msra.mxu0 0.0
  %480 = vmatprep.subr.mxu0 0.0
  %481 = vmatpush2.msra.mxu0 0.0
  %482 = vmatprep.subr.mxu0 0.0
  %483 = vmatpush2.msra.mxu0 0.0
  %484 = vmatprep.subr.mxu0 0.0
  %485 = vmatpush2.msra.mxu0 0.0
  %486 = vmatprep.subr.mxu0 0.0
  %487 = vmatpush2.msra.mxu0 0.0
  %488 = vmatprep.subr.mxu0 0.0
  %489 = vmatpush2.msra.mxu0 0.0
  %490 = vmatprep.subr.mxu0 0.0
  %491 = vmatpush2.msra.mxu0 0.0
  %492 = vmatprep.subr.mxu0 0.0
  %493 = vmatpush2.msra.mxu0 0.0
  %494 = vmatprep.subr.mxu0 0.0
  %495 = vmatpush2.msra.mxu0 0.0
  %496 = vmatprep.subr.mxu0 0.0
  %497 = vmatpush2.msra.mxu0 0.0
  %498 = vmatprep.subr.mxu0 0.0
  %499 = vmatpush2.msra.mxu0 0.0
  %500 = vmatprep.subr.mxu0 0.0
  %501 = vmatpush2.msra.mxu0 0.0
  %502 = vmatprep.subr.mxu0 0.0
  %503 = vmatpush2.msra.mxu0 0.0
  %504 = vmatprep.mubr.f32.mxu0 0.0
  %505 = vmatmul.mubr.f32.gmra.mxu0 %v414
  %v506 = vpop.f32.mrf.mxu0
  %v507 = vadd.f32 %v412, %v506
  %v508 = vpop.f32.mrf.mxu0
  %509 = vmatprep.mubr.f32.mxu0 0.0
  %510 = vmatmul.mubr.f32.gmra.mxu0 %v417
  %v511 = vpop.f32.mrf.mxu0
  %v512 = vadd.f32 %v412, %v511
  %v513 = vpop.f32.mrf.mxu0
  %514 = vmatprep.mubr.f32.mxu0 0.0
  %515 = vmatmul.mubr.f32.gmra.mxu0 %v420
  %v516 = vpop.f32.mrf.mxu0
  %v517 = vadd.f32 %v412, %v516
  %v518 = vpop.f32.mrf.mxu0
  %519 = vmatprep.mubr.f32.mxu0 0.0
  %520 = vmatmul.mubr.f32.gmra.mxu0 %v423
  %v521 = vpop.f32.mrf.mxu0
  %v522 = vadd.f32 %v412, %v521
  %v523 = vpop.f32.mrf.mxu0
  %524 = vmatprep.mubr.f32.mxu0 0.0
  %525 = vmatmul.mubr.f32.gmra.mxu0 %v426
  %v526 = vpop.f32.mrf.mxu0
  %v527 = vadd.f32 %v412, %v526
  %v528 = vpop.f32.mrf.mxu0
  %529 = vmatprep.mubr.f32.mxu0 0.0
  %530 = vmatmul.mubr.f32.gmra.mxu0 %v429
  %v531 = vpop.f32.mrf.mxu0
  %v532 = vadd.f32 %v412, %v531
  %v533 = vpop.f32.mrf.mxu0
  %534 = vmatprep.mubr.f32.mxu0 0.0
  %535 = vmatmul.mubr.f32.gmra.mxu0 %v432
  %v536 = vpop.f32.mrf.mxu0
  %v537 = vadd.f32 %v412, %v536
  %v538 = vpop.f32.mrf.mxu0
  %539 = vmatprep.mubr.f32.mxu0 0.0
  %540 = vmatmul.mubr.f32.gmra.mxu0 %v435
  %v541 = vpop.f32.mrf.mxu0
  %v542 = vadd.f32 %v412, %v541
  %v543 = vpop.f32.mrf.mxu0
  %544 = vmatprep.mubr.f32.mxu0 0.0
  %545 = vmatmul.mubr.f32.gmra.mxu0 %v438
  %v546 = vpop.f32.mrf.mxu0
  %v547 = vadd.f32 %v412, %v546
  %v548 = vpop.f32.mrf.mxu0
  %549 = vdwg.mxu0
  %s550 = scalar_lea.vmem %s5, 32
  %v551 = vld [vmem:[%s550] sm:$0xff]
  %v552 = vld [vmem:[%s550 + $0x8] sm:$0xff]
  %v553 = vld [vmem:[%s550 + $0x10] sm:$0xff]
  %v554 = vld [vmem:[%s550 + $0x18] sm:$0xff]
  %v555 = vld [vmem:[%s6 + $0x1] sm:$0x1]
  %v556 = vlaneseq
  %v557 = vshrl.u32 %v556, 7
  %v558 = vsub.s32 0, %v557
  %v559 = vrot.slane %v555, %v558
  %560 = vmatprep.subr.mxu0 0.0
  %561 = vmatpush1.msra.mxu0 0.0
  %562 = vmatprep.subr.mxu0 0.0
  %563 = vmatpush1.msra.mxu0 0.0
  %564 = vmatprep.subr.mxu0 0.0
  %565 = vmatpush1.msra.mxu0 0.0
  %566 = vmatprep.subr.mxu0 0.0
  %567 = vmatpush1.msra.mxu0 0.0
  %568 = vmatprep.subr.mxu0 0.0
  %569 = vmatpush1.msra.mxu0 0.0
  %570 = vmatprep.subr.mxu0 0.0
  %571 = vmatpush1.msra.mxu0 0.0
  %572 = vmatprep.subr.mxu0 0.0
  %573 = vmatpush1.msra.mxu0 0.0
  %574 = vmatprep.subr.mxu0 0.0
  %575 = vmatpush1.msra.mxu0 0.0
  %576 = vmatprep.subr.mxu0 0.0
  %577 = vmatpush1.msra.mxu0 0.0
  %578 = vmatprep.subr.mxu0 0.0
  %579 = vmatpush1.msra.mxu0 0.0
  %580 = vmatprep.subr.mxu0 0.0
  %581 = vmatpush1.msra.mxu0 0.0
  %582 = vmatprep.subr.mxu0 0.0
  %583 = vmatpush1.msra.mxu0 0.0
  %584 = vmatprep.subr.mxu0 0.0
  %585 = vmatpush1.msra.mxu0 %v554
  %586 = vmatprep.subr.mxu0 0.0
  %587 = vmatpush1.msra.mxu0 %v553
  %588 = vmatprep.subr.mxu0 0.0
  %589 = vmatpush1.msra.mxu0 %v552
  %590 = vmatprep.subr.mxu0 0.0
  %591 = vmatpush1.msra.mxu0 %v551
  %592 = vmatprep.subr.mxu0 0.0
  %593 = vmatpush2.msra.mxu0 0.0
  %594 = vmatprep.subr.mxu0 0.0
  %595 = vmatpush2.msra.mxu0 0.0
  %596 = vmatprep.subr.mxu0 0.0
  %597 = vmatpush2.msra.mxu0 0.0
  %598 = vmatprep.subr.mxu0 0.0
  %599 = vmatpush2.msra.mxu0 0.0
  %600 = vmatprep.subr.mxu0 0.0
  %601 = vmatpush2.msra.mxu0 0.0
  %602 = vmatprep.subr.mxu0 0.0
  %603 = vmatpush2.msra.mxu0 0.0
  %604 = vmatprep.subr.mxu0 0.0
  %605 = vmatpush2.msra.mxu0 0.0
  %606 = vmatprep.subr.mxu0 0.0
  %607 = vmatpush2.msra.mxu0 0.0
  %608 = vmatprep.subr.mxu0 0.0
  %609 = vmatpush2.msra.mxu0 0.0
  %610 = vmatprep.subr.mxu0 0.0
  %611 = vmatpush2.msra.mxu0 0.0
  %612 = vmatprep.subr.mxu0 0.0
  %613 = vmatpush2.msra.mxu0 0.0
  %614 = vmatprep.subr.mxu0 0.0
  %615 = vmatpush2.msra.mxu0 0.0
  %616 = vmatprep.subr.mxu0 0.0
  %617 = vmatpush2.msra.mxu0 0.0
  %618 = vmatprep.subr.mxu0 0.0
  %619 = vmatpush2.msra.mxu0 0.0
  %620 = vmatprep.subr.mxu0 0.0
  %621 = vmatpush2.msra.mxu0 0.0
  %622 = vmatprep.subr.mxu0 0.0
  %623 = vmatpush2.msra.mxu0 0.0
  %624 = vmatprep.mubr.f32.mxu0 0.0
  %625 = vmatmul.mubr.f32.gmra.mxu0 %v414
  %v626 = vpop.f32.mrf.mxu0
  %v627 = vadd.f32 %v559, %v626
  %v628 = vpop.f32.mrf.mxu0
  %629 = vmatprep.mubr.f32.mxu0 0.0
  %630 = vmatmul.mubr.f32.gmra.mxu0 %v417
  %v631 = vpop.f32.mrf.mxu0
  %v632 = vadd.f32 %v559, %v631
  %v633 = vpop.f32.mrf.mxu0
  %634 = vmatprep.mubr.f32.mxu0 0.0
  %635 = vmatmul.mubr.f32.gmra.mxu0 %v420
  %v636 = vpop.f32.mrf.mxu0
  %v637 = vadd.f32 %v559, %v636
  %v638 = vpop.f32.mrf.mxu0
  %639 = vmatprep.mubr.f32.mxu0 0.0
  %640 = vmatmul.mubr.f32.gmra.mxu0 %v423
  %v641 = vpop.f32.mrf.mxu0
  %v642 = vadd.f32 %v559, %v641
  %v643 = vpop.f32.mrf.mxu0
  %644 = vmatprep.mubr.f32.mxu0 0.0
  %645 = vmatmul.mubr.f32.gmra.mxu0 %v426
  %v646 = vpop.f32.mrf.mxu0
  %v647 = vadd.f32 %v559, %v646
  %v648 = vpop.f32.mrf.mxu0
  %649 = vmatprep.mubr.f32.mxu0 0.0
  %650 = vmatmul.mubr.f32.gmra.mxu0 %v429
  %v651 = vpop.f32.mrf.mxu0
  %v652 = vadd.f32 %v559, %v651
  %v653 = vpop.f32.mrf.mxu0
  %654 = vmatprep.mubr.f32.mxu0 0.0
  %655 = vmatmul.mubr.f32.gmra.mxu0 %v432
  %v656 = vpop.f32.mrf.mxu0
  %v657 = vadd.f32 %v559, %v656
  %v658 = vpop.f32.mrf.mxu0
  %659 = vmatprep.mubr.f32.mxu0 0.0
  %660 = vmatmul.mubr.f32.gmra.mxu0 %v435
  %v661 = vpop.f32.mrf.mxu0
  %v662 = vadd.f32 %v559, %v661
  %v663 = vpop.f32.mrf.mxu0
  %664 = vmatprep.mubr.f32.mxu0 0.0
  %665 = vmatmul.mubr.f32.gmra.mxu0 %v438
  %v666 = vpop.f32.mrf.mxu0
  %v667 = vadd.f32 %v559, %v666
  %v668 = vpop.f32.mrf.mxu0
  %669 = vdwg.mxu0
  %s670 = scalar_lea.vmem %s5, 64
  %v671 = vld [vmem:[%s670] sm:$0xff]
  %v672 = vld [vmem:[%s670 + $0x8] sm:$0xff]
  %v673 = vld [vmem:[%s670 + $0x10] sm:$0xff]
  %v674 = vld [vmem:[%s670 + $0x18] sm:$0xff]
  %v675 = vld [vmem:[%s6 + $0x2] sm:$0x1]
  %v676 = vlaneseq
  %v677 = vshrl.u32 %v676, 7
  %v678 = vsub.s32 0, %v677
  %v679 = vrot.slane %v675, %v678
  %680 = vmatprep.subr.mxu0 0.0
  %681 = vmatpush1.msra.mxu0 0.0
  %682 = vmatprep.subr.mxu0 0.0
  %683 = vmatpush1.msra.mxu0 0.0
  %684 = vmatprep.subr.mxu0 0.0
  %685 = vmatpush1.msra.mxu0 0.0
  %686 = vmatprep.subr.mxu0 0.0
  %687 = vmatpush1.msra.mxu0 0.0
  %688 = vmatprep.subr.mxu0 0.0
  %689 = vmatpush1.msra.mxu0 0.0
  %690 = vmatprep.subr.mxu0 0.0
  %691 = vmatpush1.msra.mxu0 0.0
  %692 = vmatprep.subr.mxu0 0.0
  %693 = vmatpush1.msra.mxu0 0.0
  %694 = vmatprep.subr.mxu0 0.0
  %695 = vmatpush1.msra.mxu0 0.0
  %696 = vmatprep.subr.mxu0 0.0
  %697 = vmatpush1.msra.mxu0 0.0
  %698 = vmatprep.subr.mxu0 0.0
  %699 = vmatpush1.msra.mxu0 0.0
  %700 = vmatprep.subr.mxu0 0.0
  %701 = vmatpush1.msra.mxu0 0.0
  %702 = vmatprep.subr.mxu0 0.0
  %703 = vmatpush1.msra.mxu0 0.0
  %704 = vmatprep.subr.mxu0 0.0
  %705 = vmatpush1.msra.mxu0 %v674
  %706 = vmatprep.subr.mxu0 0.0
  %707 = vmatpush1.msra.mxu0 %v673
  %708 = vmatprep.subr.mxu0 0.0
  %709 = vmatpush1.msra.mxu0 %v672
  %710 = vmatprep.subr.mxu0 0.0
  %711 = vmatpush1.msra.mxu0 %v671
  %712 = vmatprep.subr.mxu0 0.0
  %713 = vmatpush2.msra.mxu0 0.0
  %714 = vmatprep.subr.mxu0 0.0
  %715 = vmatpush2.msra.mxu0 0.0
  %716 = vmatprep.subr.mxu0 0.0
  %717 = vmatpush2.msra.mxu0 0.0
  %718 = vmatprep.subr.mxu0 0.0
  %719 = vmatpush2.msra.mxu0 0.0
  %720 = vmatprep.subr.mxu0 0.0
  %721 = vmatpush2.msra.mxu0 0.0
  %722 = vmatprep.subr.mxu0 0.0
  %723 = vmatpush2.msra.mxu0 0.0
  %724 = vmatprep.subr.mxu0 0.0
  %725 = vmatpush2.msra.mxu0 0.0
  %726 = vmatprep.subr.mxu0 0.0
  %727 = vmatpush2.msra.mxu0 0.0
  %728 = vmatprep.subr.mxu0 0.0
  %729 = vmatpush2.msra.mxu0 0.0
  %730 = vmatprep.subr.mxu0 0.0
  %731 = vmatpush2.msra.mxu0 0.0
  %732 = vmatprep.subr.mxu0 0.0
  %733 = vmatpush2.msra.mxu0 0.0
  %734 = vmatprep.subr.mxu0 0.0
  %735 = vmatpush2.msra.mxu0 0.0
  %736 = vmatprep.subr.mxu0 0.0
  %737 = vmatpush2.msra.mxu0 0.0
  %738 = vmatprep.subr.mxu0 0.0
  %739 = vmatpush2.msra.mxu0 0.0
  %740 = vmatprep.subr.mxu0 0.0
  %741 = vmatpush2.msra.mxu0 0.0
  %742 = vmatprep.subr.mxu0 0.0
  %743 = vmatpush2.msra.mxu0 0.0
  %744 = vmatprep.mubr.f32.mxu0 0.0
  %745 = vmatmul.mubr.f32.gmra.mxu0 %v414
  %v746 = vpop.f32.mrf.mxu0
  %v747 = vadd.f32 %v679, %v746
  %v748 = vpop.f32.mrf.mxu0
  %749 = vmatprep.mubr.f32.mxu0 0.0
  %750 = vmatmul.mubr.f32.gmra.mxu0 %v417
  %v751 = vpop.f32.mrf.mxu0
  %v752 = vadd.f32 %v679, %v751
  %v753 = vpop.f32.mrf.mxu0
  %754 = vmatprep.mubr.f32.mxu0 0.0
  %755 = vmatmul.mubr.f32.gmra.mxu0 %v420
  %v756 = vpop.f32.mrf.mxu0
  %v757 = vadd.f32 %v679, %v756
  %v758 = vpop.f32.mrf.mxu0
  %759 = vmatprep.mubr.f32.mxu0 0.0
  %760 = vmatmul.mubr.f32.gmra.mxu0 %v423
  %v761 = vpop.f32.mrf.mxu0
  %v762 = vadd.f32 %v679, %v761
  %v763 = vpop.f32.mrf.mxu0
  %764 = vmatprep.mubr.f32.mxu0 0.0
  %765 = vmatmul.mubr.f32.gmra.mxu0 %v426
  %v766 = vpop.f32.mrf.mxu0
  %v767 = vadd.f32 %v679, %v766
  %v768 = vpop.f32.mrf.mxu0
  %769 = vmatprep.mubr.f32.mxu0 0.0
  %770 = vmatmul.mubr.f32.gmra.mxu0 %v429
  %v771 = vpop.f32.mrf.mxu0
  %v772 = vadd.f32 %v679, %v771
  %v773 = vpop.f32.mrf.mxu0
  %774 = vmatprep.mubr.f32.mxu0 0.0
  %775 = vmatmul.mubr.f32.gmra.mxu0 %v432
  %v776 = vpop.f32.mrf.mxu0
  %v777 = vadd.f32 %v679, %v776
  %v778 = vpop.f32.mrf.mxu0
  %779 = vmatprep.mubr.f32.mxu0 0.0
  %780 = vmatmul.mubr.f32.gmra.mxu0 %v435
  %v781 = vpop.f32.mrf.mxu0
  %v782 = vadd.f32 %v679, %v781
  %v783 = vpop.f32.mrf.mxu0
  %784 = vmatprep.mubr.f32.mxu0 0.0
  %785 = vmatmul.mubr.f32.gmra.mxu0 %v438
  %v786 = vpop.f32.mrf.mxu0
  %v787 = vadd.f32 %v679, %v786
  %v788 = vpop.f32.mrf.mxu0
  %789 = vdwg.mxu0
  %v790 = vld [vmem:[%s7] sm:$0xff]
  %v791 = vld [vmem:[%s7 + $0x8] sm:$0xff]
  %v792 = vld [vmem:[%s7 + $0x10] sm:$0xff]
  %v793 = vld [vmem:[%s7 + $0x18] sm:$0x7]
  %s794 = scalar_lea.vmem %s7, 32
  %v795 = vld [vmem:[%s794] sm:$0xff]
  %v796 = vld [vmem:[%s794 + $0x8] sm:$0xff]
  %v797 = vld [vmem:[%s794 + $0x10] sm:$0xff]
  %v798 = vld [vmem:[%s794 + $0x18] sm:$0x7]
  %s799 = scalar_lea.vmem %s7, 64
  %v800 = vld [vmem:[%s799] sm:$0xff]
  %v801 = vld [vmem:[%s799 + $0x8] sm:$0xff]
  %v802 = vld [vmem:[%s799 + $0x10] sm:$0xff]
  %v803 = vld [vmem:[%s799 + $0x18] sm:$0x7]
  %v804 = vld [vmem:[%s8] sm:$0x1]
  %v805 = vld [vmem:[%s8 + $0x1] sm:$0x1]
  %v806 = vld [vmem:[%s8 + $0x2] sm:$0x1]
  %v807 = vld [vmem:[%s9] sm:$0x1]
  %v808 = vld [vmem:[%s9 + $0x1] sm:$0x1]
  %v809 = vld [vmem:[%s9 + $0x2] sm:$0x1]
  %vm815 = vcmask 1046528
  %v816 = vrot.slane %v507, 1
  %v817 = vrot.slane %v512, 1
  %v818 = vsel %vm815, %v816, %v817
  %v819 = vrot.slane %v517, 1
  %v820 = vsel %vm815, %v817, %v819
  %v821 = vrot.slane %v522, 1
  %v822 = vsel %vm815, %v819, %v821
  %v823 = vrot.slane %v527, 1
  %v824 = vsel %vm815, %v821, %v823
  %v830 = vsel %vm254, %v68, 0
  %v833 = vsel %vm254, %v69, 0
  %v836 = vsel %vm254, %v70, 0
  %v839 = vsel %vm254, %v71, 0
  %v842 = vsel %vm254, %v72, 0
  %v845 = vsel %vm254, %v73, 0
  %v848 = vsel %vm254, %v74, 0
  %v851 = vsel %vm254, %v75, 0
  %v854 = vsel %vm254, %v76, 0
  %v857 = vsel %vm254, %v77, 0
  %v860 = vsel %vm254, %v78, 0
  %v863 = vsel %vm254, %v79, 0
  %v866 = vsel %vm254, %v80, 0
  %v869 = vsel %vm254, %v81, 0
  %v872 = vsel %vm254, %v82, 0
  %v875 = vsel %vm254, %v83, 0
  %v878 = vsel %vm254, %v84, 0
  %v881 = vsel %vm254, %v85, 0
  %v884 = vsel %vm254, %v86, 0
  %v887 = vsel %vm254, %v87, 0
  %v890 = vsel %vm254, %v88, 0
  %v893 = vsel %vm254, %v89, 0
  %v896 = vsel %vm254, %v90, 0
  %v899 = vsel %vm254, %v91, 0
  %v902 = vsel %vm254, %v92, 0
  %v905 = vsel %vm254, %v93, 0
  %v908 = vsel %vm254, %v94, 0
  %v911 = vsel %vm254, %v95, 0
  %v914 = vsel %vm254, %v96, 0
  %v917 = vsel %vm254, %v97, 0
  %v920 = vsel %vm254, %v98, 0
  %v923 = vsel %vm254, %v99, 0
  %v926 = vsel %vm254, %v100, 0
  %v929 = vsel %vm254, %v101, 0
  %v932 = vsel %vm254, %v102, 0
  %v935 = vsel %vm254, %v103, 0
  %v938 = vsel %vm254, %v104, 0
  %v941 = vsel %vm254, %v105, 0
  %v944 = vsel %vm254, %v106, 0
  %v947 = vsel %vm254, %v107, 0
  %v950 = vsel %vm254, %v108, 0
  %v953 = vsel %vm254, %v109, 0
  %v956 = vsel %vm254, %v110, 0
  %v959 = vsel %vm254, %v111, 0
  %v962 = vsel %vm254, %v112, 0
  %v965 = vsel %vm254, %v113, 0
  %v968 = vsel %vm254, %v114, 0
  %v971 = vsel %vm254, %v115, 0
  %v974 = vsel %vm254, %v116, 0
  %v977 = vsel %vm254, %v117, 0
  %v980 = vsel %vm254, %v118, 0
  %v983 = vsel %vm254, %v119, 0
  %v986 = vsel %vm254, %v120, 0
  %v989 = vsel %vm254, %v121, 0
  %v992 = vsel %vm254, %v122, 0
  %v995 = vsel %vm254, %v123, 0
  %v998 = vsel %vm254, %v124, 0
  %v1001 = vsel %vm254, %v125, 0
  %v1004 = vsel %vm254, %v126, 0
  %v1007 = vsel %vm254, %v127, 0
  %v1010 = vsel %vm254, %v128, 0
  %v1013 = vsel %vm254, %v129, 0
  %v1016 = vsel %vm254, %v130, 0
  %v1019 = vsel %vm254, %v131, 0
  %v1022 = vsel %vm254, %v132, 0
  %v1025 = vsel %vm254, %v133, 0
  %v1028 = vsel %vm254, %v134, 0
  %v1031 = vsel %vm254, %v135, 0
  %v1034 = vsel %vm254, %v136, 0
  %v1037 = vsel %vm254, %v137, 0
  %v1040 = vsel %vm254, %v138, 0
  %v1043 = vsel %vm254, %v139, 0
  %v1046 = vsel %vm254, %v140, 0
  %v1049 = vsel %vm254, %v141, 0
  %v1052 = vsel %vm254, %v142, 0
  %v1055 = vsel %vm254, %v143, 0
  %v1058 = vsel %vm254, %v144, 0
  %v1061 = vsel %vm254, %v145, 0
  %v1064 = vsel %vm254, %v146, 0
  %v1067 = vsel %vm254, %v147, 0
  %v1070 = vsel %vm254, %v148, 0
  %v1073 = vsel %vm254, %v149, 0
  %v1076 = vsel %vm254, %v150, 0
  %v1079 = vsel %vm254, %v151, 0
  %v1082 = vsel %vm254, %v152, 0
  %v1085 = vsel %vm254, %v153, 0
  %v1088 = vsel %vm254, %v154, 0
  %v1091 = vsel %vm254, %v155, 0
  %v1094 = vsel %vm254, %v156, 0
  %v1097 = vsel %vm254, %v157, 0
  %v1100 = vsel %vm254, %v158, 0
  %v1103 = vsel %vm254, %v159, 0
  %v1106 = vsel %vm254, %v160, 0
  %v1109 = vsel %vm254, %v161, 0
  %v1112 = vsel %vm254, %v162, 0
  %v1115 = vsel %vm254, %v163, 0
  %v1118 = vsel %vm254, %v164, 0
  %v1121 = vsel %vm254, %v165, 0
  %v1124 = vsel %vm254, %v166, 0
  %v1127 = vsel %vm254, %v167, 0
  %v1130 = vsel %vm254, %v168, 0
  %v1133 = vsel %vm254, %v169, 0
  %v1136 = vsel %vm254, %v170, 0
  %v1139 = vsel %vm254, %v171, 0
  %v1142 = vsel %vm254, %v172, 0
  %v1145 = vsel %vm254, %v173, 0
  %v1148 = vsel %vm254, %v174, 0
  %v1151 = vsel %vm254, %v175, 0
  %1153 = vmatprep.subr.mxu0 0.0
  %1154 = vmatpush1.msra.mxu0 0.0
  %1155 = vmatprep.subr.mxu0 0.0
  %1156 = vmatpush1.msra.mxu0 0.0
  %1157 = vmatprep.subr.mxu0 0.0
  %1158 = vmatpush1.msra.mxu0 0.0
  %1159 = vmatprep.subr.mxu0 0.0
  %1160 = vmatpush1.msra.mxu0 0.0
  %1161 = vmatprep.subr.mxu0 0.0
  %1162 = vmatpush1.msra.mxu0 0.0
  %1163 = vmatprep.subr.mxu0 0.0
  %1164 = vmatpush1.msra.mxu0 0.0
  %1165 = vmatprep.subr.mxu0 0.0
  %1166 = vmatpush1.msra.mxu0 0.0
  %1167 = vmatprep.subr.mxu0 0.0
  %1168 = vmatpush1.msra.mxu0 0.0
  %1169 = vmatprep.subr.mxu0 0.0
  %1170 = vmatpush1.msra.mxu0 0.0
  %1171 = vmatprep.subr.mxu0 0.0
  %1172 = vmatpush1.msra.mxu0 0.0
  %1173 = vmatprep.subr.mxu0 0.0
  %1174 = vmatpush1.msra.mxu0 0.0
  %1175 = vmatprep.subr.mxu0 0.0
  %1176 = vmatpush1.msra.mxu0 0.0
  %1177 = vmatprep.subr.mxu0 0.0
  %1178 = vmatpush1.msra.mxu0 %v824
  %1179 = vmatprep.subr.mxu0 0.0
  %1180 = vmatpush1.msra.mxu0 %v822
  %1181 = vmatprep.subr.mxu0 0.0
  %1182 = vmatpush1.msra.mxu0 %v820
  %1183 = vmatprep.subr.mxu0 0.0
  %1184 = vmatpush1.msra.mxu0 %v818
  %1185 = vmatprep.subr.mxu0 0.0
  %1186 = vmatpush2.msra.mxu0 0.0
  %1187 = vmatprep.subr.mxu0 0.0
  %1188 = vmatpush2.msra.mxu0 0.0
  %1189 = vmatprep.subr.mxu0 0.0
  %1190 = vmatpush2.msra.mxu0 0.0
  %1191 = vmatprep.subr.mxu0 0.0
  %1192 = vmatpush2.msra.mxu0 0.0
  %1193 = vmatprep.subr.mxu0 0.0
  %1194 = vmatpush2.msra.mxu0 0.0
  %1195 = vmatprep.subr.mxu0 0.0
  %1196 = vmatpush2.msra.mxu0 0.0
  %1197 = vmatprep.subr.mxu0 0.0
  %1198 = vmatpush2.msra.mxu0 0.0
  %1199 = vmatprep.subr.mxu0 0.0
  %1200 = vmatpush2.msra.mxu0 0.0
  %1201 = vmatprep.subr.mxu0 0.0
  %1202 = vmatpush2.msra.mxu0 0.0
  %1203 = vmatprep.subr.mxu0 0.0
  %1204 = vmatpush2.msra.mxu0 0.0
  %1205 = vmatprep.subr.mxu0 0.0
  %1206 = vmatpush2.msra.mxu0 0.0
  %1207 = vmatprep.subr.mxu0 0.0
  %1208 = vmatpush2.msra.mxu0 0.0
  %1209 = vmatprep.subr.mxu0 0.0
  %1210 = vmatpush2.msra.mxu0 0.0
  %1211 = vmatprep.subr.mxu0 0.0
  %1212 = vmatpush2.msra.mxu0 0.0
  %1213 = vmatprep.subr.mxu0 0.0
  %1214 = vmatpush2.msra.mxu0 0.0
  %1215 = vmatprep.subr.mxu0 0.0
  %1216 = vmatpush2.msra.mxu0 0.0
  %1217 = vmatprep.mubr.f32.mxu0 0.0
  %1218 = vmatmul.mubr.f32.gmra.mxu0 %v830
  %v1219 = vpop.f32.mrf.mxu0
  %v1220 = vadd.f32 0.0, %v1219
  %v1221 = vpop.f32.mrf.mxu0
  %1222 = vmatprep.mubr.f32.mxu0 0.0
  %1223 = vmatmul.mubr.f32.gmra.mxu0 %v833
  %v1224 = vpop.f32.mrf.mxu0
  %v1225 = vadd.f32 0.0, %v1224
  %v1226 = vpop.f32.mrf.mxu0
  %1227 = vmatprep.mubr.f32.mxu0 0.0
  %1228 = vmatmul.mubr.f32.gmra.mxu0 %v836
  %v1229 = vpop.f32.mrf.mxu0
  %v1230 = vadd.f32 0.0, %v1229
  %v1231 = vpop.f32.mrf.mxu0
  %1232 = vmatprep.mubr.f32.mxu0 0.0
  %1233 = vmatmul.mubr.f32.gmra.mxu0 %v839
  %v1234 = vpop.f32.mrf.mxu0
  %v1235 = vadd.f32 0.0, %v1234
  %v1236 = vpop.f32.mrf.mxu0
  %1237 = vmatprep.mubr.f32.mxu0 0.0
  %1238 = vmatmul.mubr.f32.gmra.mxu0 %v842
  %v1239 = vpop.f32.mrf.mxu0
  %v1240 = vadd.f32 0.0, %v1239
  %v1241 = vpop.f32.mrf.mxu0
  %1242 = vmatprep.mubr.f32.mxu0 0.0
  %1243 = vmatmul.mubr.f32.gmra.mxu0 %v845
  %v1244 = vpop.f32.mrf.mxu0
  %v1245 = vadd.f32 0.0, %v1244
  %v1246 = vpop.f32.mrf.mxu0
  %1247 = vmatprep.mubr.f32.mxu0 0.0
  %1248 = vmatmul.mubr.f32.gmra.mxu0 %v848
  %v1249 = vpop.f32.mrf.mxu0
  %v1250 = vadd.f32 0.0, %v1249
  %v1251 = vpop.f32.mrf.mxu0
  %1252 = vmatprep.mubr.f32.mxu0 0.0
  %1253 = vmatmul.mubr.f32.gmra.mxu0 %v851
  %v1254 = vpop.f32.mrf.mxu0
  %v1255 = vadd.f32 0.0, %v1254
  %v1256 = vpop.f32.mrf.mxu0
  %1257 = vmatprep.mubr.f32.mxu0 0.0
  %1258 = vmatmul.mubr.f32.gmra.mxu0 %v854
  %v1259 = vpop.f32.mrf.mxu0
  %v1260 = vadd.f32 0.0, %v1259
  %v1261 = vpop.f32.mrf.mxu0
  %1262 = vmatprep.mubr.f32.mxu0 0.0
  %1263 = vmatmul.mubr.f32.gmra.mxu0 %v857
  %v1264 = vpop.f32.mrf.mxu0
  %v1265 = vadd.f32 0.0, %v1264
  %v1266 = vpop.f32.mrf.mxu0
  %1267 = vmatprep.mubr.f32.mxu0 0.0
  %1268 = vmatmul.mubr.f32.gmra.mxu0 %v860
  %v1269 = vpop.f32.mrf.mxu0
  %v1270 = vadd.f32 0.0, %v1269
  %v1271 = vpop.f32.mrf.mxu0
  %1272 = vmatprep.mubr.f32.mxu0 0.0
  %1273 = vmatmul.mubr.f32.gmra.mxu0 %v863
  %v1274 = vpop.f32.mrf.mxu0
  %v1275 = vadd.f32 0.0, %v1274
  %v1276 = vpop.f32.mrf.mxu0
  %1277 = vmatprep.mubr.f32.mxu0 0.0
  %1278 = vmatmul.mubr.f32.gmra.mxu0 %v866
  %v1279 = vpop.f32.mrf.mxu0
  %v1280 = vadd.f32 0.0, %v1279
  %v1281 = vpop.f32.mrf.mxu0
  %1282 = vmatprep.mubr.f32.mxu0 0.0
  %1283 = vmatmul.mubr.f32.gmra.mxu0 %v869
  %v1284 = vpop.f32.mrf.mxu0
  %v1285 = vadd.f32 0.0, %v1284
  %v1286 = vpop.f32.mrf.mxu0
  %1287 = vmatprep.mubr.f32.mxu0 0.0
  %1288 = vmatmul.mubr.f32.gmra.mxu0 %v872
  %v1289 = vpop.f32.mrf.mxu0
  %v1290 = vadd.f32 0.0, %v1289
  %v1291 = vpop.f32.mrf.mxu0
  %1292 = vmatprep.mubr.f32.mxu0 0.0
  %1293 = vmatmul.mubr.f32.gmra.mxu0 %v875
  %v1294 = vpop.f32.mrf.mxu0
  %v1295 = vadd.f32 0.0, %v1294
  %v1296 = vpop.f32.mrf.mxu0
  %1297 = vmatprep.mubr.f32.mxu0 0.0
  %1298 = vmatmul.mubr.f32.gmra.mxu0 %v878
  %v1299 = vpop.f32.mrf.mxu0
  %v1300 = vadd.f32 0.0, %v1299
  %v1301 = vpop.f32.mrf.mxu0
  %1302 = vmatprep.mubr.f32.mxu0 0.0
  %1303 = vmatmul.mubr.f32.gmra.mxu0 %v881
  %v1304 = vpop.f32.mrf.mxu0
  %v1305 = vadd.f32 0.0, %v1304
  %v1306 = vpop.f32.mrf.mxu0
  %1307 = vmatprep.mubr.f32.mxu0 0.0
  %1308 = vmatmul.mubr.f32.gmra.mxu0 %v884
  %v1309 = vpop.f32.mrf.mxu0
  %v1310 = vadd.f32 0.0, %v1309
  %v1311 = vpop.f32.mrf.mxu0
  %1312 = vmatprep.mubr.f32.mxu0 0.0
  %1313 = vmatmul.mubr.f32.gmra.mxu0 %v887
  %v1314 = vpop.f32.mrf.mxu0
  %v1315 = vadd.f32 0.0, %v1314
  %v1316 = vpop.f32.mrf.mxu0
  %1317 = vmatprep.mubr.f32.mxu0 0.0
  %1318 = vmatmul.mubr.f32.gmra.mxu0 %v890
  %v1319 = vpop.f32.mrf.mxu0
  %v1320 = vadd.f32 0.0, %v1319
  %v1321 = vpop.f32.mrf.mxu0
  %1322 = vmatprep.mubr.f32.mxu0 0.0
  %1323 = vmatmul.mubr.f32.gmra.mxu0 %v893
  %v1324 = vpop.f32.mrf.mxu0
  %v1325 = vadd.f32 0.0, %v1324
  %v1326 = vpop.f32.mrf.mxu0
  %1327 = vmatprep.mubr.f32.mxu0 0.0
  %1328 = vmatmul.mubr.f32.gmra.mxu0 %v896
  %v1329 = vpop.f32.mrf.mxu0
  %v1330 = vadd.f32 0.0, %v1329
  %v1331 = vpop.f32.mrf.mxu0
  %1332 = vmatprep.mubr.f32.mxu0 0.0
  %1333 = vmatmul.mubr.f32.gmra.mxu0 %v899
  %v1334 = vpop.f32.mrf.mxu0
  %v1335 = vadd.f32 0.0, %v1334
  %v1336 = vpop.f32.mrf.mxu0
  %1337 = vmatprep.mubr.f32.mxu0 0.0
  %1338 = vmatmul.mubr.f32.gmra.mxu0 %v902
  %v1339 = vpop.f32.mrf.mxu0
  %v1340 = vadd.f32 0.0, %v1339
  %v1341 = vpop.f32.mrf.mxu0
  %1342 = vmatprep.mubr.f32.mxu0 0.0
  %1343 = vmatmul.mubr.f32.gmra.mxu0 %v905
  %v1344 = vpop.f32.mrf.mxu0
  %v1345 = vadd.f32 0.0, %v1344
  %v1346 = vpop.f32.mrf.mxu0
  %1347 = vmatprep.mubr.f32.mxu0 0.0
  %1348 = vmatmul.mubr.f32.gmra.mxu0 %v908
  %v1349 = vpop.f32.mrf.mxu0
  %v1350 = vadd.f32 0.0, %v1349
  %v1351 = vpop.f32.mrf.mxu0
  %1352 = vmatprep.mubr.f32.mxu0 0.0
  %1353 = vmatmul.mubr.f32.gmra.mxu0 %v911
  %v1354 = vpop.f32.mrf.mxu0
  %v1355 = vadd.f32 0.0, %v1354
  %v1356 = vpop.f32.mrf.mxu0
  %1357 = vmatprep.mubr.f32.mxu0 0.0
  %1358 = vmatmul.mubr.f32.gmra.mxu0 %v914
  %v1359 = vpop.f32.mrf.mxu0
  %v1360 = vadd.f32 0.0, %v1359
  %v1361 = vpop.f32.mrf.mxu0
  %1362 = vmatprep.mubr.f32.mxu0 0.0
  %1363 = vmatmul.mubr.f32.gmra.mxu0 %v917
  %v1364 = vpop.f32.mrf.mxu0
  %v1365 = vadd.f32 0.0, %v1364
  %v1366 = vpop.f32.mrf.mxu0
  %1367 = vmatprep.mubr.f32.mxu0 0.0
  %1368 = vmatmul.mubr.f32.gmra.mxu0 %v920
  %v1369 = vpop.f32.mrf.mxu0
  %v1370 = vadd.f32 0.0, %v1369
  %v1371 = vpop.f32.mrf.mxu0
  %1372 = vmatprep.mubr.f32.mxu0 0.0
  %1373 = vmatmul.mubr.f32.gmra.mxu0 %v923
  %v1374 = vpop.f32.mrf.mxu0
  %v1375 = vadd.f32 0.0, %v1374
  %v1376 = vpop.f32.mrf.mxu0
  %1377 = vmatprep.mubr.f32.mxu0 0.0
  %1378 = vmatmul.mubr.f32.gmra.mxu0 %v926
  %v1379 = vpop.f32.mrf.mxu0
  %v1380 = vadd.f32 0.0, %v1379
  %v1381 = vpop.f32.mrf.mxu0
  %1382 = vmatprep.mubr.f32.mxu0 0.0
  %1383 = vmatmul.mubr.f32.gmra.mxu0 %v929
  %v1384 = vpop.f32.mrf.mxu0
  %v1385 = vadd.f32 0.0, %v1384
  %v1386 = vpop.f32.mrf.mxu0
  %1387 = vmatprep.mubr.f32.mxu0 0.0
  %1388 = vmatmul.mubr.f32.gmra.mxu0 %v932
  %v1389 = vpop.f32.mrf.mxu0
  %v1390 = vadd.f32 0.0, %v1389
  %v1391 = vpop.f32.mrf.mxu0
  %1392 = vmatprep.mubr.f32.mxu0 0.0
  %1393 = vmatmul.mubr.f32.gmra.mxu0 %v935
  %v1394 = vpop.f32.mrf.mxu0
  %v1395 = vadd.f32 0.0, %v1394
  %v1396 = vpop.f32.mrf.mxu0
  %1397 = vmatprep.mubr.f32.mxu0 0.0
  %1398 = vmatmul.mubr.f32.gmra.mxu0 %v938
  %v1399 = vpop.f32.mrf.mxu0
  %v1400 = vadd.f32 0.0, %v1399
  %v1401 = vpop.f32.mrf.mxu0
  %1402 = vmatprep.mubr.f32.mxu0 0.0
  %1403 = vmatmul.mubr.f32.gmra.mxu0 %v941
  %v1404 = vpop.f32.mrf.mxu0
  %v1405 = vadd.f32 0.0, %v1404
  %v1406 = vpop.f32.mrf.mxu0
  %1407 = vmatprep.mubr.f32.mxu0 0.0
  %1408 = vmatmul.mubr.f32.gmra.mxu0 %v944
  %v1409 = vpop.f32.mrf.mxu0
  %v1410 = vadd.f32 0.0, %v1409
  %v1411 = vpop.f32.mrf.mxu0
  %1412 = vmatprep.mubr.f32.mxu0 0.0
  %1413 = vmatmul.mubr.f32.gmra.mxu0 %v947
  %v1414 = vpop.f32.mrf.mxu0
  %v1415 = vadd.f32 0.0, %v1414
  %v1416 = vpop.f32.mrf.mxu0
  %1417 = vmatprep.mubr.f32.mxu0 0.0
  %1418 = vmatmul.mubr.f32.gmra.mxu0 %v950
  %v1419 = vpop.f32.mrf.mxu0
  %v1420 = vadd.f32 0.0, %v1419
  %v1421 = vpop.f32.mrf.mxu0
  %1422 = vmatprep.mubr.f32.mxu0 0.0
  %1423 = vmatmul.mubr.f32.gmra.mxu0 %v953
  %v1424 = vpop.f32.mrf.mxu0
  %v1425 = vadd.f32 0.0, %v1424
  %v1426 = vpop.f32.mrf.mxu0
  %1427 = vmatprep.mubr.f32.mxu0 0.0
  %1428 = vmatmul.mubr.f32.gmra.mxu0 %v956
  %v1429 = vpop.f32.mrf.mxu0
  %v1430 = vadd.f32 0.0, %v1429
  %v1431 = vpop.f32.mrf.mxu0
  %1432 = vmatprep.mubr.f32.mxu0 0.0
  %1433 = vmatmul.mubr.f32.gmra.mxu0 %v959
  %v1434 = vpop.f32.mrf.mxu0
  %v1435 = vadd.f32 0.0, %v1434
  %v1436 = vpop.f32.mrf.mxu0
  %1437 = vmatprep.mubr.f32.mxu0 0.0
  %1438 = vmatmul.mubr.f32.gmra.mxu0 %v962
  %v1439 = vpop.f32.mrf.mxu0
  %v1440 = vadd.f32 0.0, %v1439
  %v1441 = vpop.f32.mrf.mxu0
  %1442 = vmatprep.mubr.f32.mxu0 0.0
  %1443 = vmatmul.mubr.f32.gmra.mxu0 %v965
  %v1444 = vpop.f32.mrf.mxu0
  %v1445 = vadd.f32 0.0, %v1444
  %v1446 = vpop.f32.mrf.mxu0
  %1447 = vmatprep.mubr.f32.mxu0 0.0
  %1448 = vmatmul.mubr.f32.gmra.mxu0 %v968
  %v1449 = vpop.f32.mrf.mxu0
  %v1450 = vadd.f32 0.0, %v1449
  %v1451 = vpop.f32.mrf.mxu0
  %1452 = vmatprep.mubr.f32.mxu0 0.0
  %1453 = vmatmul.mubr.f32.gmra.mxu0 %v971
  %v1454 = vpop.f32.mrf.mxu0
  %v1455 = vadd.f32 0.0, %v1454
  %v1456 = vpop.f32.mrf.mxu0
  %1457 = vmatprep.mubr.f32.mxu0 0.0
  %1458 = vmatmul.mubr.f32.gmra.mxu0 %v974
  %v1459 = vpop.f32.mrf.mxu0
  %v1460 = vadd.f32 0.0, %v1459
  %v1461 = vpop.f32.mrf.mxu0
  %1462 = vmatprep.mubr.f32.mxu0 0.0
  %1463 = vmatmul.mubr.f32.gmra.mxu0 %v977
  %v1464 = vpop.f32.mrf.mxu0
  %v1465 = vadd.f32 0.0, %v1464
  %v1466 = vpop.f32.mrf.mxu0
  %1467 = vmatprep.mubr.f32.mxu0 0.0
  %1468 = vmatmul.mubr.f32.gmra.mxu0 %v980
  %v1469 = vpop.f32.mrf.mxu0
  %v1470 = vadd.f32 0.0, %v1469
  %v1471 = vpop.f32.mrf.mxu0
  %1472 = vmatprep.mubr.f32.mxu0 0.0
  %1473 = vmatmul.mubr.f32.gmra.mxu0 %v983
  %v1474 = vpop.f32.mrf.mxu0
  %v1475 = vadd.f32 0.0, %v1474
  %v1476 = vpop.f32.mrf.mxu0
  %1477 = vmatprep.mubr.f32.mxu0 0.0
  %1478 = vmatmul.mubr.f32.gmra.mxu0 %v986
  %v1479 = vpop.f32.mrf.mxu0
  %v1480 = vadd.f32 0.0, %v1479
  %v1481 = vpop.f32.mrf.mxu0
  %1482 = vmatprep.mubr.f32.mxu0 0.0
  %1483 = vmatmul.mubr.f32.gmra.mxu0 %v989
  %v1484 = vpop.f32.mrf.mxu0
  %v1485 = vadd.f32 0.0, %v1484
  %v1486 = vpop.f32.mrf.mxu0
  %1487 = vmatprep.mubr.f32.mxu0 0.0
  %1488 = vmatmul.mubr.f32.gmra.mxu0 %v992
  %v1489 = vpop.f32.mrf.mxu0
  %v1490 = vadd.f32 0.0, %v1489
  %v1491 = vpop.f32.mrf.mxu0
  %1492 = vmatprep.mubr.f32.mxu0 0.0
  %1493 = vmatmul.mubr.f32.gmra.mxu0 %v995
  %v1494 = vpop.f32.mrf.mxu0
  %v1495 = vadd.f32 0.0, %v1494
  %v1496 = vpop.f32.mrf.mxu0
  %1497 = vmatprep.mubr.f32.mxu0 0.0
  %1498 = vmatmul.mubr.f32.gmra.mxu0 %v998
  %v1499 = vpop.f32.mrf.mxu0
  %v1500 = vadd.f32 0.0, %v1499
  %v1501 = vpop.f32.mrf.mxu0
  %1502 = vmatprep.mubr.f32.mxu0 0.0
  %1503 = vmatmul.mubr.f32.gmra.mxu0 %v1001
  %v1504 = vpop.f32.mrf.mxu0
  %v1505 = vadd.f32 0.0, %v1504
  %v1506 = vpop.f32.mrf.mxu0
  %1507 = vmatprep.mubr.f32.mxu0 0.0
  %1508 = vmatmul.mubr.f32.gmra.mxu0 %v1004
  %v1509 = vpop.f32.mrf.mxu0
  %v1510 = vadd.f32 0.0, %v1509
  %v1511 = vpop.f32.mrf.mxu0
  %1512 = vmatprep.mubr.f32.mxu0 0.0
  %1513 = vmatmul.mubr.f32.gmra.mxu0 %v1007
  %v1514 = vpop.f32.mrf.mxu0
  %v1515 = vadd.f32 0.0, %v1514
  %v1516 = vpop.f32.mrf.mxu0
  %1517 = vmatprep.mubr.f32.mxu0 0.0
  %1518 = vmatmul.mubr.f32.gmra.mxu0 %v1010
  %v1519 = vpop.f32.mrf.mxu0
  %v1520 = vadd.f32 0.0, %v1519
  %v1521 = vpop.f32.mrf.mxu0
  %1522 = vmatprep.mubr.f32.mxu0 0.0
  %1523 = vmatmul.mubr.f32.gmra.mxu0 %v1013
  %v1524 = vpop.f32.mrf.mxu0
  %v1525 = vadd.f32 0.0, %v1524
  %v1526 = vpop.f32.mrf.mxu0
  %1527 = vmatprep.mubr.f32.mxu0 0.0
  %1528 = vmatmul.mubr.f32.gmra.mxu0 %v1016
  %v1529 = vpop.f32.mrf.mxu0
  %v1530 = vadd.f32 0.0, %v1529
  %v1531 = vpop.f32.mrf.mxu0
  %1532 = vmatprep.mubr.f32.mxu0 0.0
  %1533 = vmatmul.mubr.f32.gmra.mxu0 %v1019
  %v1534 = vpop.f32.mrf.mxu0
  %v1535 = vadd.f32 0.0, %v1534
  %v1536 = vpop.f32.mrf.mxu0
  %1537 = vmatprep.mubr.f32.mxu0 0.0
  %1538 = vmatmul.mubr.f32.gmra.mxu0 %v1022
  %v1539 = vpop.f32.mrf.mxu0
  %v1540 = vadd.f32 0.0, %v1539
  %v1541 = vpop.f32.mrf.mxu0
  %1542 = vmatprep.mubr.f32.mxu0 0.0
  %1543 = vmatmul.mubr.f32.gmra.mxu0 %v1025
  %v1544 = vpop.f32.mrf.mxu0
  %v1545 = vadd.f32 0.0, %v1544
  %v1546 = vpop.f32.mrf.mxu0
  %1547 = vmatprep.mubr.f32.mxu0 0.0
  %1548 = vmatmul.mubr.f32.gmra.mxu0 %v1028
  %v1549 = vpop.f32.mrf.mxu0
  %v1550 = vadd.f32 0.0, %v1549
  %v1551 = vpop.f32.mrf.mxu0
  %1552 = vmatprep.mubr.f32.mxu0 0.0
  %1553 = vmatmul.mubr.f32.gmra.mxu0 %v1031
  %v1554 = vpop.f32.mrf.mxu0
  %v1555 = vadd.f32 0.0, %v1554
  %v1556 = vpop.f32.mrf.mxu0
  %1557 = vmatprep.mubr.f32.mxu0 0.0
  %1558 = vmatmul.mubr.f32.gmra.mxu0 %v1034
  %v1559 = vpop.f32.mrf.mxu0
  %v1560 = vadd.f32 0.0, %v1559
  %v1561 = vpop.f32.mrf.mxu0
  %1562 = vmatprep.mubr.f32.mxu0 0.0
  %1563 = vmatmul.mubr.f32.gmra.mxu0 %v1037
  %v1564 = vpop.f32.mrf.mxu0
  %v1565 = vadd.f32 0.0, %v1564
  %v1566 = vpop.f32.mrf.mxu0
  %1567 = vmatprep.mubr.f32.mxu0 0.0
  %1568 = vmatmul.mubr.f32.gmra.mxu0 %v1040
  %v1569 = vpop.f32.mrf.mxu0
  %v1570 = vadd.f32 0.0, %v1569
  %v1571 = vpop.f32.mrf.mxu0
  %1572 = vmatprep.mubr.f32.mxu0 0.0
  %1573 = vmatmul.mubr.f32.gmra.mxu0 %v1043
  %v1574 = vpop.f32.mrf.mxu0
  %v1575 = vadd.f32 0.0, %v1574
  %v1576 = vpop.f32.mrf.mxu0
  %1577 = vmatprep.mubr.f32.mxu0 0.0
  %1578 = vmatmul.mubr.f32.gmra.mxu0 %v1046
  %v1579 = vpop.f32.mrf.mxu0
  %v1580 = vadd.f32 0.0, %v1579
  %v1581 = vpop.f32.mrf.mxu0
  %1582 = vmatprep.mubr.f32.mxu0 0.0
  %1583 = vmatmul.mubr.f32.gmra.mxu0 %v1049
  %v1584 = vpop.f32.mrf.mxu0
  %v1585 = vadd.f32 0.0, %v1584
  %v1586 = vpop.f32.mrf.mxu0
  %1587 = vmatprep.mubr.f32.mxu0 0.0
  %1588 = vmatmul.mubr.f32.gmra.mxu0 %v1052
  %v1589 = vpop.f32.mrf.mxu0
  %v1590 = vadd.f32 0.0, %v1589
  %v1591 = vpop.f32.mrf.mxu0
  %1592 = vmatprep.mubr.f32.mxu0 0.0
  %1593 = vmatmul.mubr.f32.gmra.mxu0 %v1055
  %v1594 = vpop.f32.mrf.mxu0
  %v1595 = vadd.f32 0.0, %v1594
  %v1596 = vpop.f32.mrf.mxu0
  %1597 = vmatprep.mubr.f32.mxu0 0.0
  %1598 = vmatmul.mubr.f32.gmra.mxu0 %v1058
  %v1599 = vpop.f32.mrf.mxu0
  %v1600 = vadd.f32 0.0, %v1599
  %v1601 = vpop.f32.mrf.mxu0
  %1602 = vmatprep.mubr.f32.mxu0 0.0
  %1603 = vmatmul.mubr.f32.gmra.mxu0 %v1061
  %v1604 = vpop.f32.mrf.mxu0
  %v1605 = vadd.f32 0.0, %v1604
  %v1606 = vpop.f32.mrf.mxu0
  %1607 = vmatprep.mubr.f32.mxu0 0.0
  %1608 = vmatmul.mubr.f32.gmra.mxu0 %v1064
  %v1609 = vpop.f32.mrf.mxu0
  %v1610 = vadd.f32 0.0, %v1609
  %v1611 = vpop.f32.mrf.mxu0
  %1612 = vmatprep.mubr.f32.mxu0 0.0
  %1613 = vmatmul.mubr.f32.gmra.mxu0 %v1067
  %v1614 = vpop.f32.mrf.mxu0
  %v1615 = vadd.f32 0.0, %v1614
  %v1616 = vpop.f32.mrf.mxu0
  %1617 = vmatprep.mubr.f32.mxu0 0.0
  %1618 = vmatmul.mubr.f32.gmra.mxu0 %v1070
  %v1619 = vpop.f32.mrf.mxu0
  %v1620 = vadd.f32 0.0, %v1619
  %v1621 = vpop.f32.mrf.mxu0
  %1622 = vmatprep.mubr.f32.mxu0 0.0
  %1623 = vmatmul.mubr.f32.gmra.mxu0 %v1073
  %v1624 = vpop.f32.mrf.mxu0
  %v1625 = vadd.f32 0.0, %v1624
  %v1626 = vpop.f32.mrf.mxu0
  %1627 = vmatprep.mubr.f32.mxu0 0.0
  %1628 = vmatmul.mubr.f32.gmra.mxu0 %v1076
  %v1629 = vpop.f32.mrf.mxu0
  %v1630 = vadd.f32 0.0, %v1629
  %v1631 = vpop.f32.mrf.mxu0
  %1632 = vmatprep.mubr.f32.mxu0 0.0
  %1633 = vmatmul.mubr.f32.gmra.mxu0 %v1079
  %v1634 = vpop.f32.mrf.mxu0
  %v1635 = vadd.f32 0.0, %v1634
  %v1636 = vpop.f32.mrf.mxu0
  %1637 = vmatprep.mubr.f32.mxu0 0.0
  %1638 = vmatmul.mubr.f32.gmra.mxu0 %v1082
  %v1639 = vpop.f32.mrf.mxu0
  %v1640 = vadd.f32 0.0, %v1639
  %v1641 = vpop.f32.mrf.mxu0
  %1642 = vmatprep.mubr.f32.mxu0 0.0
  %1643 = vmatmul.mubr.f32.gmra.mxu0 %v1085
  %v1644 = vpop.f32.mrf.mxu0
  %v1645 = vadd.f32 0.0, %v1644
  %v1646 = vpop.f32.mrf.mxu0
  %1647 = vmatprep.mubr.f32.mxu0 0.0
  %1648 = vmatmul.mubr.f32.gmra.mxu0 %v1088
  %v1649 = vpop.f32.mrf.mxu0
  %v1650 = vadd.f32 0.0, %v1649
  %v1651 = vpop.f32.mrf.mxu0
  %1652 = vmatprep.mubr.f32.mxu0 0.0
  %1653 = vmatmul.mubr.f32.gmra.mxu0 %v1091
  %v1654 = vpop.f32.mrf.mxu0
  %v1655 = vadd.f32 0.0, %v1654
  %v1656 = vpop.f32.mrf.mxu0
  %1657 = vmatprep.mubr.f32.mxu0 0.0
  %1658 = vmatmul.mubr.f32.gmra.mxu0 %v1094
  %v1659 = vpop.f32.mrf.mxu0
  %v1660 = vadd.f32 0.0, %v1659
  %v1661 = vpop.f32.mrf.mxu0
  %1662 = vmatprep.mubr.f32.mxu0 0.0
  %1663 = vmatmul.mubr.f32.gmra.mxu0 %v1097
  %v1664 = vpop.f32.mrf.mxu0
  %v1665 = vadd.f32 0.0, %v1664
  %v1666 = vpop.f32.mrf.mxu0
  %1667 = vmatprep.mubr.f32.mxu0 0.0
  %1668 = vmatmul.mubr.f32.gmra.mxu0 %v1100
  %v1669 = vpop.f32.mrf.mxu0
  %v1670 = vadd.f32 0.0, %v1669
  %v1671 = vpop.f32.mrf.mxu0
  %1672 = vmatprep.mubr.f32.mxu0 0.0
  %1673 = vmatmul.mubr.f32.gmra.mxu0 %v1103
  %v1674 = vpop.f32.mrf.mxu0
  %v1675 = vadd.f32 0.0, %v1674
  %v1676 = vpop.f32.mrf.mxu0
  %1677 = vmatprep.mubr.f32.mxu0 0.0
  %1678 = vmatmul.mubr.f32.gmra.mxu0 %v1106
  %v1679 = vpop.f32.mrf.mxu0
  %v1680 = vadd.f32 0.0, %v1679
  %v1681 = vpop.f32.mrf.mxu0
  %1682 = vmatprep.mubr.f32.mxu0 0.0
  %1683 = vmatmul.mubr.f32.gmra.mxu0 %v1109
  %v1684 = vpop.f32.mrf.mxu0
  %v1685 = vadd.f32 0.0, %v1684
  %v1686 = vpop.f32.mrf.mxu0
  %1687 = vmatprep.mubr.f32.mxu0 0.0
  %1688 = vmatmul.mubr.f32.gmra.mxu0 %v1112
  %v1689 = vpop.f32.mrf.mxu0
  %v1690 = vadd.f32 0.0, %v1689
  %v1691 = vpop.f32.mrf.mxu0
  %1692 = vmatprep.mubr.f32.mxu0 0.0
  %1693 = vmatmul.mubr.f32.gmra.mxu0 %v1115
  %v1694 = vpop.f32.mrf.mxu0
  %v1695 = vadd.f32 0.0, %v1694
  %v1696 = vpop.f32.mrf.mxu0
  %1697 = vmatprep.mubr.f32.mxu0 0.0
  %1698 = vmatmul.mubr.f32.gmra.mxu0 %v1118
  %v1699 = vpop.f32.mrf.mxu0
  %v1700 = vadd.f32 0.0, %v1699
  %v1701 = vpop.f32.mrf.mxu0
  %1702 = vmatprep.mubr.f32.mxu0 0.0
  %1703 = vmatmul.mubr.f32.gmra.mxu0 %v1121
  %v1704 = vpop.f32.mrf.mxu0
  %v1705 = vadd.f32 0.0, %v1704
  %v1706 = vpop.f32.mrf.mxu0
  %1707 = vmatprep.mubr.f32.mxu0 0.0
  %1708 = vmatmul.mubr.f32.gmra.mxu0 %v1124
  %v1709 = vpop.f32.mrf.mxu0
  %v1710 = vadd.f32 0.0, %v1709
  %v1711 = vpop.f32.mrf.mxu0
  %1712 = vmatprep.mubr.f32.mxu0 0.0
  %1713 = vmatmul.mubr.f32.gmra.mxu0 %v1127
  %v1714 = vpop.f32.mrf.mxu0
  %v1715 = vadd.f32 0.0, %v1714
  %v1716 = vpop.f32.mrf.mxu0
  %1717 = vmatprep.mubr.f32.mxu0 0.0
  %1718 = vmatmul.mubr.f32.gmra.mxu0 %v1130
  %v1719 = vpop.f32.mrf.mxu0
  %v1720 = vadd.f32 0.0, %v1719
  %v1721 = vpop.f32.mrf.mxu0
  %1722 = vmatprep.mubr.f32.mxu0 0.0
  %1723 = vmatmul.mubr.f32.gmra.mxu0 %v1133
  %v1724 = vpop.f32.mrf.mxu0
  %v1725 = vadd.f32 0.0, %v1724
  %v1726 = vpop.f32.mrf.mxu0
  %1727 = vmatprep.mubr.f32.mxu0 0.0
  %1728 = vmatmul.mubr.f32.gmra.mxu0 %v1136
  %v1729 = vpop.f32.mrf.mxu0
  %v1730 = vadd.f32 0.0, %v1729
  %v1731 = vpop.f32.mrf.mxu0
  %1732 = vmatprep.mubr.f32.mxu0 0.0
  %1733 = vmatmul.mubr.f32.gmra.mxu0 %v1139
  %v1734 = vpop.f32.mrf.mxu0
  %v1735 = vadd.f32 0.0, %v1734
  %v1736 = vpop.f32.mrf.mxu0
  %1737 = vmatprep.mubr.f32.mxu0 0.0
  %1738 = vmatmul.mubr.f32.gmra.mxu0 %v1142
  %v1739 = vpop.f32.mrf.mxu0
  %v1740 = vadd.f32 0.0, %v1739
  %v1741 = vpop.f32.mrf.mxu0
  %1742 = vmatprep.mubr.f32.mxu0 0.0
  %1743 = vmatmul.mubr.f32.gmra.mxu0 %v1145
  %v1744 = vpop.f32.mrf.mxu0
  %v1745 = vadd.f32 0.0, %v1744
  %v1746 = vpop.f32.mrf.mxu0
  %1747 = vmatprep.mubr.f32.mxu0 0.0
  %1748 = vmatmul.mubr.f32.gmra.mxu0 %v1148
  %v1749 = vpop.f32.mrf.mxu0
  %v1750 = vadd.f32 0.0, %v1749
  %v1751 = vpop.f32.mrf.mxu0
  %1752 = vmatprep.mubr.f32.mxu0 0.0
  %1753 = vmatmul.mubr.f32.gmra.mxu0 %v1151
  %v1754 = vpop.f32.mrf.mxu0
  %v1755 = vadd.f32 0.0, %v1754
  %v1756 = vpop.f32.mrf.mxu0
  %1757 = vdwg.mxu0
  %v1758 = vlaneseq
  %v1759 = vshrl.u32 %v1758, 7
  %v1760 = vsub.s32 0, %v1759
  %v1761 = vrot.slane %v790, %v1760
  %v1762 = vmul.f32 %v1220, %v1761
  %v1763 = vmul.f32 %v1225, %v1761
  %v1764 = vmul.f32 %v1230, %v1761
  %v1765 = vmul.f32 %v1235, %v1761
  %v1766 = vadd.f32 %v1762, 0.0
  %v1767 = vadd.f32 %v1763, 0.0
  %v1768 = vadd.f32 %v1764, 0.0
  %v1769 = vadd.f32 %v1765, 0.0
  %v1770 = vlaneseq
  %v1771 = vshrl.u32 %v1770, 7
  %v1772 = vsub.s32 1, %v1771
  %v1773 = vrot.slane %v790, %v1772
  %v1774 = vmul.f32 %v1240, %v1773
  %v1775 = vmul.f32 %v1245, %v1773
  %v1776 = vmul.f32 %v1250, %v1773
  %v1777 = vmul.f32 %v1255, %v1773
  %v1778 = vadd.f32 %v1766, %v1774
  %v1779 = vadd.f32 %v1767, %v1775
  %v1780 = vadd.f32 %v1768, %v1776
  %v1781 = vadd.f32 %v1769, %v1777
  %v1782 = vlaneseq
  %v1783 = vshrl.u32 %v1782, 7
  %v1784 = vsub.s32 2, %v1783
  %v1785 = vrot.slane %v790, %v1784
  %v1786 = vmul.f32 %v1260, %v1785
  %v1787 = vmul.f32 %v1265, %v1785
  %v1788 = vmul.f32 %v1270, %v1785
  %v1789 = vmul.f32 %v1275, %v1785
  %v1790 = vadd.f32 %v1778, %v1786
  %v1791 = vadd.f32 %v1779, %v1787
  %v1792 = vadd.f32 %v1780, %v1788
  %v1793 = vadd.f32 %v1781, %v1789
  %v1794 = vlaneseq
  %v1795 = vshrl.u32 %v1794, 7
  %v1796 = vsub.s32 3, %v1795
  %v1797 = vrot.slane %v790, %v1796
  %v1798 = vmul.f32 %v1280, %v1797
  %v1799 = vmul.f32 %v1285, %v1797
  %v1800 = vmul.f32 %v1290, %v1797
  %v1801 = vmul.f32 %v1295, %v1797
  %v1802 = vadd.f32 %v1790, %v1798
  %v1803 = vadd.f32 %v1791, %v1799
  %v1804 = vadd.f32 %v1792, %v1800
  %v1805 = vadd.f32 %v1793, %v1801
  %v1806 = vlaneseq
  %v1807 = vshrl.u32 %v1806, 7
  %v1808 = vsub.s32 4, %v1807
  %v1809 = vrot.slane %v790, %v1808
  %v1810 = vmul.f32 %v1300, %v1809
  %v1811 = vmul.f32 %v1305, %v1809
  %v1812 = vmul.f32 %v1310, %v1809
  %v1813 = vmul.f32 %v1315, %v1809
  %v1814 = vadd.f32 %v1802, %v1810
  %v1815 = vadd.f32 %v1803, %v1811
  %v1816 = vadd.f32 %v1804, %v1812
  %v1817 = vadd.f32 %v1805, %v1813
  %v1818 = vlaneseq
  %v1819 = vshrl.u32 %v1818, 7
  %v1820 = vsub.s32 5, %v1819
  %v1821 = vrot.slane %v790, %v1820
  %v1822 = vmul.f32 %v1320, %v1821
  %v1823 = vmul.f32 %v1325, %v1821
  %v1824 = vmul.f32 %v1330, %v1821
  %v1825 = vmul.f32 %v1335, %v1821
  %v1826 = vadd.f32 %v1814, %v1822
  %v1827 = vadd.f32 %v1815, %v1823
  %v1828 = vadd.f32 %v1816, %v1824
  %v1829 = vadd.f32 %v1817, %v1825
  %v1830 = vlaneseq
  %v1831 = vshrl.u32 %v1830, 7
  %v1832 = vsub.s32 6, %v1831
  %v1833 = vrot.slane %v790, %v1832
  %v1834 = vmul.f32 %v1340, %v1833
  %v1835 = vmul.f32 %v1345, %v1833
  %v1836 = vmul.f32 %v1350, %v1833
  %v1837 = vmul.f32 %v1355, %v1833
  %v1838 = vadd.f32 %v1826, %v1834
  %v1839 = vadd.f32 %v1827, %v1835
  %v1840 = vadd.f32 %v1828, %v1836
  %v1841 = vadd.f32 %v1829, %v1837
  %v1842 = vlaneseq
  %v1843 = vshrl.u32 %v1842, 7
  %v1844 = vsub.s32 7, %v1843
  %v1845 = vrot.slane %v790, %v1844
  %v1846 = vmul.f32 %v1360, %v1845
  %v1847 = vmul.f32 %v1365, %v1845
  %v1848 = vmul.f32 %v1370, %v1845
  %v1849 = vmul.f32 %v1375, %v1845
  %v1850 = vadd.f32 %v1838, %v1846
  %v1851 = vadd.f32 %v1839, %v1847
  %v1852 = vadd.f32 %v1840, %v1848
  %v1853 = vadd.f32 %v1841, %v1849
  %v1854 = vlaneseq
  %v1855 = vshrl.u32 %v1854, 7
  %v1856 = vsub.s32 0, %v1855
  %v1857 = vrot.slane %v791, %v1856
  %v1858 = vmul.f32 %v1380, %v1857
  %v1859 = vmul.f32 %v1385, %v1857
  %v1860 = vmul.f32 %v1390, %v1857
  %v1861 = vmul.f32 %v1395, %v1857
  %v1862 = vadd.f32 %v1850, %v1858
  %v1863 = vadd.f32 %v1851, %v1859
  %v1864 = vadd.f32 %v1852, %v1860
  %v1865 = vadd.f32 %v1853, %v1861
  %v1866 = vlaneseq
  %v1867 = vshrl.u32 %v1866, 7
  %v1868 = vsub.s32 1, %v1867
  %v1869 = vrot.slane %v791, %v1868
  %v1870 = vmul.f32 %v1400, %v1869
  %v1871 = vmul.f32 %v1405, %v1869
  %v1872 = vmul.f32 %v1410, %v1869
  %v1873 = vmul.f32 %v1415, %v1869
  %v1874 = vadd.f32 %v1862, %v1870
  %v1875 = vadd.f32 %v1863, %v1871
  %v1876 = vadd.f32 %v1864, %v1872
  %v1877 = vadd.f32 %v1865, %v1873
  %v1878 = vlaneseq
  %v1879 = vshrl.u32 %v1878, 7
  %v1880 = vsub.s32 2, %v1879
  %v1881 = vrot.slane %v791, %v1880
  %v1882 = vmul.f32 %v1420, %v1881
  %v1883 = vmul.f32 %v1425, %v1881
  %v1884 = vmul.f32 %v1430, %v1881
  %v1885 = vmul.f32 %v1435, %v1881
  %v1886 = vadd.f32 %v1874, %v1882
  %v1887 = vadd.f32 %v1875, %v1883
  %v1888 = vadd.f32 %v1876, %v1884
  %v1889 = vadd.f32 %v1877, %v1885
  %v1890 = vlaneseq
  %v1891 = vshrl.u32 %v1890, 7
  %v1892 = vsub.s32 3, %v1891
  %v1893 = vrot.slane %v791, %v1892
  %v1894 = vmul.f32 %v1440, %v1893
  %v1895 = vmul.f32 %v1445, %v1893
  %v1896 = vmul.f32 %v1450, %v1893
  %v1897 = vmul.f32 %v1455, %v1893
  %v1898 = vadd.f32 %v1886, %v1894
  %v1899 = vadd.f32 %v1887, %v1895
  %v1900 = vadd.f32 %v1888, %v1896
  %v1901 = vadd.f32 %v1889, %v1897
  %v1902 = vlaneseq
  %v1903 = vshrl.u32 %v1902, 7
  %v1904 = vsub.s32 4, %v1903
  %v1905 = vrot.slane %v791, %v1904
  %v1906 = vmul.f32 %v1460, %v1905
  %v1907 = vmul.f32 %v1465, %v1905
  %v1908 = vmul.f32 %v1470, %v1905
  %v1909 = vmul.f32 %v1475, %v1905
  %v1910 = vadd.f32 %v1898, %v1906
  %v1911 = vadd.f32 %v1899, %v1907
  %v1912 = vadd.f32 %v1900, %v1908
  %v1913 = vadd.f32 %v1901, %v1909
  %v1914 = vlaneseq
  %v1915 = vshrl.u32 %v1914, 7
  %v1916 = vsub.s32 5, %v1915
  %v1917 = vrot.slane %v791, %v1916
  %v1918 = vmul.f32 %v1480, %v1917
  %v1919 = vmul.f32 %v1485, %v1917
  %v1920 = vmul.f32 %v1490, %v1917
  %v1921 = vmul.f32 %v1495, %v1917
  %v1922 = vadd.f32 %v1910, %v1918
  %v1923 = vadd.f32 %v1911, %v1919
  %v1924 = vadd.f32 %v1912, %v1920
  %v1925 = vadd.f32 %v1913, %v1921
  %v1926 = vlaneseq
  %v1927 = vshrl.u32 %v1926, 7
  %v1928 = vsub.s32 6, %v1927
  %v1929 = vrot.slane %v791, %v1928
  %v1930 = vmul.f32 %v1500, %v1929
  %v1931 = vmul.f32 %v1505, %v1929
  %v1932 = vmul.f32 %v1510, %v1929
  %v1933 = vmul.f32 %v1515, %v1929
  %v1934 = vadd.f32 %v1922, %v1930
  %v1935 = vadd.f32 %v1923, %v1931
  %v1936 = vadd.f32 %v1924, %v1932
  %v1937 = vadd.f32 %v1925, %v1933
  %v1938 = vlaneseq
  %v1939 = vshrl.u32 %v1938, 7
  %v1940 = vsub.s32 7, %v1939
  %v1941 = vrot.slane %v791, %v1940
  %v1942 = vmul.f32 %v1520, %v1941
  %v1943 = vmul.f32 %v1525, %v1941
  %v1944 = vmul.f32 %v1530, %v1941
  %v1945 = vmul.f32 %v1535, %v1941
  %v1946 = vadd.f32 %v1934, %v1942
  %v1947 = vadd.f32 %v1935, %v1943
  %v1948 = vadd.f32 %v1936, %v1944
  %v1949 = vadd.f32 %v1937, %v1945
  %v1950 = vlaneseq
  %v1951 = vshrl.u32 %v1950, 7
  %v1952 = vsub.s32 0, %v1951
  %v1953 = vrot.slane %v792, %v1952
  %v1954 = vmul.f32 %v1540, %v1953
  %v1955 = vmul.f32 %v1545, %v1953
  %v1956 = vmul.f32 %v1550, %v1953
  %v1957 = vmul.f32 %v1555, %v1953
  %v1958 = vadd.f32 %v1946, %v1954
  %v1959 = vadd.f32 %v1947, %v1955
  %v1960 = vadd.f32 %v1948, %v1956
  %v1961 = vadd.f32 %v1949, %v1957
  %v1962 = vlaneseq
  %v1963 = vshrl.u32 %v1962, 7
  %v1964 = vsub.s32 1, %v1963
  %v1965 = vrot.slane %v792, %v1964
  %v1966 = vmul.f32 %v1560, %v1965
  %v1967 = vmul.f32 %v1565, %v1965
  %v1968 = vmul.f32 %v1570, %v1965
  %v1969 = vmul.f32 %v1575, %v1965
  %v1970 = vadd.f32 %v1958, %v1966
  %v1971 = vadd.f32 %v1959, %v1967
  %v1972 = vadd.f32 %v1960, %v1968
  %v1973 = vadd.f32 %v1961, %v1969
  %v1974 = vlaneseq
  %v1975 = vshrl.u32 %v1974, 7
  %v1976 = vsub.s32 2, %v1975
  %v1977 = vrot.slane %v792, %v1976
  %v1978 = vmul.f32 %v1580, %v1977
  %v1979 = vmul.f32 %v1585, %v1977
  %v1980 = vmul.f32 %v1590, %v1977
  %v1981 = vmul.f32 %v1595, %v1977
  %v1982 = vadd.f32 %v1970, %v1978
  %v1983 = vadd.f32 %v1971, %v1979
  %v1984 = vadd.f32 %v1972, %v1980
  %v1985 = vadd.f32 %v1973, %v1981
  %v1986 = vlaneseq
  %v1987 = vshrl.u32 %v1986, 7
  %v1988 = vsub.s32 3, %v1987
  %v1989 = vrot.slane %v792, %v1988
  %v1990 = vmul.f32 %v1600, %v1989
  %v1991 = vmul.f32 %v1605, %v1989
  %v1992 = vmul.f32 %v1610, %v1989
  %v1993 = vmul.f32 %v1615, %v1989
  %v1994 = vadd.f32 %v1982, %v1990
  %v1995 = vadd.f32 %v1983, %v1991
  %v1996 = vadd.f32 %v1984, %v1992
  %v1997 = vadd.f32 %v1985, %v1993
  %v1998 = vlaneseq
  %v1999 = vshrl.u32 %v1998, 7
  %v2000 = vsub.s32 4, %v1999
  %v2001 = vrot.slane %v792, %v2000
  %v2002 = vmul.f32 %v1620, %v2001
  %v2003 = vmul.f32 %v1625, %v2001
  %v2004 = vmul.f32 %v1630, %v2001
  %v2005 = vmul.f32 %v1635, %v2001
  %v2006 = vadd.f32 %v1994, %v2002
  %v2007 = vadd.f32 %v1995, %v2003
  %v2008 = vadd.f32 %v1996, %v2004
  %v2009 = vadd.f32 %v1997, %v2005
  %v2010 = vlaneseq
  %v2011 = vshrl.u32 %v2010, 7
  %v2012 = vsub.s32 5, %v2011
  %v2013 = vrot.slane %v792, %v2012
  %v2014 = vmul.f32 %v1640, %v2013
  %v2015 = vmul.f32 %v1645, %v2013
  %v2016 = vmul.f32 %v1650, %v2013
  %v2017 = vmul.f32 %v1655, %v2013
  %v2018 = vadd.f32 %v2006, %v2014
  %v2019 = vadd.f32 %v2007, %v2015
  %v2020 = vadd.f32 %v2008, %v2016
  %v2021 = vadd.f32 %v2009, %v2017
  %v2022 = vlaneseq
  %v2023 = vshrl.u32 %v2022, 7
  %v2024 = vsub.s32 6, %v2023
  %v2025 = vrot.slane %v792, %v2024
  %v2026 = vmul.f32 %v1660, %v2025
  %v2027 = vmul.f32 %v1665, %v2025
  %v2028 = vmul.f32 %v1670, %v2025
  %v2029 = vmul.f32 %v1675, %v2025
  %v2030 = vadd.f32 %v2018, %v2026
  %v2031 = vadd.f32 %v2019, %v2027
  %v2032 = vadd.f32 %v2020, %v2028
  %v2033 = vadd.f32 %v2021, %v2029
  %v2034 = vlaneseq
  %v2035 = vshrl.u32 %v2034, 7
  %v2036 = vsub.s32 7, %v2035
  %v2037 = vrot.slane %v792, %v2036
  %v2038 = vmul.f32 %v1680, %v2037
  %v2039 = vmul.f32 %v1685, %v2037
  %v2040 = vmul.f32 %v1690, %v2037
  %v2041 = vmul.f32 %v1695, %v2037
  %v2042 = vadd.f32 %v2030, %v2038
  %v2043 = vadd.f32 %v2031, %v2039
  %v2044 = vadd.f32 %v2032, %v2040
  %v2045 = vadd.f32 %v2033, %v2041
  %v2046 = vlaneseq
  %v2047 = vshrl.u32 %v2046, 7
  %v2048 = vsub.s32 0, %v2047
  %v2049 = vrot.slane %v793, %v2048
  %v2050 = vmul.f32 %v1700, %v2049
  %v2051 = vmul.f32 %v1705, %v2049
  %v2052 = vmul.f32 %v1710, %v2049
  %v2053 = vmul.f32 %v1715, %v2049
  %v2054 = vadd.f32 %v2042, %v2050
  %v2055 = vadd.f32 %v2043, %v2051
  %v2056 = vadd.f32 %v2044, %v2052
  %v2057 = vadd.f32 %v2045, %v2053
  %v2058 = vlaneseq
  %v2059 = vshrl.u32 %v2058, 7
  %v2060 = vsub.s32 1, %v2059
  %v2061 = vrot.slane %v793, %v2060
  %v2062 = vmul.f32 %v1720, %v2061
  %v2063 = vmul.f32 %v1725, %v2061
  %v2064 = vmul.f32 %v1730, %v2061
  %v2065 = vmul.f32 %v1735, %v2061
  %v2066 = vadd.f32 %v2054, %v2062
  %v2067 = vadd.f32 %v2055, %v2063
  %v2068 = vadd.f32 %v2056, %v2064
  %v2069 = vadd.f32 %v2057, %v2065
  %v2070 = vlaneseq
  %v2071 = vshrl.u32 %v2070, 7
  %v2072 = vsub.s32 2, %v2071
  %v2073 = vrot.slane %v793, %v2072
  %v2074 = vmul.f32 %v1740, %v2073
  %v2075 = vmul.f32 %v1745, %v2073
  %v2076 = vmul.f32 %v1750, %v2073
  %v2077 = vmul.f32 %v1755, %v2073
  %v2078 = vadd.f32 %v2066, %v2074
  %v2079 = vadd.f32 %v2067, %v2075
  %v2080 = vadd.f32 %v2068, %v2076
  %v2081 = vadd.f32 %v2069, %v2077
  %vm2086 = vcmask 1040384
  %v2087 = vrot.slane %v2078, 7
  %v2088 = vrot.slane %v2079, 7
  %v2089 = vsel %vm2086, %v2087, %v2088
  %v2090 = vrot.slane %v2080, 7
  %v2091 = vsel %vm2086, %v2088, %v2090
  %v2092 = vrot.slane %v2081, 7
  %v2093 = vsel %vm2086, %v2090, %v2092
  %v2099 = vsel %vm2086, %v507, %v2087
  %v2101 = vsel %vm254, %v2099, 0
  %v2103 = vsel %vm254, %v2089, 0
  %v2105 = vsel %vm254, %v2091, 0
  %v2107 = vsel %vm254, %v2093, 0
  %v2109 = vsel %vm254, %v2092, 0
  %2111 = vmatprep.subr.mxu0 0.0
  %2112 = vmatpush1.msra.mxu0 0.0
  %2113 = vmatprep.subr.mxu0 0.0
  %2114 = vmatpush1.msra.mxu0 0.0
  %2115 = vmatprep.subr.mxu0 0.0
  %2116 = vmatpush1.msra.mxu0 0.0
  %2117 = vmatprep.subr.mxu0 0.0
  %2118 = vmatpush1.msra.mxu0 0.0
  %2119 = vmatprep.subr.mxu0 0.0
  %2120 = vmatpush1.msra.mxu0 0.0
  %2121 = vmatprep.subr.mxu0 0.0
  %2122 = vmatpush1.msra.mxu0 0.0
  %2123 = vmatprep.subr.mxu0 0.0
  %2124 = vmatpush1.msra.mxu0 0.0
  %2125 = vmatprep.subr.mxu0 0.0
  %2126 = vmatpush1.msra.mxu0 0.0
  %2127 = vmatprep.subr.mxu0 0.0
  %2128 = vmatpush1.msra.mxu0 0.0
  %2129 = vmatprep.subr.mxu0 0.0
  %2130 = vmatpush1.msra.mxu0 0.0
  %2131 = vmatprep.subr.mxu0 0.0
  %2132 = vmatpush1.msra.mxu0 0.0
  %2133 = vmatprep.subr.mxu0 0.0
  %2134 = vmatpush1.msra.mxu0 0.0
  %2135 = vmatprep.subr.mxu0 0.0
  %2136 = vmatpush1.msra.mxu0 %v179
  %2137 = vmatprep.subr.mxu0 0.0
  %2138 = vmatpush1.msra.mxu0 %v178
  %2139 = vmatprep.subr.mxu0 0.0
  %2140 = vmatpush1.msra.mxu0 %v177
  %2141 = vmatprep.subr.mxu0 0.0
  %2142 = vmatpush1.msra.mxu0 %v176
  %2143 = vmatprep.subr.mxu0 0.0
  %2144 = vmatpush2.msra.mxu0 0.0
  %2145 = vmatprep.subr.mxu0 0.0
  %2146 = vmatpush2.msra.mxu0 0.0
  %2147 = vmatprep.subr.mxu0 0.0
  %2148 = vmatpush2.msra.mxu0 0.0
  %2149 = vmatprep.subr.mxu0 0.0
  %2150 = vmatpush2.msra.mxu0 0.0
  %2151 = vmatprep.subr.mxu0 0.0
  %2152 = vmatpush2.msra.mxu0 0.0
  %2153 = vmatprep.subr.mxu0 0.0
  %2154 = vmatpush2.msra.mxu0 0.0
  %2155 = vmatprep.subr.mxu0 0.0
  %2156 = vmatpush2.msra.mxu0 0.0
  %2157 = vmatprep.subr.mxu0 0.0
  %2158 = vmatpush2.msra.mxu0 0.0
  %2159 = vmatprep.subr.mxu0 0.0
  %2160 = vmatpush2.msra.mxu0 0.0
  %2161 = vmatprep.subr.mxu0 0.0
  %2162 = vmatpush2.msra.mxu0 0.0
  %2163 = vmatprep.subr.mxu0 0.0
  %2164 = vmatpush2.msra.mxu0 0.0
  %2165 = vmatprep.subr.mxu0 0.0
  %2166 = vmatpush2.msra.mxu0 0.0
  %2167 = vmatprep.subr.mxu0 0.0
  %2168 = vmatpush2.msra.mxu0 0.0
  %2169 = vmatprep.subr.mxu0 0.0
  %2170 = vmatpush2.msra.mxu0 0.0
  %2171 = vmatprep.subr.mxu0 0.0
  %2172 = vmatpush2.msra.mxu0 0.0
  %2173 = vmatprep.subr.mxu0 0.0
  %2174 = vmatpush2.msra.mxu0 0.0
  %2175 = vmatprep.mubr.f32.mxu0 0.0
  %2176 = vmatmul.mubr.f32.gmra.mxu0 %v2101
  %v2177 = vpop.f32.mrf.mxu0
  %v2178 = vadd.f32 0.0, %v2177
  %v2179 = vpop.f32.mrf.mxu0
  %2180 = vmatprep.mubr.f32.mxu0 0.0
  %2181 = vmatmul.mubr.f32.gmra.mxu0 %v2103
  %v2182 = vpop.f32.mrf.mxu0
  %v2183 = vadd.f32 0.0, %v2182
  %v2184 = vpop.f32.mrf.mxu0
  %2185 = vmatprep.mubr.f32.mxu0 0.0
  %2186 = vmatmul.mubr.f32.gmra.mxu0 %v2105
  %v2187 = vpop.f32.mrf.mxu0
  %v2188 = vadd.f32 0.0, %v2187
  %v2189 = vpop.f32.mrf.mxu0
  %2190 = vmatprep.mubr.f32.mxu0 0.0
  %2191 = vmatmul.mubr.f32.gmra.mxu0 %v2107
  %v2192 = vpop.f32.mrf.mxu0
  %v2193 = vadd.f32 0.0, %v2192
  %v2194 = vpop.f32.mrf.mxu0
  %2195 = vmatprep.mubr.f32.mxu0 0.0
  %2196 = vmatmul.mubr.f32.gmra.mxu0 %v2109
  %v2197 = vpop.f32.mrf.mxu0
  %v2198 = vadd.f32 0.0, %v2197
  %v2199 = vpop.f32.mrf.mxu0
  %2200 = vdwg.mxu0
  %v2201 = vsub.f32 %v2099, %v2178
  %v2202 = vsub.f32 %v2089, %v2183
  %v2203 = vsub.f32 %v2091, %v2188
  %v2204 = vsub.f32 %v2093, %v2193
  %v2205 = vsub.f32 %v2092, %v2198
  %v2206 = vmul.f32 %v2201, %v2201
  %v2207 = vmul.f32 %v2202, %v2202
  %v2208 = vmul.f32 %v2203, %v2203
  %v2209 = vmul.f32 %v2204, %v2204
  %v2210 = vmul.f32 %v2205, %v2205
  %v2212 = vsel %vm254, %v2206, 0
  %v2215 = vsel %vm254, %v2207, 0
  %v2218 = vsel %vm254, %v2208, 0
  %v2221 = vsel %vm254, %v2209, 0
  %v2224 = vsel %vm254, %v2210, 0
  %2226 = vmatprep.subr.mxu0 0.0
  %2227 = vmatpush1.msra.mxu0 0.0
  %2228 = vmatprep.subr.mxu0 0.0
  %2229 = vmatpush1.msra.mxu0 0.0
  %2230 = vmatprep.subr.mxu0 0.0
  %2231 = vmatpush1.msra.mxu0 0.0
  %2232 = vmatprep.subr.mxu0 0.0
  %2233 = vmatpush1.msra.mxu0 0.0
  %2234 = vmatprep.subr.mxu0 0.0
  %2235 = vmatpush1.msra.mxu0 0.0
  %2236 = vmatprep.subr.mxu0 0.0
  %2237 = vmatpush1.msra.mxu0 0.0
  %2238 = vmatprep.subr.mxu0 0.0
  %2239 = vmatpush1.msra.mxu0 0.0
  %2240 = vmatprep.subr.mxu0 0.0
  %2241 = vmatpush1.msra.mxu0 0.0
  %2242 = vmatprep.subr.mxu0 0.0
  %2243 = vmatpush1.msra.mxu0 0.0
  %2244 = vmatprep.subr.mxu0 0.0
  %2245 = vmatpush1.msra.mxu0 0.0
  %2246 = vmatprep.subr.mxu0 0.0
  %2247 = vmatpush1.msra.mxu0 0.0
  %2248 = vmatprep.subr.mxu0 0.0
  %2249 = vmatpush1.msra.mxu0 0.0
  %2250 = vmatprep.subr.mxu0 0.0
  %2251 = vmatpush1.msra.mxu0 %v179
  %2252 = vmatprep.subr.mxu0 0.0
  %2253 = vmatpush1.msra.mxu0 %v178
  %2254 = vmatprep.subr.mxu0 0.0
  %2255 = vmatpush1.msra.mxu0 %v177
  %2256 = vmatprep.subr.mxu0 0.0
  %2257 = vmatpush1.msra.mxu0 %v176
  %2258 = vmatprep.subr.mxu0 0.0
  %2259 = vmatpush2.msra.mxu0 0.0
  %2260 = vmatprep.subr.mxu0 0.0
  %2261 = vmatpush2.msra.mxu0 0.0
  %2262 = vmatprep.subr.mxu0 0.0
  %2263 = vmatpush2.msra.mxu0 0.0
  %2264 = vmatprep.subr.mxu0 0.0
  %2265 = vmatpush2.msra.mxu0 0.0
  %2266 = vmatprep.subr.mxu0 0.0
  %2267 = vmatpush2.msra.mxu0 0.0
  %2268 = vmatprep.subr.mxu0 0.0
  %2269 = vmatpush2.msra.mxu0 0.0
  %2270 = vmatprep.subr.mxu0 0.0
  %2271 = vmatpush2.msra.mxu0 0.0
  %2272 = vmatprep.subr.mxu0 0.0
  %2273 = vmatpush2.msra.mxu0 0.0
  %2274 = vmatprep.subr.mxu0 0.0
  %2275 = vmatpush2.msra.mxu0 0.0
  %2276 = vmatprep.subr.mxu0 0.0
  %2277 = vmatpush2.msra.mxu0 0.0
  %2278 = vmatprep.subr.mxu0 0.0
  %2279 = vmatpush2.msra.mxu0 0.0
  %2280 = vmatprep.subr.mxu0 0.0
  %2281 = vmatpush2.msra.mxu0 0.0
  %2282 = vmatprep.subr.mxu0 0.0
  %2283 = vmatpush2.msra.mxu0 0.0
  %2284 = vmatprep.subr.mxu0 0.0
  %2285 = vmatpush2.msra.mxu0 0.0
  %2286 = vmatprep.subr.mxu0 0.0
  %2287 = vmatpush2.msra.mxu0 0.0
  %2288 = vmatprep.subr.mxu0 0.0
  %2289 = vmatpush2.msra.mxu0 0.0
  %2290 = vmatprep.mubr.f32.mxu0 0.0
  %2291 = vmatmul.mubr.f32.gmra.mxu0 %v2212
  %v2292 = vpop.f32.mrf.mxu0
  %v2293 = vadd.f32 1e-05, %v2292
  %v2294 = vpop.f32.mrf.mxu0
  %2295 = vmatprep.mubr.f32.mxu0 0.0
  %2296 = vmatmul.mubr.f32.gmra.mxu0 %v2215
  %v2297 = vpop.f32.mrf.mxu0
  %v2298 = vadd.f32 1e-05, %v2297
  %v2299 = vpop.f32.mrf.mxu0
  %2300 = vmatprep.mubr.f32.mxu0 0.0
  %2301 = vmatmul.mubr.f32.gmra.mxu0 %v2218
  %v2302 = vpop.f32.mrf.mxu0
  %v2303 = vadd.f32 1e-05, %v2302
  %v2304 = vpop.f32.mrf.mxu0
  %2305 = vmatprep.mubr.f32.mxu0 0.0
  %2306 = vmatmul.mubr.f32.gmra.mxu0 %v2221
  %v2307 = vpop.f32.mrf.mxu0
  %v2308 = vadd.f32 1e-05, %v2307
  %v2309 = vpop.f32.mrf.mxu0
  %2310 = vmatprep.mubr.f32.mxu0 0.0
  %2311 = vmatmul.mubr.f32.gmra.mxu0 %v2224
  %v2312 = vpop.f32.mrf.mxu0
  %v2313 = vadd.f32 1e-05, %v2312
  %v2314 = vpop.f32.mrf.mxu0
  %2315 = vdwg.mxu0
  %v2316 = vrsqrt.pop %v2293
  %v2317 = vrsqrt.pop %v2298
  %v2318 = vrsqrt.pop %v2303
  %v2319 = vrsqrt.pop %v2308
  %v2320 = vrsqrt.pop %v2313
  %v2321 = vmul.f32 %v2201, %v2316
  %v2322 = vmul.f32 %v2202, %v2317
  %v2323 = vmul.f32 %v2203, %v2318
  %v2324 = vmul.f32 %v2204, %v2319
  %v2325 = vmul.f32 %v2205, %v2320
  %v2326 = vlaneseq
  %v2327 = vshrl.u32 %v2326, 7
  %v2328 = vsub.s32 0, %v2327
  %v2329 = vrot.slane %v804, %v2328
  %v2330 = vmul.f32 %v2321, %v2329
  %v2331 = vmul.f32 %v2322, %v2329
  %v2332 = vmul.f32 %v2323, %v2329
  %v2333 = vmul.f32 %v2324, %v2329
  %v2334 = vmul.f32 %v2325, %v2329
  %v2335 = vlaneseq
  %v2336 = vshrl.u32 %v2335, 7
  %v2337 = vsub.s32 0, %v2336
  %v2338 = vrot.slane %v807, %v2337
  %v2339 = vadd.f32 %v2330, %v2338
  %v2340 = vadd.f32 %v2331, %v2338
  %v2341 = vadd.f32 %v2332, %v2338
  %v2342 = vadd.f32 %v2333, %v2338
  %v2343 = vadd.f32 %v2334, %v2338
  %v2349 = vrot.slane %v627, 1
  %v2350 = vrot.slane %v632, 1
  %v2351 = vsel %vm815, %v2349, %v2350
  %v2352 = vrot.slane %v637, 1
  %v2353 = vsel %vm815, %v2350, %v2352
  %v2354 = vrot.slane %v642, 1
  %v2355 = vsel %vm815, %v2352, %v2354
  %v2356 = vrot.slane %v647, 1
  %v2357 = vsel %vm815, %v2354, %v2356
  %2362 = vmatprep.subr.mxu0 0.0
  %2363 = vmatpush1.msra.mxu0 0.0
  %2364 = vmatprep.subr.mxu0 0.0
  %2365 = vmatpush1.msra.mxu0 0.0
  %2366 = vmatprep.subr.mxu0 0.0
  %2367 = vmatpush1.msra.mxu0 0.0
  %2368 = vmatprep.subr.mxu0 0.0
  %2369 = vmatpush1.msra.mxu0 0.0
  %2370 = vmatprep.subr.mxu0 0.0
  %2371 = vmatpush1.msra.mxu0 0.0
  %2372 = vmatprep.subr.mxu0 0.0
  %2373 = vmatpush1.msra.mxu0 0.0
  %2374 = vmatprep.subr.mxu0 0.0
  %2375 = vmatpush1.msra.mxu0 0.0
  %2376 = vmatprep.subr.mxu0 0.0
  %2377 = vmatpush1.msra.mxu0 0.0
  %2378 = vmatprep.subr.mxu0 0.0
  %2379 = vmatpush1.msra.mxu0 0.0
  %2380 = vmatprep.subr.mxu0 0.0
  %2381 = vmatpush1.msra.mxu0 0.0
  %2382 = vmatprep.subr.mxu0 0.0
  %2383 = vmatpush1.msra.mxu0 0.0
  %2384 = vmatprep.subr.mxu0 0.0
  %2385 = vmatpush1.msra.mxu0 0.0
  %2386 = vmatprep.subr.mxu0 0.0
  %2387 = vmatpush1.msra.mxu0 %v2357
  %2388 = vmatprep.subr.mxu0 0.0
  %2389 = vmatpush1.msra.mxu0 %v2355
  %2390 = vmatprep.subr.mxu0 0.0
  %2391 = vmatpush1.msra.mxu0 %v2353
  %2392 = vmatprep.subr.mxu0 0.0
  %2393 = vmatpush1.msra.mxu0 %v2351
  %2394 = vmatprep.subr.mxu0 0.0
  %2395 = vmatpush2.msra.mxu0 0.0
  %2396 = vmatprep.subr.mxu0 0.0
  %2397 = vmatpush2.msra.mxu0 0.0
  %2398 = vmatprep.subr.mxu0 0.0
  %2399 = vmatpush2.msra.mxu0 0.0
  %2400 = vmatprep.subr.mxu0 0.0
  %2401 = vmatpush2.msra.mxu0 0.0
  %2402 = vmatprep.subr.mxu0 0.0
  %2403 = vmatpush2.msra.mxu0 0.0
  %2404 = vmatprep.subr.mxu0 0.0
  %2405 = vmatpush2.msra.mxu0 0.0
  %2406 = vmatprep.subr.mxu0 0.0
  %2407 = vmatpush2.msra.mxu0 0.0
  %2408 = vmatprep.subr.mxu0 0.0
  %2409 = vmatpush2.msra.mxu0 0.0
  %2410 = vmatprep.subr.mxu0 0.0
  %2411 = vmatpush2.msra.mxu0 0.0
  %2412 = vmatprep.subr.mxu0 0.0
  %2413 = vmatpush2.msra.mxu0 0.0
  %2414 = vmatprep.subr.mxu0 0.0
  %2415 = vmatpush2.msra.mxu0 0.0
  %2416 = vmatprep.subr.mxu0 0.0
  %2417 = vmatpush2.msra.mxu0 0.0
  %2418 = vmatprep.subr.mxu0 0.0
  %2419 = vmatpush2.msra.mxu0 0.0
  %2420 = vmatprep.subr.mxu0 0.0
  %2421 = vmatpush2.msra.mxu0 0.0
  %2422 = vmatprep.subr.mxu0 0.0
  %2423 = vmatpush2.msra.mxu0 0.0
  %2424 = vmatprep.subr.mxu0 0.0
  %2425 = vmatpush2.msra.mxu0 0.0
  %2426 = vmatprep.mubr.f32.mxu0 0.0
  %2427 = vmatmul.mubr.f32.gmra.mxu0 %v830
  %v2428 = vpop.f32.mrf.mxu0
  %v2429 = vadd.f32 0.0, %v2428
  %v2430 = vpop.f32.mrf.mxu0
  %2431 = vmatprep.mubr.f32.mxu0 0.0
  %2432 = vmatmul.mubr.f32.gmra.mxu0 %v833
  %v2433 = vpop.f32.mrf.mxu0
  %v2434 = vadd.f32 0.0, %v2433
  %v2435 = vpop.f32.mrf.mxu0
  %2436 = vmatprep.mubr.f32.mxu0 0.0
  %2437 = vmatmul.mubr.f32.gmra.mxu0 %v836
  %v2438 = vpop.f32.mrf.mxu0
  %v2439 = vadd.f32 0.0, %v2438
  %v2440 = vpop.f32.mrf.mxu0
  %2441 = vmatprep.mubr.f32.mxu0 0.0
  %2442 = vmatmul.mubr.f32.gmra.mxu0 %v839
  %v2443 = vpop.f32.mrf.mxu0
  %v2444 = vadd.f32 0.0, %v2443
  %v2445 = vpop.f32.mrf.mxu0
  %2446 = vmatprep.mubr.f32.mxu0 0.0
  %2447 = vmatmul.mubr.f32.gmra.mxu0 %v842
  %v2448 = vpop.f32.mrf.mxu0
  %v2449 = vadd.f32 0.0, %v2448
  %v2450 = vpop.f32.mrf.mxu0
  %2451 = vmatprep.mubr.f32.mxu0 0.0
  %2452 = vmatmul.mubr.f32.gmra.mxu0 %v845
  %v2453 = vpop.f32.mrf.mxu0
  %v2454 = vadd.f32 0.0, %v2453
  %v2455 = vpop.f32.mrf.mxu0
  %2456 = vmatprep.mubr.f32.mxu0 0.0
  %2457 = vmatmul.mubr.f32.gmra.mxu0 %v848
  %v2458 = vpop.f32.mrf.mxu0
  %v2459 = vadd.f32 0.0, %v2458
  %v2460 = vpop.f32.mrf.mxu0
  %2461 = vmatprep.mubr.f32.mxu0 0.0
  %2462 = vmatmul.mubr.f32.gmra.mxu0 %v851
  %v2463 = vpop.f32.mrf.mxu0
  %v2464 = vadd.f32 0.0, %v2463
  %v2465 = vpop.f32.mrf.mxu0
  %2466 = vmatprep.mubr.f32.mxu0 0.0
  %2467 = vmatmul.mubr.f32.gmra.mxu0 %v854
  %v2468 = vpop.f32.mrf.mxu0
  %v2469 = vadd.f32 0.0, %v2468
  %v2470 = vpop.f32.mrf.mxu0
  %2471 = vmatprep.mubr.f32.mxu0 0.0
  %2472 = vmatmul.mubr.f32.gmra.mxu0 %v857
  %v2473 = vpop.f32.mrf.mxu0
  %v2474 = vadd.f32 0.0, %v2473
  %v2475 = vpop.f32.mrf.mxu0
  %2476 = vmatprep.mubr.f32.mxu0 0.0
  %2477 = vmatmul.mubr.f32.gmra.mxu0 %v860
  %v2478 = vpop.f32.mrf.mxu0
  %v2479 = vadd.f32 0.0, %v2478
  %v2480 = vpop.f32.mrf.mxu0
  %2481 = vmatprep.mubr.f32.mxu0 0.0
  %2482 = vmatmul.mubr.f32.gmra.mxu0 %v863
  %v2483 = vpop.f32.mrf.mxu0
  %v2484 = vadd.f32 0.0, %v2483
  %v2485 = vpop.f32.mrf.mxu0
  %2486 = vmatprep.mubr.f32.mxu0 0.0
  %2487 = vmatmul.mubr.f32.gmra.mxu0 %v866
  %v2488 = vpop.f32.mrf.mxu0
  %v2489 = vadd.f32 0.0, %v2488
  %v2490 = vpop.f32.mrf.mxu0
  %2491 = vmatprep.mubr.f32.mxu0 0.0
  %2492 = vmatmul.mubr.f32.gmra.mxu0 %v869
  %v2493 = vpop.f32.mrf.mxu0
  %v2494 = vadd.f32 0.0, %v2493
  %v2495 = vpop.f32.mrf.mxu0
  %2496 = vmatprep.mubr.f32.mxu0 0.0
  %2497 = vmatmul.mubr.f32.gmra.mxu0 %v872
  %v2498 = vpop.f32.mrf.mxu0
  %v2499 = vadd.f32 0.0, %v2498
  %v2500 = vpop.f32.mrf.mxu0
  %2501 = vmatprep.mubr.f32.mxu0 0.0
  %2502 = vmatmul.mubr.f32.gmra.mxu0 %v875
  %v2503 = vpop.f32.mrf.mxu0
  %v2504 = vadd.f32 0.0, %v2503
  %v2505 = vpop.f32.mrf.mxu0
  %2506 = vmatprep.mubr.f32.mxu0 0.0
  %2507 = vmatmul.mubr.f32.gmra.mxu0 %v878
  %v2508 = vpop.f32.mrf.mxu0
  %v2509 = vadd.f32 0.0, %v2508
  %v2510 = vpop.f32.mrf.mxu0
  %2511 = vmatprep.mubr.f32.mxu0 0.0
  %2512 = vmatmul.mubr.f32.gmra.mxu0 %v881
  %v2513 = vpop.f32.mrf.mxu0
  %v2514 = vadd.f32 0.0, %v2513
  %v2515 = vpop.f32.mrf.mxu0
  %2516 = vmatprep.mubr.f32.mxu0 0.0
  %2517 = vmatmul.mubr.f32.gmra.mxu0 %v884
  %v2518 = vpop.f32.mrf.mxu0
  %v2519 = vadd.f32 0.0, %v2518
  %v2520 = vpop.f32.mrf.mxu0
  %2521 = vmatprep.mubr.f32.mxu0 0.0
  %2522 = vmatmul.mubr.f32.gmra.mxu0 %v887
  %v2523 = vpop.f32.mrf.mxu0
  %v2524 = vadd.f32 0.0, %v2523
  %v2525 = vpop.f32.mrf.mxu0
  %2526 = vmatprep.mubr.f32.mxu0 0.0
  %2527 = vmatmul.mubr.f32.gmra.mxu0 %v890
  %v2528 = vpop.f32.mrf.mxu0
  %v2529 = vadd.f32 0.0, %v2528
  %v2530 = vpop.f32.mrf.mxu0
  %2531 = vmatprep.mubr.f32.mxu0 0.0
  %2532 = vmatmul.mubr.f32.gmra.mxu0 %v893
  %v2533 = vpop.f32.mrf.mxu0
  %v2534 = vadd.f32 0.0, %v2533
  %v2535 = vpop.f32.mrf.mxu0
  %2536 = vmatprep.mubr.f32.mxu0 0.0
  %2537 = vmatmul.mubr.f32.gmra.mxu0 %v896
  %v2538 = vpop.f32.mrf.mxu0
  %v2539 = vadd.f32 0.0, %v2538
  %v2540 = vpop.f32.mrf.mxu0
  %2541 = vmatprep.mubr.f32.mxu0 0.0
  %2542 = vmatmul.mubr.f32.gmra.mxu0 %v899
  %v2543 = vpop.f32.mrf.mxu0
  %v2544 = vadd.f32 0.0, %v2543
  %v2545 = vpop.f32.mrf.mxu0
  %2546 = vmatprep.mubr.f32.mxu0 0.0
  %2547 = vmatmul.mubr.f32.gmra.mxu0 %v902
  %v2548 = vpop.f32.mrf.mxu0
  %v2549 = vadd.f32 0.0, %v2548
  %v2550 = vpop.f32.mrf.mxu0
  %2551 = vmatprep.mubr.f32.mxu0 0.0
  %2552 = vmatmul.mubr.f32.gmra.mxu0 %v905
  %v2553 = vpop.f32.mrf.mxu0
  %v2554 = vadd.f32 0.0, %v2553
  %v2555 = vpop.f32.mrf.mxu0
  %2556 = vmatprep.mubr.f32.mxu0 0.0
  %2557 = vmatmul.mubr.f32.gmra.mxu0 %v908
  %v2558 = vpop.f32.mrf.mxu0
  %v2559 = vadd.f32 0.0, %v2558
  %v2560 = vpop.f32.mrf.mxu0
  %2561 = vmatprep.mubr.f32.mxu0 0.0
  %2562 = vmatmul.mubr.f32.gmra.mxu0 %v911
  %v2563 = vpop.f32.mrf.mxu0
  %v2564 = vadd.f32 0.0, %v2563
  %v2565 = vpop.f32.mrf.mxu0
  %2566 = vmatprep.mubr.f32.mxu0 0.0
  %2567 = vmatmul.mubr.f32.gmra.mxu0 %v914
  %v2568 = vpop.f32.mrf.mxu0
  %v2569 = vadd.f32 0.0, %v2568
  %v2570 = vpop.f32.mrf.mxu0
  %2571 = vmatprep.mubr.f32.mxu0 0.0
  %2572 = vmatmul.mubr.f32.gmra.mxu0 %v917
  %v2573 = vpop.f32.mrf.mxu0
  %v2574 = vadd.f32 0.0, %v2573
  %v2575 = vpop.f32.mrf.mxu0
  %2576 = vmatprep.mubr.f32.mxu0 0.0
  %2577 = vmatmul.mubr.f32.gmra.mxu0 %v920
  %v2578 = vpop.f32.mrf.mxu0
  %v2579 = vadd.f32 0.0, %v2578
  %v2580 = vpop.f32.mrf.mxu0
  %2581 = vmatprep.mubr.f32.mxu0 0.0
  %2582 = vmatmul.mubr.f32.gmra.mxu0 %v923
  %v2583 = vpop.f32.mrf.mxu0
  %v2584 = vadd.f32 0.0, %v2583
  %v2585 = vpop.f32.mrf.mxu0
  %2586 = vmatprep.mubr.f32.mxu0 0.0
  %2587 = vmatmul.mubr.f32.gmra.mxu0 %v926
  %v2588 = vpop.f32.mrf.mxu0
  %v2589 = vadd.f32 0.0, %v2588
  %v2590 = vpop.f32.mrf.mxu0
  %2591 = vmatprep.mubr.f32.mxu0 0.0
  %2592 = vmatmul.mubr.f32.gmra.mxu0 %v929
  %v2593 = vpop.f32.mrf.mxu0
  %v2594 = vadd.f32 0.0, %v2593
  %v2595 = vpop.f32.mrf.mxu0
  %2596 = vmatprep.mubr.f32.mxu0 0.0
  %2597 = vmatmul.mubr.f32.gmra.mxu0 %v932
  %v2598 = vpop.f32.mrf.mxu0
  %v2599 = vadd.f32 0.0, %v2598
  %v2600 = vpop.f32.mrf.mxu0
  %2601 = vmatprep.mubr.f32.mxu0 0.0
  %2602 = vmatmul.mubr.f32.gmra.mxu0 %v935
  %v2603 = vpop.f32.mrf.mxu0
  %v2604 = vadd.f32 0.0, %v2603
  %v2605 = vpop.f32.mrf.mxu0
  %2606 = vmatprep.mubr.f32.mxu0 0.0
  %2607 = vmatmul.mubr.f32.gmra.mxu0 %v938
  %v2608 = vpop.f32.mrf.mxu0
  %v2609 = vadd.f32 0.0, %v2608
  %v2610 = vpop.f32.mrf.mxu0
  %2611 = vmatprep.mubr.f32.mxu0 0.0
  %2612 = vmatmul.mubr.f32.gmra.mxu0 %v941
  %v2613 = vpop.f32.mrf.mxu0
  %v2614 = vadd.f32 0.0, %v2613
  %v2615 = vpop.f32.mrf.mxu0
  %2616 = vmatprep.mubr.f32.mxu0 0.0
  %2617 = vmatmul.mubr.f32.gmra.mxu0 %v944
  %v2618 = vpop.f32.mrf.mxu0
  %v2619 = vadd.f32 0.0, %v2618
  %v2620 = vpop.f32.mrf.mxu0
  %2621 = vmatprep.mubr.f32.mxu0 0.0
  %2622 = vmatmul.mubr.f32.gmra.mxu0 %v947
  %v2623 = vpop.f32.mrf.mxu0
  %v2624 = vadd.f32 0.0, %v2623
  %v2625 = vpop.f32.mrf.mxu0
  %2626 = vmatprep.mubr.f32.mxu0 0.0
  %2627 = vmatmul.mubr.f32.gmra.mxu0 %v950
  %v2628 = vpop.f32.mrf.mxu0
  %v2629 = vadd.f32 0.0, %v2628
  %v2630 = vpop.f32.mrf.mxu0
  %2631 = vmatprep.mubr.f32.mxu0 0.0
  %2632 = vmatmul.mubr.f32.gmra.mxu0 %v953
  %v2633 = vpop.f32.mrf.mxu0
  %v2634 = vadd.f32 0.0, %v2633
  %v2635 = vpop.f32.mrf.mxu0
  %2636 = vmatprep.mubr.f32.mxu0 0.0
  %2637 = vmatmul.mubr.f32.gmra.mxu0 %v956
  %v2638 = vpop.f32.mrf.mxu0
  %v2639 = vadd.f32 0.0, %v2638
  %v2640 = vpop.f32.mrf.mxu0
  %2641 = vmatprep.mubr.f32.mxu0 0.0
  %2642 = vmatmul.mubr.f32.gmra.mxu0 %v959
  %v2643 = vpop.f32.mrf.mxu0
  %v2644 = vadd.f32 0.0, %v2643
  %v2645 = vpop.f32.mrf.mxu0
  %2646 = vmatprep.mubr.f32.mxu0 0.0
  %2647 = vmatmul.mubr.f32.gmra.mxu0 %v962
  %v2648 = vpop.f32.mrf.mxu0
  %v2649 = vadd.f32 0.0, %v2648
  %v2650 = vpop.f32.mrf.mxu0
  %2651 = vmatprep.mubr.f32.mxu0 0.0
  %2652 = vmatmul.mubr.f32.gmra.mxu0 %v965
  %v2653 = vpop.f32.mrf.mxu0
  %v2654 = vadd.f32 0.0, %v2653
  %v2655 = vpop.f32.mrf.mxu0
  %2656 = vmatprep.mubr.f32.mxu0 0.0
  %2657 = vmatmul.mubr.f32.gmra.mxu0 %v968
  %v2658 = vpop.f32.mrf.mxu0
  %v2659 = vadd.f32 0.0, %v2658
  %v2660 = vpop.f32.mrf.mxu0
  %2661 = vmatprep.mubr.f32.mxu0 0.0
  %2662 = vmatmul.mubr.f32.gmra.mxu0 %v971
  %v2663 = vpop.f32.mrf.mxu0
  %v2664 = vadd.f32 0.0, %v2663
  %v2665 = vpop.f32.mrf.mxu0
  %2666 = vmatprep.mubr.f32.mxu0 0.0
  %2667 = vmatmul.mubr.f32.gmra.mxu0 %v974
  %v2668 = vpop.f32.mrf.mxu0
  %v2669 = vadd.f32 0.0, %v2668
  %v2670 = vpop.f32.mrf.mxu0
  %2671 = vmatprep.mubr.f32.mxu0 0.0
  %2672 = vmatmul.mubr.f32.gmra.mxu0 %v977
  %v2673 = vpop.f32.mrf.mxu0
  %v2674 = vadd.f32 0.0, %v2673
  %v2675 = vpop.f32.mrf.mxu0
  %2676 = vmatprep.mubr.f32.mxu0 0.0
  %2677 = vmatmul.mubr.f32.gmra.mxu0 %v980
  %v2678 = vpop.f32.mrf.mxu0
  %v2679 = vadd.f32 0.0, %v2678
  %v2680 = vpop.f32.mrf.mxu0
  %2681 = vmatprep.mubr.f32.mxu0 0.0
  %2682 = vmatmul.mubr.f32.gmra.mxu0 %v983
  %v2683 = vpop.f32.mrf.mxu0
  %v2684 = vadd.f32 0.0, %v2683
  %v2685 = vpop.f32.mrf.mxu0
  %2686 = vmatprep.mubr.f32.mxu0 0.0
  %2687 = vmatmul.mubr.f32.gmra.mxu0 %v986
  %v2688 = vpop.f32.mrf.mxu0
  %v2689 = vadd.f32 0.0, %v2688
  %v2690 = vpop.f32.mrf.mxu0
  %2691 = vmatprep.mubr.f32.mxu0 0.0
  %2692 = vmatmul.mubr.f32.gmra.mxu0 %v989
  %v2693 = vpop.f32.mrf.mxu0
  %v2694 = vadd.f32 0.0, %v2693
  %v2695 = vpop.f32.mrf.mxu0
  %2696 = vmatprep.mubr.f32.mxu0 0.0
  %2697 = vmatmul.mubr.f32.gmra.mxu0 %v992
  %v2698 = vpop.f32.mrf.mxu0
  %v2699 = vadd.f32 0.0, %v2698
  %v2700 = vpop.f32.mrf.mxu0
  %2701 = vmatprep.mubr.f32.mxu0 0.0
  %2702 = vmatmul.mubr.f32.gmra.mxu0 %v995
  %v2703 = vpop.f32.mrf.mxu0
  %v2704 = vadd.f32 0.0, %v2703
  %v2705 = vpop.f32.mrf.mxu0
  %2706 = vmatprep.mubr.f32.mxu0 0.0
  %2707 = vmatmul.mubr.f32.gmra.mxu0 %v998
  %v2708 = vpop.f32.mrf.mxu0
  %v2709 = vadd.f32 0.0, %v2708
  %v2710 = vpop.f32.mrf.mxu0
  %2711 = vmatprep.mubr.f32.mxu0 0.0
  %2712 = vmatmul.mubr.f32.gmra.mxu0 %v1001
  %v2713 = vpop.f32.mrf.mxu0
  %v2714 = vadd.f32 0.0, %v2713
  %v2715 = vpop.f32.mrf.mxu0
  %2716 = vmatprep.mubr.f32.mxu0 0.0
  %2717 = vmatmul.mubr.f32.gmra.mxu0 %v1004
  %v2718 = vpop.f32.mrf.mxu0
  %v2719 = vadd.f32 0.0, %v2718
  %v2720 = vpop.f32.mrf.mxu0
  %2721 = vmatprep.mubr.f32.mxu0 0.0
  %2722 = vmatmul.mubr.f32.gmra.mxu0 %v1007
  %v2723 = vpop.f32.mrf.mxu0
  %v2724 = vadd.f32 0.0, %v2723
  %v2725 = vpop.f32.mrf.mxu0
  %2726 = vmatprep.mubr.f32.mxu0 0.0
  %2727 = vmatmul.mubr.f32.gmra.mxu0 %v1010
  %v2728 = vpop.f32.mrf.mxu0
  %v2729 = vadd.f32 0.0, %v2728
  %v2730 = vpop.f32.mrf.mxu0
  %2731 = vmatprep.mubr.f32.mxu0 0.0
  %2732 = vmatmul.mubr.f32.gmra.mxu0 %v1013
  %v2733 = vpop.f32.mrf.mxu0
  %v2734 = vadd.f32 0.0, %v2733
  %v2735 = vpop.f32.mrf.mxu0
  %2736 = vmatprep.mubr.f32.mxu0 0.0
  %2737 = vmatmul.mubr.f32.gmra.mxu0 %v1016
  %v2738 = vpop.f32.mrf.mxu0
  %v2739 = vadd.f32 0.0, %v2738
  %v2740 = vpop.f32.mrf.mxu0
  %2741 = vmatprep.mubr.f32.mxu0 0.0
  %2742 = vmatmul.mubr.f32.gmra.mxu0 %v1019
  %v2743 = vpop.f32.mrf.mxu0
  %v2744 = vadd.f32 0.0, %v2743
  %v2745 = vpop.f32.mrf.mxu0
  %2746 = vmatprep.mubr.f32.mxu0 0.0
  %2747 = vmatmul.mubr.f32.gmra.mxu0 %v1022
  %v2748 = vpop.f32.mrf.mxu0
  %v2749 = vadd.f32 0.0, %v2748
  %v2750 = vpop.f32.mrf.mxu0
  %2751 = vmatprep.mubr.f32.mxu0 0.0
  %2752 = vmatmul.mubr.f32.gmra.mxu0 %v1025
  %v2753 = vpop.f32.mrf.mxu0
  %v2754 = vadd.f32 0.0, %v2753
  %v2755 = vpop.f32.mrf.mxu0
  %2756 = vmatprep.mubr.f32.mxu0 0.0
  %2757 = vmatmul.mubr.f32.gmra.mxu0 %v1028
  %v2758 = vpop.f32.mrf.mxu0
  %v2759 = vadd.f32 0.0, %v2758
  %v2760 = vpop.f32.mrf.mxu0
  %2761 = vmatprep.mubr.f32.mxu0 0.0
  %2762 = vmatmul.mubr.f32.gmra.mxu0 %v1031
  %v2763 = vpop.f32.mrf.mxu0
  %v2764 = vadd.f32 0.0, %v2763
  %v2765 = vpop.f32.mrf.mxu0
  %2766 = vmatprep.mubr.f32.mxu0 0.0
  %2767 = vmatmul.mubr.f32.gmra.mxu0 %v1034
  %v2768 = vpop.f32.mrf.mxu0
  %v2769 = vadd.f32 0.0, %v2768
  %v2770 = vpop.f32.mrf.mxu0
  %2771 = vmatprep.mubr.f32.mxu0 0.0
  %2772 = vmatmul.mubr.f32.gmra.mxu0 %v1037
  %v2773 = vpop.f32.mrf.mxu0
  %v2774 = vadd.f32 0.0, %v2773
  %v2775 = vpop.f32.mrf.mxu0
  %2776 = vmatprep.mubr.f32.mxu0 0.0
  %2777 = vmatmul.mubr.f32.gmra.mxu0 %v1040
  %v2778 = vpop.f32.mrf.mxu0
  %v2779 = vadd.f32 0.0, %v2778
  %v2780 = vpop.f32.mrf.mxu0
  %2781 = vmatprep.mubr.f32.mxu0 0.0
  %2782 = vmatmul.mubr.f32.gmra.mxu0 %v1043
  %v2783 = vpop.f32.mrf.mxu0
  %v2784 = vadd.f32 0.0, %v2783
  %v2785 = vpop.f32.mrf.mxu0
  %2786 = vmatprep.mubr.f32.mxu0 0.0
  %2787 = vmatmul.mubr.f32.gmra.mxu0 %v1046
  %v2788 = vpop.f32.mrf.mxu0
  %v2789 = vadd.f32 0.0, %v2788
  %v2790 = vpop.f32.mrf.mxu0
  %2791 = vmatprep.mubr.f32.mxu0 0.0
  %2792 = vmatmul.mubr.f32.gmra.mxu0 %v1049
  %v2793 = vpop.f32.mrf.mxu0
  %v2794 = vadd.f32 0.0, %v2793
  %v2795 = vpop.f32.mrf.mxu0
  %2796 = vmatprep.mubr.f32.mxu0 0.0
  %2797 = vmatmul.mubr.f32.gmra.mxu0 %v1052
  %v2798 = vpop.f32.mrf.mxu0
  %v2799 = vadd.f32 0.0, %v2798
  %v2800 = vpop.f32.mrf.mxu0
  %2801 = vmatprep.mubr.f32.mxu0 0.0
  %2802 = vmatmul.mubr.f32.gmra.mxu0 %v1055
  %v2803 = vpop.f32.mrf.mxu0
  %v2804 = vadd.f32 0.0, %v2803
  %v2805 = vpop.f32.mrf.mxu0
  %2806 = vmatprep.mubr.f32.mxu0 0.0
  %2807 = vmatmul.mubr.f32.gmra.mxu0 %v1058
  %v2808 = vpop.f32.mrf.mxu0
  %v2809 = vadd.f32 0.0, %v2808
  %v2810 = vpop.f32.mrf.mxu0
  %2811 = vmatprep.mubr.f32.mxu0 0.0
  %2812 = vmatmul.mubr.f32.gmra.mxu0 %v1061
  %v2813 = vpop.f32.mrf.mxu0
  %v2814 = vadd.f32 0.0, %v2813
  %v2815 = vpop.f32.mrf.mxu0
  %2816 = vmatprep.mubr.f32.mxu0 0.0
  %2817 = vmatmul.mubr.f32.gmra.mxu0 %v1064
  %v2818 = vpop.f32.mrf.mxu0
  %v2819 = vadd.f32 0.0, %v2818
  %v2820 = vpop.f32.mrf.mxu0
  %2821 = vmatprep.mubr.f32.mxu0 0.0
  %2822 = vmatmul.mubr.f32.gmra.mxu0 %v1067
  %v2823 = vpop.f32.mrf.mxu0
  %v2824 = vadd.f32 0.0, %v2823
  %v2825 = vpop.f32.mrf.mxu0
  %2826 = vmatprep.mubr.f32.mxu0 0.0
  %2827 = vmatmul.mubr.f32.gmra.mxu0 %v1070
  %v2828 = vpop.f32.mrf.mxu0
  %v2829 = vadd.f32 0.0, %v2828
  %v2830 = vpop.f32.mrf.mxu0
  %2831 = vmatprep.mubr.f32.mxu0 0.0
  %2832 = vmatmul.mubr.f32.gmra.mxu0 %v1073
  %v2833 = vpop.f32.mrf.mxu0
  %v2834 = vadd.f32 0.0, %v2833
  %v2835 = vpop.f32.mrf.mxu0
  %2836 = vmatprep.mubr.f32.mxu0 0.0
  %2837 = vmatmul.mubr.f32.gmra.mxu0 %v1076
  %v2838 = vpop.f32.mrf.mxu0
  %v2839 = vadd.f32 0.0, %v2838
  %v2840 = vpop.f32.mrf.mxu0
  %2841 = vmatprep.mubr.f32.mxu0 0.0
  %2842 = vmatmul.mubr.f32.gmra.mxu0 %v1079
  %v2843 = vpop.f32.mrf.mxu0
  %v2844 = vadd.f32 0.0, %v2843
  %v2845 = vpop.f32.mrf.mxu0
  %2846 = vmatprep.mubr.f32.mxu0 0.0
  %2847 = vmatmul.mubr.f32.gmra.mxu0 %v1082
  %v2848 = vpop.f32.mrf.mxu0
  %v2849 = vadd.f32 0.0, %v2848
  %v2850 = vpop.f32.mrf.mxu0
  %2851 = vmatprep.mubr.f32.mxu0 0.0
  %2852 = vmatmul.mubr.f32.gmra.mxu0 %v1085
  %v2853 = vpop.f32.mrf.mxu0
  %v2854 = vadd.f32 0.0, %v2853
  %v2855 = vpop.f32.mrf.mxu0
  %2856 = vmatprep.mubr.f32.mxu0 0.0
  %2857 = vmatmul.mubr.f32.gmra.mxu0 %v1088
  %v2858 = vpop.f32.mrf.mxu0
  %v2859 = vadd.f32 0.0, %v2858
  %v2860 = vpop.f32.mrf.mxu0
  %2861 = vmatprep.mubr.f32.mxu0 0.0
  %2862 = vmatmul.mubr.f32.gmra.mxu0 %v1091
  %v2863 = vpop.f32.mrf.mxu0
  %v2864 = vadd.f32 0.0, %v2863
  %v2865 = vpop.f32.mrf.mxu0
  %2866 = vmatprep.mubr.f32.mxu0 0.0
  %2867 = vmatmul.mubr.f32.gmra.mxu0 %v1094
  %v2868 = vpop.f32.mrf.mxu0
  %v2869 = vadd.f32 0.0, %v2868
  %v2870 = vpop.f32.mrf.mxu0
  %2871 = vmatprep.mubr.f32.mxu0 0.0
  %2872 = vmatmul.mubr.f32.gmra.mxu0 %v1097
  %v2873 = vpop.f32.mrf.mxu0
  %v2874 = vadd.f32 0.0, %v2873
  %v2875 = vpop.f32.mrf.mxu0
  %2876 = vmatprep.mubr.f32.mxu0 0.0
  %2877 = vmatmul.mubr.f32.gmra.mxu0 %v1100
  %v2878 = vpop.f32.mrf.mxu0
  %v2879 = vadd.f32 0.0, %v2878
  %v2880 = vpop.f32.mrf.mxu0
  %2881 = vmatprep.mubr.f32.mxu0 0.0
  %2882 = vmatmul.mubr.f32.gmra.mxu0 %v1103
  %v2883 = vpop.f32.mrf.mxu0
  %v2884 = vadd.f32 0.0, %v2883
  %v2885 = vpop.f32.mrf.mxu0
  %2886 = vmatprep.mubr.f32.mxu0 0.0
  %2887 = vmatmul.mubr.f32.gmra.mxu0 %v1106
  %v2888 = vpop.f32.mrf.mxu0
  %v2889 = vadd.f32 0.0, %v2888
  %v2890 = vpop.f32.mrf.mxu0
  %2891 = vmatprep.mubr.f32.mxu0 0.0
  %2892 = vmatmul.mubr.f32.gmra.mxu0 %v1109
  %v2893 = vpop.f32.mrf.mxu0
  %v2894 = vadd.f32 0.0, %v2893
  %v2895 = vpop.f32.mrf.mxu0
  %2896 = vmatprep.mubr.f32.mxu0 0.0
  %2897 = vmatmul.mubr.f32.gmra.mxu0 %v1112
  %v2898 = vpop.f32.mrf.mxu0
  %v2899 = vadd.f32 0.0, %v2898
  %v2900 = vpop.f32.mrf.mxu0
  %2901 = vmatprep.mubr.f32.mxu0 0.0
  %2902 = vmatmul.mubr.f32.gmra.mxu0 %v1115
  %v2903 = vpop.f32.mrf.mxu0
  %v2904 = vadd.f32 0.0, %v2903
  %v2905 = vpop.f32.mrf.mxu0
  %2906 = vmatprep.mubr.f32.mxu0 0.0
  %2907 = vmatmul.mubr.f32.gmra.mxu0 %v1118
  %v2908 = vpop.f32.mrf.mxu0
  %v2909 = vadd.f32 0.0, %v2908
  %v2910 = vpop.f32.mrf.mxu0
  %2911 = vmatprep.mubr.f32.mxu0 0.0
  %2912 = vmatmul.mubr.f32.gmra.mxu0 %v1121
  %v2913 = vpop.f32.mrf.mxu0
  %v2914 = vadd.f32 0.0, %v2913
  %v2915 = vpop.f32.mrf.mxu0
  %2916 = vmatprep.mubr.f32.mxu0 0.0
  %2917 = vmatmul.mubr.f32.gmra.mxu0 %v1124
  %v2918 = vpop.f32.mrf.mxu0
  %v2919 = vadd.f32 0.0, %v2918
  %v2920 = vpop.f32.mrf.mxu0
  %2921 = vmatprep.mubr.f32.mxu0 0.0
  %2922 = vmatmul.mubr.f32.gmra.mxu0 %v1127
  %v2923 = vpop.f32.mrf.mxu0
  %v2924 = vadd.f32 0.0, %v2923
  %v2925 = vpop.f32.mrf.mxu0
  %2926 = vmatprep.mubr.f32.mxu0 0.0
  %2927 = vmatmul.mubr.f32.gmra.mxu0 %v1130
  %v2928 = vpop.f32.mrf.mxu0
  %v2929 = vadd.f32 0.0, %v2928
  %v2930 = vpop.f32.mrf.mxu0
  %2931 = vmatprep.mubr.f32.mxu0 0.0
  %2932 = vmatmul.mubr.f32.gmra.mxu0 %v1133
  %v2933 = vpop.f32.mrf.mxu0
  %v2934 = vadd.f32 0.0, %v2933
  %v2935 = vpop.f32.mrf.mxu0
  %2936 = vmatprep.mubr.f32.mxu0 0.0
  %2937 = vmatmul.mubr.f32.gmra.mxu0 %v1136
  %v2938 = vpop.f32.mrf.mxu0
  %v2939 = vadd.f32 0.0, %v2938
  %v2940 = vpop.f32.mrf.mxu0
  %2941 = vmatprep.mubr.f32.mxu0 0.0
  %2942 = vmatmul.mubr.f32.gmra.mxu0 %v1139
  %v2943 = vpop.f32.mrf.mxu0
  %v2944 = vadd.f32 0.0, %v2943
  %v2945 = vpop.f32.mrf.mxu0
  %2946 = vmatprep.mubr.f32.mxu0 0.0
  %2947 = vmatmul.mubr.f32.gmra.mxu0 %v1142
  %v2948 = vpop.f32.mrf.mxu0
  %v2949 = vadd.f32 0.0, %v2948
  %v2950 = vpop.f32.mrf.mxu0
  %2951 = vmatprep.mubr.f32.mxu0 0.0
  %2952 = vmatmul.mubr.f32.gmra.mxu0 %v1145
  %v2953 = vpop.f32.mrf.mxu0
  %v2954 = vadd.f32 0.0, %v2953
  %v2955 = vpop.f32.mrf.mxu0
  %2956 = vmatprep.mubr.f32.mxu0 0.0
  %2957 = vmatmul.mubr.f32.gmra.mxu0 %v1148
  %v2958 = vpop.f32.mrf.mxu0
  %v2959 = vadd.f32 0.0, %v2958
  %v2960 = vpop.f32.mrf.mxu0
  %2961 = vmatprep.mubr.f32.mxu0 0.0
  %2962 = vmatmul.mubr.f32.gmra.mxu0 %v1151
  %v2963 = vpop.f32.mrf.mxu0
  %v2964 = vadd.f32 0.0, %v2963
  %v2965 = vpop.f32.mrf.mxu0
  %2966 = vdwg.mxu0
  %v2967 = vlaneseq
  %v2968 = vshrl.u32 %v2967, 7
  %v2969 = vsub.s32 0, %v2968
  %v2970 = vrot.slane %v795, %v2969
  %v2971 = vmul.f32 %v2429, %v2970
  %v2972 = vmul.f32 %v2434, %v2970
  %v2973 = vmul.f32 %v2439, %v2970
  %v2974 = vmul.f32 %v2444, %v2970
  %v2975 = vadd.f32 %v2971, 0.0
  %v2976 = vadd.f32 %v2972, 0.0
  %v2977 = vadd.f32 %v2973, 0.0
  %v2978 = vadd.f32 %v2974, 0.0
  %v2979 = vlaneseq
  %v2980 = vshrl.u32 %v2979, 7
  %v2981 = vsub.s32 1, %v2980
  %v2982 = vrot.slane %v795, %v2981
  %v2983 = vmul.f32 %v2449, %v2982
  %v2984 = vmul.f32 %v2454, %v2982
  %v2985 = vmul.f32 %v2459, %v2982
  %v2986 = vmul.f32 %v2464, %v2982
  %v2987 = vadd.f32 %v2975, %v2983
  %v2988 = vadd.f32 %v2976, %v2984
  %v2989 = vadd.f32 %v2977, %v2985
  %v2990 = vadd.f32 %v2978, %v2986
  %v2991 = vlaneseq
  %v2992 = vshrl.u32 %v2991, 7
  %v2993 = vsub.s32 2, %v2992
  %v2994 = vrot.slane %v795, %v2993
  %v2995 = vmul.f32 %v2469, %v2994
  %v2996 = vmul.f32 %v2474, %v2994
  %v2997 = vmul.f32 %v2479, %v2994
  %v2998 = vmul.f32 %v2484, %v2994
  %v2999 = vadd.f32 %v2987, %v2995
  %v3000 = vadd.f32 %v2988, %v2996
  %v3001 = vadd.f32 %v2989, %v2997
  %v3002 = vadd.f32 %v2990, %v2998
  %v3003 = vlaneseq
  %v3004 = vshrl.u32 %v3003, 7
  %v3005 = vsub.s32 3, %v3004
  %v3006 = vrot.slane %v795, %v3005
  %v3007 = vmul.f32 %v2489, %v3006
  %v3008 = vmul.f32 %v2494, %v3006
  %v3009 = vmul.f32 %v2499, %v3006
  %v3010 = vmul.f32 %v2504, %v3006
  %v3011 = vadd.f32 %v2999, %v3007
  %v3012 = vadd.f32 %v3000, %v3008
  %v3013 = vadd.f32 %v3001, %v3009
  %v3014 = vadd.f32 %v3002, %v3010
  %v3015 = vlaneseq
  %v3016 = vshrl.u32 %v3015, 7
  %v3017 = vsub.s32 4, %v3016
  %v3018 = vrot.slane %v795, %v3017
  %v3019 = vmul.f32 %v2509, %v3018
  %v3020 = vmul.f32 %v2514, %v3018
  %v3021 = vmul.f32 %v2519, %v3018
  %v3022 = vmul.f32 %v2524, %v3018
  %v3023 = vadd.f32 %v3011, %v3019
  %v3024 = vadd.f32 %v3012, %v3020
  %v3025 = vadd.f32 %v3013, %v3021
  %v3026 = vadd.f32 %v3014, %v3022
  %v3027 = vlaneseq
  %v3028 = vshrl.u32 %v3027, 7
  %v3029 = vsub.s32 5, %v3028
  %v3030 = vrot.slane %v795, %v3029
  %v3031 = vmul.f32 %v2529, %v3030
  %v3032 = vmul.f32 %v2534, %v3030
  %v3033 = vmul.f32 %v2539, %v3030
  %v3034 = vmul.f32 %v2544, %v3030
  %v3035 = vadd.f32 %v3023, %v3031
  %v3036 = vadd.f32 %v3024, %v3032
  %v3037 = vadd.f32 %v3025, %v3033
  %v3038 = vadd.f32 %v3026, %v3034
  %v3039 = vlaneseq
  %v3040 = vshrl.u32 %v3039, 7
  %v3041 = vsub.s32 6, %v3040
  %v3042 = vrot.slane %v795, %v3041
  %v3043 = vmul.f32 %v2549, %v3042
  %v3044 = vmul.f32 %v2554, %v3042
  %v3045 = vmul.f32 %v2559, %v3042
  %v3046 = vmul.f32 %v2564, %v3042
  %v3047 = vadd.f32 %v3035, %v3043
  %v3048 = vadd.f32 %v3036, %v3044
  %v3049 = vadd.f32 %v3037, %v3045
  %v3050 = vadd.f32 %v3038, %v3046
  %v3051 = vlaneseq
  %v3052 = vshrl.u32 %v3051, 7
  %v3053 = vsub.s32 7, %v3052
  %v3054 = vrot.slane %v795, %v3053
  %v3055 = vmul.f32 %v2569, %v3054
  %v3056 = vmul.f32 %v2574, %v3054
  %v3057 = vmul.f32 %v2579, %v3054
  %v3058 = vmul.f32 %v2584, %v3054
  %v3059 = vadd.f32 %v3047, %v3055
  %v3060 = vadd.f32 %v3048, %v3056
  %v3061 = vadd.f32 %v3049, %v3057
  %v3062 = vadd.f32 %v3050, %v3058
  %v3063 = vlaneseq
  %v3064 = vshrl.u32 %v3063, 7
  %v3065 = vsub.s32 0, %v3064
  %v3066 = vrot.slane %v796, %v3065
  %v3067 = vmul.f32 %v2589, %v3066
  %v3068 = vmul.f32 %v2594, %v3066
  %v3069 = vmul.f32 %v2599, %v3066
  %v3070 = vmul.f32 %v2604, %v3066
  %v3071 = vadd.f32 %v3059, %v3067
  %v3072 = vadd.f32 %v3060, %v3068
  %v3073 = vadd.f32 %v3061, %v3069
  %v3074 = vadd.f32 %v3062, %v3070
  %v3075 = vlaneseq
  %v3076 = vshrl.u32 %v3075, 7
  %v3077 = vsub.s32 1, %v3076
  %v3078 = vrot.slane %v796, %v3077
  %v3079 = vmul.f32 %v2609, %v3078
  %v3080 = vmul.f32 %v2614, %v3078
  %v3081 = vmul.f32 %v2619, %v3078
  %v3082 = vmul.f32 %v2624, %v3078
  %v3083 = vadd.f32 %v3071, %v3079
  %v3084 = vadd.f32 %v3072, %v3080
  %v3085 = vadd.f32 %v3073, %v3081
  %v3086 = vadd.f32 %v3074, %v3082
  %v3087 = vlaneseq
  %v3088 = vshrl.u32 %v3087, 7
  %v3089 = vsub.s32 2, %v3088
  %v3090 = vrot.slane %v796, %v3089
  %v3091 = vmul.f32 %v2629, %v3090
  %v3092 = vmul.f32 %v2634, %v3090
  %v3093 = vmul.f32 %v2639, %v3090
  %v3094 = vmul.f32 %v2644, %v3090
  %v3095 = vadd.f32 %v3083, %v3091
  %v3096 = vadd.f32 %v3084, %v3092
  %v3097 = vadd.f32 %v3085, %v3093
  %v3098 = vadd.f32 %v3086, %v3094
  %v3099 = vlaneseq
  %v3100 = vshrl.u32 %v3099, 7
  %v3101 = vsub.s32 3, %v3100
  %v3102 = vrot.slane %v796, %v3101
  %v3103 = vmul.f32 %v2649, %v3102
  %v3104 = vmul.f32 %v2654, %v3102
  %v3105 = vmul.f32 %v2659, %v3102
  %v3106 = vmul.f32 %v2664, %v3102
  %v3107 = vadd.f32 %v3095, %v3103
  %v3108 = vadd.f32 %v3096, %v3104
  %v3109 = vadd.f32 %v3097, %v3105
  %v3110 = vadd.f32 %v3098, %v3106
  %v3111 = vlaneseq
  %v3112 = vshrl.u32 %v3111, 7
  %v3113 = vsub.s32 4, %v3112
  %v3114 = vrot.slane %v796, %v3113
  %v3115 = vmul.f32 %v2669, %v3114
  %v3116 = vmul.f32 %v2674, %v3114
  %v3117 = vmul.f32 %v2679, %v3114
  %v3118 = vmul.f32 %v2684, %v3114
  %v3119 = vadd.f32 %v3107, %v3115
  %v3120 = vadd.f32 %v3108, %v3116
  %v3121 = vadd.f32 %v3109, %v3117
  %v3122 = vadd.f32 %v3110, %v3118
  %v3123 = vlaneseq
  %v3124 = vshrl.u32 %v3123, 7
  %v3125 = vsub.s32 5, %v3124
  %v3126 = vrot.slane %v796, %v3125
  %v3127 = vmul.f32 %v2689, %v3126
  %v3128 = vmul.f32 %v2694, %v3126
  %v3129 = vmul.f32 %v2699, %v3126
  %v3130 = vmul.f32 %v2704, %v3126
  %v3131 = vadd.f32 %v3119, %v3127
  %v3132 = vadd.f32 %v3120, %v3128
  %v3133 = vadd.f32 %v3121, %v3129
  %v3134 = vadd.f32 %v3122, %v3130
  %v3135 = vlaneseq
  %v3136 = vshrl.u32 %v3135, 7
  %v3137 = vsub.s32 6, %v3136
  %v3138 = vrot.slane %v796, %v3137
  %v3139 = vmul.f32 %v2709, %v3138
  %v3140 = vmul.f32 %v2714, %v3138
  %v3141 = vmul.f32 %v2719, %v3138
  %v3142 = vmul.f32 %v2724, %v3138
  %v3143 = vadd.f32 %v3131, %v3139
  %v3144 = vadd.f32 %v3132, %v3140
  %v3145 = vadd.f32 %v3133, %v3141
  %v3146 = vadd.f32 %v3134, %v3142
  %v3147 = vlaneseq
  %v3148 = vshrl.u32 %v3147, 7
  %v3149 = vsub.s32 7, %v3148
  %v3150 = vrot.slane %v796, %v3149
  %v3151 = vmul.f32 %v2729, %v3150
  %v3152 = vmul.f32 %v2734, %v3150
  %v3153 = vmul.f32 %v2739, %v3150
  %v3154 = vmul.f32 %v2744, %v3150
  %v3155 = vadd.f32 %v3143, %v3151
  %v3156 = vadd.f32 %v3144, %v3152
  %v3157 = vadd.f32 %v3145, %v3153
  %v3158 = vadd.f32 %v3146, %v3154
  %v3159 = vlaneseq
  %v3160 = vshrl.u32 %v3159, 7
  %v3161 = vsub.s32 0, %v3160
  %v3162 = vrot.slane %v797, %v3161
  %v3163 = vmul.f32 %v2749, %v3162
  %v3164 = vmul.f32 %v2754, %v3162
  %v3165 = vmul.f32 %v2759, %v3162
  %v3166 = vmul.f32 %v2764, %v3162
  %v3167 = vadd.f32 %v3155, %v3163
  %v3168 = vadd.f32 %v3156, %v3164
  %v3169 = vadd.f32 %v3157, %v3165
  %v3170 = vadd.f32 %v3158, %v3166
  %v3171 = vlaneseq
  %v3172 = vshrl.u32 %v3171, 7
  %v3173 = vsub.s32 1, %v3172
  %v3174 = vrot.slane %v797, %v3173
  %v3175 = vmul.f32 %v2769, %v3174
  %v3176 = vmul.f32 %v2774, %v3174
  %v3177 = vmul.f32 %v2779, %v3174
  %v3178 = vmul.f32 %v2784, %v3174
  %v3179 = vadd.f32 %v3167, %v3175
  %v3180 = vadd.f32 %v3168, %v3176
  %v3181 = vadd.f32 %v3169, %v3177
  %v3182 = vadd.f32 %v3170, %v3178
  %v3183 = vlaneseq
  %v3184 = vshrl.u32 %v3183, 7
  %v3185 = vsub.s32 2, %v3184
  %v3186 = vrot.slane %v797, %v3185
  %v3187 = vmul.f32 %v2789, %v3186
  %v3188 = vmul.f32 %v2794, %v3186
  %v3189 = vmul.f32 %v2799, %v3186
  %v3190 = vmul.f32 %v2804, %v3186
  %v3191 = vadd.f32 %v3179, %v3187
  %v3192 = vadd.f32 %v3180, %v3188
  %v3193 = vadd.f32 %v3181, %v3189
  %v3194 = vadd.f32 %v3182, %v3190
  %v3195 = vlaneseq
  %v3196 = vshrl.u32 %v3195, 7
  %v3197 = vsub.s32 3, %v3196
  %v3198 = vrot.slane %v797, %v3197
  %v3199 = vmul.f32 %v2809, %v3198
  %v3200 = vmul.f32 %v2814, %v3198
  %v3201 = vmul.f32 %v2819, %v3198
  %v3202 = vmul.f32 %v2824, %v3198
  %v3203 = vadd.f32 %v3191, %v3199
  %v3204 = vadd.f32 %v3192, %v3200
  %v3205 = vadd.f32 %v3193, %v3201
  %v3206 = vadd.f32 %v3194, %v3202
  %v3207 = vlaneseq
  %v3208 = vshrl.u32 %v3207, 7
  %v3209 = vsub.s32 4, %v3208
  %v3210 = vrot.slane %v797, %v3209
  %v3211 = vmul.f32 %v2829, %v3210
  %v3212 = vmul.f32 %v2834, %v3210
  %v3213 = vmul.f32 %v2839, %v3210
  %v3214 = vmul.f32 %v2844, %v3210
  %v3215 = vadd.f32 %v3203, %v3211
  %v3216 = vadd.f32 %v3204, %v3212
  %v3217 = vadd.f32 %v3205, %v3213
  %v3218 = vadd.f32 %v3206, %v3214
  %v3219 = vlaneseq
  %v3220 = vshrl.u32 %v3219, 7
  %v3221 = vsub.s32 5, %v3220
  %v3222 = vrot.slane %v797, %v3221
  %v3223 = vmul.f32 %v2849, %v3222
  %v3224 = vmul.f32 %v2854, %v3222
  %v3225 = vmul.f32 %v2859, %v3222
  %v3226 = vmul.f32 %v2864, %v3222
  %v3227 = vadd.f32 %v3215, %v3223
  %v3228 = vadd.f32 %v3216, %v3224
  %v3229 = vadd.f32 %v3217, %v3225
  %v3230 = vadd.f32 %v3218, %v3226
  %v3231 = vlaneseq
  %v3232 = vshrl.u32 %v3231, 7
  %v3233 = vsub.s32 6, %v3232
  %v3234 = vrot.slane %v797, %v3233
  %v3235 = vmul.f32 %v2869, %v3234
  %v3236 = vmul.f32 %v2874, %v3234
  %v3237 = vmul.f32 %v2879, %v3234
  %v3238 = vmul.f32 %v2884, %v3234
  %v3239 = vadd.f32 %v3227, %v3235
  %v3240 = vadd.f32 %v3228, %v3236
  %v3241 = vadd.f32 %v3229, %v3237
  %v3242 = vadd.f32 %v3230, %v3238
  %v3243 = vlaneseq
  %v3244 = vshrl.u32 %v3243, 7
  %v3245 = vsub.s32 7, %v3244
  %v3246 = vrot.slane %v797, %v3245
  %v3247 = vmul.f32 %v2889, %v3246
  %v3248 = vmul.f32 %v2894, %v3246
  %v3249 = vmul.f32 %v2899, %v3246
  %v3250 = vmul.f32 %v2904, %v3246
  %v3251 = vadd.f32 %v3239, %v3247
  %v3252 = vadd.f32 %v3240, %v3248
  %v3253 = vadd.f32 %v3241, %v3249
  %v3254 = vadd.f32 %v3242, %v3250
  %v3255 = vlaneseq
  %v3256 = vshrl.u32 %v3255, 7
  %v3257 = vsub.s32 0, %v3256
  %v3258 = vrot.slane %v798, %v3257
  %v3259 = vmul.f32 %v2909, %v3258
  %v3260 = vmul.f32 %v2914, %v3258
  %v3261 = vmul.f32 %v2919, %v3258
  %v3262 = vmul.f32 %v2924, %v3258
  %v3263 = vadd.f32 %v3251, %v3259
  %v3264 = vadd.f32 %v3252, %v3260
  %v3265 = vadd.f32 %v3253, %v3261
  %v3266 = vadd.f32 %v3254, %v3262
  %v3267 = vlaneseq
  %v3268 = vshrl.u32 %v3267, 7
  %v3269 = vsub.s32 1, %v3268
  %v3270 = vrot.slane %v798, %v3269
  %v3271 = vmul.f32 %v2929, %v3270
  %v3272 = vmul.f32 %v2934, %v3270
  %v3273 = vmul.f32 %v2939, %v3270
  %v3274 = vmul.f32 %v2944, %v3270
  %v3275 = vadd.f32 %v3263, %v3271
  %v3276 = vadd.f32 %v3264, %v3272
  %v3277 = vadd.f32 %v3265, %v3273
  %v3278 = vadd.f32 %v3266, %v3274
  %v3279 = vlaneseq
  %v3280 = vshrl.u32 %v3279, 7
  %v3281 = vsub.s32 2, %v3280
  %v3282 = vrot.slane %v798, %v3281
  %v3283 = vmul.f32 %v2949, %v3282
  %v3284 = vmul.f32 %v2954, %v3282
  %v3285 = vmul.f32 %v2959, %v3282
  %v3286 = vmul.f32 %v2964, %v3282
  %v3287 = vadd.f32 %v3275, %v3283
  %v3288 = vadd.f32 %v3276, %v3284
  %v3289 = vadd.f32 %v3277, %v3285
  %v3290 = vadd.f32 %v3278, %v3286
  %v3295 = vrot.slane %v3287, 7
  %v3296 = vrot.slane %v3288, 7
  %v3297 = vsel %vm2086, %v3295, %v3296
  %v3298 = vrot.slane %v3289, 7
  %v3299 = vsel %vm2086, %v3296, %v3298
  %v3300 = vrot.slane %v3290, 7
  %v3301 = vsel %vm2086, %v3298, %v3300
  %v3307 = vsel %vm2086, %v627, %v3295
  %v3309 = vsel %vm254, %v3307, 0
  %v3311 = vsel %vm254, %v3297, 0
  %v3313 = vsel %vm254, %v3299, 0
  %v3315 = vsel %vm254, %v3301, 0
  %v3317 = vsel %vm254, %v3300, 0
  %3319 = vmatprep.subr.mxu0 0.0
  %3320 = vmatpush1.msra.mxu0 0.0
  %3321 = vmatprep.subr.mxu0 0.0
  %3322 = vmatpush1.msra.mxu0 0.0
  %3323 = vmatprep.subr.mxu0 0.0
  %3324 = vmatpush1.msra.mxu0 0.0
  %3325 = vmatprep.subr.mxu0 0.0
  %3326 = vmatpush1.msra.mxu0 0.0
  %3327 = vmatprep.subr.mxu0 0.0
  %3328 = vmatpush1.msra.mxu0 0.0
  %3329 = vmatprep.subr.mxu0 0.0
  %3330 = vmatpush1.msra.mxu0 0.0
  %3331 = vmatprep.subr.mxu0 0.0
  %3332 = vmatpush1.msra.mxu0 0.0
  %3333 = vmatprep.subr.mxu0 0.0
  %3334 = vmatpush1.msra.mxu0 0.0
  %3335 = vmatprep.subr.mxu0 0.0
  %3336 = vmatpush1.msra.mxu0 0.0
  %3337 = vmatprep.subr.mxu0 0.0
  %3338 = vmatpush1.msra.mxu0 0.0
  %3339 = vmatprep.subr.mxu0 0.0
  %3340 = vmatpush1.msra.mxu0 0.0
  %3341 = vmatprep.subr.mxu0 0.0
  %3342 = vmatpush1.msra.mxu0 0.0
  %3343 = vmatprep.subr.mxu0 0.0
  %3344 = vmatpush1.msra.mxu0 %v179
  %3345 = vmatprep.subr.mxu0 0.0
  %3346 = vmatpush1.msra.mxu0 %v178
  %3347 = vmatprep.subr.mxu0 0.0
  %3348 = vmatpush1.msra.mxu0 %v177
  %3349 = vmatprep.subr.mxu0 0.0
  %3350 = vmatpush1.msra.mxu0 %v176
  %3351 = vmatprep.subr.mxu0 0.0
  %3352 = vmatpush2.msra.mxu0 0.0
  %3353 = vmatprep.subr.mxu0 0.0
  %3354 = vmatpush2.msra.mxu0 0.0
  %3355 = vmatprep.subr.mxu0 0.0
  %3356 = vmatpush2.msra.mxu0 0.0
  %3357 = vmatprep.subr.mxu0 0.0
  %3358 = vmatpush2.msra.mxu0 0.0
  %3359 = vmatprep.subr.mxu0 0.0
  %3360 = vmatpush2.msra.mxu0 0.0
  %3361 = vmatprep.subr.mxu0 0.0
  %3362 = vmatpush2.msra.mxu0 0.0
  %3363 = vmatprep.subr.mxu0 0.0
  %3364 = vmatpush2.msra.mxu0 0.0
  %3365 = vmatprep.subr.mxu0 0.0
  %3366 = vmatpush2.msra.mxu0 0.0
  %3367 = vmatprep.subr.mxu0 0.0
  %3368 = vmatpush2.msra.mxu0 0.0
  %3369 = vmatprep.subr.mxu0 0.0
  %3370 = vmatpush2.msra.mxu0 0.0
  %3371 = vmatprep.subr.mxu0 0.0
  %3372 = vmatpush2.msra.mxu0 0.0
  %3373 = vmatprep.subr.mxu0 0.0
  %3374 = vmatpush2.msra.mxu0 0.0
  %3375 = vmatprep.subr.mxu0 0.0
  %3376 = vmatpush2.msra.mxu0 0.0
  %3377 = vmatprep.subr.mxu0 0.0
  %3378 = vmatpush2.msra.mxu0 0.0
  %3379 = vmatprep.subr.mxu0 0.0
  %3380 = vmatpush2.msra.mxu0 0.0
  %3381 = vmatprep.subr.mxu0 0.0
  %3382 = vmatpush2.msra.mxu0 0.0
  %3383 = vmatprep.mubr.f32.mxu0 0.0
  %3384 = vmatmul.mubr.f32.gmra.mxu0 %v3309
  %v3385 = vpop.f32.mrf.mxu0
  %v3386 = vadd.f32 0.0, %v3385
  %v3387 = vpop.f32.mrf.mxu0
  %3388 = vmatprep.mubr.f32.mxu0 0.0
  %3389 = vmatmul.mubr.f32.gmra.mxu0 %v3311
  %v3390 = vpop.f32.mrf.mxu0
  %v3391 = vadd.f32 0.0, %v3390
  %v3392 = vpop.f32.mrf.mxu0
  %3393 = vmatprep.mubr.f32.mxu0 0.0
  %3394 = vmatmul.mubr.f32.gmra.mxu0 %v3313
  %v3395 = vpop.f32.mrf.mxu0
  %v3396 = vadd.f32 0.0, %v3395
  %v3397 = vpop.f32.mrf.mxu0
  %3398 = vmatprep.mubr.f32.mxu0 0.0
  %3399 = vmatmul.mubr.f32.gmra.mxu0 %v3315
  %v3400 = vpop.f32.mrf.mxu0
  %v3401 = vadd.f32 0.0, %v3400
  %v3402 = vpop.f32.mrf.mxu0
  %3403 = vmatprep.mubr.f32.mxu0 0.0
  %3404 = vmatmul.mubr.f32.gmra.mxu0 %v3317
  %v3405 = vpop.f32.mrf.mxu0
  %v3406 = vadd.f32 0.0, %v3405
  %v3407 = vpop.f32.mrf.mxu0
  %3408 = vdwg.mxu0
  %v3409 = vsub.f32 %v3307, %v3386
  %v3410 = vsub.f32 %v3297, %v3391
  %v3411 = vsub.f32 %v3299, %v3396
  %v3412 = vsub.f32 %v3301, %v3401
  %v3413 = vsub.f32 %v3300, %v3406
  %v3414 = vmul.f32 %v3409, %v3409
  %v3415 = vmul.f32 %v3410, %v3410
  %v3416 = vmul.f32 %v3411, %v3411
  %v3417 = vmul.f32 %v3412, %v3412
  %v3418 = vmul.f32 %v3413, %v3413
  %v3420 = vsel %vm254, %v3414, 0
  %v3423 = vsel %vm254, %v3415, 0
  %v3426 = vsel %vm254, %v3416, 0
  %v3429 = vsel %vm254, %v3417, 0
  %v3432 = vsel %vm254, %v3418, 0
  %3434 = vmatprep.subr.mxu0 0.0
  %3435 = vmatpush1.msra.mxu0 0.0
  %3436 = vmatprep.subr.mxu0 0.0
  %3437 = vmatpush1.msra.mxu0 0.0
  %3438 = vmatprep.subr.mxu0 0.0
  %3439 = vmatpush1.msra.mxu0 0.0
  %3440 = vmatprep.subr.mxu0 0.0
  %3441 = vmatpush1.msra.mxu0 0.0
  %3442 = vmatprep.subr.mxu0 0.0
  %3443 = vmatpush1.msra.mxu0 0.0
  %3444 = vmatprep.subr.mxu0 0.0
  %3445 = vmatpush1.msra.mxu0 0.0
  %3446 = vmatprep.subr.mxu0 0.0
  %3447 = vmatpush1.msra.mxu0 0.0
  %3448 = vmatprep.subr.mxu0 0.0
  %3449 = vmatpush1.msra.mxu0 0.0
  %3450 = vmatprep.subr.mxu0 0.0
  %3451 = vmatpush1.msra.mxu0 0.0
  %3452 = vmatprep.subr.mxu0 0.0
  %3453 = vmatpush1.msra.mxu0 0.0
  %3454 = vmatprep.subr.mxu0 0.0
  %3455 = vmatpush1.msra.mxu0 0.0
  %3456 = vmatprep.subr.mxu0 0.0
  %3457 = vmatpush1.msra.mxu0 0.0
  %3458 = vmatprep.subr.mxu0 0.0
  %3459 = vmatpush1.msra.mxu0 %v179
  %3460 = vmatprep.subr.mxu0 0.0
  %3461 = vmatpush1.msra.mxu0 %v178
  %3462 = vmatprep.subr.mxu0 0.0
  %3463 = vmatpush1.msra.mxu0 %v177
  %3464 = vmatprep.subr.mxu0 0.0
  %3465 = vmatpush1.msra.mxu0 %v176
  %3466 = vmatprep.subr.mxu0 0.0
  %3467 = vmatpush2.msra.mxu0 0.0
  %3468 = vmatprep.subr.mxu0 0.0
  %3469 = vmatpush2.msra.mxu0 0.0
  %3470 = vmatprep.subr.mxu0 0.0
  %3471 = vmatpush2.msra.mxu0 0.0
  %3472 = vmatprep.subr.mxu0 0.0
  %3473 = vmatpush2.msra.mxu0 0.0
  %3474 = vmatprep.subr.mxu0 0.0
  %3475 = vmatpush2.msra.mxu0 0.0
  %3476 = vmatprep.subr.mxu0 0.0
  %3477 = vmatpush2.msra.mxu0 0.0
  %3478 = vmatprep.subr.mxu0 0.0
  %3479 = vmatpush2.msra.mxu0 0.0
  %3480 = vmatprep.subr.mxu0 0.0
  %3481 = vmatpush2.msra.mxu0 0.0
  %3482 = vmatprep.subr.mxu0 0.0
  %3483 = vmatpush2.msra.mxu0 0.0
  %3484 = vmatprep.subr.mxu0 0.0
  %3485 = vmatpush2.msra.mxu0 0.0
  %3486 = vmatprep.subr.mxu0 0.0
  %3487 = vmatpush2.msra.mxu0 0.0
  %3488 = vmatprep.subr.mxu0 0.0
  %3489 = vmatpush2.msra.mxu0 0.0
  %3490 = vmatprep.subr.mxu0 0.0
  %3491 = vmatpush2.msra.mxu0 0.0
  %3492 = vmatprep.subr.mxu0 0.0
  %3493 = vmatpush2.msra.mxu0 0.0
  %3494 = vmatprep.subr.mxu0 0.0
  %3495 = vmatpush2.msra.mxu0 0.0
  %3496 = vmatprep.subr.mxu0 0.0
  %3497 = vmatpush2.msra.mxu0 0.0
  %3498 = vmatprep.mubr.f32.mxu0 0.0
  %3499 = vmatmul.mubr.f32.gmra.mxu0 %v3420
  %v3500 = vpop.f32.mrf.mxu0
  %v3501 = vadd.f32 1e-05, %v3500
  %v3502 = vpop.f32.mrf.mxu0
  %3503 = vmatprep.mubr.f32.mxu0 0.0
  %3504 = vmatmul.mubr.f32.gmra.mxu0 %v3423
  %v3505 = vpop.f32.mrf.mxu0
  %v3506 = vadd.f32 1e-05, %v3505
  %v3507 = vpop.f32.mrf.mxu0
  %3508 = vmatprep.mubr.f32.mxu0 0.0
  %3509 = vmatmul.mubr.f32.gmra.mxu0 %v3426
  %v3510 = vpop.f32.mrf.mxu0
  %v3511 = vadd.f32 1e-05, %v3510
  %v3512 = vpop.f32.mrf.mxu0
  %3513 = vmatprep.mubr.f32.mxu0 0.0
  %3514 = vmatmul.mubr.f32.gmra.mxu0 %v3429
  %v3515 = vpop.f32.mrf.mxu0
  %v3516 = vadd.f32 1e-05, %v3515
  %v3517 = vpop.f32.mrf.mxu0
  %3518 = vmatprep.mubr.f32.mxu0 0.0
  %3519 = vmatmul.mubr.f32.gmra.mxu0 %v3432
  %v3520 = vpop.f32.mrf.mxu0
  %v3521 = vadd.f32 1e-05, %v3520
  %v3522 = vpop.f32.mrf.mxu0
  %3523 = vdwg.mxu0
  %v3524 = vrsqrt.pop %v3501
  %v3525 = vrsqrt.pop %v3506
  %v3526 = vrsqrt.pop %v3511
  %v3527 = vrsqrt.pop %v3516
  %v3528 = vrsqrt.pop %v3521
  %v3529 = vmul.f32 %v3409, %v3524
  %v3530 = vmul.f32 %v3410, %v3525
  %v3531 = vmul.f32 %v3411, %v3526
  %v3532 = vmul.f32 %v3412, %v3527
  %v3533 = vmul.f32 %v3413, %v3528
  %v3534 = vlaneseq
  %v3535 = vshrl.u32 %v3534, 7
  %v3536 = vsub.s32 0, %v3535
  %v3537 = vrot.slane %v805, %v3536
  %v3538 = vmul.f32 %v3529, %v3537
  %v3539 = vmul.f32 %v3530, %v3537
  %v3540 = vmul.f32 %v3531, %v3537
  %v3541 = vmul.f32 %v3532, %v3537
  %v3542 = vmul.f32 %v3533, %v3537
  %v3543 = vlaneseq
  %v3544 = vshrl.u32 %v3543, 7
  %v3545 = vsub.s32 0, %v3544
  %v3546 = vrot.slane %v808, %v3545
  %v3547 = vadd.f32 %v3538, %v3546
  %v3548 = vadd.f32 %v3539, %v3546
  %v3549 = vadd.f32 %v3540, %v3546
  %v3550 = vadd.f32 %v3541, %v3546
  %v3551 = vadd.f32 %v3542, %v3546
  %v3557 = vrot.slane %v747, 1
  %v3558 = vrot.slane %v752, 1
  %v3559 = vsel %vm815, %v3557, %v3558
  %v3560 = vrot.slane %v757, 1
  %v3561 = vsel %vm815, %v3558, %v3560
  %v3562 = vrot.slane %v762, 1
  %v3563 = vsel %vm815, %v3560, %v3562
  %v3564 = vrot.slane %v767, 1
  %v3565 = vsel %vm815, %v3562, %v3564
  %3570 = vmatprep.subr.mxu0 0.0
  %3571 = vmatpush1.msra.mxu0 0.0
  %3572 = vmatprep.subr.mxu0 0.0
  %3573 = vmatpush1.msra.mxu0 0.0
  %3574 = vmatprep.subr.mxu0 0.0
  %3575 = vmatpush1.msra.mxu0 0.0
  %3576 = vmatprep.subr.mxu0 0.0
  %3577 = vmatpush1.msra.mxu0 0.0
  %3578 = vmatprep.subr.mxu0 0.0
  %3579 = vmatpush1.msra.mxu0 0.0
  %3580 = vmatprep.subr.mxu0 0.0
  %3581 = vmatpush1.msra.mxu0 0.0
  %3582 = vmatprep.subr.mxu0 0.0
  %3583 = vmatpush1.msra.mxu0 0.0
  %3584 = vmatprep.subr.mxu0 0.0
  %3585 = vmatpush1.msra.mxu0 0.0
  %3586 = vmatprep.subr.mxu0 0.0
  %3587 = vmatpush1.msra.mxu0 0.0
  %3588 = vmatprep.subr.mxu0 0.0
  %3589 = vmatpush1.msra.mxu0 0.0
  %3590 = vmatprep.subr.mxu0 0.0
  %3591 = vmatpush1.msra.mxu0 0.0
  %3592 = vmatprep.subr.mxu0 0.0
  %3593 = vmatpush1.msra.mxu0 0.0
  %3594 = vmatprep.subr.mxu0 0.0
  %3595 = vmatpush1.msra.mxu0 %v3565
  %3596 = vmatprep.subr.mxu0 0.0
  %3597 = vmatpush1.msra.mxu0 %v3563
  %3598 = vmatprep.subr.mxu0 0.0
  %3599 = vmatpush1.msra.mxu0 %v3561
  %3600 = vmatprep.subr.mxu0 0.0
  %3601 = vmatpush1.msra.mxu0 %v3559
  %3602 = vmatprep.subr.mxu0 0.0
  %3603 = vmatpush2.msra.mxu0 0.0
  %3604 = vmatprep.subr.mxu0 0.0
  %3605 = vmatpush2.msra.mxu0 0.0
  %3606 = vmatprep.subr.mxu0 0.0
  %3607 = vmatpush2.msra.mxu0 0.0
  %3608 = vmatprep.subr.mxu0 0.0
  %3609 = vmatpush2.msra.mxu0 0.0
  %3610 = vmatprep.subr.mxu0 0.0
  %3611 = vmatpush2.msra.mxu0 0.0
  %3612 = vmatprep.subr.mxu0 0.0
  %3613 = vmatpush2.msra.mxu0 0.0
  %3614 = vmatprep.subr.mxu0 0.0
  %3615 = vmatpush2.msra.mxu0 0.0
  %3616 = vmatprep.subr.mxu0 0.0
  %3617 = vmatpush2.msra.mxu0 0.0
  %3618 = vmatprep.subr.mxu0 0.0
  %3619 = vmatpush2.msra.mxu0 0.0
  %3620 = vmatprep.subr.mxu0 0.0
  %3621 = vmatpush2.msra.mxu0 0.0
  %3622 = vmatprep.subr.mxu0 0.0
  %3623 = vmatpush2.msra.mxu0 0.0
  %3624 = vmatprep.subr.mxu0 0.0
  %3625 = vmatpush2.msra.mxu0 0.0
  %3626 = vmatprep.subr.mxu0 0.0
  %3627 = vmatpush2.msra.mxu0 0.0
  %3628 = vmatprep.subr.mxu0 0.0
  %3629 = vmatpush2.msra.mxu0 0.0
  %3630 = vmatprep.subr.mxu0 0.0
  %3631 = vmatpush2.msra.mxu0 0.0
  %3632 = vmatprep.subr.mxu0 0.0
  %3633 = vmatpush2.msra.mxu0 0.0
  %3634 = vmatprep.mubr.f32.mxu0 0.0
  %3635 = vmatmul.mubr.f32.gmra.mxu0 %v830
  %v3636 = vpop.f32.mrf.mxu0
  %v3637 = vadd.f32 0.0, %v3636
  %v3638 = vpop.f32.mrf.mxu0
  %3639 = vmatprep.mubr.f32.mxu0 0.0
  %3640 = vmatmul.mubr.f32.gmra.mxu0 %v833
  %v3641 = vpop.f32.mrf.mxu0
  %v3642 = vadd.f32 0.0, %v3641
  %v3643 = vpop.f32.mrf.mxu0
  %3644 = vmatprep.mubr.f32.mxu0 0.0
  %3645 = vmatmul.mubr.f32.gmra.mxu0 %v836
  %v3646 = vpop.f32.mrf.mxu0
  %v3647 = vadd.f32 0.0, %v3646
  %v3648 = vpop.f32.mrf.mxu0
  %3649 = vmatprep.mubr.f32.mxu0 0.0
  %3650 = vmatmul.mubr.f32.gmra.mxu0 %v839
  %v3651 = vpop.f32.mrf.mxu0
  %v3652 = vadd.f32 0.0, %v3651
  %v3653 = vpop.f32.mrf.mxu0
  %3654 = vmatprep.mubr.f32.mxu0 0.0
  %3655 = vmatmul.mubr.f32.gmra.mxu0 %v842
  %v3656 = vpop.f32.mrf.mxu0
  %v3657 = vadd.f32 0.0, %v3656
  %v3658 = vpop.f32.mrf.mxu0
  %3659 = vmatprep.mubr.f32.mxu0 0.0
  %3660 = vmatmul.mubr.f32.gmra.mxu0 %v845
  %v3661 = vpop.f32.mrf.mxu0
  %v3662 = vadd.f32 0.0, %v3661
  %v3663 = vpop.f32.mrf.mxu0
  %3664 = vmatprep.mubr.f32.mxu0 0.0
  %3665 = vmatmul.mubr.f32.gmra.mxu0 %v848
  %v3666 = vpop.f32.mrf.mxu0
  %v3667 = vadd.f32 0.0, %v3666
  %v3668 = vpop.f32.mrf.mxu0
  %3669 = vmatprep.mubr.f32.mxu0 0.0
  %3670 = vmatmul.mubr.f32.gmra.mxu0 %v851
  %v3671 = vpop.f32.mrf.mxu0
  %v3672 = vadd.f32 0.0, %v3671
  %v3673 = vpop.f32.mrf.mxu0
  %3674 = vmatprep.mubr.f32.mxu0 0.0
  %3675 = vmatmul.mubr.f32.gmra.mxu0 %v854
  %v3676 = vpop.f32.mrf.mxu0
  %v3677 = vadd.f32 0.0, %v3676
  %v3678 = vpop.f32.mrf.mxu0
  %3679 = vmatprep.mubr.f32.mxu0 0.0
  %3680 = vmatmul.mubr.f32.gmra.mxu0 %v857
  %v3681 = vpop.f32.mrf.mxu0
  %v3682 = vadd.f32 0.0, %v3681
  %v3683 = vpop.f32.mrf.mxu0
  %3684 = vmatprep.mubr.f32.mxu0 0.0
  %3685 = vmatmul.mubr.f32.gmra.mxu0 %v860
  %v3686 = vpop.f32.mrf.mxu0
  %v3687 = vadd.f32 0.0, %v3686
  %v3688 = vpop.f32.mrf.mxu0
  %3689 = vmatprep.mubr.f32.mxu0 0.0
  %3690 = vmatmul.mubr.f32.gmra.mxu0 %v863
  %v3691 = vpop.f32.mrf.mxu0
  %v3692 = vadd.f32 0.0, %v3691
  %v3693 = vpop.f32.mrf.mxu0
  %3694 = vmatprep.mubr.f32.mxu0 0.0
  %3695 = vmatmul.mubr.f32.gmra.mxu0 %v866
  %v3696 = vpop.f32.mrf.mxu0
  %v3697 = vadd.f32 0.0, %v3696
  %v3698 = vpop.f32.mrf.mxu0
  %3699 = vmatprep.mubr.f32.mxu0 0.0
  %3700 = vmatmul.mubr.f32.gmra.mxu0 %v869
  %v3701 = vpop.f32.mrf.mxu0
  %v3702 = vadd.f32 0.0, %v3701
  %v3703 = vpop.f32.mrf.mxu0
  %3704 = vmatprep.mubr.f32.mxu0 0.0
  %3705 = vmatmul.mubr.f32.gmra.mxu0 %v872
  %v3706 = vpop.f32.mrf.mxu0
  %v3707 = vadd.f32 0.0, %v3706
  %v3708 = vpop.f32.mrf.mxu0
  %3709 = vmatprep.mubr.f32.mxu0 0.0
  %3710 = vmatmul.mubr.f32.gmra.mxu0 %v875
  %v3711 = vpop.f32.mrf.mxu0
  %v3712 = vadd.f32 0.0, %v3711
  %v3713 = vpop.f32.mrf.mxu0
  %3714 = vmatprep.mubr.f32.mxu0 0.0
  %3715 = vmatmul.mubr.f32.gmra.mxu0 %v878
  %v3716 = vpop.f32.mrf.mxu0
  %v3717 = vadd.f32 0.0, %v3716
  %v3718 = vpop.f32.mrf.mxu0
  %3719 = vmatprep.mubr.f32.mxu0 0.0
  %3720 = vmatmul.mubr.f32.gmra.mxu0 %v881
  %v3721 = vpop.f32.mrf.mxu0
  %v3722 = vadd.f32 0.0, %v3721
  %v3723 = vpop.f32.mrf.mxu0
  %3724 = vmatprep.mubr.f32.mxu0 0.0
  %3725 = vmatmul.mubr.f32.gmra.mxu0 %v884
  %v3726 = vpop.f32.mrf.mxu0
  %v3727 = vadd.f32 0.0, %v3726
  %v3728 = vpop.f32.mrf.mxu0
  %3729 = vmatprep.mubr.f32.mxu0 0.0
  %3730 = vmatmul.mubr.f32.gmra.mxu0 %v887
  %v3731 = vpop.f32.mrf.mxu0
  %v3732 = vadd.f32 0.0, %v3731
  %v3733 = vpop.f32.mrf.mxu0
  %3734 = vmatprep.mubr.f32.mxu0 0.0
  %3735 = vmatmul.mubr.f32.gmra.mxu0 %v890
  %v3736 = vpop.f32.mrf.mxu0
  %v3737 = vadd.f32 0.0, %v3736
  %v3738 = vpop.f32.mrf.mxu0
  %3739 = vmatprep.mubr.f32.mxu0 0.0
  %3740 = vmatmul.mubr.f32.gmra.mxu0 %v893
  %v3741 = vpop.f32.mrf.mxu0
  %v3742 = vadd.f32 0.0, %v3741
  %v3743 = vpop.f32.mrf.mxu0
  %3744 = vmatprep.mubr.f32.mxu0 0.0
  %3745 = vmatmul.mubr.f32.gmra.mxu0 %v896
  %v3746 = vpop.f32.mrf.mxu0
  %v3747 = vadd.f32 0.0, %v3746
  %v3748 = vpop.f32.mrf.mxu0
  %3749 = vmatprep.mubr.f32.mxu0 0.0
  %3750 = vmatmul.mubr.f32.gmra.mxu0 %v899
  %v3751 = vpop.f32.mrf.mxu0
  %v3752 = vadd.f32 0.0, %v3751
  %v3753 = vpop.f32.mrf.mxu0
  %3754 = vmatprep.mubr.f32.mxu0 0.0
  %3755 = vmatmul.mubr.f32.gmra.mxu0 %v902
  %v3756 = vpop.f32.mrf.mxu0
  %v3757 = vadd.f32 0.0, %v3756
  %v3758 = vpop.f32.mrf.mxu0
  %3759 = vmatprep.mubr.f32.mxu0 0.0
  %3760 = vmatmul.mubr.f32.gmra.mxu0 %v905
  %v3761 = vpop.f32.mrf.mxu0
  %v3762 = vadd.f32 0.0, %v3761
  %v3763 = vpop.f32.mrf.mxu0
  %3764 = vmatprep.mubr.f32.mxu0 0.0
  %3765 = vmatmul.mubr.f32.gmra.mxu0 %v908
  %v3766 = vpop.f32.mrf.mxu0
  %v3767 = vadd.f32 0.0, %v3766
  %v3768 = vpop.f32.mrf.mxu0
  %3769 = vmatprep.mubr.f32.mxu0 0.0
  %3770 = vmatmul.mubr.f32.gmra.mxu0 %v911
  %v3771 = vpop.f32.mrf.mxu0
  %v3772 = vadd.f32 0.0, %v3771
  %v3773 = vpop.f32.mrf.mxu0
  %3774 = vmatprep.mubr.f32.mxu0 0.0
  %3775 = vmatmul.mubr.f32.gmra.mxu0 %v914
  %v3776 = vpop.f32.mrf.mxu0
  %v3777 = vadd.f32 0.0, %v3776
  %v3778 = vpop.f32.mrf.mxu0
  %3779 = vmatprep.mubr.f32.mxu0 0.0
  %3780 = vmatmul.mubr.f32.gmra.mxu0 %v917
  %v3781 = vpop.f32.mrf.mxu0
  %v3782 = vadd.f32 0.0, %v3781
  %v3783 = vpop.f32.mrf.mxu0
  %3784 = vmatprep.mubr.f32.mxu0 0.0
  %3785 = vmatmul.mubr.f32.gmra.mxu0 %v920
  %v3786 = vpop.f32.mrf.mxu0
  %v3787 = vadd.f32 0.0, %v3786
  %v3788 = vpop.f32.mrf.mxu0
  %3789 = vmatprep.mubr.f32.mxu0 0.0
  %3790 = vmatmul.mubr.f32.gmra.mxu0 %v923
  %v3791 = vpop.f32.mrf.mxu0
  %v3792 = vadd.f32 0.0, %v3791
  %v3793 = vpop.f32.mrf.mxu0
  %3794 = vmatprep.mubr.f32.mxu0 0.0
  %3795 = vmatmul.mubr.f32.gmra.mxu0 %v926
  %v3796 = vpop.f32.mrf.mxu0
  %v3797 = vadd.f32 0.0, %v3796
  %v3798 = vpop.f32.mrf.mxu0
  %3799 = vmatprep.mubr.f32.mxu0 0.0
  %3800 = vmatmul.mubr.f32.gmra.mxu0 %v929
  %v3801 = vpop.f32.mrf.mxu0
  %v3802 = vadd.f32 0.0, %v3801
  %v3803 = vpop.f32.mrf.mxu0
  %3804 = vmatprep.mubr.f32.mxu0 0.0
  %3805 = vmatmul.mubr.f32.gmra.mxu0 %v932
  %v3806 = vpop.f32.mrf.mxu0
  %v3807 = vadd.f32 0.0, %v3806
  %v3808 = vpop.f32.mrf.mxu0
  %3809 = vmatprep.mubr.f32.mxu0 0.0
  %3810 = vmatmul.mubr.f32.gmra.mxu0 %v935
  %v3811 = vpop.f32.mrf.mxu0
  %v3812 = vadd.f32 0.0, %v3811
  %v3813 = vpop.f32.mrf.mxu0
  %3814 = vmatprep.mubr.f32.mxu0 0.0
  %3815 = vmatmul.mubr.f32.gmra.mxu0 %v938
  %v3816 = vpop.f32.mrf.mxu0
  %v3817 = vadd.f32 0.0, %v3816
  %v3818 = vpop.f32.mrf.mxu0
  %3819 = vmatprep.mubr.f32.mxu0 0.0
  %3820 = vmatmul.mubr.f32.gmra.mxu0 %v941
  %v3821 = vpop.f32.mrf.mxu0
  %v3822 = vadd.f32 0.0, %v3821
  %v3823 = vpop.f32.mrf.mxu0
  %3824 = vmatprep.mubr.f32.mxu0 0.0
  %3825 = vmatmul.mubr.f32.gmra.mxu0 %v944
  %v3826 = vpop.f32.mrf.mxu0
  %v3827 = vadd.f32 0.0, %v3826
  %v3828 = vpop.f32.mrf.mxu0
  %3829 = vmatprep.mubr.f32.mxu0 0.0
  %3830 = vmatmul.mubr.f32.gmra.mxu0 %v947
  %v3831 = vpop.f32.mrf.mxu0
  %v3832 = vadd.f32 0.0, %v3831
  %v3833 = vpop.f32.mrf.mxu0
  %3834 = vmatprep.mubr.f32.mxu0 0.0
  %3835 = vmatmul.mubr.f32.gmra.mxu0 %v950
  %v3836 = vpop.f32.mrf.mxu0
  %v3837 = vadd.f32 0.0, %v3836
  %v3838 = vpop.f32.mrf.mxu0
  %3839 = vmatprep.mubr.f32.mxu0 0.0
  %3840 = vmatmul.mubr.f32.gmra.mxu0 %v953
  %v3841 = vpop.f32.mrf.mxu0
  %v3842 = vadd.f32 0.0, %v3841
  %v3843 = vpop.f32.mrf.mxu0
  %3844 = vmatprep.mubr.f32.mxu0 0.0
  %3845 = vmatmul.mubr.f32.gmra.mxu0 %v956
  %v3846 = vpop.f32.mrf.mxu0
  %v3847 = vadd.f32 0.0, %v3846
  %v3848 = vpop.f32.mrf.mxu0
  %3849 = vmatprep.mubr.f32.mxu0 0.0
  %3850 = vmatmul.mubr.f32.gmra.mxu0 %v959
  %v3851 = vpop.f32.mrf.mxu0
  %v3852 = vadd.f32 0.0, %v3851
  %v3853 = vpop.f32.mrf.mxu0
  %3854 = vmatprep.mubr.f32.mxu0 0.0
  %3855 = vmatmul.mubr.f32.gmra.mxu0 %v962
  %v3856 = vpop.f32.mrf.mxu0
  %v3857 = vadd.f32 0.0, %v3856
  %v3858 = vpop.f32.mrf.mxu0
  %3859 = vmatprep.mubr.f32.mxu0 0.0
  %3860 = vmatmul.mubr.f32.gmra.mxu0 %v965
  %v3861 = vpop.f32.mrf.mxu0
  %v3862 = vadd.f32 0.0, %v3861
  %v3863 = vpop.f32.mrf.mxu0
  %3864 = vmatprep.mubr.f32.mxu0 0.0
  %3865 = vmatmul.mubr.f32.gmra.mxu0 %v968
  %v3866 = vpop.f32.mrf.mxu0
  %v3867 = vadd.f32 0.0, %v3866
  %v3868 = vpop.f32.mrf.mxu0
  %3869 = vmatprep.mubr.f32.mxu0 0.0
  %3870 = vmatmul.mubr.f32.gmra.mxu0 %v971
  %v3871 = vpop.f32.mrf.mxu0
  %v3872 = vadd.f32 0.0, %v3871
  %v3873 = vpop.f32.mrf.mxu0
  %3874 = vmatprep.mubr.f32.mxu0 0.0
  %3875 = vmatmul.mubr.f32.gmra.mxu0 %v974
  %v3876 = vpop.f32.mrf.mxu0
  %v3877 = vadd.f32 0.0, %v3876
  %v3878 = vpop.f32.mrf.mxu0
  %3879 = vmatprep.mubr.f32.mxu0 0.0
  %3880 = vmatmul.mubr.f32.gmra.mxu0 %v977
  %v3881 = vpop.f32.mrf.mxu0
  %v3882 = vadd.f32 0.0, %v3881
  %v3883 = vpop.f32.mrf.mxu0
  %3884 = vmatprep.mubr.f32.mxu0 0.0
  %3885 = vmatmul.mubr.f32.gmra.mxu0 %v980
  %v3886 = vpop.f32.mrf.mxu0
  %v3887 = vadd.f32 0.0, %v3886
  %v3888 = vpop.f32.mrf.mxu0
  %3889 = vmatprep.mubr.f32.mxu0 0.0
  %3890 = vmatmul.mubr.f32.gmra.mxu0 %v983
  %v3891 = vpop.f32.mrf.mxu0
  %v3892 = vadd.f32 0.0, %v3891
  %v3893 = vpop.f32.mrf.mxu0
  %3894 = vmatprep.mubr.f32.mxu0 0.0
  %3895 = vmatmul.mubr.f32.gmra.mxu0 %v986
  %v3896 = vpop.f32.mrf.mxu0
  %v3897 = vadd.f32 0.0, %v3896
  %v3898 = vpop.f32.mrf.mxu0
  %3899 = vmatprep.mubr.f32.mxu0 0.0
  %3900 = vmatmul.mubr.f32.gmra.mxu0 %v989
  %v3901 = vpop.f32.mrf.mxu0
  %v3902 = vadd.f32 0.0, %v3901
  %v3903 = vpop.f32.mrf.mxu0
  %3904 = vmatprep.mubr.f32.mxu0 0.0
  %3905 = vmatmul.mubr.f32.gmra.mxu0 %v992
  %v3906 = vpop.f32.mrf.mxu0
  %v3907 = vadd.f32 0.0, %v3906
  %v3908 = vpop.f32.mrf.mxu0
  %3909 = vmatprep.mubr.f32.mxu0 0.0
  %3910 = vmatmul.mubr.f32.gmra.mxu0 %v995
  %v3911 = vpop.f32.mrf.mxu0
  %v3912 = vadd.f32 0.0, %v3911
  %v3913 = vpop.f32.mrf.mxu0
  %3914 = vmatprep.mubr.f32.mxu0 0.0
  %3915 = vmatmul.mubr.f32.gmra.mxu0 %v998
  %v3916 = vpop.f32.mrf.mxu0
  %v3917 = vadd.f32 0.0, %v3916
  %v3918 = vpop.f32.mrf.mxu0
  %3919 = vmatprep.mubr.f32.mxu0 0.0
  %3920 = vmatmul.mubr.f32.gmra.mxu0 %v1001
  %v3921 = vpop.f32.mrf.mxu0
  %v3922 = vadd.f32 0.0, %v3921
  %v3923 = vpop.f32.mrf.mxu0
  %3924 = vmatprep.mubr.f32.mxu0 0.0
  %3925 = vmatmul.mubr.f32.gmra.mxu0 %v1004
  %v3926 = vpop.f32.mrf.mxu0
  %v3927 = vadd.f32 0.0, %v3926
  %v3928 = vpop.f32.mrf.mxu0
  %3929 = vmatprep.mubr.f32.mxu0 0.0
  %3930 = vmatmul.mubr.f32.gmra.mxu0 %v1007
  %v3931 = vpop.f32.mrf.mxu0
  %v3932 = vadd.f32 0.0, %v3931
  %v3933 = vpop.f32.mrf.mxu0
  %3934 = vmatprep.mubr.f32.mxu0 0.0
  %3935 = vmatmul.mubr.f32.gmra.mxu0 %v1010
  %v3936 = vpop.f32.mrf.mxu0
  %v3937 = vadd.f32 0.0, %v3936
  %v3938 = vpop.f32.mrf.mxu0
  %3939 = vmatprep.mubr.f32.mxu0 0.0
  %3940 = vmatmul.mubr.f32.gmra.mxu0 %v1013
  %v3941 = vpop.f32.mrf.mxu0
  %v3942 = vadd.f32 0.0, %v3941
  %v3943 = vpop.f32.mrf.mxu0
  %3944 = vmatprep.mubr.f32.mxu0 0.0
  %3945 = vmatmul.mubr.f32.gmra.mxu0 %v1016
  %v3946 = vpop.f32.mrf.mxu0
  %v3947 = vadd.f32 0.0, %v3946
  %v3948 = vpop.f32.mrf.mxu0
  %3949 = vmatprep.mubr.f32.mxu0 0.0
  %3950 = vmatmul.mubr.f32.gmra.mxu0 %v1019
  %v3951 = vpop.f32.mrf.mxu0
  %v3952 = vadd.f32 0.0, %v3951
  %v3953 = vpop.f32.mrf.mxu0
  %3954 = vmatprep.mubr.f32.mxu0 0.0
  %3955 = vmatmul.mubr.f32.gmra.mxu0 %v1022
  %v3956 = vpop.f32.mrf.mxu0
  %v3957 = vadd.f32 0.0, %v3956
  %v3958 = vpop.f32.mrf.mxu0
  %3959 = vmatprep.mubr.f32.mxu0 0.0
  %3960 = vmatmul.mubr.f32.gmra.mxu0 %v1025
  %v3961 = vpop.f32.mrf.mxu0
  %v3962 = vadd.f32 0.0, %v3961
  %v3963 = vpop.f32.mrf.mxu0
  %3964 = vmatprep.mubr.f32.mxu0 0.0
  %3965 = vmatmul.mubr.f32.gmra.mxu0 %v1028
  %v3966 = vpop.f32.mrf.mxu0
  %v3967 = vadd.f32 0.0, %v3966
  %v3968 = vpop.f32.mrf.mxu0
  %3969 = vmatprep.mubr.f32.mxu0 0.0
  %3970 = vmatmul.mubr.f32.gmra.mxu0 %v1031
  %v3971 = vpop.f32.mrf.mxu0
  %v3972 = vadd.f32 0.0, %v3971
  %v3973 = vpop.f32.mrf.mxu0
  %3974 = vmatprep.mubr.f32.mxu0 0.0
  %3975 = vmatmul.mubr.f32.gmra.mxu0 %v1034
  %v3976 = vpop.f32.mrf.mxu0
  %v3977 = vadd.f32 0.0, %v3976
  %v3978 = vpop.f32.mrf.mxu0
  %3979 = vmatprep.mubr.f32.mxu0 0.0
  %3980 = vmatmul.mubr.f32.gmra.mxu0 %v1037
  %v3981 = vpop.f32.mrf.mxu0
  %v3982 = vadd.f32 0.0, %v3981
  %v3983 = vpop.f32.mrf.mxu0
  %3984 = vmatprep.mubr.f32.mxu0 0.0
  %3985 = vmatmul.mubr.f32.gmra.mxu0 %v1040
  %v3986 = vpop.f32.mrf.mxu0
  %v3987 = vadd.f32 0.0, %v3986
  %v3988 = vpop.f32.mrf.mxu0
  %3989 = vmatprep.mubr.f32.mxu0 0.0
  %3990 = vmatmul.mubr.f32.gmra.mxu0 %v1043
  %v3991 = vpop.f32.mrf.mxu0
  %v3992 = vadd.f32 0.0, %v3991
  %v3993 = vpop.f32.mrf.mxu0
  %3994 = vmatprep.mubr.f32.mxu0 0.0
  %3995 = vmatmul.mubr.f32.gmra.mxu0 %v1046
  %v3996 = vpop.f32.mrf.mxu0
  %v3997 = vadd.f32 0.0, %v3996
  %v3998 = vpop.f32.mrf.mxu0
  %3999 = vmatprep.mubr.f32.mxu0 0.0
  %4000 = vmatmul.mubr.f32.gmra.mxu0 %v1049
  %v4001 = vpop.f32.mrf.mxu0
  %v4002 = vadd.f32 0.0, %v4001
  %v4003 = vpop.f32.mrf.mxu0
  %4004 = vmatprep.mubr.f32.mxu0 0.0
  %4005 = vmatmul.mubr.f32.gmra.mxu0 %v1052
  %v4006 = vpop.f32.mrf.mxu0
  %v4007 = vadd.f32 0.0, %v4006
  %v4008 = vpop.f32.mrf.mxu0
  %4009 = vmatprep.mubr.f32.mxu0 0.0
  %4010 = vmatmul.mubr.f32.gmra.mxu0 %v1055
  %v4011 = vpop.f32.mrf.mxu0
  %v4012 = vadd.f32 0.0, %v4011
  %v4013 = vpop.f32.mrf.mxu0
  %4014 = vmatprep.mubr.f32.mxu0 0.0
  %4015 = vmatmul.mubr.f32.gmra.mxu0 %v1058
  %v4016 = vpop.f32.mrf.mxu0
  %v4017 = vadd.f32 0.0, %v4016
  %v4018 = vpop.f32.mrf.mxu0
  %4019 = vmatprep.mubr.f32.mxu0 0.0
  %4020 = vmatmul.mubr.f32.gmra.mxu0 %v1061
  %v4021 = vpop.f32.mrf.mxu0
  %v4022 = vadd.f32 0.0, %v4021
  %v4023 = vpop.f32.mrf.mxu0
  %4024 = vmatprep.mubr.f32.mxu0 0.0
  %4025 = vmatmul.mubr.f32.gmra.mxu0 %v1064
  %v4026 = vpop.f32.mrf.mxu0
  %v4027 = vadd.f32 0.0, %v4026
  %v4028 = vpop.f32.mrf.mxu0
  %4029 = vmatprep.mubr.f32.mxu0 0.0
  %4030 = vmatmul.mubr.f32.gmra.mxu0 %v1067
  %v4031 = vpop.f32.mrf.mxu0
  %v4032 = vadd.f32 0.0, %v4031
  %v4033 = vpop.f32.mrf.mxu0
  %4034 = vmatprep.mubr.f32.mxu0 0.0
  %4035 = vmatmul.mubr.f32.gmra.mxu0 %v1070
  %v4036 = vpop.f32.mrf.mxu0
  %v4037 = vadd.f32 0.0, %v4036
  %v4038 = vpop.f32.mrf.mxu0
  %4039 = vmatprep.mubr.f32.mxu0 0.0
  %4040 = vmatmul.mubr.f32.gmra.mxu0 %v1073
  %v4041 = vpop.f32.mrf.mxu0
  %v4042 = vadd.f32 0.0, %v4041
  %v4043 = vpop.f32.mrf.mxu0
  %4044 = vmatprep.mubr.f32.mxu0 0.0
  %4045 = vmatmul.mubr.f32.gmra.mxu0 %v1076
  %v4046 = vpop.f32.mrf.mxu0
  %v4047 = vadd.f32 0.0, %v4046
  %v4048 = vpop.f32.mrf.mxu0
  %4049 = vmatprep.mubr.f32.mxu0 0.0
  %4050 = vmatmul.mubr.f32.gmra.mxu0 %v1079
  %v4051 = vpop.f32.mrf.mxu0
  %v4052 = vadd.f32 0.0, %v4051
  %v4053 = vpop.f32.mrf.mxu0
  %4054 = vmatprep.mubr.f32.mxu0 0.0
  %4055 = vmatmul.mubr.f32.gmra.mxu0 %v1082
  %v4056 = vpop.f32.mrf.mxu0
  %v4057 = vadd.f32 0.0, %v4056
  %v4058 = vpop.f32.mrf.mxu0
  %4059 = vmatprep.mubr.f32.mxu0 0.0
  %4060 = vmatmul.mubr.f32.gmra.mxu0 %v1085
  %v4061 = vpop.f32.mrf.mxu0
  %v4062 = vadd.f32 0.0, %v4061
  %v4063 = vpop.f32.mrf.mxu0
  %4064 = vmatprep.mubr.f32.mxu0 0.0
  %4065 = vmatmul.mubr.f32.gmra.mxu0 %v1088
  %v4066 = vpop.f32.mrf.mxu0
  %v4067 = vadd.f32 0.0, %v4066
  %v4068 = vpop.f32.mrf.mxu0
  %4069 = vmatprep.mubr.f32.mxu0 0.0
  %4070 = vmatmul.mubr.f32.gmra.mxu0 %v1091
  %v4071 = vpop.f32.mrf.mxu0
  %v4072 = vadd.f32 0.0, %v4071
  %v4073 = vpop.f32.mrf.mxu0
  %4074 = vmatprep.mubr.f32.mxu0 0.0
  %4075 = vmatmul.mubr.f32.gmra.mxu0 %v1094
  %v4076 = vpop.f32.mrf.mxu0
  %v4077 = vadd.f32 0.0, %v4076
  %v4078 = vpop.f32.mrf.mxu0
  %4079 = vmatprep.mubr.f32.mxu0 0.0
  %4080 = vmatmul.mubr.f32.gmra.mxu0 %v1097
  %v4081 = vpop.f32.mrf.mxu0
  %v4082 = vadd.f32 0.0, %v4081
  %v4083 = vpop.f32.mrf.mxu0
  %4084 = vmatprep.mubr.f32.mxu0 0.0
  %4085 = vmatmul.mubr.f32.gmra.mxu0 %v1100
  %v4086 = vpop.f32.mrf.mxu0
  %v4087 = vadd.f32 0.0, %v4086
  %v4088 = vpop.f32.mrf.mxu0
  %4089 = vmatprep.mubr.f32.mxu0 0.0
  %4090 = vmatmul.mubr.f32.gmra.mxu0 %v1103
  %v4091 = vpop.f32.mrf.mxu0
  %v4092 = vadd.f32 0.0, %v4091
  %v4093 = vpop.f32.mrf.mxu0
  %4094 = vmatprep.mubr.f32.mxu0 0.0
  %4095 = vmatmul.mubr.f32.gmra.mxu0 %v1106
  %v4096 = vpop.f32.mrf.mxu0
  %v4097 = vadd.f32 0.0, %v4096
  %v4098 = vpop.f32.mrf.mxu0
  %4099 = vmatprep.mubr.f32.mxu0 0.0
  %4100 = vmatmul.mubr.f32.gmra.mxu0 %v1109
  %v4101 = vpop.f32.mrf.mxu0
  %v4102 = vadd.f32 0.0, %v4101
  %v4103 = vpop.f32.mrf.mxu0
  %4104 = vmatprep.mubr.f32.mxu0 0.0
  %4105 = vmatmul.mubr.f32.gmra.mxu0 %v1112
  %v4106 = vpop.f32.mrf.mxu0
  %v4107 = vadd.f32 0.0, %v4106
  %v4108 = vpop.f32.mrf.mxu0
  %4109 = vmatprep.mubr.f32.mxu0 0.0
  %4110 = vmatmul.mubr.f32.gmra.mxu0 %v1115
  %v4111 = vpop.f32.mrf.mxu0
  %v4112 = vadd.f32 0.0, %v4111
  %v4113 = vpop.f32.mrf.mxu0
  %4114 = vmatprep.mubr.f32.mxu0 0.0
  %4115 = vmatmul.mubr.f32.gmra.mxu0 %v1118
  %v4116 = vpop.f32.mrf.mxu0
  %v4117 = vadd.f32 0.0, %v4116
  %v4118 = vpop.f32.mrf.mxu0
  %4119 = vmatprep.mubr.f32.mxu0 0.0
  %4120 = vmatmul.mubr.f32.gmra.mxu0 %v1121
  %v4121 = vpop.f32.mrf.mxu0
  %v4122 = vadd.f32 0.0, %v4121
  %v4123 = vpop.f32.mrf.mxu0
  %4124 = vmatprep.mubr.f32.mxu0 0.0
  %4125 = vmatmul.mubr.f32.gmra.mxu0 %v1124
  %v4126 = vpop.f32.mrf.mxu0
  %v4127 = vadd.f32 0.0, %v4126
  %v4128 = vpop.f32.mrf.mxu0
  %4129 = vmatprep.mubr.f32.mxu0 0.0
  %4130 = vmatmul.mubr.f32.gmra.mxu0 %v1127
  %v4131 = vpop.f32.mrf.mxu0
  %v4132 = vadd.f32 0.0, %v4131
  %v4133 = vpop.f32.mrf.mxu0
  %4134 = vmatprep.mubr.f32.mxu0 0.0
  %4135 = vmatmul.mubr.f32.gmra.mxu0 %v1130
  %v4136 = vpop.f32.mrf.mxu0
  %v4137 = vadd.f32 0.0, %v4136
  %v4138 = vpop.f32.mrf.mxu0
  %4139 = vmatprep.mubr.f32.mxu0 0.0
  %4140 = vmatmul.mubr.f32.gmra.mxu0 %v1133
  %v4141 = vpop.f32.mrf.mxu0
  %v4142 = vadd.f32 0.0, %v4141
  %v4143 = vpop.f32.mrf.mxu0
  %4144 = vmatprep.mubr.f32.mxu0 0.0
  %4145 = vmatmul.mubr.f32.gmra.mxu0 %v1136
  %v4146 = vpop.f32.mrf.mxu0
  %v4147 = vadd.f32 0.0, %v4146
  %v4148 = vpop.f32.mrf.mxu0
  %4149 = vmatprep.mubr.f32.mxu0 0.0
  %4150 = vmatmul.mubr.f32.gmra.mxu0 %v1139
  %v4151 = vpop.f32.mrf.mxu0
  %v4152 = vadd.f32 0.0, %v4151
  %v4153 = vpop.f32.mrf.mxu0
  %4154 = vmatprep.mubr.f32.mxu0 0.0
  %4155 = vmatmul.mubr.f32.gmra.mxu0 %v1142
  %v4156 = vpop.f32.mrf.mxu0
  %v4157 = vadd.f32 0.0, %v4156
  %v4158 = vpop.f32.mrf.mxu0
  %4159 = vmatprep.mubr.f32.mxu0 0.0
  %4160 = vmatmul.mubr.f32.gmra.mxu0 %v1145
  %v4161 = vpop.f32.mrf.mxu0
  %v4162 = vadd.f32 0.0, %v4161
  %v4163 = vpop.f32.mrf.mxu0
  %4164 = vmatprep.mubr.f32.mxu0 0.0
  %4165 = vmatmul.mubr.f32.gmra.mxu0 %v1148
  %v4166 = vpop.f32.mrf.mxu0
  %v4167 = vadd.f32 0.0, %v4166
  %v4168 = vpop.f32.mrf.mxu0
  %4169 = vmatprep.mubr.f32.mxu0 0.0
  %4170 = vmatmul.mubr.f32.gmra.mxu0 %v1151
  %v4171 = vpop.f32.mrf.mxu0
  %v4172 = vadd.f32 0.0, %v4171
  %v4173 = vpop.f32.mrf.mxu0
  %4174 = vdwg.mxu0
  %v4175 = vlaneseq
  %v4176 = vshrl.u32 %v4175, 7
  %v4177 = vsub.s32 0, %v4176
  %v4178 = vrot.slane %v800, %v4177
  %v4179 = vmul.f32 %v3637, %v4178
  %v4180 = vmul.f32 %v3642, %v4178
  %v4181 = vmul.f32 %v3647, %v4178
  %v4182 = vmul.f32 %v3652, %v4178
  %v4183 = vadd.f32 %v4179, 0.0
  %v4184 = vadd.f32 %v4180, 0.0
  %v4185 = vadd.f32 %v4181, 0.0
  %v4186 = vadd.f32 %v4182, 0.0
  %v4187 = vlaneseq
  %v4188 = vshrl.u32 %v4187, 7
  %v4189 = vsub.s32 1, %v4188
  %v4190 = vrot.slane %v800, %v4189
  %v4191 = vmul.f32 %v3657, %v4190
  %v4192 = vmul.f32 %v3662, %v4190
  %v4193 = vmul.f32 %v3667, %v4190
  %v4194 = vmul.f32 %v3672, %v4190
  %v4195 = vadd.f32 %v4183, %v4191
  %v4196 = vadd.f32 %v4184, %v4192
  %v4197 = vadd.f32 %v4185, %v4193
  %v4198 = vadd.f32 %v4186, %v4194
  %v4199 = vlaneseq
  %v4200 = vshrl.u32 %v4199, 7
  %v4201 = vsub.s32 2, %v4200
  %v4202 = vrot.slane %v800, %v4201
  %v4203 = vmul.f32 %v3677, %v4202
  %v4204 = vmul.f32 %v3682, %v4202
  %v4205 = vmul.f32 %v3687, %v4202
  %v4206 = vmul.f32 %v3692, %v4202
  %v4207 = vadd.f32 %v4195, %v4203
  %v4208 = vadd.f32 %v4196, %v4204
  %v4209 = vadd.f32 %v4197, %v4205
  %v4210 = vadd.f32 %v4198, %v4206
  %v4211 = vlaneseq
  %v4212 = vshrl.u32 %v4211, 7
  %v4213 = vsub.s32 3, %v4212
  %v4214 = vrot.slane %v800, %v4213
  %v4215 = vmul.f32 %v3697, %v4214
  %v4216 = vmul.f32 %v3702, %v4214
  %v4217 = vmul.f32 %v3707, %v4214
  %v4218 = vmul.f32 %v3712, %v4214
  %v4219 = vadd.f32 %v4207, %v4215
  %v4220 = vadd.f32 %v4208, %v4216
  %v4221 = vadd.f32 %v4209, %v4217
  %v4222 = vadd.f32 %v4210, %v4218
  %v4223 = vlaneseq
  %v4224 = vshrl.u32 %v4223, 7
  %v4225 = vsub.s32 4, %v4224
  %v4226 = vrot.slane %v800, %v4225
  %v4227 = vmul.f32 %v3717, %v4226
  %v4228 = vmul.f32 %v3722, %v4226
  %v4229 = vmul.f32 %v3727, %v4226
  %v4230 = vmul.f32 %v3732, %v4226
  %v4231 = vadd.f32 %v4219, %v4227
  %v4232 = vadd.f32 %v4220, %v4228
  %v4233 = vadd.f32 %v4221, %v4229
  %v4234 = vadd.f32 %v4222, %v4230
  %v4235 = vlaneseq
  %v4236 = vshrl.u32 %v4235, 7
  %v4237 = vsub.s32 5, %v4236
  %v4238 = vrot.slane %v800, %v4237
  %v4239 = vmul.f32 %v3737, %v4238
  %v4240 = vmul.f32 %v3742, %v4238
  %v4241 = vmul.f32 %v3747, %v4238
  %v4242 = vmul.f32 %v3752, %v4238
  %v4243 = vadd.f32 %v4231, %v4239
  %v4244 = vadd.f32 %v4232, %v4240
  %v4245 = vadd.f32 %v4233, %v4241
  %v4246 = vadd.f32 %v4234, %v4242
  %v4247 = vlaneseq
  %v4248 = vshrl.u32 %v4247, 7
  %v4249 = vsub.s32 6, %v4248
  %v4250 = vrot.slane %v800, %v4249
  %v4251 = vmul.f32 %v3757, %v4250
  %v4252 = vmul.f32 %v3762, %v4250
  %v4253 = vmul.f32 %v3767, %v4250
  %v4254 = vmul.f32 %v3772, %v4250
  %v4255 = vadd.f32 %v4243, %v4251
  %v4256 = vadd.f32 %v4244, %v4252
  %v4257 = vadd.f32 %v4245, %v4253
  %v4258 = vadd.f32 %v4246, %v4254
  %v4259 = vlaneseq
  %v4260 = vshrl.u32 %v4259, 7
  %v4261 = vsub.s32 7, %v4260
  %v4262 = vrot.slane %v800, %v4261
  %v4263 = vmul.f32 %v3777, %v4262
  %v4264 = vmul.f32 %v3782, %v4262
  %v4265 = vmul.f32 %v3787, %v4262
  %v4266 = vmul.f32 %v3792, %v4262
  %v4267 = vadd.f32 %v4255, %v4263
  %v4268 = vadd.f32 %v4256, %v4264
  %v4269 = vadd.f32 %v4257, %v4265
  %v4270 = vadd.f32 %v4258, %v4266
  %v4271 = vlaneseq
  %v4272 = vshrl.u32 %v4271, 7
  %v4273 = vsub.s32 0, %v4272
  %v4274 = vrot.slane %v801, %v4273
  %v4275 = vmul.f32 %v3797, %v4274
  %v4276 = vmul.f32 %v3802, %v4274
  %v4277 = vmul.f32 %v3807, %v4274
  %v4278 = vmul.f32 %v3812, %v4274
  %v4279 = vadd.f32 %v4267, %v4275
  %v4280 = vadd.f32 %v4268, %v4276
  %v4281 = vadd.f32 %v4269, %v4277
  %v4282 = vadd.f32 %v4270, %v4278
  %v4283 = vlaneseq
  %v4284 = vshrl.u32 %v4283, 7
  %v4285 = vsub.s32 1, %v4284
  %v4286 = vrot.slane %v801, %v4285
  %v4287 = vmul.f32 %v3817, %v4286
  %v4288 = vmul.f32 %v3822, %v4286
  %v4289 = vmul.f32 %v3827, %v4286
  %v4290 = vmul.f32 %v3832, %v4286
  %v4291 = vadd.f32 %v4279, %v4287
  %v4292 = vadd.f32 %v4280, %v4288
  %v4293 = vadd.f32 %v4281, %v4289
  %v4294 = vadd.f32 %v4282, %v4290
  %v4295 = vlaneseq
  %v4296 = vshrl.u32 %v4295, 7
  %v4297 = vsub.s32 2, %v4296
  %v4298 = vrot.slane %v801, %v4297
  %v4299 = vmul.f32 %v3837, %v4298
  %v4300 = vmul.f32 %v3842, %v4298
  %v4301 = vmul.f32 %v3847, %v4298
  %v4302 = vmul.f32 %v3852, %v4298
  %v4303 = vadd.f32 %v4291, %v4299
  %v4304 = vadd.f32 %v4292, %v4300
  %v4305 = vadd.f32 %v4293, %v4301
  %v4306 = vadd.f32 %v4294, %v4302
  %v4307 = vlaneseq
  %v4308 = vshrl.u32 %v4307, 7
  %v4309 = vsub.s32 3, %v4308
  %v4310 = vrot.slane %v801, %v4309
  %v4311 = vmul.f32 %v3857, %v4310
  %v4312 = vmul.f32 %v3862, %v4310
  %v4313 = vmul.f32 %v3867, %v4310
  %v4314 = vmul.f32 %v3872, %v4310
  %v4315 = vadd.f32 %v4303, %v4311
  %v4316 = vadd.f32 %v4304, %v4312
  %v4317 = vadd.f32 %v4305, %v4313
  %v4318 = vadd.f32 %v4306, %v4314
  %v4319 = vlaneseq
  %v4320 = vshrl.u32 %v4319, 7
  %v4321 = vsub.s32 4, %v4320
  %v4322 = vrot.slane %v801, %v4321
  %v4323 = vmul.f32 %v3877, %v4322
  %v4324 = vmul.f32 %v3882, %v4322
  %v4325 = vmul.f32 %v3887, %v4322
  %v4326 = vmul.f32 %v3892, %v4322
  %v4327 = vadd.f32 %v4315, %v4323
  %v4328 = vadd.f32 %v4316, %v4324
  %v4329 = vadd.f32 %v4317, %v4325
  %v4330 = vadd.f32 %v4318, %v4326
  %v4331 = vlaneseq
  %v4332 = vshrl.u32 %v4331, 7
  %v4333 = vsub.s32 5, %v4332
  %v4334 = vrot.slane %v801, %v4333
  %v4335 = vmul.f32 %v3897, %v4334
  %v4336 = vmul.f32 %v3902, %v4334
  %v4337 = vmul.f32 %v3907, %v4334
  %v4338 = vmul.f32 %v3912, %v4334
  %v4339 = vadd.f32 %v4327, %v4335
  %v4340 = vadd.f32 %v4328, %v4336
  %v4341 = vadd.f32 %v4329, %v4337
  %v4342 = vadd.f32 %v4330, %v4338
  %v4343 = vlaneseq
  %v4344 = vshrl.u32 %v4343, 7
  %v4345 = vsub.s32 6, %v4344
  %v4346 = vrot.slane %v801, %v4345
  %v4347 = vmul.f32 %v3917, %v4346
  %v4348 = vmul.f32 %v3922, %v4346
  %v4349 = vmul.f32 %v3927, %v4346
  %v4350 = vmul.f32 %v3932, %v4346
  %v4351 = vadd.f32 %v4339, %v4347
  %v4352 = vadd.f32 %v4340, %v4348
  %v4353 = vadd.f32 %v4341, %v4349
  %v4354 = vadd.f32 %v4342, %v4350
  %v4355 = vlaneseq
  %v4356 = vshrl.u32 %v4355, 7
  %v4357 = vsub.s32 7, %v4356
  %v4358 = vrot.slane %v801, %v4357
  %v4359 = vmul.f32 %v3937, %v4358
  %v4360 = vmul.f32 %v3942, %v4358
  %v4361 = vmul.f32 %v3947, %v4358
  %v4362 = vmul.f32 %v3952, %v4358
  %v4363 = vadd.f32 %v4351, %v4359
  %v4364 = vadd.f32 %v4352, %v4360
  %v4365 = vadd.f32 %v4353, %v4361
  %v4366 = vadd.f32 %v4354, %v4362
  %v4367 = vlaneseq
  %v4368 = vshrl.u32 %v4367, 7
  %v4369 = vsub.s32 0, %v4368
  %v4370 = vrot.slane %v802, %v4369
  %v4371 = vmul.f32 %v3957, %v4370
  %v4372 = vmul.f32 %v3962, %v4370
  %v4373 = vmul.f32 %v3967, %v4370
  %v4374 = vmul.f32 %v3972, %v4370
  %v4375 = vadd.f32 %v4363, %v4371
  %v4376 = vadd.f32 %v4364, %v4372
  %v4377 = vadd.f32 %v4365, %v4373
  %v4378 = vadd.f32 %v4366, %v4374
  %v4379 = vlaneseq
  %v4380 = vshrl.u32 %v4379, 7
  %v4381 = vsub.s32 1, %v4380
  %v4382 = vrot.slane %v802, %v4381
  %v4383 = vmul.f32 %v3977, %v4382
  %v4384 = vmul.f32 %v3982, %v4382
  %v4385 = vmul.f32 %v3987, %v4382
  %v4386 = vmul.f32 %v3992, %v4382
  %v4387 = vadd.f32 %v4375, %v4383
  %v4388 = vadd.f32 %v4376, %v4384
  %v4389 = vadd.f32 %v4377, %v4385
  %v4390 = vadd.f32 %v4378, %v4386
  %v4391 = vlaneseq
  %v4392 = vshrl.u32 %v4391, 7
  %v4393 = vsub.s32 2, %v4392
  %v4394 = vrot.slane %v802, %v4393
  %v4395 = vmul.f32 %v3997, %v4394
  %v4396 = vmul.f32 %v4002, %v4394
  %v4397 = vmul.f32 %v4007, %v4394
  %v4398 = vmul.f32 %v4012, %v4394
  %v4399 = vadd.f32 %v4387, %v4395
  %v4400 = vadd.f32 %v4388, %v4396
  %v4401 = vadd.f32 %v4389, %v4397
  %v4402 = vadd.f32 %v4390, %v4398
  %v4403 = vlaneseq
  %v4404 = vshrl.u32 %v4403, 7
  %v4405 = vsub.s32 3, %v4404
  %v4406 = vrot.slane %v802, %v4405
  %v4407 = vmul.f32 %v4017, %v4406
  %v4408 = vmul.f32 %v4022, %v4406
  %v4409 = vmul.f32 %v4027, %v4406
  %v4410 = vmul.f32 %v4032, %v4406
  %v4411 = vadd.f32 %v4399, %v4407
  %v4412 = vadd.f32 %v4400, %v4408
  %v4413 = vadd.f32 %v4401, %v4409
  %v4414 = vadd.f32 %v4402, %v4410
  %v4415 = vlaneseq
  %v4416 = vshrl.u32 %v4415, 7
  %v4417 = vsub.s32 4, %v4416
  %v4418 = vrot.slane %v802, %v4417
  %v4419 = vmul.f32 %v4037, %v4418
  %v4420 = vmul.f32 %v4042, %v4418
  %v4421 = vmul.f32 %v4047, %v4418
  %v4422 = vmul.f32 %v4052, %v4418
  %v4423 = vadd.f32 %v4411, %v4419
  %v4424 = vadd.f32 %v4412, %v4420
  %v4425 = vadd.f32 %v4413, %v4421
  %v4426 = vadd.f32 %v4414, %v4422
  %v4427 = vlaneseq
  %v4428 = vshrl.u32 %v4427, 7
  %v4429 = vsub.s32 5, %v4428
  %v4430 = vrot.slane %v802, %v4429
  %v4431 = vmul.f32 %v4057, %v4430
  %v4432 = vmul.f32 %v4062, %v4430
  %v4433 = vmul.f32 %v4067, %v4430
  %v4434 = vmul.f32 %v4072, %v4430
  %v4435 = vadd.f32 %v4423, %v4431
  %v4436 = vadd.f32 %v4424, %v4432
  %v4437 = vadd.f32 %v4425, %v4433
  %v4438 = vadd.f32 %v4426, %v4434
  %v4439 = vlaneseq
  %v4440 = vshrl.u32 %v4439, 7
  %v4441 = vsub.s32 6, %v4440
  %v4442 = vrot.slane %v802, %v4441
  %v4443 = vmul.f32 %v4077, %v4442
  %v4444 = vmul.f32 %v4082, %v4442
  %v4445 = vmul.f32 %v4087, %v4442
  %v4446 = vmul.f32 %v4092, %v4442
  %v4447 = vadd.f32 %v4435, %v4443
  %v4448 = vadd.f32 %v4436, %v4444
  %v4449 = vadd.f32 %v4437, %v4445
  %v4450 = vadd.f32 %v4438, %v4446
  %v4451 = vlaneseq
  %v4452 = vshrl.u32 %v4451, 7
  %v4453 = vsub.s32 7, %v4452
  %v4454 = vrot.slane %v802, %v4453
  %v4455 = vmul.f32 %v4097, %v4454
  %v4456 = vmul.f32 %v4102, %v4454
  %v4457 = vmul.f32 %v4107, %v4454
  %v4458 = vmul.f32 %v4112, %v4454
  %v4459 = vadd.f32 %v4447, %v4455
  %v4460 = vadd.f32 %v4448, %v4456
  %v4461 = vadd.f32 %v4449, %v4457
  %v4462 = vadd.f32 %v4450, %v4458
  %v4463 = vlaneseq
  %v4464 = vshrl.u32 %v4463, 7
  %v4465 = vsub.s32 0, %v4464
  %v4466 = vrot.slane %v803, %v4465
  %v4467 = vmul.f32 %v4117, %v4466
  %v4468 = vmul.f32 %v4122, %v4466
  %v4469 = vmul.f32 %v4127, %v4466
  %v4470 = vmul.f32 %v4132, %v4466
  %v4471 = vadd.f32 %v4459, %v4467
  %v4472 = vadd.f32 %v4460, %v4468
  %v4473 = vadd.f32 %v4461, %v4469
  %v4474 = vadd.f32 %v4462, %v4470
  %v4475 = vlaneseq
  %v4476 = vshrl.u32 %v4475, 7
  %v4477 = vsub.s32 1, %v4476
  %v4478 = vrot.slane %v803, %v4477
  %v4479 = vmul.f32 %v4137, %v4478
  %v4480 = vmul.f32 %v4142, %v4478
  %v4481 = vmul.f32 %v4147, %v4478
  %v4482 = vmul.f32 %v4152, %v4478
  %v4483 = vadd.f32 %v4471, %v4479
  %v4484 = vadd.f32 %v4472, %v4480
  %v4485 = vadd.f32 %v4473, %v4481
  %v4486 = vadd.f32 %v4474, %v4482
  %v4487 = vlaneseq
  %v4488 = vshrl.u32 %v4487, 7
  %v4489 = vsub.s32 2, %v4488
  %v4490 = vrot.slane %v803, %v4489
  %v4491 = vmul.f32 %v4157, %v4490
  %v4492 = vmul.f32 %v4162, %v4490
  %v4493 = vmul.f32 %v4167, %v4490
  %v4494 = vmul.f32 %v4172, %v4490
  %v4495 = vadd.f32 %v4483, %v4491
  %v4496 = vadd.f32 %v4484, %v4492
  %v4497 = vadd.f32 %v4485, %v4493
  %v4498 = vadd.f32 %v4486, %v4494
  %v4503 = vrot.slane %v4495, 7
  %v4504 = vrot.slane %v4496, 7
  %v4505 = vsel %vm2086, %v4503, %v4504
  %v4506 = vrot.slane %v4497, 7
  %v4507 = vsel %vm2086, %v4504, %v4506
  %v4508 = vrot.slane %v4498, 7
  %v4509 = vsel %vm2086, %v4506, %v4508
  %v4515 = vsel %vm2086, %v747, %v4503
  %v4517 = vsel %vm254, %v4515, 0
  %v4519 = vsel %vm254, %v4505, 0
  %v4521 = vsel %vm254, %v4507, 0
  %v4523 = vsel %vm254, %v4509, 0
  %v4525 = vsel %vm254, %v4508, 0
  %4527 = vmatprep.subr.mxu0 0.0
  %4528 = vmatpush1.msra.mxu0 0.0
  %4529 = vmatprep.subr.mxu0 0.0
  %4530 = vmatpush1.msra.mxu0 0.0
  %4531 = vmatprep.subr.mxu0 0.0
  %4532 = vmatpush1.msra.mxu0 0.0
  %4533 = vmatprep.subr.mxu0 0.0
  %4534 = vmatpush1.msra.mxu0 0.0
  %4535 = vmatprep.subr.mxu0 0.0
  %4536 = vmatpush1.msra.mxu0 0.0
  %4537 = vmatprep.subr.mxu0 0.0
  %4538 = vmatpush1.msra.mxu0 0.0
  %4539 = vmatprep.subr.mxu0 0.0
  %4540 = vmatpush1.msra.mxu0 0.0
  %4541 = vmatprep.subr.mxu0 0.0
  %4542 = vmatpush1.msra.mxu0 0.0
  %4543 = vmatprep.subr.mxu0 0.0
  %4544 = vmatpush1.msra.mxu0 0.0
  %4545 = vmatprep.subr.mxu0 0.0
  %4546 = vmatpush1.msra.mxu0 0.0
  %4547 = vmatprep.subr.mxu0 0.0
  %4548 = vmatpush1.msra.mxu0 0.0
  %4549 = vmatprep.subr.mxu0 0.0
  %4550 = vmatpush1.msra.mxu0 0.0
  %4551 = vmatprep.subr.mxu0 0.0
  %4552 = vmatpush1.msra.mxu0 %v179
  %4553 = vmatprep.subr.mxu0 0.0
  %4554 = vmatpush1.msra.mxu0 %v178
  %4555 = vmatprep.subr.mxu0 0.0
  %4556 = vmatpush1.msra.mxu0 %v177
  %4557 = vmatprep.subr.mxu0 0.0
  %4558 = vmatpush1.msra.mxu0 %v176
  %4559 = vmatprep.subr.mxu0 0.0
  %4560 = vmatpush2.msra.mxu0 0.0
  %4561 = vmatprep.subr.mxu0 0.0
  %4562 = vmatpush2.msra.mxu0 0.0
  %4563 = vmatprep.subr.mxu0 0.0
  %4564 = vmatpush2.msra.mxu0 0.0
  %4565 = vmatprep.subr.mxu0 0.0
  %4566 = vmatpush2.msra.mxu0 0.0
  %4567 = vmatprep.subr.mxu0 0.0
  %4568 = vmatpush2.msra.mxu0 0.0
  %4569 = vmatprep.subr.mxu0 0.0
  %4570 = vmatpush2.msra.mxu0 0.0
  %4571 = vmatprep.subr.mxu0 0.0
  %4572 = vmatpush2.msra.mxu0 0.0
  %4573 = vmatprep.subr.mxu0 0.0
  %4574 = vmatpush2.msra.mxu0 0.0
  %4575 = vmatprep.subr.mxu0 0.0
  %4576 = vmatpush2.msra.mxu0 0.0
  %4577 = vmatprep.subr.mxu0 0.0
  %4578 = vmatpush2.msra.mxu0 0.0
  %4579 = vmatprep.subr.mxu0 0.0
  %4580 = vmatpush2.msra.mxu0 0.0
  %4581 = vmatprep.subr.mxu0 0.0
  %4582 = vmatpush2.msra.mxu0 0.0
  %4583 = vmatprep.subr.mxu0 0.0
  %4584 = vmatpush2.msra.mxu0 0.0
  %4585 = vmatprep.subr.mxu0 0.0
  %4586 = vmatpush2.msra.mxu0 0.0
  %4587 = vmatprep.subr.mxu0 0.0
  %4588 = vmatpush2.msra.mxu0 0.0
  %4589 = vmatprep.subr.mxu0 0.0
  %4590 = vmatpush2.msra.mxu0 0.0
  %4591 = vmatprep.mubr.f32.mxu0 0.0
  %4592 = vmatmul.mubr.f32.gmra.mxu0 %v4517
  %v4593 = vpop.f32.mrf.mxu0
  %v4594 = vadd.f32 0.0, %v4593
  %v4595 = vpop.f32.mrf.mxu0
  %4596 = vmatprep.mubr.f32.mxu0 0.0
  %4597 = vmatmul.mubr.f32.gmra.mxu0 %v4519
  %v4598 = vpop.f32.mrf.mxu0
  %v4599 = vadd.f32 0.0, %v4598
  %v4600 = vpop.f32.mrf.mxu0
  %4601 = vmatprep.mubr.f32.mxu0 0.0
  %4602 = vmatmul.mubr.f32.gmra.mxu0 %v4521
  %v4603 = vpop.f32.mrf.mxu0
  %v4604 = vadd.f32 0.0, %v4603
  %v4605 = vpop.f32.mrf.mxu0
  %4606 = vmatprep.mubr.f32.mxu0 0.0
  %4607 = vmatmul.mubr.f32.gmra.mxu0 %v4523
  %v4608 = vpop.f32.mrf.mxu0
  %v4609 = vadd.f32 0.0, %v4608
  %v4610 = vpop.f32.mrf.mxu0
  %4611 = vmatprep.mubr.f32.mxu0 0.0
  %4612 = vmatmul.mubr.f32.gmra.mxu0 %v4525
  %v4613 = vpop.f32.mrf.mxu0
  %v4614 = vadd.f32 0.0, %v4613
  %v4615 = vpop.f32.mrf.mxu0
  %4616 = vdwg.mxu0
  %v4617 = vsub.f32 %v4515, %v4594
  %v4618 = vsub.f32 %v4505, %v4599
  %v4619 = vsub.f32 %v4507, %v4604
  %v4620 = vsub.f32 %v4509, %v4609
  %v4621 = vsub.f32 %v4508, %v4614
  %v4622 = vmul.f32 %v4617, %v4617
  %v4623 = vmul.f32 %v4618, %v4618
  %v4624 = vmul.f32 %v4619, %v4619
  %v4625 = vmul.f32 %v4620, %v4620
  %v4626 = vmul.f32 %v4621, %v4621
  %v4628 = vsel %vm254, %v4622, 0
  %v4631 = vsel %vm254, %v4623, 0
  %v4634 = vsel %vm254, %v4624, 0
  %v4637 = vsel %vm254, %v4625, 0
  %v4640 = vsel %vm254, %v4626, 0
  %4642 = vmatprep.subr.mxu0 0.0
  %4643 = vmatpush1.msra.mxu0 0.0
  %4644 = vmatprep.subr.mxu0 0.0
  %4645 = vmatpush1.msra.mxu0 0.0
  %4646 = vmatprep.subr.mxu0 0.0
  %4647 = vmatpush1.msra.mxu0 0.0
  %4648 = vmatprep.subr.mxu0 0.0
  %4649 = vmatpush1.msra.mxu0 0.0
  %4650 = vmatprep.subr.mxu0 0.0
  %4651 = vmatpush1.msra.mxu0 0.0
  %4652 = vmatprep.subr.mxu0 0.0
  %4653 = vmatpush1.msra.mxu0 0.0
  %4654 = vmatprep.subr.mxu0 0.0
  %4655 = vmatpush1.msra.mxu0 0.0
  %4656 = vmatprep.subr.mxu0 0.0
  %4657 = vmatpush1.msra.mxu0 0.0
  %4658 = vmatprep.subr.mxu0 0.0
  %4659 = vmatpush1.msra.mxu0 0.0
  %4660 = vmatprep.subr.mxu0 0.0
  %4661 = vmatpush1.msra.mxu0 0.0
  %4662 = vmatprep.subr.mxu0 0.0
  %4663 = vmatpush1.msra.mxu0 0.0
  %4664 = vmatprep.subr.mxu0 0.0
  %4665 = vmatpush1.msra.mxu0 0.0
  %4666 = vmatprep.subr.mxu0 0.0
  %4667 = vmatpush1.msra.mxu0 %v179
  %4668 = vmatprep.subr.mxu0 0.0
  %4669 = vmatpush1.msra.mxu0 %v178
  %4670 = vmatprep.subr.mxu0 0.0
  %4671 = vmatpush1.msra.mxu0 %v177
  %4672 = vmatprep.subr.mxu0 0.0
  %4673 = vmatpush1.msra.mxu0 %v176
  %4674 = vmatprep.subr.mxu0 0.0
  %4675 = vmatpush2.msra.mxu0 0.0
  %4676 = vmatprep.subr.mxu0 0.0
  %4677 = vmatpush2.msra.mxu0 0.0
  %4678 = vmatprep.subr.mxu0 0.0
  %4679 = vmatpush2.msra.mxu0 0.0
  %4680 = vmatprep.subr.mxu0 0.0
  %4681 = vmatpush2.msra.mxu0 0.0
  %4682 = vmatprep.subr.mxu0 0.0
  %4683 = vmatpush2.msra.mxu0 0.0
  %4684 = vmatprep.subr.mxu0 0.0
  %4685 = vmatpush2.msra.mxu0 0.0
  %4686 = vmatprep.subr.mxu0 0.0
  %4687 = vmatpush2.msra.mxu0 0.0
  %4688 = vmatprep.subr.mxu0 0.0
  %4689 = vmatpush2.msra.mxu0 0.0
  %4690 = vmatprep.subr.mxu0 0.0
  %4691 = vmatpush2.msra.mxu0 0.0
  %4692 = vmatprep.subr.mxu0 0.0
  %4693 = vmatpush2.msra.mxu0 0.0
  %4694 = vmatprep.subr.mxu0 0.0
  %4695 = vmatpush2.msra.mxu0 0.0
  %4696 = vmatprep.subr.mxu0 0.0
  %4697 = vmatpush2.msra.mxu0 0.0
  %4698 = vmatprep.subr.mxu0 0.0
  %4699 = vmatpush2.msra.mxu0 0.0
  %4700 = vmatprep.subr.mxu0 0.0
  %4701 = vmatpush2.msra.mxu0 0.0
  %4702 = vmatprep.subr.mxu0 0.0
  %4703 = vmatpush2.msra.mxu0 0.0
  %4704 = vmatprep.subr.mxu0 0.0
  %4705 = vmatpush2.msra.mxu0 0.0
  %4706 = vmatprep.mubr.f32.mxu0 0.0
  %4707 = vmatmul.mubr.f32.gmra.mxu0 %v4628
  %v4708 = vpop.f32.mrf.mxu0
  %v4709 = vadd.f32 1e-05, %v4708
  %v4710 = vpop.f32.mrf.mxu0
  %4711 = vmatprep.mubr.f32.mxu0 0.0
  %4712 = vmatmul.mubr.f32.gmra.mxu0 %v4631
  %v4713 = vpop.f32.mrf.mxu0
  %v4714 = vadd.f32 1e-05, %v4713
  %v4715 = vpop.f32.mrf.mxu0
  %4716 = vmatprep.mubr.f32.mxu0 0.0
  %4717 = vmatmul.mubr.f32.gmra.mxu0 %v4634
  %v4718 = vpop.f32.mrf.mxu0
  %v4719 = vadd.f32 1e-05, %v4718
  %v4720 = vpop.f32.mrf.mxu0
  %4721 = vmatprep.mubr.f32.mxu0 0.0
  %4722 = vmatmul.mubr.f32.gmra.mxu0 %v4637
  %v4723 = vpop.f32.mrf.mxu0
  %v4724 = vadd.f32 1e-05, %v4723
  %v4725 = vpop.f32.mrf.mxu0
  %4726 = vmatprep.mubr.f32.mxu0 0.0
  %4727 = vmatmul.mubr.f32.gmra.mxu0 %v4640
  %v4728 = vpop.f32.mrf.mxu0
  %v4729 = vadd.f32 1e-05, %v4728
  %v4730 = vpop.f32.mrf.mxu0
  %4731 = vdwg.mxu0
  %v4732 = vrsqrt.pop %v4709
  %v4733 = vrsqrt.pop %v4714
  %v4734 = vrsqrt.pop %v4719
  %v4735 = vrsqrt.pop %v4724
  %v4736 = vrsqrt.pop %v4729
  %v4737 = vmul.f32 %v4617, %v4732
  %v4738 = vmul.f32 %v4618, %v4733
  %v4739 = vmul.f32 %v4619, %v4734
  %v4740 = vmul.f32 %v4620, %v4735
  %v4741 = vmul.f32 %v4621, %v4736
  %v4742 = vlaneseq
  %v4743 = vshrl.u32 %v4742, 7
  %v4744 = vsub.s32 0, %v4743
  %v4745 = vrot.slane %v806, %v4744
  %v4746 = vmul.f32 %v4737, %v4745
  %v4747 = vmul.f32 %v4738, %v4745
  %v4748 = vmul.f32 %v4739, %v4745
  %v4749 = vmul.f32 %v4740, %v4745
  %v4750 = vmul.f32 %v4741, %v4745
  %v4751 = vlaneseq
  %v4752 = vshrl.u32 %v4751, 7
  %v4753 = vsub.s32 0, %v4752
  %v4754 = vrot.slane %v809, %v4753
  %v4755 = vadd.f32 %v4746, %v4754
  %v4756 = vadd.f32 %v4747, %v4754
  %v4757 = vadd.f32 %v4748, %v4754
  %v4758 = vadd.f32 %v4749, %v4754
  %v4759 = vadd.f32 %v4750, %v4754
  %v4760 = vmul.f32 %v2339, 0.35355338
  %v4761 = vmul.f32 %v2340, 0.35355338
  %v4762 = vmul.f32 %v2341, 0.35355338
  %v4763 = vmul.f32 %v2342, 0.35355338
  %v4764 = vmul.f32 %v2343, 0.35355338
  %v4765 = vmul.f32 %v3547, %v217
  %v4766 = vmul.f32 %v3548, %v217
  %v4767 = vmul.f32 %v3549, %v217
  %v4768 = vmul.f32 %v3550, %v217
  %v4769 = vmul.f32 %v3551, %v217
  %v4771 = vsel %vm254, %v4760, 0
  %v4774 = vsel %vm254, %v4761, 0
  %v4777 = vsel %vm254, %v4762, 0
  %v4780 = vsel %vm254, %v4763, 0
  %v4783 = vsel %vm254, %v4764, 0
  %v4786 = vsel %vm254, %v4765, 0
  %v4789 = vsel %vm254, %v4766, 0
  %v4792 = vsel %vm254, %v4767, 0
  %v4795 = vsel %vm254, %v4768, 0
  %v4798 = vsel %vm254, %v4769, 0
  %4800 = vmatprep.subr.mxu0 0.0
  %4801 = vmatpush1.xpose.msra.mxu0 0.0
  %4802 = vmatprep.subr.mxu0 0.0
  %4803 = vmatpush1.xpose.msra.mxu0 0.0
  %4804 = vmatprep.subr.mxu0 0.0
  %4805 = vmatpush1.xpose.msra.mxu0 0.0
  %4806 = vmatprep.subr.mxu0 0.0
  %4807 = vmatpush1.xpose.msra.mxu0 0.0
  %4808 = vmatprep.subr.mxu0 0.0
  %4809 = vmatpush1.xpose.msra.mxu0 0.0
  %4810 = vmatprep.subr.mxu0 0.0
  %4811 = vmatpush1.xpose.msra.mxu0 0.0
  %4812 = vmatprep.subr.mxu0 0.0
  %4813 = vmatpush1.xpose.msra.mxu0 0.0
  %4814 = vmatprep.subr.mxu0 0.0
  %4815 = vmatpush1.xpose.msra.mxu0 0.0
  %4816 = vmatprep.subr.mxu0 0.0
  %4817 = vmatpush1.xpose.msra.mxu0 0.0
  %4818 = vmatprep.subr.mxu0 0.0
  %4819 = vmatpush1.xpose.msra.mxu0 0.0
  %4820 = vmatprep.subr.mxu0 0.0
  %4821 = vmatpush1.xpose.msra.mxu0 0.0
  %4822 = vmatprep.subr.mxu0 0.0
  %4823 = vmatpush1.xpose.msra.mxu0 %v4798
  %4824 = vmatprep.subr.mxu0 0.0
  %4825 = vmatpush1.xpose.msra.mxu0 %v4795
  %4826 = vmatprep.subr.mxu0 0.0
  %4827 = vmatpush1.xpose.msra.mxu0 %v4792
  %4828 = vmatprep.subr.mxu0 0.0
  %4829 = vmatpush1.xpose.msra.mxu0 %v4789
  %4830 = vmatprep.subr.mxu0 0.0
  %4831 = vmatpush1.xpose.msra.mxu0 %v4786
  %4832 = vmatprep.subr.mxu0 0.0
  %4833 = vmatpush2.xpose.msra.mxu0 0.0
  %4834 = vmatprep.subr.mxu0 0.0
  %4835 = vmatpush2.xpose.msra.mxu0 0.0
  %4836 = vmatprep.subr.mxu0 0.0
  %4837 = vmatpush2.xpose.msra.mxu0 0.0
  %4838 = vmatprep.subr.mxu0 0.0
  %4839 = vmatpush2.xpose.msra.mxu0 0.0
  %4840 = vmatprep.subr.mxu0 0.0
  %4841 = vmatpush2.xpose.msra.mxu0 0.0
  %4842 = vmatprep.subr.mxu0 0.0
  %4843 = vmatpush2.xpose.msra.mxu0 0.0
  %4844 = vmatprep.subr.mxu0 0.0
  %4845 = vmatpush2.xpose.msra.mxu0 0.0
  %4846 = vmatprep.subr.mxu0 0.0
  %4847 = vmatpush2.xpose.msra.mxu0 0.0
  %4848 = vmatprep.subr.mxu0 0.0
  %4849 = vmatpush2.xpose.msra.mxu0 0.0
  %4850 = vmatprep.subr.mxu0 0.0
  %4851 = vmatpush2.xpose.msra.mxu0 0.0
  %4852 = vmatprep.subr.mxu0 0.0
  %4853 = vmatpush2.xpose.msra.mxu0 0.0
  %4854 = vmatprep.subr.mxu0 0.0
  %4855 = vmatpush2.xpose.msra.mxu0 0.0
  %4856 = vmatprep.subr.mxu0 0.0
  %4857 = vmatpush2.xpose.msra.mxu0 0.0
  %4858 = vmatprep.subr.mxu0 0.0
  %4859 = vmatpush2.xpose.msra.mxu0 0.0
  %4860 = vmatprep.subr.mxu0 0.0
  %4861 = vmatpush2.xpose.msra.mxu0 0.0
  %4862 = vmatprep.subr.mxu0 0.0
  %4863 = vmatpush2.xpose.msra.mxu0 0.0
  %4864 = vmatprep.mubr.f32.mxu0 0.0
  %4865 = vmatmul.mubr.f32.gmra.mxu0 %v4771
  %v4866 = vpop.f32.mrf.mxu0
  %v4867 = vadd.f32 0.0, %v4866
  %v4868 = vpop.f32.mrf.mxu0
  %4869 = vmatprep.mubr.f32.mxu0 0.0
  %4870 = vmatmul.mubr.f32.gmra.mxu0 %v4774
  %v4871 = vpop.f32.mrf.mxu0
  %v4872 = vadd.f32 0.0, %v4871
  %v4873 = vpop.f32.mrf.mxu0
  %4874 = vmatprep.mubr.f32.mxu0 0.0
  %4875 = vmatmul.mubr.f32.gmra.mxu0 %v4777
  %v4876 = vpop.f32.mrf.mxu0
  %v4877 = vadd.f32 0.0, %v4876
  %v4878 = vpop.f32.mrf.mxu0
  %4879 = vmatprep.mubr.f32.mxu0 0.0
  %4880 = vmatmul.mubr.f32.gmra.mxu0 %v4780
  %v4881 = vpop.f32.mrf.mxu0
  %v4882 = vadd.f32 0.0, %v4881
  %v4883 = vpop.f32.mrf.mxu0
  %4884 = vmatprep.mubr.f32.mxu0 0.0
  %4885 = vmatmul.mubr.f32.gmra.mxu0 %v4783
  %v4886 = vpop.f32.mrf.mxu0
  %v4887 = vadd.f32 0.0, %v4886
  %v4888 = vpop.f32.mrf.mxu0
  %4889 = vdwg.mxu0
  %vm4890 = vcmask 269312
  %v4891 = vsel %vm4890, %v4867, -inf
  %4892 = vmax.xlane.f32.xlu0 %v4891
  %v4893 = vpop.xlane.xlu0 %4892
  %v4894 = vsel %vm4890, %v4872, -inf
  %4895 = vmax.xlane.f32.xlu0 %v4894
  %v4896 = vpop.xlane.xlu0 %4895
  %v4897 = vsel %vm4890, %v4877, -inf
  %4898 = vmax.xlane.f32.xlu0 %v4897
  %v4899 = vpop.xlane.xlu0 %4898
  %v4900 = vsel %vm4890, %v4882, -inf
  %4901 = vmax.xlane.f32.xlu0 %v4900
  %v4902 = vpop.xlane.xlu0 %4901
  %vm4903 = vcmask 262144
  %v4904 = vsel %vm4903, %v4887, -inf
  %4905 = vmax.xlane.f32.xlu0 %v4904
  %v4906 = vpop.xlane.xlu0 %4905
  %v4907 = vsub.f32 %v4867, %v4893
  %v4908 = vsub.f32 %v4872, %v4896
  %v4909 = vsub.f32 %v4877, %v4899
  %v4910 = vsub.f32 %v4882, %v4902
  %v4911 = vsub.f32 %v4887, %v4906
  %v4912 = vmul.f32 %v4907, 1.442695
  %v4913 = vpow.pop %v4912
  %v4914 = vmul.f32 %v4908, 1.442695
  %v4915 = vpow.pop %v4914
  %v4916 = vmul.f32 %v4909, 1.442695
  %v4917 = vpow.pop %v4916
  %v4918 = vmul.f32 %v4910, 1.442695
  %v4919 = vpow.pop %v4918
  %v4920 = vmul.f32 %v4911, 1.442695
  %v4921 = vpow.pop %v4920
  %v4922 = vsel %vm4890, %v4913, 0.0
  %4923 = vadd.xlane.f32.xlu0 %v4922
  %v4924 = vpop.xlane.xlu0 %4923
  %v4925 = vsel %vm4890, %v4915, 0.0
  %4926 = vadd.xlane.f32.xlu0 %v4925
  %v4927 = vpop.xlane.xlu0 %4926
  %v4928 = vsel %vm4890, %v4917, 0.0
  %4929 = vadd.xlane.f32.xlu0 %v4928
  %v4930 = vpop.xlane.xlu0 %4929
  %v4931 = vsel %vm4890, %v4919, 0.0
  %4932 = vadd.xlane.f32.xlu0 %v4931
  %v4933 = vpop.xlane.xlu0 %4932
  %v4934 = vsel %vm4903, %v4921, 0.0
  %4935 = vadd.xlane.f32.xlu0 %v4934
  %v4936 = vpop.xlane.xlu0 %4935
  %v4937 = vrcp.pop %v4924
  %v4938 = vrcp.pop %v4927
  %v4939 = vrcp.pop %v4930
  %v4940 = vrcp.pop %v4933
  %v4941 = vrcp.pop %v4936
  %v4942 = vmul.f32 %v4913, %v4937
  %v4943 = vmul.f32 %v4915, %v4938
  %v4944 = vmul.f32 %v4917, %v4939
  %v4945 = vmul.f32 %v4919, %v4940
  %v4946 = vmul.f32 %v4921, %v4941
  %v4947 = vmul.f32 %v4755, %v217
  %v4948 = vmul.f32 %v4756, %v217
  %v4949 = vmul.f32 %v4757, %v217
  %v4950 = vmul.f32 %v4758, %v217
  %v4951 = vmul.f32 %v4759, %v217
  %v4952 = vmul.f32 %v3547, %v222
  %v4953 = vmul.f32 %v3548, %v222
  %v4954 = vmul.f32 %v3549, %v222
  %v4955 = vmul.f32 %v3550, %v222
  %v4956 = vmul.f32 %v3551, %v222
  %v4958 = vsel %vm254, %v4952, 0
  %v4961 = vsel %vm254, %v4953, 0
  %v4964 = vsel %vm254, %v4954, 0
  %v4967 = vsel %vm254, %v4955, 0
  %v4970 = vsel %vm254, %v4956, 0
  %4972 = vmatprep.subr.mxu0 0.0
  %4973 = vmatpush1.xpose.msra.mxu0 0.0
  %4974 = vmatprep.subr.mxu0 0.0
  %4975 = vmatpush1.xpose.msra.mxu0 0.0
  %4976 = vmatprep.subr.mxu0 0.0
  %4977 = vmatpush1.xpose.msra.mxu0 0.0
  %4978 = vmatprep.subr.mxu0 0.0
  %4979 = vmatpush1.xpose.msra.mxu0 0.0
  %4980 = vmatprep.subr.mxu0 0.0
  %4981 = vmatpush1.xpose.msra.mxu0 0.0
  %4982 = vmatprep.subr.mxu0 0.0
  %4983 = vmatpush1.xpose.msra.mxu0 0.0
  %4984 = vmatprep.subr.mxu0 0.0
  %4985 = vmatpush1.xpose.msra.mxu0 0.0
  %4986 = vmatprep.subr.mxu0 0.0
  %4987 = vmatpush1.xpose.msra.mxu0 0.0
  %4988 = vmatprep.subr.mxu0 0.0
  %4989 = vmatpush1.xpose.msra.mxu0 0.0
  %4990 = vmatprep.subr.mxu0 0.0
  %4991 = vmatpush1.xpose.msra.mxu0 0.0
  %4992 = vmatprep.subr.mxu0 0.0
  %4993 = vmatpush1.xpose.msra.mxu0 0.0
  %4994 = vmatprep.subr.mxu0 0.0
  %4995 = vmatpush1.xpose.msra.mxu0 %v4970
  %4996 = vmatprep.subr.mxu0 0.0
  %4997 = vmatpush1.xpose.msra.mxu0 %v4967
  %4998 = vmatprep.subr.mxu0 0.0
  %4999 = vmatpush1.xpose.msra.mxu0 %v4964
  %5000 = vmatprep.subr.mxu0 0.0
  %5001 = vmatpush1.xpose.msra.mxu0 %v4961
  %5002 = vmatprep.subr.mxu0 0.0
  %5003 = vmatpush1.xpose.msra.mxu0 %v4958
  %5004 = vmatprep.subr.mxu0 0.0
  %5005 = vmatpush2.xpose.msra.mxu0 0.0
  %5006 = vmatprep.subr.mxu0 0.0
  %5007 = vmatpush2.xpose.msra.mxu0 0.0
  %5008 = vmatprep.subr.mxu0 0.0
  %5009 = vmatpush2.xpose.msra.mxu0 0.0
  %5010 = vmatprep.subr.mxu0 0.0
  %5011 = vmatpush2.xpose.msra.mxu0 0.0
  %5012 = vmatprep.subr.mxu0 0.0
  %5013 = vmatpush2.xpose.msra.mxu0 0.0
  %5014 = vmatprep.subr.mxu0 0.0
  %5015 = vmatpush2.xpose.msra.mxu0 0.0
  %5016 = vmatprep.subr.mxu0 0.0
  %5017 = vmatpush2.xpose.msra.mxu0 0.0
  %5018 = vmatprep.subr.mxu0 0.0
  %5019 = vmatpush2.xpose.msra.mxu0 0.0
  %5020 = vmatprep.subr.mxu0 0.0
  %5021 = vmatpush2.xpose.msra.mxu0 0.0
  %5022 = vmatprep.subr.mxu0 0.0
  %5023 = vmatpush2.xpose.msra.mxu0 0.0
  %5024 = vmatprep.subr.mxu0 0.0
  %5025 = vmatpush2.xpose.msra.mxu0 0.0
  %5026 = vmatprep.subr.mxu0 0.0
  %5027 = vmatpush2.xpose.msra.mxu0 0.0
  %5028 = vmatprep.subr.mxu0 0.0
  %5029 = vmatpush2.xpose.msra.mxu0 0.0
  %5030 = vmatprep.subr.mxu0 0.0
  %5031 = vmatpush2.xpose.msra.mxu0 0.0
  %5032 = vmatprep.subr.mxu0 0.0
  %5033 = vmatpush2.xpose.msra.mxu0 0.0
  %5034 = vmatprep.subr.mxu0 0.0
  %5035 = vmatpush2.xpose.msra.mxu0 0.0
  %5036 = vmatprep.mubr.f32.mxu0 0.0
  %5037 = vmatmul.mubr.f32.gmra.mxu0 %v4771
  %v5038 = vpop.f32.mrf.mxu0
  %v5039 = vadd.f32 0.0, %v5038
  %v5040 = vpop.f32.mrf.mxu0
  %5041 = vmatprep.mubr.f32.mxu0 0.0
  %5042 = vmatmul.mubr.f32.gmra.mxu0 %v4774
  %v5043 = vpop.f32.mrf.mxu0
  %v5044 = vadd.f32 0.0, %v5043
  %v5045 = vpop.f32.mrf.mxu0
  %5046 = vmatprep.mubr.f32.mxu0 0.0
  %5047 = vmatmul.mubr.f32.gmra.mxu0 %v4777
  %v5048 = vpop.f32.mrf.mxu0
  %v5049 = vadd.f32 0.0, %v5048
  %v5050 = vpop.f32.mrf.mxu0
  %5051 = vmatprep.mubr.f32.mxu0 0.0
  %5052 = vmatmul.mubr.f32.gmra.mxu0 %v4780
  %v5053 = vpop.f32.mrf.mxu0
  %v5054 = vadd.f32 0.0, %v5053
  %v5055 = vpop.f32.mrf.mxu0
  %5056 = vmatprep.mubr.f32.mxu0 0.0
  %5057 = vmatmul.mubr.f32.gmra.mxu0 %v4783
  %v5058 = vpop.f32.mrf.mxu0
  %v5059 = vadd.f32 0.0, %v5058
  %v5060 = vpop.f32.mrf.mxu0
  %5061 = vdwg.mxu0
  %v5062 = vsel %vm4890, %v5039, -inf
  %5063 = vmax.xlane.f32.xlu0 %v5062
  %v5064 = vpop.xlane.xlu0 %5063
  %v5065 = vsel %vm4890, %v5044, -inf
  %5066 = vmax.xlane.f32.xlu0 %v5065
  %v5067 = vpop.xlane.xlu0 %5066
  %v5068 = vsel %vm4890, %v5049, -inf
  %5069 = vmax.xlane.f32.xlu0 %v5068
  %v5070 = vpop.xlane.xlu0 %5069
  %v5071 = vsel %vm4890, %v5054, -inf
  %5072 = vmax.xlane.f32.xlu0 %v5071
  %v5073 = vpop.xlane.xlu0 %5072
  %v5074 = vsel %vm4903, %v5059, -inf
  %5075 = vmax.xlane.f32.xlu0 %v5074
  %v5076 = vpop.xlane.xlu0 %5075
  %v5077 = vsub.f32 %v5039, %v5064
  %v5078 = vsub.f32 %v5044, %v5067
  %v5079 = vsub.f32 %v5049, %v5070
  %v5080 = vsub.f32 %v5054, %v5073
  %v5081 = vsub.f32 %v5059, %v5076
  %v5082 = vmul.f32 %v5077, 1.442695
  %v5083 = vpow.pop %v5082
  %v5084 = vmul.f32 %v5078, 1.442695
  %v5085 = vpow.pop %v5084
  %v5086 = vmul.f32 %v5079, 1.442695
  %v5087 = vpow.pop %v5086
  %v5088 = vmul.f32 %v5080, 1.442695
  %v5089 = vpow.pop %v5088
  %v5090 = vmul.f32 %v5081, 1.442695
  %v5091 = vpow.pop %v5090
  %v5092 = vsel %vm4890, %v5083, 0.0
  %5093 = vadd.xlane.f32.xlu0 %v5092
  %v5094 = vpop.xlane.xlu0 %5093
  %v5095 = vsel %vm4890, %v5085, 0.0
  %5096 = vadd.xlane.f32.xlu0 %v5095
  %v5097 = vpop.xlane.xlu0 %5096
  %v5098 = vsel %vm4890, %v5087, 0.0
  %5099 = vadd.xlane.f32.xlu0 %v5098
  %v5100 = vpop.xlane.xlu0 %5099
  %v5101 = vsel %vm4890, %v5089, 0.0
  %5102 = vadd.xlane.f32.xlu0 %v5101
  %v5103 = vpop.xlane.xlu0 %5102
  %v5104 = vsel %vm4903, %v5091, 0.0
  %5105 = vadd.xlane.f32.xlu0 %v5104
  %v5106 = vpop.xlane.xlu0 %5105
  %v5107 = vrcp.pop %v5094
  %v5108 = vrcp.pop %v5097
  %v5109 = vrcp.pop %v5100
  %v5110 = vrcp.pop %v5103
  %v5111 = vrcp.pop %v5106
  %v5112 = vmul.f32 %v5083, %v5107
  %v5113 = vmul.f32 %v5085, %v5108
  %v5114 = vmul.f32 %v5087, %v5109
  %v5115 = vmul.f32 %v5089, %v5110
  %v5116 = vmul.f32 %v5091, %v5111
  %v5117 = vmul.f32 %v4755, %v222
  %v5118 = vmul.f32 %v4756, %v222
  %v5119 = vmul.f32 %v4757, %v222
  %v5120 = vmul.f32 %v4758, %v222
  %v5121 = vmul.f32 %v4759, %v222
  %v5123 = vsel %vm4890, %v5112, 0
  %v5126 = vsel %vm4890, %v5113, 0
  %v5129 = vsel %vm4890, %v5114, 0
  %v5132 = vsel %vm4890, %v5115, 0
  %v5135 = vsel %vm4890, %v5116, 0
  %v5138 = vsel %vm2086, %v5121, 0
  %5140 = vmatprep.subr.mxu0 0.0
  %5141 = vmatpush1.msra.mxu0 0.0
  %5142 = vmatprep.subr.mxu0 0.0
  %5143 = vmatpush1.msra.mxu0 0.0
  %5144 = vmatprep.subr.mxu0 0.0
  %5145 = vmatpush1.msra.mxu0 0.0
  %5146 = vmatprep.subr.mxu0 0.0
  %5147 = vmatpush1.msra.mxu0 0.0
  %5148 = vmatprep.subr.mxu0 0.0
  %5149 = vmatpush1.msra.mxu0 0.0
  %5150 = vmatprep.subr.mxu0 0.0
  %5151 = vmatpush1.msra.mxu0 0.0
  %5152 = vmatprep.subr.mxu0 0.0
  %5153 = vmatpush1.msra.mxu0 0.0
  %5154 = vmatprep.subr.mxu0 0.0
  %5155 = vmatpush1.msra.mxu0 0.0
  %5156 = vmatprep.subr.mxu0 0.0
  %5157 = vmatpush1.msra.mxu0 0.0
  %5158 = vmatprep.subr.mxu0 0.0
  %5159 = vmatpush1.msra.mxu0 0.0
  %5160 = vmatprep.subr.mxu0 0.0
  %5161 = vmatpush1.msra.mxu0 0.0
  %5162 = vmatprep.subr.mxu0 0.0
  %5163 = vmatpush1.msra.mxu0 %v5138
  %5164 = vmatprep.subr.mxu0 0.0
  %5165 = vmatpush1.msra.mxu0 %v5120
  %5166 = vmatprep.subr.mxu0 0.0
  %5167 = vmatpush1.msra.mxu0 %v5119
  %5168 = vmatprep.subr.mxu0 0.0
  %5169 = vmatpush1.msra.mxu0 %v5118
  %5170 = vmatprep.subr.mxu0 0.0
  %5171 = vmatpush1.msra.mxu0 %v5117
  %5172 = vmatprep.subr.mxu0 0.0
  %5173 = vmatpush2.msra.mxu0 0.0
  %5174 = vmatprep.subr.mxu0 0.0
  %5175 = vmatpush2.msra.mxu0 0.0
  %5176 = vmatprep.subr.mxu0 0.0
  %5177 = vmatpush2.msra.mxu0 0.0
  %5178 = vmatprep.subr.mxu0 0.0
  %5179 = vmatpush2.msra.mxu0 0.0
  %5180 = vmatprep.subr.mxu0 0.0
  %5181 = vmatpush2.msra.mxu0 0.0
  %5182 = vmatprep.subr.mxu0 0.0
  %5183 = vmatpush2.msra.mxu0 0.0
  %5184 = vmatprep.subr.mxu0 0.0
  %5185 = vmatpush2.msra.mxu0 0.0
  %5186 = vmatprep.subr.mxu0 0.0
  %5187 = vmatpush2.msra.mxu0 0.0
  %5188 = vmatprep.subr.mxu0 0.0
  %5189 = vmatpush2.msra.mxu0 0.0
  %5190 = vmatprep.subr.mxu0 0.0
  %5191 = vmatpush2.msra.mxu0 0.0
  %5192 = vmatprep.subr.mxu0 0.0
  %5193 = vmatpush2.msra.mxu0 0.0
  %5194 = vmatprep.subr.mxu0 0.0
  %5195 = vmatpush2.msra.mxu0 0.0
  %5196 = vmatprep.subr.mxu0 0.0
  %5197 = vmatpush2.msra.mxu0 0.0
  %5198 = vmatprep.subr.mxu0 0.0
  %5199 = vmatpush2.msra.mxu0 0.0
  %5200 = vmatprep.subr.mxu0 0.0
  %5201 = vmatpush2.msra.mxu0 0.0
  %5202 = vmatprep.subr.mxu0 0.0
  %5203 = vmatpush2.msra.mxu0 0.0
  %5204 = vmatprep.mubr.f32.mxu0 0.0
  %5205 = vmatmul.mubr.f32.gmra.mxu0 %v5123
  %v5206 = vpop.f32.mrf.mxu0
  %v5207 = vadd.f32 0.0, %v5206
  %v5208 = vpop.f32.mrf.mxu0
  %5209 = vmatprep.mubr.f32.mxu0 0.0
  %5210 = vmatmul.mubr.f32.gmra.mxu0 %v5126
  %v5211 = vpop.f32.mrf.mxu0
  %v5212 = vadd.f32 0.0, %v5211
  %v5213 = vpop.f32.mrf.mxu0
  %5214 = vmatprep.mubr.f32.mxu0 0.0
  %5215 = vmatmul.mubr.f32.gmra.mxu0 %v5129
  %v5216 = vpop.f32.mrf.mxu0
  %v5217 = vadd.f32 0.0, %v5216
  %v5218 = vpop.f32.mrf.mxu0
  %5219 = vmatprep.mubr.f32.mxu0 0.0
  %5220 = vmatmul.mubr.f32.gmra.mxu0 %v5132
  %v5221 = vpop.f32.mrf.mxu0
  %v5222 = vadd.f32 0.0, %v5221
  %v5223 = vpop.f32.mrf.mxu0
  %5224 = vmatprep.mubr.f32.mxu0 0.0
  %5225 = vmatmul.mubr.f32.gmra.mxu0 %v5135
  %v5226 = vpop.f32.mrf.mxu0
  %v5227 = vadd.f32 0.0, %v5226
  %v5228 = vpop.f32.mrf.mxu0
  %5229 = vdwg.mxu0
  %v5231 = vsel %vm4890, %v4942, 0
  %v5234 = vsel %vm4890, %v4943, 0
  %v5237 = vsel %vm4890, %v4944, 0
  %v5240 = vsel %vm4890, %v4945, 0
  %v5243 = vsel %vm4890, %v4946, 0
  %v5246 = vsel %vm2086, %v4951, 0
  %5248 = vmatprep.subr.mxu0 0.0
  %5249 = vmatpush1.msra.mxu0 0.0
  %5250 = vmatprep.subr.mxu0 0.0
  %5251 = vmatpush1.msra.mxu0 0.0
  %5252 = vmatprep.subr.mxu0 0.0
  %5253 = vmatpush1.msra.mxu0 0.0
  %5254 = vmatprep.subr.mxu0 0.0
  %5255 = vmatpush1.msra.mxu0 0.0
  %5256 = vmatprep.subr.mxu0 0.0
  %5257 = vmatpush1.msra.mxu0 0.0
  %5258 = vmatprep.subr.mxu0 0.0
  %5259 = vmatpush1.msra.mxu0 0.0
  %5260 = vmatprep.subr.mxu0 0.0
  %5261 = vmatpush1.msra.mxu0 0.0
  %5262 = vmatprep.subr.mxu0 0.0
  %5263 = vmatpush1.msra.mxu0 0.0
  %5264 = vmatprep.subr.mxu0 0.0
  %5265 = vmatpush1.msra.mxu0 0.0
  %5266 = vmatprep.subr.mxu0 0.0
  %5267 = vmatpush1.msra.mxu0 0.0
  %5268 = vmatprep.subr.mxu0 0.0
  %5269 = vmatpush1.msra.mxu0 0.0
  %5270 = vmatprep.subr.mxu0 0.0
  %5271 = vmatpush1.msra.mxu0 %v5246
  %5272 = vmatprep.subr.mxu0 0.0
  %5273 = vmatpush1.msra.mxu0 %v4950
  %5274 = vmatprep.subr.mxu0 0.0
  %5275 = vmatpush1.msra.mxu0 %v4949
  %5276 = vmatprep.subr.mxu0 0.0
  %5277 = vmatpush1.msra.mxu0 %v4948
  %5278 = vmatprep.subr.mxu0 0.0
  %5279 = vmatpush1.msra.mxu0 %v4947
  %5280 = vmatprep.subr.mxu0 0.0
  %5281 = vmatpush2.msra.mxu0 0.0
  %5282 = vmatprep.subr.mxu0 0.0
  %5283 = vmatpush2.msra.mxu0 0.0
  %5284 = vmatprep.subr.mxu0 0.0
  %5285 = vmatpush2.msra.mxu0 0.0
  %5286 = vmatprep.subr.mxu0 0.0
  %5287 = vmatpush2.msra.mxu0 0.0
  %5288 = vmatprep.subr.mxu0 0.0
  %5289 = vmatpush2.msra.mxu0 0.0
  %5290 = vmatprep.subr.mxu0 0.0
  %5291 = vmatpush2.msra.mxu0 0.0
  %5292 = vmatprep.subr.mxu0 0.0
  %5293 = vmatpush2.msra.mxu0 0.0
  %5294 = vmatprep.subr.mxu0 0.0
  %5295 = vmatpush2.msra.mxu0 0.0
  %5296 = vmatprep.subr.mxu0 0.0
  %5297 = vmatpush2.msra.mxu0 0.0
  %5298 = vmatprep.subr.mxu0 0.0
  %5299 = vmatpush2.msra.mxu0 0.0
  %5300 = vmatprep.subr.mxu0 0.0
  %5301 = vmatpush2.msra.mxu0 0.0
  %5302 = vmatprep.subr.mxu0 0.0
  %5303 = vmatpush2.msra.mxu0 0.0
  %5304 = vmatprep.subr.mxu0 0.0
  %5305 = vmatpush2.msra.mxu0 0.0
  %5306 = vmatprep.subr.mxu0 0.0
  %5307 = vmatpush2.msra.mxu0 0.0
  %5308 = vmatprep.subr.mxu0 0.0
  %5309 = vmatpush2.msra.mxu0 0.0
  %5310 = vmatprep.subr.mxu0 0.0
  %5311 = vmatpush2.msra.mxu0 0.0
  %5312 = vmatprep.mubr.f32.mxu0 0.0
  %5313 = vmatmul.mubr.f32.gmra.mxu0 %v5231
  %v5314 = vpop.f32.mrf.mxu0
  %v5315 = vadd.f32 %v5207, %v5314
  %v5316 = vpop.f32.mrf.mxu0
  %5317 = vmatprep.mubr.f32.mxu0 0.0
  %5318 = vmatmul.mubr.f32.gmra.mxu0 %v5234
  %v5319 = vpop.f32.mrf.mxu0
  %v5320 = vadd.f32 %v5212, %v5319
  %v5321 = vpop.f32.mrf.mxu0
  %5322 = vmatprep.mubr.f32.mxu0 0.0
  %5323 = vmatmul.mubr.f32.gmra.mxu0 %v5237
  %v5324 = vpop.f32.mrf.mxu0
  %v5325 = vadd.f32 %v5217, %v5324
  %v5326 = vpop.f32.mrf.mxu0
  %5327 = vmatprep.mubr.f32.mxu0 0.0
  %5328 = vmatmul.mubr.f32.gmra.mxu0 %v5240
  %v5329 = vpop.f32.mrf.mxu0
  %v5330 = vadd.f32 %v5222, %v5329
  %v5331 = vpop.f32.mrf.mxu0
  %5332 = vmatprep.mubr.f32.mxu0 0.0
  %5333 = vmatmul.mubr.f32.gmra.mxu0 %v5243
  %v5334 = vpop.f32.mrf.mxu0
  %v5335 = vadd.f32 %v5227, %v5334
  %v5336 = vpop.f32.mrf.mxu0
  %5337 = vdwg.mxu0
  %v5338 = vmul.f32 %v3547, %v227
  %v5339 = vmul.f32 %v3548, %v227
  %v5340 = vmul.f32 %v3549, %v227
  %v5341 = vmul.f32 %v3550, %v227
  %v5342 = vmul.f32 %v3551, %v227
  %v5344 = vsel %vm254, %v5338, 0
  %v5347 = vsel %vm254, %v5339, 0
  %v5350 = vsel %vm254, %v5340, 0
  %v5353 = vsel %vm254, %v5341, 0
  %v5356 = vsel %vm254, %v5342, 0
  %5358 = vmatprep.subr.mxu0 0.0
  %5359 = vmatpush1.xpose.msra.mxu0 0.0
  %5360 = vmatprep.subr.mxu0 0.0
  %5361 = vmatpush1.xpose.msra.mxu0 0.0
  %5362 = vmatprep.subr.mxu0 0.0
  %5363 = vmatpush1.xpose.msra.mxu0 0.0
  %5364 = vmatprep.subr.mxu0 0.0
  %5365 = vmatpush1.xpose.msra.mxu0 0.0
  %5366 = vmatprep.subr.mxu0 0.0
  %5367 = vmatpush1.xpose.msra.mxu0 0.0
  %5368 = vmatprep.subr.mxu0 0.0
  %5369 = vmatpush1.xpose.msra.mxu0 0.0
  %5370 = vmatprep.subr.mxu0 0.0
  %5371 = vmatpush1.xpose.msra.mxu0 0.0
  %5372 = vmatprep.subr.mxu0 0.0
  %5373 = vmatpush1.xpose.msra.mxu0 0.0
  %5374 = vmatprep.subr.mxu0 0.0
  %5375 = vmatpush1.xpose.msra.mxu0 0.0
  %5376 = vmatprep.subr.mxu0 0.0
  %5377 = vmatpush1.xpose.msra.mxu0 0.0
  %5378 = vmatprep.subr.mxu0 0.0
  %5379 = vmatpush1.xpose.msra.mxu0 0.0
  %5380 = vmatprep.subr.mxu0 0.0
  %5381 = vmatpush1.xpose.msra.mxu0 %v5356
  %5382 = vmatprep.subr.mxu0 0.0
  %5383 = vmatpush1.xpose.msra.mxu0 %v5353
  %5384 = vmatprep.subr.mxu0 0.0
  %5385 = vmatpush1.xpose.msra.mxu0 %v5350
  %5386 = vmatprep.subr.mxu0 0.0
  %5387 = vmatpush1.xpose.msra.mxu0 %v5347
  %5388 = vmatprep.subr.mxu0 0.0
  %5389 = vmatpush1.xpose.msra.mxu0 %v5344
  %5390 = vmatprep.subr.mxu0 0.0
  %5391 = vmatpush2.xpose.msra.mxu0 0.0
  %5392 = vmatprep.subr.mxu0 0.0
  %5393 = vmatpush2.xpose.msra.mxu0 0.0
  %5394 = vmatprep.subr.mxu0 0.0
  %5395 = vmatpush2.xpose.msra.mxu0 0.0
  %5396 = vmatprep.subr.mxu0 0.0
  %5397 = vmatpush2.xpose.msra.mxu0 0.0
  %5398 = vmatprep.subr.mxu0 0.0
  %5399 = vmatpush2.xpose.msra.mxu0 0.0
  %5400 = vmatprep.subr.mxu0 0.0
  %5401 = vmatpush2.xpose.msra.mxu0 0.0
  %5402 = vmatprep.subr.mxu0 0.0
  %5403 = vmatpush2.xpose.msra.mxu0 0.0
  %5404 = vmatprep.subr.mxu0 0.0
  %5405 = vmatpush2.xpose.msra.mxu0 0.0
  %5406 = vmatprep.subr.mxu0 0.0
  %5407 = vmatpush2.xpose.msra.mxu0 0.0
  %5408 = vmatprep.subr.mxu0 0.0
  %5409 = vmatpush2.xpose.msra.mxu0 0.0
  %5410 = vmatprep.subr.mxu0 0.0
  %5411 = vmatpush2.xpose.msra.mxu0 0.0
  %5412 = vmatprep.subr.mxu0 0.0
  %5413 = vmatpush2.xpose.msra.mxu0 0.0
  %5414 = vmatprep.subr.mxu0 0.0
  %5415 = vmatpush2.xpose.msra.mxu0 0.0
  %5416 = vmatprep.subr.mxu0 0.0
  %5417 = vmatpush2.xpose.msra.mxu0 0.0
  %5418 = vmatprep.subr.mxu0 0.0
  %5419 = vmatpush2.xpose.msra.mxu0 0.0
  %5420 = vmatprep.subr.mxu0 0.0
  %5421 = vmatpush2.xpose.msra.mxu0 0.0
  %5422 = vmatprep.mubr.f32.mxu0 0.0
  %5423 = vmatmul.mubr.f32.gmra.mxu0 %v4771
  %v5424 = vpop.f32.mrf.mxu0
  %v5425 = vadd.f32 0.0, %v5424
  %v5426 = vpop.f32.mrf.mxu0
  %5427 = vmatprep.mubr.f32.mxu0 0.0
  %5428 = vmatmul.mubr.f32.gmra.mxu0 %v4774
  %v5429 = vpop.f32.mrf.mxu0
  %v5430 = vadd.f32 0.0, %v5429
  %v5431 = vpop.f32.mrf.mxu0
  %5432 = vmatprep.mubr.f32.mxu0 0.0
  %5433 = vmatmul.mubr.f32.gmra.mxu0 %v4777
  %v5434 = vpop.f32.mrf.mxu0
  %v5435 = vadd.f32 0.0, %v5434
  %v5436 = vpop.f32.mrf.mxu0
  %5437 = vmatprep.mubr.f32.mxu0 0.0
  %5438 = vmatmul.mubr.f32.gmra.mxu0 %v4780
  %v5439 = vpop.f32.mrf.mxu0
  %v5440 = vadd.f32 0.0, %v5439
  %v5441 = vpop.f32.mrf.mxu0
  %5442 = vmatprep.mubr.f32.mxu0 0.0
  %5443 = vmatmul.mubr.f32.gmra.mxu0 %v4783
  %v5444 = vpop.f32.mrf.mxu0
  %v5445 = vadd.f32 0.0, %v5444
  %v5446 = vpop.f32.mrf.mxu0
  %5447 = vdwg.mxu0
  %v5448 = vsel %vm4890, %v5425, -inf
  %5449 = vmax.xlane.f32.xlu0 %v5448
  %v5450 = vpop.xlane.xlu0 %5449
  %v5451 = vsel %vm4890, %v5430, -inf
  %5452 = vmax.xlane.f32.xlu0 %v5451
  %v5453 = vpop.xlane.xlu0 %5452
  %v5454 = vsel %vm4890, %v5435, -inf
  %5455 = vmax.xlane.f32.xlu0 %v5454
  %v5456 = vpop.xlane.xlu0 %5455
  %v5457 = vsel %vm4890, %v5440, -inf
  %5458 = vmax.xlane.f32.xlu0 %v5457
  %v5459 = vpop.xlane.xlu0 %5458
  %v5460 = vsel %vm4903, %v5445, -inf
  %5461 = vmax.xlane.f32.xlu0 %v5460
  %v5462 = vpop.xlane.xlu0 %5461
  %v5463 = vsub.f32 %v5425, %v5450
  %v5464 = vsub.f32 %v5430, %v5453
  %v5465 = vsub.f32 %v5435, %v5456
  %v5466 = vsub.f32 %v5440, %v5459
  %v5467 = vsub.f32 %v5445, %v5462
  %v5468 = vmul.f32 %v5463, 1.442695
  %v5469 = vpow.pop %v5468
  %v5470 = vmul.f32 %v5464, 1.442695
  %v5471 = vpow.pop %v5470
  %v5472 = vmul.f32 %v5465, 1.442695
  %v5473 = vpow.pop %v5472
  %v5474 = vmul.f32 %v5466, 1.442695
  %v5475 = vpow.pop %v5474
  %v5476 = vmul.f32 %v5467, 1.442695
  %v5477 = vpow.pop %v5476
  %v5478 = vsel %vm4890, %v5469, 0.0
  %5479 = vadd.xlane.f32.xlu0 %v5478
  %v5480 = vpop.xlane.xlu0 %5479
  %v5481 = vsel %vm4890, %v5471, 0.0
  %5482 = vadd.xlane.f32.xlu0 %v5481
  %v5483 = vpop.xlane.xlu0 %5482
  %v5484 = vsel %vm4890, %v5473, 0.0
  %5485 = vadd.xlane.f32.xlu0 %v5484
  %v5486 = vpop.xlane.xlu0 %5485
  %v5487 = vsel %vm4890, %v5475, 0.0
  %5488 = vadd.xlane.f32.xlu0 %v5487
  %v5489 = vpop.xlane.xlu0 %5488
  %v5490 = vsel %vm4903, %v5477, 0.0
  %5491 = vadd.xlane.f32.xlu0 %v5490
  %v5492 = vpop.xlane.xlu0 %5491
  %v5493 = vrcp.pop %v5480
  %v5494 = vrcp.pop %v5483
  %v5495 = vrcp.pop %v5486
  %v5496 = vrcp.pop %v5489
  %v5497 = vrcp.pop %v5492
  %v5498 = vmul.f32 %v5469, %v5493
  %v5499 = vmul.f32 %v5471, %v5494
  %v5500 = vmul.f32 %v5473, %v5495
  %v5501 = vmul.f32 %v5475, %v5496
  %v5502 = vmul.f32 %v5477, %v5497
  %v5503 = vmul.f32 %v4755, %v227
  %v5504 = vmul.f32 %v4756, %v227
  %v5505 = vmul.f32 %v4757, %v227
  %v5506 = vmul.f32 %v4758, %v227
  %v5507 = vmul.f32 %v4759, %v227
  %v5509 = vsel %vm4890, %v5498, 0
  %v5512 = vsel %vm4890, %v5499, 0
  %v5515 = vsel %vm4890, %v5500, 0
  %v5518 = vsel %vm4890, %v5501, 0
  %v5521 = vsel %vm4890, %v5502, 0
  %v5524 = vsel %vm2086, %v5507, 0
  %5526 = vmatprep.subr.mxu0 0.0
  %5527 = vmatpush1.msra.mxu0 0.0
  %5528 = vmatprep.subr.mxu0 0.0
  %5529 = vmatpush1.msra.mxu0 0.0
  %5530 = vmatprep.subr.mxu0 0.0
  %5531 = vmatpush1.msra.mxu0 0.0
  %5532 = vmatprep.subr.mxu0 0.0
  %5533 = vmatpush1.msra.mxu0 0.0
  %5534 = vmatprep.subr.mxu0 0.0
  %5535 = vmatpush1.msra.mxu0 0.0
  %5536 = vmatprep.subr.mxu0 0.0
  %5537 = vmatpush1.msra.mxu0 0.0
  %5538 = vmatprep.subr.mxu0 0.0
  %5539 = vmatpush1.msra.mxu0 0.0
  %5540 = vmatprep.subr.mxu0 0.0
  %5541 = vmatpush1.msra.mxu0 0.0
  %5542 = vmatprep.subr.mxu0 0.0
  %5543 = vmatpush1.msra.mxu0 0.0
  %5544 = vmatprep.subr.mxu0 0.0
  %5545 = vmatpush1.msra.mxu0 0.0
  %5546 = vmatprep.subr.mxu0 0.0
  %5547 = vmatpush1.msra.mxu0 0.0
  %5548 = vmatprep.subr.mxu0 0.0
  %5549 = vmatpush1.msra.mxu0 %v5524
  %5550 = vmatprep.subr.mxu0 0.0
  %5551 = vmatpush1.msra.mxu0 %v5506
  %5552 = vmatprep.subr.mxu0 0.0
  %5553 = vmatpush1.msra.mxu0 %v5505
  %5554 = vmatprep.subr.mxu0 0.0
  %5555 = vmatpush1.msra.mxu0 %v5504
  %5556 = vmatprep.subr.mxu0 0.0
  %5557 = vmatpush1.msra.mxu0 %v5503
  %5558 = vmatprep.subr.mxu0 0.0
  %5559 = vmatpush2.msra.mxu0 0.0
  %5560 = vmatprep.subr.mxu0 0.0
  %5561 = vmatpush2.msra.mxu0 0.0
  %5562 = vmatprep.subr.mxu0 0.0
  %5563 = vmatpush2.msra.mxu0 0.0
  %5564 = vmatprep.subr.mxu0 0.0
  %5565 = vmatpush2.msra.mxu0 0.0
  %5566 = vmatprep.subr.mxu0 0.0
  %5567 = vmatpush2.msra.mxu0 0.0
  %5568 = vmatprep.subr.mxu0 0.0
  %5569 = vmatpush2.msra.mxu0 0.0
  %5570 = vmatprep.subr.mxu0 0.0
  %5571 = vmatpush2.msra.mxu0 0.0
  %5572 = vmatprep.subr.mxu0 0.0
  %5573 = vmatpush2.msra.mxu0 0.0
  %5574 = vmatprep.subr.mxu0 0.0
  %5575 = vmatpush2.msra.mxu0 0.0
  %5576 = vmatprep.subr.mxu0 0.0
  %5577 = vmatpush2.msra.mxu0 0.0
  %5578 = vmatprep.subr.mxu0 0.0
  %5579 = vmatpush2.msra.mxu0 0.0
  %5580 = vmatprep.subr.mxu0 0.0
  %5581 = vmatpush2.msra.mxu0 0.0
  %5582 = vmatprep.subr.mxu0 0.0
  %5583 = vmatpush2.msra.mxu0 0.0
  %5584 = vmatprep.subr.mxu0 0.0
  %5585 = vmatpush2.msra.mxu0 0.0
  %5586 = vmatprep.subr.mxu0 0.0
  %5587 = vmatpush2.msra.mxu0 0.0
  %5588 = vmatprep.subr.mxu0 0.0
  %5589 = vmatpush2.msra.mxu0 0.0
  %5590 = vmatprep.mubr.f32.mxu0 0.0
  %5591 = vmatmul.mubr.f32.gmra.mxu0 %v5509
  %v5592 = vpop.f32.mrf.mxu0
  %v5593 = vadd.f32 0.0, %v5592
  %v5594 = vpop.f32.mrf.mxu0
  %5595 = vmatprep.mubr.f32.mxu0 0.0
  %5596 = vmatmul.mubr.f32.gmra.mxu0 %v5512
  %v5597 = vpop.f32.mrf.mxu0
  %v5598 = vadd.f32 0.0, %v5597
  %v5599 = vpop.f32.mrf.mxu0
  %5600 = vmatprep.mubr.f32.mxu0 0.0
  %5601 = vmatmul.mubr.f32.gmra.mxu0 %v5515
  %v5602 = vpop.f32.mrf.mxu0
  %v5603 = vadd.f32 0.0, %v5602
  %v5604 = vpop.f32.mrf.mxu0
  %5605 = vmatprep.mubr.f32.mxu0 0.0
  %5606 = vmatmul.mubr.f32.gmra.mxu0 %v5518
  %v5607 = vpop.f32.mrf.mxu0
  %v5608 = vadd.f32 0.0, %v5607
  %v5609 = vpop.f32.mrf.mxu0
  %5610 = vmatprep.mubr.f32.mxu0 0.0
  %5611 = vmatmul.mubr.f32.gmra.mxu0 %v5521
  %v5612 = vpop.f32.mrf.mxu0
  %v5613 = vadd.f32 0.0, %v5612
  %v5614 = vpop.f32.mrf.mxu0
  %5615 = vdwg.mxu0
  %v5616 = vadd.f32 %v5315, %v5593
  %v5617 = vadd.f32 %v5320, %v5598
  %v5618 = vadd.f32 %v5325, %v5603
  %v5619 = vadd.f32 %v5330, %v5608
  %v5620 = vadd.f32 %v5335, %v5613
  %v5621 = vmul.f32 %v3547, %v232
  %v5622 = vmul.f32 %v3548, %v232
  %v5623 = vmul.f32 %v3549, %v232
  %v5624 = vmul.f32 %v3550, %v232
  %v5625 = vmul.f32 %v3551, %v232
  %v5627 = vsel %vm254, %v5621, 0
  %v5630 = vsel %vm254, %v5622, 0
  %v5633 = vsel %vm254, %v5623, 0
  %v5636 = vsel %vm254, %v5624, 0
  %v5639 = vsel %vm254, %v5625, 0
  %5641 = vmatprep.subr.mxu0 0.0
  %5642 = vmatpush1.xpose.msra.mxu0 0.0
  %5643 = vmatprep.subr.mxu0 0.0
  %5644 = vmatpush1.xpose.msra.mxu0 0.0
  %5645 = vmatprep.subr.mxu0 0.0
  %5646 = vmatpush1.xpose.msra.mxu0 0.0
  %5647 = vmatprep.subr.mxu0 0.0
  %5648 = vmatpush1.xpose.msra.mxu0 0.0
  %5649 = vmatprep.subr.mxu0 0.0
  %5650 = vmatpush1.xpose.msra.mxu0 0.0
  %5651 = vmatprep.subr.mxu0 0.0
  %5652 = vmatpush1.xpose.msra.mxu0 0.0
  %5653 = vmatprep.subr.mxu0 0.0
  %5654 = vmatpush1.xpose.msra.mxu0 0.0
  %5655 = vmatprep.subr.mxu0 0.0
  %5656 = vmatpush1.xpose.msra.mxu0 0.0
  %5657 = vmatprep.subr.mxu0 0.0
  %5658 = vmatpush1.xpose.msra.mxu0 0.0
  %5659 = vmatprep.subr.mxu0 0.0
  %5660 = vmatpush1.xpose.msra.mxu0 0.0
  %5661 = vmatprep.subr.mxu0 0.0
  %5662 = vmatpush1.xpose.msra.mxu0 0.0
  %5663 = vmatprep.subr.mxu0 0.0
  %5664 = vmatpush1.xpose.msra.mxu0 %v5639
  %5665 = vmatprep.subr.mxu0 0.0
  %5666 = vmatpush1.xpose.msra.mxu0 %v5636
  %5667 = vmatprep.subr.mxu0 0.0
  %5668 = vmatpush1.xpose.msra.mxu0 %v5633
  %5669 = vmatprep.subr.mxu0 0.0
  %5670 = vmatpush1.xpose.msra.mxu0 %v5630
  %5671 = vmatprep.subr.mxu0 0.0
  %5672 = vmatpush1.xpose.msra.mxu0 %v5627
  %5673 = vmatprep.subr.mxu0 0.0
  %5674 = vmatpush2.xpose.msra.mxu0 0.0
  %5675 = vmatprep.subr.mxu0 0.0
  %5676 = vmatpush2.xpose.msra.mxu0 0.0
  %5677 = vmatprep.subr.mxu0 0.0
  %5678 = vmatpush2.xpose.msra.mxu0 0.0
  %5679 = vmatprep.subr.mxu0 0.0
  %5680 = vmatpush2.xpose.msra.mxu0 0.0
  %5681 = vmatprep.subr.mxu0 0.0
  %5682 = vmatpush2.xpose.msra.mxu0 0.0
  %5683 = vmatprep.subr.mxu0 0.0
  %5684 = vmatpush2.xpose.msra.mxu0 0.0
  %5685 = vmatprep.subr.mxu0 0.0
  %5686 = vmatpush2.xpose.msra.mxu0 0.0
  %5687 = vmatprep.subr.mxu0 0.0
  %5688 = vmatpush2.xpose.msra.mxu0 0.0
  %5689 = vmatprep.subr.mxu0 0.0
  %5690 = vmatpush2.xpose.msra.mxu0 0.0
  %5691 = vmatprep.subr.mxu0 0.0
  %5692 = vmatpush2.xpose.msra.mxu0 0.0
  %5693 = vmatprep.subr.mxu0 0.0
  %5694 = vmatpush2.xpose.msra.mxu0 0.0
  %5695 = vmatprep.subr.mxu0 0.0
  %5696 = vmatpush2.xpose.msra.mxu0 0.0
  %5697 = vmatprep.subr.mxu0 0.0
  %5698 = vmatpush2.xpose.msra.mxu0 0.0
  %5699 = vmatprep.subr.mxu0 0.0
  %5700 = vmatpush2.xpose.msra.mxu0 0.0
  %5701 = vmatprep.subr.mxu0 0.0
  %5702 = vmatpush2.xpose.msra.mxu0 0.0
  %5703 = vmatprep.subr.mxu0 0.0
  %5704 = vmatpush2.xpose.msra.mxu0 0.0
  %5705 = vmatprep.mubr.f32.mxu0 0.0
  %5706 = vmatmul.mubr.f32.gmra.mxu0 %v4771
  %v5707 = vpop.f32.mrf.mxu0
  %v5708 = vadd.f32 0.0, %v5707
  %v5709 = vpop.f32.mrf.mxu0
  %5710 = vmatprep.mubr.f32.mxu0 0.0
  %5711 = vmatmul.mubr.f32.gmra.mxu0 %v4774
  %v5712 = vpop.f32.mrf.mxu0
  %v5713 = vadd.f32 0.0, %v5712
  %v5714 = vpop.f32.mrf.mxu0
  %5715 = vmatprep.mubr.f32.mxu0 0.0
  %5716 = vmatmul.mubr.f32.gmra.mxu0 %v4777
  %v5717 = vpop.f32.mrf.mxu0
  %v5718 = vadd.f32 0.0, %v5717
  %v5719 = vpop.f32.mrf.mxu0
  %5720 = vmatprep.mubr.f32.mxu0 0.0
  %5721 = vmatmul.mubr.f32.gmra.mxu0 %v4780
  %v5722 = vpop.f32.mrf.mxu0
  %v5723 = vadd.f32 0.0, %v5722
  %v5724 = vpop.f32.mrf.mxu0
  %5725 = vmatprep.mubr.f32.mxu0 0.0
  %5726 = vmatmul.mubr.f32.gmra.mxu0 %v4783
  %v5727 = vpop.f32.mrf.mxu0
  %v5728 = vadd.f32 0.0, %v5727
  %v5729 = vpop.f32.mrf.mxu0
  %5730 = vdwg.mxu0
  %v5731 = vsel %vm4890, %v5708, -inf
  %5732 = vmax.xlane.f32.xlu0 %v5731
  %v5733 = vpop.xlane.xlu0 %5732
  %v5734 = vsel %vm4890, %v5713, -inf
  %5735 = vmax.xlane.f32.xlu0 %v5734
  %v5736 = vpop.xlane.xlu0 %5735
  %v5737 = vsel %vm4890, %v5718, -inf
  %5738 = vmax.xlane.f32.xlu0 %v5737
  %v5739 = vpop.xlane.xlu0 %5738
  %v5740 = vsel %vm4890, %v5723, -inf
  %5741 = vmax.xlane.f32.xlu0 %v5740
  %v5742 = vpop.xlane.xlu0 %5741
  %v5743 = vsel %vm4903, %v5728, -inf
  %5744 = vmax.xlane.f32.xlu0 %v5743
  %v5745 = vpop.xlane.xlu0 %5744
  %v5746 = vsub.f32 %v5708, %v5733
  %v5747 = vsub.f32 %v5713, %v5736
  %v5748 = vsub.f32 %v5718, %v5739
  %v5749 = vsub.f32 %v5723, %v5742
  %v5750 = vsub.f32 %v5728, %v5745
  %v5751 = vmul.f32 %v5746, 1.442695
  %v5752 = vpow.pop %v5751
  %v5753 = vmul.f32 %v5747, 1.442695
  %v5754 = vpow.pop %v5753
  %v5755 = vmul.f32 %v5748, 1.442695
  %v5756 = vpow.pop %v5755
  %v5757 = vmul.f32 %v5749, 1.442695
  %v5758 = vpow.pop %v5757
  %v5759 = vmul.f32 %v5750, 1.442695
  %v5760 = vpow.pop %v5759
  %v5761 = vsel %vm4890, %v5752, 0.0
  %5762 = vadd.xlane.f32.xlu0 %v5761
  %v5763 = vpop.xlane.xlu0 %5762
  %v5764 = vsel %vm4890, %v5754, 0.0
  %5765 = vadd.xlane.f32.xlu0 %v5764
  %v5766 = vpop.xlane.xlu0 %5765
  %v5767 = vsel %vm4890, %v5756, 0.0
  %5768 = vadd.xlane.f32.xlu0 %v5767
  %v5769 = vpop.xlane.xlu0 %5768
  %v5770 = vsel %vm4890, %v5758, 0.0
  %5771 = vadd.xlane.f32.xlu0 %v5770
  %v5772 = vpop.xlane.xlu0 %5771
  %v5773 = vsel %vm4903, %v5760, 0.0
  %5774 = vadd.xlane.f32.xlu0 %v5773
  %v5775 = vpop.xlane.xlu0 %5774
  %v5776 = vrcp.pop %v5763
  %v5777 = vrcp.pop %v5766
  %v5778 = vrcp.pop %v5769
  %v5779 = vrcp.pop %v5772
  %v5780 = vrcp.pop %v5775
  %v5781 = vmul.f32 %v5752, %v5776
  %v5782 = vmul.f32 %v5754, %v5777
  %v5783 = vmul.f32 %v5756, %v5778
  %v5784 = vmul.f32 %v5758, %v5779
  %v5785 = vmul.f32 %v5760, %v5780
  %v5786 = vmul.f32 %v4755, %v232
  %v5787 = vmul.f32 %v4756, %v232
  %v5788 = vmul.f32 %v4757, %v232
  %v5789 = vmul.f32 %v4758, %v232
  %v5790 = vmul.f32 %v4759, %v232
  %v5792 = vsel %vm4890, %v5781, 0
  %v5795 = vsel %vm4890, %v5782, 0
  %v5798 = vsel %vm4890, %v5783, 0
  %v5801 = vsel %vm4890, %v5784, 0
  %v5804 = vsel %vm4890, %v5785, 0
  %v5807 = vsel %vm2086, %v5790, 0
  %5809 = vmatprep.subr.mxu0 0.0
  %5810 = vmatpush1.msra.mxu0 0.0
  %5811 = vmatprep.subr.mxu0 0.0
  %5812 = vmatpush1.msra.mxu0 0.0
  %5813 = vmatprep.subr.mxu0 0.0
  %5814 = vmatpush1.msra.mxu0 0.0
  %5815 = vmatprep.subr.mxu0 0.0
  %5816 = vmatpush1.msra.mxu0 0.0
  %5817 = vmatprep.subr.mxu0 0.0
  %5818 = vmatpush1.msra.mxu0 0.0
  %5819 = vmatprep.subr.mxu0 0.0
  %5820 = vmatpush1.msra.mxu0 0.0
  %5821 = vmatprep.subr.mxu0 0.0
  %5822 = vmatpush1.msra.mxu0 0.0
  %5823 = vmatprep.subr.mxu0 0.0
  %5824 = vmatpush1.msra.mxu0 0.0
  %5825 = vmatprep.subr.mxu0 0.0
  %5826 = vmatpush1.msra.mxu0 0.0
  %5827 = vmatprep.subr.mxu0 0.0
  %5828 = vmatpush1.msra.mxu0 0.0
  %5829 = vmatprep.subr.mxu0 0.0
  %5830 = vmatpush1.msra.mxu0 0.0
  %5831 = vmatprep.subr.mxu0 0.0
  %5832 = vmatpush1.msra.mxu0 %v5807
  %5833 = vmatprep.subr.mxu0 0.0
  %5834 = vmatpush1.msra.mxu0 %v5789
  %5835 = vmatprep.subr.mxu0 0.0
  %5836 = vmatpush1.msra.mxu0 %v5788
  %5837 = vmatprep.subr.mxu0 0.0
  %5838 = vmatpush1.msra.mxu0 %v5787
  %5839 = vmatprep.subr.mxu0 0.0
  %5840 = vmatpush1.msra.mxu0 %v5786
  %5841 = vmatprep.subr.mxu0 0.0
  %5842 = vmatpush2.msra.mxu0 0.0
  %5843 = vmatprep.subr.mxu0 0.0
  %5844 = vmatpush2.msra.mxu0 0.0
  %5845 = vmatprep.subr.mxu0 0.0
  %5846 = vmatpush2.msra.mxu0 0.0
  %5847 = vmatprep.subr.mxu0 0.0
  %5848 = vmatpush2.msra.mxu0 0.0
  %5849 = vmatprep.subr.mxu0 0.0
  %5850 = vmatpush2.msra.mxu0 0.0
  %5851 = vmatprep.subr.mxu0 0.0
  %5852 = vmatpush2.msra.mxu0 0.0
  %5853 = vmatprep.subr.mxu0 0.0
  %5854 = vmatpush2.msra.mxu0 0.0
  %5855 = vmatprep.subr.mxu0 0.0
  %5856 = vmatpush2.msra.mxu0 0.0
  %5857 = vmatprep.subr.mxu0 0.0
  %5858 = vmatpush2.msra.mxu0 0.0
  %5859 = vmatprep.subr.mxu0 0.0
  %5860 = vmatpush2.msra.mxu0 0.0
  %5861 = vmatprep.subr.mxu0 0.0
  %5862 = vmatpush2.msra.mxu0 0.0
  %5863 = vmatprep.subr.mxu0 0.0
  %5864 = vmatpush2.msra.mxu0 0.0
  %5865 = vmatprep.subr.mxu0 0.0
  %5866 = vmatpush2.msra.mxu0 0.0
  %5867 = vmatprep.subr.mxu0 0.0
  %5868 = vmatpush2.msra.mxu0 0.0
  %5869 = vmatprep.subr.mxu0 0.0
  %5870 = vmatpush2.msra.mxu0 0.0
  %5871 = vmatprep.subr.mxu0 0.0
  %5872 = vmatpush2.msra.mxu0 0.0
  %5873 = vmatprep.mubr.f32.mxu0 0.0
  %5874 = vmatmul.mubr.f32.gmra.mxu0 %v5792
  %v5875 = vpop.f32.mrf.mxu0
  %v5876 = vadd.f32 0.0, %v5875
  %v5877 = vpop.f32.mrf.mxu0
  %5878 = vmatprep.mubr.f32.mxu0 0.0
  %5879 = vmatmul.mubr.f32.gmra.mxu0 %v5795
  %v5880 = vpop.f32.mrf.mxu0
  %v5881 = vadd.f32 0.0, %v5880
  %v5882 = vpop.f32.mrf.mxu0
  %5883 = vmatprep.mubr.f32.mxu0 0.0
  %5884 = vmatmul.mubr.f32.gmra.mxu0 %v5798
  %v5885 = vpop.f32.mrf.mxu0
  %v5886 = vadd.f32 0.0, %v5885
  %v5887 = vpop.f32.mrf.mxu0
  %5888 = vmatprep.mubr.f32.mxu0 0.0
  %5889 = vmatmul.mubr.f32.gmra.mxu0 %v5801
  %v5890 = vpop.f32.mrf.mxu0
  %v5891 = vadd.f32 0.0, %v5890
  %v5892 = vpop.f32.mrf.mxu0
  %5893 = vmatprep.mubr.f32.mxu0 0.0
  %5894 = vmatmul.mubr.f32.gmra.mxu0 %v5804
  %v5895 = vpop.f32.mrf.mxu0
  %v5896 = vadd.f32 0.0, %v5895
  %v5897 = vpop.f32.mrf.mxu0
  %5898 = vdwg.mxu0
  %v5899 = vadd.f32 %v5616, %v5876
  %v5900 = vadd.f32 %v5617, %v5881
  %v5901 = vadd.f32 %v5618, %v5886
  %v5902 = vadd.f32 %v5619, %v5891
  %v5903 = vadd.f32 %v5620, %v5896
  %v5904 = vmul.f32 %v249, %v2339
  %v5905 = vmul.f32 %v250, %v2340
  %v5906 = vmul.f32 %v251, %v2341
  %v5907 = vmul.f32 %v252, %v2342
  %v5908 = vmul.f32 %v253, %v2343
  %v5909 = vadd.f32 %v5899, %v5904
  %v5910 = vadd.f32 %v5900, %v5905
  %v5911 = vadd.f32 %v5901, %v5906
  %v5912 = vadd.f32 %v5902, %v5907
  %v5913 = vadd.f32 %v5903, %v5908
  %vm5918 = vcmask 1045504
  %v5919 = vrot.slane %v527, 2
  %v5920 = vrot.slane %v532, 2
  %v5921 = vsel %vm5918, %v5919, %v5920
  %v5922 = vrot.slane %v537, 2
  %v5923 = vsel %vm5918, %v5920, %v5922
  %v5924 = vrot.slane %v542, 2
  %v5925 = vsel %vm5918, %v5922, %v5924
  %v5926 = vrot.slane %v547, 2
  %v5927 = vsel %vm5918, %v5924, %v5926
  %5932 = vmatprep.subr.mxu0 0.0
  %5933 = vmatpush1.msra.mxu0 0.0
  %5934 = vmatprep.subr.mxu0 0.0
  %5935 = vmatpush1.msra.mxu0 0.0
  %5936 = vmatprep.subr.mxu0 0.0
  %5937 = vmatpush1.msra.mxu0 0.0
  %5938 = vmatprep.subr.mxu0 0.0
  %5939 = vmatpush1.msra.mxu0 0.0
  %5940 = vmatprep.subr.mxu0 0.0
  %5941 = vmatpush1.msra.mxu0 0.0
  %5942 = vmatprep.subr.mxu0 0.0
  %5943 = vmatpush1.msra.mxu0 0.0
  %5944 = vmatprep.subr.mxu0 0.0
  %5945 = vmatpush1.msra.mxu0 0.0
  %5946 = vmatprep.subr.mxu0 0.0
  %5947 = vmatpush1.msra.mxu0 0.0
  %5948 = vmatprep.subr.mxu0 0.0
  %5949 = vmatpush1.msra.mxu0 0.0
  %5950 = vmatprep.subr.mxu0 0.0
  %5951 = vmatpush1.msra.mxu0 0.0
  %5952 = vmatprep.subr.mxu0 0.0
  %5953 = vmatpush1.msra.mxu0 0.0
  %5954 = vmatprep.subr.mxu0 0.0
  %5955 = vmatpush1.msra.mxu0 0.0
  %5956 = vmatprep.subr.mxu0 0.0
  %5957 = vmatpush1.msra.mxu0 %v5927
  %5958 = vmatprep.subr.mxu0 0.0
  %5959 = vmatpush1.msra.mxu0 %v5925
  %5960 = vmatprep.subr.mxu0 0.0
  %5961 = vmatpush1.msra.mxu0 %v5923
  %5962 = vmatprep.subr.mxu0 0.0
  %5963 = vmatpush1.msra.mxu0 %v5921
  %5964 = vmatprep.subr.mxu0 0.0
  %5965 = vmatpush2.msra.mxu0 0.0
  %5966 = vmatprep.subr.mxu0 0.0
  %5967 = vmatpush2.msra.mxu0 0.0
  %5968 = vmatprep.subr.mxu0 0.0
  %5969 = vmatpush2.msra.mxu0 0.0
  %5970 = vmatprep.subr.mxu0 0.0
  %5971 = vmatpush2.msra.mxu0 0.0
  %5972 = vmatprep.subr.mxu0 0.0
  %5973 = vmatpush2.msra.mxu0 0.0
  %5974 = vmatprep.subr.mxu0 0.0
  %5975 = vmatpush2.msra.mxu0 0.0
  %5976 = vmatprep.subr.mxu0 0.0
  %5977 = vmatpush2.msra.mxu0 0.0
  %5978 = vmatprep.subr.mxu0 0.0
  %5979 = vmatpush2.msra.mxu0 0.0
  %5980 = vmatprep.subr.mxu0 0.0
  %5981 = vmatpush2.msra.mxu0 0.0
  %5982 = vmatprep.subr.mxu0 0.0
  %5983 = vmatpush2.msra.mxu0 0.0
  %5984 = vmatprep.subr.mxu0 0.0
  %5985 = vmatpush2.msra.mxu0 0.0
  %5986 = vmatprep.subr.mxu0 0.0
  %5987 = vmatpush2.msra.mxu0 0.0
  %5988 = vmatprep.subr.mxu0 0.0
  %5989 = vmatpush2.msra.mxu0 0.0
  %5990 = vmatprep.subr.mxu0 0.0
  %5991 = vmatpush2.msra.mxu0 0.0
  %5992 = vmatprep.subr.mxu0 0.0
  %5993 = vmatpush2.msra.mxu0 0.0
  %5994 = vmatprep.subr.mxu0 0.0
  %5995 = vmatpush2.msra.mxu0 0.0
  %5996 = vmatprep.mubr.f32.mxu0 0.0
  %5997 = vmatmul.mubr.f32.gmra.mxu0 %v830
  %v5998 = vpop.f32.mrf.mxu0
  %v5999 = vadd.f32 0.0, %v5998
  %v6000 = vpop.f32.mrf.mxu0
  %6001 = vmatprep.mubr.f32.mxu0 0.0
  %6002 = vmatmul.mubr.f32.gmra.mxu0 %v833
  %v6003 = vpop.f32.mrf.mxu0
  %v6004 = vadd.f32 0.0, %v6003
  %v6005 = vpop.f32.mrf.mxu0
  %6006 = vmatprep.mubr.f32.mxu0 0.0
  %6007 = vmatmul.mubr.f32.gmra.mxu0 %v836
  %v6008 = vpop.f32.mrf.mxu0
  %v6009 = vadd.f32 0.0, %v6008
  %v6010 = vpop.f32.mrf.mxu0
  %6011 = vmatprep.mubr.f32.mxu0 0.0
  %6012 = vmatmul.mubr.f32.gmra.mxu0 %v839
  %v6013 = vpop.f32.mrf.mxu0
  %v6014 = vadd.f32 0.0, %v6013
  %v6015 = vpop.f32.mrf.mxu0
  %6016 = vmatprep.mubr.f32.mxu0 0.0
  %6017 = vmatmul.mubr.f32.gmra.mxu0 %v842
  %v6018 = vpop.f32.mrf.mxu0
  %v6019 = vadd.f32 0.0, %v6018
  %v6020 = vpop.f32.mrf.mxu0
  %6021 = vmatprep.mubr.f32.mxu0 0.0
  %6022 = vmatmul.mubr.f32.gmra.mxu0 %v845
  %v6023 = vpop.f32.mrf.mxu0
  %v6024 = vadd.f32 0.0, %v6023
  %v6025 = vpop.f32.mrf.mxu0
  %6026 = vmatprep.mubr.f32.mxu0 0.0
  %6027 = vmatmul.mubr.f32.gmra.mxu0 %v848
  %v6028 = vpop.f32.mrf.mxu0
  %v6029 = vadd.f32 0.0, %v6028
  %v6030 = vpop.f32.mrf.mxu0
  %6031 = vmatprep.mubr.f32.mxu0 0.0
  %6032 = vmatmul.mubr.f32.gmra.mxu0 %v851
  %v6033 = vpop.f32.mrf.mxu0
  %v6034 = vadd.f32 0.0, %v6033
  %v6035 = vpop.f32.mrf.mxu0
  %6036 = vmatprep.mubr.f32.mxu0 0.0
  %6037 = vmatmul.mubr.f32.gmra.mxu0 %v854
  %v6038 = vpop.f32.mrf.mxu0
  %v6039 = vadd.f32 0.0, %v6038
  %v6040 = vpop.f32.mrf.mxu0
  %6041 = vmatprep.mubr.f32.mxu0 0.0
  %6042 = vmatmul.mubr.f32.gmra.mxu0 %v857
  %v6043 = vpop.f32.mrf.mxu0
  %v6044 = vadd.f32 0.0, %v6043
  %v6045 = vpop.f32.mrf.mxu0
  %6046 = vmatprep.mubr.f32.mxu0 0.0
  %6047 = vmatmul.mubr.f32.gmra.mxu0 %v860
  %v6048 = vpop.f32.mrf.mxu0
  %v6049 = vadd.f32 0.0, %v6048
  %v6050 = vpop.f32.mrf.mxu0
  %6051 = vmatprep.mubr.f32.mxu0 0.0
  %6052 = vmatmul.mubr.f32.gmra.mxu0 %v863
  %v6053 = vpop.f32.mrf.mxu0
  %v6054 = vadd.f32 0.0, %v6053
  %v6055 = vpop.f32.mrf.mxu0
  %6056 = vmatprep.mubr.f32.mxu0 0.0
  %6057 = vmatmul.mubr.f32.gmra.mxu0 %v866
  %v6058 = vpop.f32.mrf.mxu0
  %v6059 = vadd.f32 0.0, %v6058
  %v6060 = vpop.f32.mrf.mxu0
  %6061 = vmatprep.mubr.f32.mxu0 0.0
  %6062 = vmatmul.mubr.f32.gmra.mxu0 %v869
  %v6063 = vpop.f32.mrf.mxu0
  %v6064 = vadd.f32 0.0, %v6063
  %v6065 = vpop.f32.mrf.mxu0
  %6066 = vmatprep.mubr.f32.mxu0 0.0
  %6067 = vmatmul.mubr.f32.gmra.mxu0 %v872
  %v6068 = vpop.f32.mrf.mxu0
  %v6069 = vadd.f32 0.0, %v6068
  %v6070 = vpop.f32.mrf.mxu0
  %6071 = vmatprep.mubr.f32.mxu0 0.0
  %6072 = vmatmul.mubr.f32.gmra.mxu0 %v875
  %v6073 = vpop.f32.mrf.mxu0
  %v6074 = vadd.f32 0.0, %v6073
  %v6075 = vpop.f32.mrf.mxu0
  %6076 = vmatprep.mubr.f32.mxu0 0.0
  %6077 = vmatmul.mubr.f32.gmra.mxu0 %v878
  %v6078 = vpop.f32.mrf.mxu0
  %v6079 = vadd.f32 0.0, %v6078
  %v6080 = vpop.f32.mrf.mxu0
  %6081 = vmatprep.mubr.f32.mxu0 0.0
  %6082 = vmatmul.mubr.f32.gmra.mxu0 %v881
  %v6083 = vpop.f32.mrf.mxu0
  %v6084 = vadd.f32 0.0, %v6083
  %v6085 = vpop.f32.mrf.mxu0
  %6086 = vmatprep.mubr.f32.mxu0 0.0
  %6087 = vmatmul.mubr.f32.gmra.mxu0 %v884
  %v6088 = vpop.f32.mrf.mxu0
  %v6089 = vadd.f32 0.0, %v6088
  %v6090 = vpop.f32.mrf.mxu0
  %6091 = vmatprep.mubr.f32.mxu0 0.0
  %6092 = vmatmul.mubr.f32.gmra.mxu0 %v887
  %v6093 = vpop.f32.mrf.mxu0
  %v6094 = vadd.f32 0.0, %v6093
  %v6095 = vpop.f32.mrf.mxu0
  %6096 = vmatprep.mubr.f32.mxu0 0.0
  %6097 = vmatmul.mubr.f32.gmra.mxu0 %v890
  %v6098 = vpop.f32.mrf.mxu0
  %v6099 = vadd.f32 0.0, %v6098
  %v6100 = vpop.f32.mrf.mxu0
  %6101 = vmatprep.mubr.f32.mxu0 0.0
  %6102 = vmatmul.mubr.f32.gmra.mxu0 %v893
  %v6103 = vpop.f32.mrf.mxu0
  %v6104 = vadd.f32 0.0, %v6103
  %v6105 = vpop.f32.mrf.mxu0
  %6106 = vmatprep.mubr.f32.mxu0 0.0
  %6107 = vmatmul.mubr.f32.gmra.mxu0 %v896
  %v6108 = vpop.f32.mrf.mxu0
  %v6109 = vadd.f32 0.0, %v6108
  %v6110 = vpop.f32.mrf.mxu0
  %6111 = vmatprep.mubr.f32.mxu0 0.0
  %6112 = vmatmul.mubr.f32.gmra.mxu0 %v899
  %v6113 = vpop.f32.mrf.mxu0
  %v6114 = vadd.f32 0.0, %v6113
  %v6115 = vpop.f32.mrf.mxu0
  %6116 = vmatprep.mubr.f32.mxu0 0.0
  %6117 = vmatmul.mubr.f32.gmra.mxu0 %v902
  %v6118 = vpop.f32.mrf.mxu0
  %v6119 = vadd.f32 0.0, %v6118
  %v6120 = vpop.f32.mrf.mxu0
  %6121 = vmatprep.mubr.f32.mxu0 0.0
  %6122 = vmatmul.mubr.f32.gmra.mxu0 %v905
  %v6123 = vpop.f32.mrf.mxu0
  %v6124 = vadd.f32 0.0, %v6123
  %v6125 = vpop.f32.mrf.mxu0
  %6126 = vmatprep.mubr.f32.mxu0 0.0
  %6127 = vmatmul.mubr.f32.gmra.mxu0 %v908
  %v6128 = vpop.f32.mrf.mxu0
  %v6129 = vadd.f32 0.0, %v6128
  %v6130 = vpop.f32.mrf.mxu0
  %6131 = vmatprep.mubr.f32.mxu0 0.0
  %6132 = vmatmul.mubr.f32.gmra.mxu0 %v911
  %v6133 = vpop.f32.mrf.mxu0
  %v6134 = vadd.f32 0.0, %v6133
  %v6135 = vpop.f32.mrf.mxu0
  %6136 = vmatprep.mubr.f32.mxu0 0.0
  %6137 = vmatmul.mubr.f32.gmra.mxu0 %v914
  %v6138 = vpop.f32.mrf.mxu0
  %v6139 = vadd.f32 0.0, %v6138
  %v6140 = vpop.f32.mrf.mxu0
  %6141 = vmatprep.mubr.f32.mxu0 0.0
  %6142 = vmatmul.mubr.f32.gmra.mxu0 %v917
  %v6143 = vpop.f32.mrf.mxu0
  %v6144 = vadd.f32 0.0, %v6143
  %v6145 = vpop.f32.mrf.mxu0
  %6146 = vmatprep.mubr.f32.mxu0 0.0
  %6147 = vmatmul.mubr.f32.gmra.mxu0 %v920
  %v6148 = vpop.f32.mrf.mxu0
  %v6149 = vadd.f32 0.0, %v6148
  %v6150 = vpop.f32.mrf.mxu0
  %6151 = vmatprep.mubr.f32.mxu0 0.0
  %6152 = vmatmul.mubr.f32.gmra.mxu0 %v923
  %v6153 = vpop.f32.mrf.mxu0
  %v6154 = vadd.f32 0.0, %v6153
  %v6155 = vpop.f32.mrf.mxu0
  %6156 = vmatprep.mubr.f32.mxu0 0.0
  %6157 = vmatmul.mubr.f32.gmra.mxu0 %v926
  %v6158 = vpop.f32.mrf.mxu0
  %v6159 = vadd.f32 0.0, %v6158
  %v6160 = vpop.f32.mrf.mxu0
  %6161 = vmatprep.mubr.f32.mxu0 0.0
  %6162 = vmatmul.mubr.f32.gmra.mxu0 %v929
  %v6163 = vpop.f32.mrf.mxu0
  %v6164 = vadd.f32 0.0, %v6163
  %v6165 = vpop.f32.mrf.mxu0
  %6166 = vmatprep.mubr.f32.mxu0 0.0
  %6167 = vmatmul.mubr.f32.gmra.mxu0 %v932
  %v6168 = vpop.f32.mrf.mxu0
  %v6169 = vadd.f32 0.0, %v6168
  %v6170 = vpop.f32.mrf.mxu0
  %6171 = vmatprep.mubr.f32.mxu0 0.0
  %6172 = vmatmul.mubr.f32.gmra.mxu0 %v935
  %v6173 = vpop.f32.mrf.mxu0
  %v6174 = vadd.f32 0.0, %v6173
  %v6175 = vpop.f32.mrf.mxu0
  %6176 = vmatprep.mubr.f32.mxu0 0.0
  %6177 = vmatmul.mubr.f32.gmra.mxu0 %v938
  %v6178 = vpop.f32.mrf.mxu0
  %v6179 = vadd.f32 0.0, %v6178
  %v6180 = vpop.f32.mrf.mxu0
  %6181 = vmatprep.mubr.f32.mxu0 0.0
  %6182 = vmatmul.mubr.f32.gmra.mxu0 %v941
  %v6183 = vpop.f32.mrf.mxu0
  %v6184 = vadd.f32 0.0, %v6183
  %v6185 = vpop.f32.mrf.mxu0
  %6186 = vmatprep.mubr.f32.mxu0 0.0
  %6187 = vmatmul.mubr.f32.gmra.mxu0 %v944
  %v6188 = vpop.f32.mrf.mxu0
  %v6189 = vadd.f32 0.0, %v6188
  %v6190 = vpop.f32.mrf.mxu0
  %6191 = vmatprep.mubr.f32.mxu0 0.0
  %6192 = vmatmul.mubr.f32.gmra.mxu0 %v947
  %v6193 = vpop.f32.mrf.mxu0
  %v6194 = vadd.f32 0.0, %v6193
  %v6195 = vpop.f32.mrf.mxu0
  %6196 = vmatprep.mubr.f32.mxu0 0.0
  %6197 = vmatmul.mubr.f32.gmra.mxu0 %v950
  %v6198 = vpop.f32.mrf.mxu0
  %v6199 = vadd.f32 0.0, %v6198
  %v6200 = vpop.f32.mrf.mxu0
  %6201 = vmatprep.mubr.f32.mxu0 0.0
  %6202 = vmatmul.mubr.f32.gmra.mxu0 %v953
  %v6203 = vpop.f32.mrf.mxu0
  %v6204 = vadd.f32 0.0, %v6203
  %v6205 = vpop.f32.mrf.mxu0
  %6206 = vmatprep.mubr.f32.mxu0 0.0
  %6207 = vmatmul.mubr.f32.gmra.mxu0 %v956
  %v6208 = vpop.f32.mrf.mxu0
  %v6209 = vadd.f32 0.0, %v6208
  %v6210 = vpop.f32.mrf.mxu0
  %6211 = vmatprep.mubr.f32.mxu0 0.0
  %6212 = vmatmul.mubr.f32.gmra.mxu0 %v959
  %v6213 = vpop.f32.mrf.mxu0
  %v6214 = vadd.f32 0.0, %v6213
  %v6215 = vpop.f32.mrf.mxu0
  %6216 = vmatprep.mubr.f32.mxu0 0.0
  %6217 = vmatmul.mubr.f32.gmra.mxu0 %v962
  %v6218 = vpop.f32.mrf.mxu0
  %v6219 = vadd.f32 0.0, %v6218
  %v6220 = vpop.f32.mrf.mxu0
  %6221 = vmatprep.mubr.f32.mxu0 0.0
  %6222 = vmatmul.mubr.f32.gmra.mxu0 %v965
  %v6223 = vpop.f32.mrf.mxu0
  %v6224 = vadd.f32 0.0, %v6223
  %v6225 = vpop.f32.mrf.mxu0
  %6226 = vmatprep.mubr.f32.mxu0 0.0
  %6227 = vmatmul.mubr.f32.gmra.mxu0 %v968
  %v6228 = vpop.f32.mrf.mxu0
  %v6229 = vadd.f32 0.0, %v6228
  %v6230 = vpop.f32.mrf.mxu0
  %6231 = vmatprep.mubr.f32.mxu0 0.0
  %6232 = vmatmul.mubr.f32.gmra.mxu0 %v971
  %v6233 = vpop.f32.mrf.mxu0
  %v6234 = vadd.f32 0.0, %v6233
  %v6235 = vpop.f32.mrf.mxu0
  %6236 = vmatprep.mubr.f32.mxu0 0.0
  %6237 = vmatmul.mubr.f32.gmra.mxu0 %v974
  %v6238 = vpop.f32.mrf.mxu0
  %v6239 = vadd.f32 0.0, %v6238
  %v6240 = vpop.f32.mrf.mxu0
  %6241 = vmatprep.mubr.f32.mxu0 0.0
  %6242 = vmatmul.mubr.f32.gmra.mxu0 %v977
  %v6243 = vpop.f32.mrf.mxu0
  %v6244 = vadd.f32 0.0, %v6243
  %v6245 = vpop.f32.mrf.mxu0
  %6246 = vmatprep.mubr.f32.mxu0 0.0
  %6247 = vmatmul.mubr.f32.gmra.mxu0 %v980
  %v6248 = vpop.f32.mrf.mxu0
  %v6249 = vadd.f32 0.0, %v6248
  %v6250 = vpop.f32.mrf.mxu0
  %6251 = vmatprep.mubr.f32.mxu0 0.0
  %6252 = vmatmul.mubr.f32.gmra.mxu0 %v983
  %v6253 = vpop.f32.mrf.mxu0
  %v6254 = vadd.f32 0.0, %v6253
  %v6255 = vpop.f32.mrf.mxu0
  %6256 = vmatprep.mubr.f32.mxu0 0.0
  %6257 = vmatmul.mubr.f32.gmra.mxu0 %v986
  %v6258 = vpop.f32.mrf.mxu0
  %v6259 = vadd.f32 0.0, %v6258
  %v6260 = vpop.f32.mrf.mxu0
  %6261 = vmatprep.mubr.f32.mxu0 0.0
  %6262 = vmatmul.mubr.f32.gmra.mxu0 %v989
  %v6263 = vpop.f32.mrf.mxu0
  %v6264 = vadd.f32 0.0, %v6263
  %v6265 = vpop.f32.mrf.mxu0
  %6266 = vmatprep.mubr.f32.mxu0 0.0
  %6267 = vmatmul.mubr.f32.gmra.mxu0 %v992
  %v6268 = vpop.f32.mrf.mxu0
  %v6269 = vadd.f32 0.0, %v6268
  %v6270 = vpop.f32.mrf.mxu0
  %6271 = vmatprep.mubr.f32.mxu0 0.0
  %6272 = vmatmul.mubr.f32.gmra.mxu0 %v995
  %v6273 = vpop.f32.mrf.mxu0
  %v6274 = vadd.f32 0.0, %v6273
  %v6275 = vpop.f32.mrf.mxu0
  %6276 = vmatprep.mubr.f32.mxu0 0.0
  %6277 = vmatmul.mubr.f32.gmra.mxu0 %v998
  %v6278 = vpop.f32.mrf.mxu0
  %v6279 = vadd.f32 0.0, %v6278
  %v6280 = vpop.f32.mrf.mxu0
  %6281 = vmatprep.mubr.f32.mxu0 0.0
  %6282 = vmatmul.mubr.f32.gmra.mxu0 %v1001
  %v6283 = vpop.f32.mrf.mxu0
  %v6284 = vadd.f32 0.0, %v6283
  %v6285 = vpop.f32.mrf.mxu0
  %6286 = vmatprep.mubr.f32.mxu0 0.0
  %6287 = vmatmul.mubr.f32.gmra.mxu0 %v1004
  %v6288 = vpop.f32.mrf.mxu0
  %v6289 = vadd.f32 0.0, %v6288
  %v6290 = vpop.f32.mrf.mxu0
  %6291 = vmatprep.mubr.f32.mxu0 0.0
  %6292 = vmatmul.mubr.f32.gmra.mxu0 %v1007
  %v6293 = vpop.f32.mrf.mxu0
  %v6294 = vadd.f32 0.0, %v6293
  %v6295 = vpop.f32.mrf.mxu0
  %6296 = vmatprep.mubr.f32.mxu0 0.0
  %6297 = vmatmul.mubr.f32.gmra.mxu0 %v1010
  %v6298 = vpop.f32.mrf.mxu0
  %v6299 = vadd.f32 0.0, %v6298
  %v6300 = vpop.f32.mrf.mxu0
  %6301 = vmatprep.mubr.f32.mxu0 0.0
  %6302 = vmatmul.mubr.f32.gmra.mxu0 %v1013
  %v6303 = vpop.f32.mrf.mxu0
  %v6304 = vadd.f32 0.0, %v6303
  %v6305 = vpop.f32.mrf.mxu0
  %6306 = vmatprep.mubr.f32.mxu0 0.0
  %6307 = vmatmul.mubr.f32.gmra.mxu0 %v1016
  %v6308 = vpop.f32.mrf.mxu0
  %v6309 = vadd.f32 0.0, %v6308
  %v6310 = vpop.f32.mrf.mxu0
  %6311 = vmatprep.mubr.f32.mxu0 0.0
  %6312 = vmatmul.mubr.f32.gmra.mxu0 %v1019
  %v6313 = vpop.f32.mrf.mxu0
  %v6314 = vadd.f32 0.0, %v6313
  %v6315 = vpop.f32.mrf.mxu0
  %6316 = vmatprep.mubr.f32.mxu0 0.0
  %6317 = vmatmul.mubr.f32.gmra.mxu0 %v1022
  %v6318 = vpop.f32.mrf.mxu0
  %v6319 = vadd.f32 0.0, %v6318
  %v6320 = vpop.f32.mrf.mxu0
  %6321 = vmatprep.mubr.f32.mxu0 0.0
  %6322 = vmatmul.mubr.f32.gmra.mxu0 %v1025
  %v6323 = vpop.f32.mrf.mxu0
  %v6324 = vadd.f32 0.0, %v6323
  %v6325 = vpop.f32.mrf.mxu0
  %6326 = vmatprep.mubr.f32.mxu0 0.0
  %6327 = vmatmul.mubr.f32.gmra.mxu0 %v1028
  %v6328 = vpop.f32.mrf.mxu0
  %v6329 = vadd.f32 0.0, %v6328
  %v6330 = vpop.f32.mrf.mxu0
  %6331 = vmatprep.mubr.f32.mxu0 0.0
  %6332 = vmatmul.mubr.f32.gmra.mxu0 %v1031
  %v6333 = vpop.f32.mrf.mxu0
  %v6334 = vadd.f32 0.0, %v6333
  %v6335 = vpop.f32.mrf.mxu0
  %6336 = vmatprep.mubr.f32.mxu0 0.0
  %6337 = vmatmul.mubr.f32.gmra.mxu0 %v1034
  %v6338 = vpop.f32.mrf.mxu0
  %v6339 = vadd.f32 0.0, %v6338
  %v6340 = vpop.f32.mrf.mxu0
  %6341 = vmatprep.mubr.f32.mxu0 0.0
  %6342 = vmatmul.mubr.f32.gmra.mxu0 %v1037
  %v6343 = vpop.f32.mrf.mxu0
  %v6344 = vadd.f32 0.0, %v6343
  %v6345 = vpop.f32.mrf.mxu0
  %6346 = vmatprep.mubr.f32.mxu0 0.0
  %6347 = vmatmul.mubr.f32.gmra.mxu0 %v1040
  %v6348 = vpop.f32.mrf.mxu0
  %v6349 = vadd.f32 0.0, %v6348
  %v6350 = vpop.f32.mrf.mxu0
  %6351 = vmatprep.mubr.f32.mxu0 0.0
  %6352 = vmatmul.mubr.f32.gmra.mxu0 %v1043
  %v6353 = vpop.f32.mrf.mxu0
  %v6354 = vadd.f32 0.0, %v6353
  %v6355 = vpop.f32.mrf.mxu0
  %6356 = vmatprep.mubr.f32.mxu0 0.0
  %6357 = vmatmul.mubr.f32.gmra.mxu0 %v1046
  %v6358 = vpop.f32.mrf.mxu0
  %v6359 = vadd.f32 0.0, %v6358
  %v6360 = vpop.f32.mrf.mxu0
  %6361 = vmatprep.mubr.f32.mxu0 0.0
  %6362 = vmatmul.mubr.f32.gmra.mxu0 %v1049
  %v6363 = vpop.f32.mrf.mxu0
  %v6364 = vadd.f32 0.0, %v6363
  %v6365 = vpop.f32.mrf.mxu0
  %6366 = vmatprep.mubr.f32.mxu0 0.0
  %6367 = vmatmul.mubr.f32.gmra.mxu0 %v1052
  %v6368 = vpop.f32.mrf.mxu0
  %v6369 = vadd.f32 0.0, %v6368
  %v6370 = vpop.f32.mrf.mxu0
  %6371 = vmatprep.mubr.f32.mxu0 0.0
  %6372 = vmatmul.mubr.f32.gmra.mxu0 %v1055
  %v6373 = vpop.f32.mrf.mxu0
  %v6374 = vadd.f32 0.0, %v6373
  %v6375 = vpop.f32.mrf.mxu0
  %6376 = vmatprep.mubr.f32.mxu0 0.0
  %6377 = vmatmul.mubr.f32.gmra.mxu0 %v1058
  %v6378 = vpop.f32.mrf.mxu0
  %v6379 = vadd.f32 0.0, %v6378
  %v6380 = vpop.f32.mrf.mxu0
  %6381 = vmatprep.mubr.f32.mxu0 0.0
  %6382 = vmatmul.mubr.f32.gmra.mxu0 %v1061
  %v6383 = vpop.f32.mrf.mxu0
  %v6384 = vadd.f32 0.0, %v6383
  %v6385 = vpop.f32.mrf.mxu0
  %6386 = vmatprep.mubr.f32.mxu0 0.0
  %6387 = vmatmul.mubr.f32.gmra.mxu0 %v1064
  %v6388 = vpop.f32.mrf.mxu0
  %v6389 = vadd.f32 0.0, %v6388
  %v6390 = vpop.f32.mrf.mxu0
  %6391 = vmatprep.mubr.f32.mxu0 0.0
  %6392 = vmatmul.mubr.f32.gmra.mxu0 %v1067
  %v6393 = vpop.f32.mrf.mxu0
  %v6394 = vadd.f32 0.0, %v6393
  %v6395 = vpop.f32.mrf.mxu0
  %6396 = vmatprep.mubr.f32.mxu0 0.0
  %6397 = vmatmul.mubr.f32.gmra.mxu0 %v1070
  %v6398 = vpop.f32.mrf.mxu0
  %v6399 = vadd.f32 0.0, %v6398
  %v6400 = vpop.f32.mrf.mxu0
  %6401 = vmatprep.mubr.f32.mxu0 0.0
  %6402 = vmatmul.mubr.f32.gmra.mxu0 %v1073
  %v6403 = vpop.f32.mrf.mxu0
  %v6404 = vadd.f32 0.0, %v6403
  %v6405 = vpop.f32.mrf.mxu0
  %6406 = vmatprep.mubr.f32.mxu0 0.0
  %6407 = vmatmul.mubr.f32.gmra.mxu0 %v1076
  %v6408 = vpop.f32.mrf.mxu0
  %v6409 = vadd.f32 0.0, %v6408
  %v6410 = vpop.f32.mrf.mxu0
  %6411 = vmatprep.mubr.f32.mxu0 0.0
  %6412 = vmatmul.mubr.f32.gmra.mxu0 %v1079
  %v6413 = vpop.f32.mrf.mxu0
  %v6414 = vadd.f32 0.0, %v6413
  %v6415 = vpop.f32.mrf.mxu0
  %6416 = vmatprep.mubr.f32.mxu0 0.0
  %6417 = vmatmul.mubr.f32.gmra.mxu0 %v1082
  %v6418 = vpop.f32.mrf.mxu0
  %v6419 = vadd.f32 0.0, %v6418
  %v6420 = vpop.f32.mrf.mxu0
  %6421 = vmatprep.mubr.f32.mxu0 0.0
  %6422 = vmatmul.mubr.f32.gmra.mxu0 %v1085
  %v6423 = vpop.f32.mrf.mxu0
  %v6424 = vadd.f32 0.0, %v6423
  %v6425 = vpop.f32.mrf.mxu0
  %6426 = vmatprep.mubr.f32.mxu0 0.0
  %6427 = vmatmul.mubr.f32.gmra.mxu0 %v1088
  %v6428 = vpop.f32.mrf.mxu0
  %v6429 = vadd.f32 0.0, %v6428
  %v6430 = vpop.f32.mrf.mxu0
  %6431 = vmatprep.mubr.f32.mxu0 0.0
  %6432 = vmatmul.mubr.f32.gmra.mxu0 %v1091
  %v6433 = vpop.f32.mrf.mxu0
  %v6434 = vadd.f32 0.0, %v6433
  %v6435 = vpop.f32.mrf.mxu0
  %6436 = vmatprep.mubr.f32.mxu0 0.0
  %6437 = vmatmul.mubr.f32.gmra.mxu0 %v1094
  %v6438 = vpop.f32.mrf.mxu0
  %v6439 = vadd.f32 0.0, %v6438
  %v6440 = vpop.f32.mrf.mxu0
  %6441 = vmatprep.mubr.f32.mxu0 0.0
  %6442 = vmatmul.mubr.f32.gmra.mxu0 %v1097
  %v6443 = vpop.f32.mrf.mxu0
  %v6444 = vadd.f32 0.0, %v6443
  %v6445 = vpop.f32.mrf.mxu0
  %6446 = vmatprep.mubr.f32.mxu0 0.0
  %6447 = vmatmul.mubr.f32.gmra.mxu0 %v1100
  %v6448 = vpop.f32.mrf.mxu0
  %v6449 = vadd.f32 0.0, %v6448
  %v6450 = vpop.f32.mrf.mxu0
  %6451 = vmatprep.mubr.f32.mxu0 0.0
  %6452 = vmatmul.mubr.f32.gmra.mxu0 %v1103
  %v6453 = vpop.f32.mrf.mxu0
  %v6454 = vadd.f32 0.0, %v6453
  %v6455 = vpop.f32.mrf.mxu0
  %6456 = vmatprep.mubr.f32.mxu0 0.0
  %6457 = vmatmul.mubr.f32.gmra.mxu0 %v1106
  %v6458 = vpop.f32.mrf.mxu0
  %v6459 = vadd.f32 0.0, %v6458
  %v6460 = vpop.f32.mrf.mxu0
  %6461 = vmatprep.mubr.f32.mxu0 0.0
  %6462 = vmatmul.mubr.f32.gmra.mxu0 %v1109
  %v6463 = vpop.f32.mrf.mxu0
  %v6464 = vadd.f32 0.0, %v6463
  %v6465 = vpop.f32.mrf.mxu0
  %6466 = vmatprep.mubr.f32.mxu0 0.0
  %6467 = vmatmul.mubr.f32.gmra.mxu0 %v1112
  %v6468 = vpop.f32.mrf.mxu0
  %v6469 = vadd.f32 0.0, %v6468
  %v6470 = vpop.f32.mrf.mxu0
  %6471 = vmatprep.mubr.f32.mxu0 0.0
  %6472 = vmatmul.mubr.f32.gmra.mxu0 %v1115
  %v6473 = vpop.f32.mrf.mxu0
  %v6474 = vadd.f32 0.0, %v6473
  %v6475 = vpop.f32.mrf.mxu0
  %6476 = vmatprep.mubr.f32.mxu0 0.0
  %6477 = vmatmul.mubr.f32.gmra.mxu0 %v1118
  %v6478 = vpop.f32.mrf.mxu0
  %v6479 = vadd.f32 0.0, %v6478
  %v6480 = vpop.f32.mrf.mxu0
  %6481 = vmatprep.mubr.f32.mxu0 0.0
  %6482 = vmatmul.mubr.f32.gmra.mxu0 %v1121
  %v6483 = vpop.f32.mrf.mxu0
  %v6484 = vadd.f32 0.0, %v6483
  %v6485 = vpop.f32.mrf.mxu0
  %6486 = vmatprep.mubr.f32.mxu0 0.0
  %6487 = vmatmul.mubr.f32.gmra.mxu0 %v1124
  %v6488 = vpop.f32.mrf.mxu0
  %v6489 = vadd.f32 0.0, %v6488
  %v6490 = vpop.f32.mrf.mxu0
  %6491 = vmatprep.mubr.f32.mxu0 0.0
  %6492 = vmatmul.mubr.f32.gmra.mxu0 %v1127
  %v6493 = vpop.f32.mrf.mxu0
  %v6494 = vadd.f32 0.0, %v6493
  %v6495 = vpop.f32.mrf.mxu0
  %6496 = vmatprep.mubr.f32.mxu0 0.0
  %6497 = vmatmul.mubr.f32.gmra.mxu0 %v1130
  %v6498 = vpop.f32.mrf.mxu0
  %v6499 = vadd.f32 0.0, %v6498
  %v6500 = vpop.f32.mrf.mxu0
  %6501 = vmatprep.mubr.f32.mxu0 0.0
  %6502 = vmatmul.mubr.f32.gmra.mxu0 %v1133
  %v6503 = vpop.f32.mrf.mxu0
  %v6504 = vadd.f32 0.0, %v6503
  %v6505 = vpop.f32.mrf.mxu0
  %6506 = vmatprep.mubr.f32.mxu0 0.0
  %6507 = vmatmul.mubr.f32.gmra.mxu0 %v1136
  %v6508 = vpop.f32.mrf.mxu0
  %v6509 = vadd.f32 0.0, %v6508
  %v6510 = vpop.f32.mrf.mxu0
  %6511 = vmatprep.mubr.f32.mxu0 0.0
  %6512 = vmatmul.mubr.f32.gmra.mxu0 %v1139
  %v6513 = vpop.f32.mrf.mxu0
  %v6514 = vadd.f32 0.0, %v6513
  %v6515 = vpop.f32.mrf.mxu0
  %6516 = vmatprep.mubr.f32.mxu0 0.0
  %6517 = vmatmul.mubr.f32.gmra.mxu0 %v1142
  %v6518 = vpop.f32.mrf.mxu0
  %v6519 = vadd.f32 0.0, %v6518
  %v6520 = vpop.f32.mrf.mxu0
  %6521 = vmatprep.mubr.f32.mxu0 0.0
  %6522 = vmatmul.mubr.f32.gmra.mxu0 %v1145
  %v6523 = vpop.f32.mrf.mxu0
  %v6524 = vadd.f32 0.0, %v6523
  %v6525 = vpop.f32.mrf.mxu0
  %6526 = vmatprep.mubr.f32.mxu0 0.0
  %6527 = vmatmul.mubr.f32.gmra.mxu0 %v1148
  %v6528 = vpop.f32.mrf.mxu0
  %v6529 = vadd.f32 0.0, %v6528
  %v6530 = vpop.f32.mrf.mxu0
  %6531 = vmatprep.mubr.f32.mxu0 0.0
  %6532 = vmatmul.mubr.f32.gmra.mxu0 %v1151
  %v6533 = vpop.f32.mrf.mxu0
  %v6534 = vadd.f32 0.0, %v6533
  %v6535 = vpop.f32.mrf.mxu0
  %6536 = vdwg.mxu0
  %v6537 = vmul.f32 %v5999, %v1761
  %v6538 = vmul.f32 %v6004, %v1761
  %v6539 = vmul.f32 %v6009, %v1761
  %v6540 = vmul.f32 %v6014, %v1761
  %v6541 = vadd.f32 %v6537, 0.0
  %v6542 = vadd.f32 %v6538, 0.0
  %v6543 = vadd.f32 %v6539, 0.0
  %v6544 = vadd.f32 %v6540, 0.0
  %v6545 = vmul.f32 %v6019, %v1773
  %v6546 = vmul.f32 %v6024, %v1773
  %v6547 = vmul.f32 %v6029, %v1773
  %v6548 = vmul.f32 %v6034, %v1773
  %v6549 = vadd.f32 %v6541, %v6545
  %v6550 = vadd.f32 %v6542, %v6546
  %v6551 = vadd.f32 %v6543, %v6547
  %v6552 = vadd.f32 %v6544, %v6548
  %v6553 = vmul.f32 %v6039, %v1785
  %v6554 = vmul.f32 %v6044, %v1785
  %v6555 = vmul.f32 %v6049, %v1785
  %v6556 = vmul.f32 %v6054, %v1785
  %v6557 = vadd.f32 %v6549, %v6553
  %v6558 = vadd.f32 %v6550, %v6554
  %v6559 = vadd.f32 %v6551, %v6555
  %v6560 = vadd.f32 %v6552, %v6556
  %v6561 = vmul.f32 %v6059, %v1797
  %v6562 = vmul.f32 %v6064, %v1797
  %v6563 = vmul.f32 %v6069, %v1797
  %v6564 = vmul.f32 %v6074, %v1797
  %v6565 = vadd.f32 %v6557, %v6561
  %v6566 = vadd.f32 %v6558, %v6562
  %v6567 = vadd.f32 %v6559, %v6563
  %v6568 = vadd.f32 %v6560, %v6564
  %v6569 = vmul.f32 %v6079, %v1809
  %v6570 = vmul.f32 %v6084, %v1809
  %v6571 = vmul.f32 %v6089, %v1809
  %v6572 = vmul.f32 %v6094, %v1809
  %v6573 = vadd.f32 %v6565, %v6569
  %v6574 = vadd.f32 %v6566, %v6570
  %v6575 = vadd.f32 %v6567, %v6571
  %v6576 = vadd.f32 %v6568, %v6572
  %v6577 = vmul.f32 %v6099, %v1821
  %v6578 = vmul.f32 %v6104, %v1821
  %v6579 = vmul.f32 %v6109, %v1821
  %v6580 = vmul.f32 %v6114, %v1821
  %v6581 = vadd.f32 %v6573, %v6577
  %v6582 = vadd.f32 %v6574, %v6578
  %v6583 = vadd.f32 %v6575, %v6579
  %v6584 = vadd.f32 %v6576, %v6580
  %v6585 = vmul.f32 %v6119, %v1833
  %v6586 = vmul.f32 %v6124, %v1833
  %v6587 = vmul.f32 %v6129, %v1833
  %v6588 = vmul.f32 %v6134, %v1833
  %v6589 = vadd.f32 %v6581, %v6585
  %v6590 = vadd.f32 %v6582, %v6586
  %v6591 = vadd.f32 %v6583, %v6587
  %v6592 = vadd.f32 %v6584, %v6588
  %v6593 = vmul.f32 %v6139, %v1845
  %v6594 = vmul.f32 %v6144, %v1845
  %v6595 = vmul.f32 %v6149, %v1845
  %v6596 = vmul.f32 %v6154, %v1845
  %v6597 = vadd.f32 %v6589, %v6593
  %v6598 = vadd.f32 %v6590, %v6594
  %v6599 = vadd.f32 %v6591, %v6595
  %v6600 = vadd.f32 %v6592, %v6596
  %v6601 = vmul.f32 %v6159, %v1857
  %v6602 = vmul.f32 %v6164, %v1857
  %v6603 = vmul.f32 %v6169, %v1857
  %v6604 = vmul.f32 %v6174, %v1857
  %v6605 = vadd.f32 %v6597, %v6601
  %v6606 = vadd.f32 %v6598, %v6602
  %v6607 = vadd.f32 %v6599, %v6603
  %v6608 = vadd.f32 %v6600, %v6604
  %v6609 = vmul.f32 %v6179, %v1869
  %v6610 = vmul.f32 %v6184, %v1869
  %v6611 = vmul.f32 %v6189, %v1869
  %v6612 = vmul.f32 %v6194, %v1869
  %v6613 = vadd.f32 %v6605, %v6609
  %v6614 = vadd.f32 %v6606, %v6610
  %v6615 = vadd.f32 %v6607, %v6611
  %v6616 = vadd.f32 %v6608, %v6612
  %v6617 = vmul.f32 %v6199, %v1881
  %v6618 = vmul.f32 %v6204, %v1881
  %v6619 = vmul.f32 %v6209, %v1881
  %v6620 = vmul.f32 %v6214, %v1881
  %v6621 = vadd.f32 %v6613, %v6617
  %v6622 = vadd.f32 %v6614, %v6618
  %v6623 = vadd.f32 %v6615, %v6619
  %v6624 = vadd.f32 %v6616, %v6620
  %v6625 = vmul.f32 %v6219, %v1893
  %v6626 = vmul.f32 %v6224, %v1893
  %v6627 = vmul.f32 %v6229, %v1893
  %v6628 = vmul.f32 %v6234, %v1893
  %v6629 = vadd.f32 %v6621, %v6625
  %v6630 = vadd.f32 %v6622, %v6626
  %v6631 = vadd.f32 %v6623, %v6627
  %v6632 = vadd.f32 %v6624, %v6628
  %v6633 = vmul.f32 %v6239, %v1905
  %v6634 = vmul.f32 %v6244, %v1905
  %v6635 = vmul.f32 %v6249, %v1905
  %v6636 = vmul.f32 %v6254, %v1905
  %v6637 = vadd.f32 %v6629, %v6633
  %v6638 = vadd.f32 %v6630, %v6634
  %v6639 = vadd.f32 %v6631, %v6635
  %v6640 = vadd.f32 %v6632, %v6636
  %v6641 = vmul.f32 %v6259, %v1917
  %v6642 = vmul.f32 %v6264, %v1917
  %v6643 = vmul.f32 %v6269, %v1917
  %v6644 = vmul.f32 %v6274, %v1917
  %v6645 = vadd.f32 %v6637, %v6641
  %v6646 = vadd.f32 %v6638, %v6642
  %v6647 = vadd.f32 %v6639, %v6643
  %v6648 = vadd.f32 %v6640, %v6644
  %v6649 = vmul.f32 %v6279, %v1929
  %v6650 = vmul.f32 %v6284, %v1929
  %v6651 = vmul.f32 %v6289, %v1929
  %v6652 = vmul.f32 %v6294, %v1929
  %v6653 = vadd.f32 %v6645, %v6649
  %v6654 = vadd.f32 %v6646, %v6650
  %v6655 = vadd.f32 %v6647, %v6651
  %v6656 = vadd.f32 %v6648, %v6652
  %v6657 = vmul.f32 %v6299, %v1941
  %v6658 = vmul.f32 %v6304, %v1941
  %v6659 = vmul.f32 %v6309, %v1941
  %v6660 = vmul.f32 %v6314, %v1941
  %v6661 = vadd.f32 %v6653, %v6657
  %v6662 = vadd.f32 %v6654, %v6658
  %v6663 = vadd.f32 %v6655, %v6659
  %v6664 = vadd.f32 %v6656, %v6660
  %v6665 = vmul.f32 %v6319, %v1953
  %v6666 = vmul.f32 %v6324, %v1953
  %v6667 = vmul.f32 %v6329, %v1953
  %v6668 = vmul.f32 %v6334, %v1953
  %v6669 = vadd.f32 %v6661, %v6665
  %v6670 = vadd.f32 %v6662, %v6666
  %v6671 = vadd.f32 %v6663, %v6667
  %v6672 = vadd.f32 %v6664, %v6668
  %v6673 = vmul.f32 %v6339, %v1965
  %v6674 = vmul.f32 %v6344, %v1965
  %v6675 = vmul.f32 %v6349, %v1965
  %v6676 = vmul.f32 %v6354, %v1965
  %v6677 = vadd.f32 %v6669, %v6673
  %v6678 = vadd.f32 %v6670, %v6674
  %v6679 = vadd.f32 %v6671, %v6675
  %v6680 = vadd.f32 %v6672, %v6676
  %v6681 = vmul.f32 %v6359, %v1977
  %v6682 = vmul.f32 %v6364, %v1977
  %v6683 = vmul.f32 %v6369, %v1977
  %v6684 = vmul.f32 %v6374, %v1977
  %v6685 = vadd.f32 %v6677, %v6681
  %v6686 = vadd.f32 %v6678, %v6682
  %v6687 = vadd.f32 %v6679, %v6683
  %v6688 = vadd.f32 %v6680, %v6684
  %v6689 = vmul.f32 %v6379, %v1989
  %v6690 = vmul.f32 %v6384, %v1989
  %v6691 = vmul.f32 %v6389, %v1989
  %v6692 = vmul.f32 %v6394, %v1989
  %v6693 = vadd.f32 %v6685, %v6689
  %v6694 = vadd.f32 %v6686, %v6690
  %v6695 = vadd.f32 %v6687, %v6691
  %v6696 = vadd.f32 %v6688, %v6692
  %v6697 = vmul.f32 %v6399, %v2001
  %v6698 = vmul.f32 %v6404, %v2001
  %v6699 = vmul.f32 %v6409, %v2001
  %v6700 = vmul.f32 %v6414, %v2001
  %v6701 = vadd.f32 %v6693, %v6697
  %v6702 = vadd.f32 %v6694, %v6698
  %v6703 = vadd.f32 %v6695, %v6699
  %v6704 = vadd.f32 %v6696, %v6700
  %v6705 = vmul.f32 %v6419, %v2013
  %v6706 = vmul.f32 %v6424, %v2013
  %v6707 = vmul.f32 %v6429, %v2013
  %v6708 = vmul.f32 %v6434, %v2013
  %v6709 = vadd.f32 %v6701, %v6705
  %v6710 = vadd.f32 %v6702, %v6706
  %v6711 = vadd.f32 %v6703, %v6707
  %v6712 = vadd.f32 %v6704, %v6708
  %v6713 = vmul.f32 %v6439, %v2025
  %v6714 = vmul.f32 %v6444, %v2025
  %v6715 = vmul.f32 %v6449, %v2025
  %v6716 = vmul.f32 %v6454, %v2025
  %v6717 = vadd.f32 %v6709, %v6713
  %v6718 = vadd.f32 %v6710, %v6714
  %v6719 = vadd.f32 %v6711, %v6715
  %v6720 = vadd.f32 %v6712, %v6716
  %v6721 = vmul.f32 %v6459, %v2037
  %v6722 = vmul.f32 %v6464, %v2037
  %v6723 = vmul.f32 %v6469, %v2037
  %v6724 = vmul.f32 %v6474, %v2037
  %v6725 = vadd.f32 %v6717, %v6721
  %v6726 = vadd.f32 %v6718, %v6722
  %v6727 = vadd.f32 %v6719, %v6723
  %v6728 = vadd.f32 %v6720, %v6724
  %v6729 = vmul.f32 %v6479, %v2049
  %v6730 = vmul.f32 %v6484, %v2049
  %v6731 = vmul.f32 %v6489, %v2049
  %v6732 = vmul.f32 %v6494, %v2049
  %v6733 = vadd.f32 %v6725, %v6729
  %v6734 = vadd.f32 %v6726, %v6730
  %v6735 = vadd.f32 %v6727, %v6731
  %v6736 = vadd.f32 %v6728, %v6732
  %v6737 = vmul.f32 %v6499, %v2061
  %v6738 = vmul.f32 %v6504, %v2061
  %v6739 = vmul.f32 %v6509, %v2061
  %v6740 = vmul.f32 %v6514, %v2061
  %v6741 = vadd.f32 %v6733, %v6737
  %v6742 = vadd.f32 %v6734, %v6738
  %v6743 = vadd.f32 %v6735, %v6739
  %v6744 = vadd.f32 %v6736, %v6740
  %v6745 = vmul.f32 %v6519, %v2073
  %v6746 = vmul.f32 %v6524, %v2073
  %v6747 = vmul.f32 %v6529, %v2073
  %v6748 = vmul.f32 %v6534, %v2073
  %v6749 = vadd.f32 %v6741, %v6745
  %v6750 = vadd.f32 %v6742, %v6746
  %v6751 = vadd.f32 %v6743, %v6747
  %v6752 = vadd.f32 %v6744, %v6748
  %v6758 = vrot.slane %v6749, 7
  %v6759 = vrot.slane %v6750, 7
  %v6760 = vsel %vm2086, %v6758, %v6759
  %v6761 = vrot.slane %v6751, 7
  %v6762 = vsel %vm2086, %v6759, %v6761
  %v6763 = vrot.slane %v6752, 7
  %v6764 = vsel %vm2086, %v6761, %v6763
  %v6770 = vsel %vm2086, %v823, %v6758
  %v6772 = vsel %vm254, %v6770, 0
  %v6774 = vsel %vm254, %v6760, 0
  %v6776 = vsel %vm254, %v6762, 0
  %v6778 = vsel %vm254, %v6764, 0
  %v6780 = vsel %vm254, %v6763, 0
  %6782 = vmatprep.subr.mxu0 0.0
  %6783 = vmatpush1.msra.mxu0 0.0
  %6784 = vmatprep.subr.mxu0 0.0
  %6785 = vmatpush1.msra.mxu0 0.0
  %6786 = vmatprep.subr.mxu0 0.0
  %6787 = vmatpush1.msra.mxu0 0.0
  %6788 = vmatprep.subr.mxu0 0.0
  %6789 = vmatpush1.msra.mxu0 0.0
  %6790 = vmatprep.subr.mxu0 0.0
  %6791 = vmatpush1.msra.mxu0 0.0
  %6792 = vmatprep.subr.mxu0 0.0
  %6793 = vmatpush1.msra.mxu0 0.0
  %6794 = vmatprep.subr.mxu0 0.0
  %6795 = vmatpush1.msra.mxu0 0.0
  %6796 = vmatprep.subr.mxu0 0.0
  %6797 = vmatpush1.msra.mxu0 0.0
  %6798 = vmatprep.subr.mxu0 0.0
  %6799 = vmatpush1.msra.mxu0 0.0
  %6800 = vmatprep.subr.mxu0 0.0
  %6801 = vmatpush1.msra.mxu0 0.0
  %6802 = vmatprep.subr.mxu0 0.0
  %6803 = vmatpush1.msra.mxu0 0.0
  %6804 = vmatprep.subr.mxu0 0.0
  %6805 = vmatpush1.msra.mxu0 0.0
  %6806 = vmatprep.subr.mxu0 0.0
  %6807 = vmatpush1.msra.mxu0 %v179
  %6808 = vmatprep.subr.mxu0 0.0
  %6809 = vmatpush1.msra.mxu0 %v178
  %6810 = vmatprep.subr.mxu0 0.0
  %6811 = vmatpush1.msra.mxu0 %v177
  %6812 = vmatprep.subr.mxu0 0.0
  %6813 = vmatpush1.msra.mxu0 %v176
  %6814 = vmatprep.subr.mxu0 0.0
  %6815 = vmatpush2.msra.mxu0 0.0
  %6816 = vmatprep.subr.mxu0 0.0
  %6817 = vmatpush2.msra.mxu0 0.0
  %6818 = vmatprep.subr.mxu0 0.0
  %6819 = vmatpush2.msra.mxu0 0.0
  %6820 = vmatprep.subr.mxu0 0.0
  %6821 = vmatpush2.msra.mxu0 0.0
  %6822 = vmatprep.subr.mxu0 0.0
  %6823 = vmatpush2.msra.mxu0 0.0
  %6824 = vmatprep.subr.mxu0 0.0
  %6825 = vmatpush2.msra.mxu0 0.0
  %6826 = vmatprep.subr.mxu0 0.0
  %6827 = vmatpush2.msra.mxu0 0.0
  %6828 = vmatprep.subr.mxu0 0.0
  %6829 = vmatpush2.msra.mxu0 0.0
  %6830 = vmatprep.subr.mxu0 0.0
  %6831 = vmatpush2.msra.mxu0 0.0
  %6832 = vmatprep.subr.mxu0 0.0
  %6833 = vmatpush2.msra.mxu0 0.0
  %6834 = vmatprep.subr.mxu0 0.0
  %6835 = vmatpush2.msra.mxu0 0.0
  %6836 = vmatprep.subr.mxu0 0.0
  %6837 = vmatpush2.msra.mxu0 0.0
  %6838 = vmatprep.subr.mxu0 0.0
  %6839 = vmatpush2.msra.mxu0 0.0
  %6840 = vmatprep.subr.mxu0 0.0
  %6841 = vmatpush2.msra.mxu0 0.0
  %6842 = vmatprep.subr.mxu0 0.0
  %6843 = vmatpush2.msra.mxu0 0.0
  %6844 = vmatprep.subr.mxu0 0.0
  %6845 = vmatpush2.msra.mxu0 0.0
  %6846 = vmatprep.mubr.f32.mxu0 0.0
  %6847 = vmatmul.mubr.f32.gmra.mxu0 %v6772
  %v6848 = vpop.f32.mrf.mxu0
  %v6849 = vadd.f32 0.0, %v6848
  %v6850 = vpop.f32.mrf.mxu0
  %6851 = vmatprep.mubr.f32.mxu0 0.0
  %6852 = vmatmul.mubr.f32.gmra.mxu0 %v6774
  %v6853 = vpop.f32.mrf.mxu0
  %v6854 = vadd.f32 0.0, %v6853
  %v6855 = vpop.f32.mrf.mxu0
  %6856 = vmatprep.mubr.f32.mxu0 0.0
  %6857 = vmatmul.mubr.f32.gmra.mxu0 %v6776
  %v6858 = vpop.f32.mrf.mxu0
  %v6859 = vadd.f32 0.0, %v6858
  %v6860 = vpop.f32.mrf.mxu0
  %6861 = vmatprep.mubr.f32.mxu0 0.0
  %6862 = vmatmul.mubr.f32.gmra.mxu0 %v6778
  %v6863 = vpop.f32.mrf.mxu0
  %v6864 = vadd.f32 0.0, %v6863
  %v6865 = vpop.f32.mrf.mxu0
  %6866 = vmatprep.mubr.f32.mxu0 0.0
  %6867 = vmatmul.mubr.f32.gmra.mxu0 %v6780
  %v6868 = vpop.f32.mrf.mxu0
  %v6869 = vadd.f32 0.0, %v6868
  %v6870 = vpop.f32.mrf.mxu0
  %6871 = vdwg.mxu0
  %v6872 = vsub.f32 %v6770, %v6849
  %v6873 = vsub.f32 %v6760, %v6854
  %v6874 = vsub.f32 %v6762, %v6859
  %v6875 = vsub.f32 %v6764, %v6864
  %v6876 = vsub.f32 %v6763, %v6869
  %v6877 = vmul.f32 %v6872, %v6872
  %v6878 = vmul.f32 %v6873, %v6873
  %v6879 = vmul.f32 %v6874, %v6874
  %v6880 = vmul.f32 %v6875, %v6875
  %v6881 = vmul.f32 %v6876, %v6876
  %v6883 = vsel %vm254, %v6877, 0
  %v6886 = vsel %vm254, %v6878, 0
  %v6889 = vsel %vm254, %v6879, 0
  %v6892 = vsel %vm254, %v6880, 0
  %v6895 = vsel %vm254, %v6881, 0
  %6897 = vmatprep.subr.mxu0 0.0
  %6898 = vmatpush1.msra.mxu0 0.0
  %6899 = vmatprep.subr.mxu0 0.0
  %6900 = vmatpush1.msra.mxu0 0.0
  %6901 = vmatprep.subr.mxu0 0.0
  %6902 = vmatpush1.msra.mxu0 0.0
  %6903 = vmatprep.subr.mxu0 0.0
  %6904 = vmatpush1.msra.mxu0 0.0
  %6905 = vmatprep.subr.mxu0 0.0
  %6906 = vmatpush1.msra.mxu0 0.0
  %6907 = vmatprep.subr.mxu0 0.0
  %6908 = vmatpush1.msra.mxu0 0.0
  %6909 = vmatprep.subr.mxu0 0.0
  %6910 = vmatpush1.msra.mxu0 0.0
  %6911 = vmatprep.subr.mxu0 0.0
  %6912 = vmatpush1.msra.mxu0 0.0
  %6913 = vmatprep.subr.mxu0 0.0
  %6914 = vmatpush1.msra.mxu0 0.0
  %6915 = vmatprep.subr.mxu0 0.0
  %6916 = vmatpush1.msra.mxu0 0.0
  %6917 = vmatprep.subr.mxu0 0.0
  %6918 = vmatpush1.msra.mxu0 0.0
  %6919 = vmatprep.subr.mxu0 0.0
  %6920 = vmatpush1.msra.mxu0 0.0
  %6921 = vmatprep.subr.mxu0 0.0
  %6922 = vmatpush1.msra.mxu0 %v179
  %6923 = vmatprep.subr.mxu0 0.0
  %6924 = vmatpush1.msra.mxu0 %v178
  %6925 = vmatprep.subr.mxu0 0.0
  %6926 = vmatpush1.msra.mxu0 %v177
  %6927 = vmatprep.subr.mxu0 0.0
  %6928 = vmatpush1.msra.mxu0 %v176
  %6929 = vmatprep.subr.mxu0 0.0
  %6930 = vmatpush2.msra.mxu0 0.0
  %6931 = vmatprep.subr.mxu0 0.0
  %6932 = vmatpush2.msra.mxu0 0.0
  %6933 = vmatprep.subr.mxu0 0.0
  %6934 = vmatpush2.msra.mxu0 0.0
  %6935 = vmatprep.subr.mxu0 0.0
  %6936 = vmatpush2.msra.mxu0 0.0
  %6937 = vmatprep.subr.mxu0 0.0
  %6938 = vmatpush2.msra.mxu0 0.0
  %6939 = vmatprep.subr.mxu0 0.0
  %6940 = vmatpush2.msra.mxu0 0.0
  %6941 = vmatprep.subr.mxu0 0.0
  %6942 = vmatpush2.msra.mxu0 0.0
  %6943 = vmatprep.subr.mxu0 0.0
  %6944 = vmatpush2.msra.mxu0 0.0
  %6945 = vmatprep.subr.mxu0 0.0
  %6946 = vmatpush2.msra.mxu0 0.0
  %6947 = vmatprep.subr.mxu0 0.0
  %6948 = vmatpush2.msra.mxu0 0.0
  %6949 = vmatprep.subr.mxu0 0.0
  %6950 = vmatpush2.msra.mxu0 0.0
  %6951 = vmatprep.subr.mxu0 0.0
  %6952 = vmatpush2.msra.mxu0 0.0
  %6953 = vmatprep.subr.mxu0 0.0
  %6954 = vmatpush2.msra.mxu0 0.0
  %6955 = vmatprep.subr.mxu0 0.0
  %6956 = vmatpush2.msra.mxu0 0.0
  %6957 = vmatprep.subr.mxu0 0.0
  %6958 = vmatpush2.msra.mxu0 0.0
  %6959 = vmatprep.subr.mxu0 0.0
  %6960 = vmatpush2.msra.mxu0 0.0
  %6961 = vmatprep.mubr.f32.mxu0 0.0
  %6962 = vmatmul.mubr.f32.gmra.mxu0 %v6883
  %v6963 = vpop.f32.mrf.mxu0
  %v6964 = vadd.f32 1e-05, %v6963
  %v6965 = vpop.f32.mrf.mxu0
  %6966 = vmatprep.mubr.f32.mxu0 0.0
  %6967 = vmatmul.mubr.f32.gmra.mxu0 %v6886
  %v6968 = vpop.f32.mrf.mxu0
  %v6969 = vadd.f32 1e-05, %v6968
  %v6970 = vpop.f32.mrf.mxu0
  %6971 = vmatprep.mubr.f32.mxu0 0.0
  %6972 = vmatmul.mubr.f32.gmra.mxu0 %v6889
  %v6973 = vpop.f32.mrf.mxu0
  %v6974 = vadd.f32 1e-05, %v6973
  %v6975 = vpop.f32.mrf.mxu0
  %6976 = vmatprep.mubr.f32.mxu0 0.0
  %6977 = vmatmul.mubr.f32.gmra.mxu0 %v6892
  %v6978 = vpop.f32.mrf.mxu0
  %v6979 = vadd.f32 1e-05, %v6978
  %v6980 = vpop.f32.mrf.mxu0
  %6981 = vmatprep.mubr.f32.mxu0 0.0
  %6982 = vmatmul.mubr.f32.gmra.mxu0 %v6895
  %v6983 = vpop.f32.mrf.mxu0
  %v6984 = vadd.f32 1e-05, %v6983
  %v6985 = vpop.f32.mrf.mxu0
  %6986 = vdwg.mxu0
  %v6987 = vrsqrt.pop %v6964
  %v6988 = vrsqrt.pop %v6969
  %v6989 = vrsqrt.pop %v6974
  %v6990 = vrsqrt.pop %v6979
  %v6991 = vrsqrt.pop %v6984
  %v6992 = vmul.f32 %v6872, %v6987
  %v6993 = vmul.f32 %v6873, %v6988
  %v6994 = vmul.f32 %v6874, %v6989
  %v6995 = vmul.f32 %v6875, %v6990
  %v6996 = vmul.f32 %v6876, %v6991
  %v6997 = vmul.f32 %v6992, %v2329
  %v6998 = vmul.f32 %v6993, %v2329
  %v6999 = vmul.f32 %v6994, %v2329
  %v7000 = vmul.f32 %v6995, %v2329
  %v7001 = vmul.f32 %v6996, %v2329
  %v7002 = vadd.f32 %v6997, %v2338
  %v7003 = vadd.f32 %v6998, %v2338
  %v7004 = vadd.f32 %v6999, %v2338
  %v7005 = vadd.f32 %v7000, %v2338
  %v7006 = vadd.f32 %v7001, %v2338
  %v7011 = vrot.slane %v647, 2
  %v7012 = vrot.slane %v652, 2
  %v7013 = vsel %vm5918, %v7011, %v7012
  %v7014 = vrot.slane %v657, 2
  %v7015 = vsel %vm5918, %v7012, %v7014
  %v7016 = vrot.slane %v662, 2
  %v7017 = vsel %vm5918, %v7014, %v7016
  %v7018 = vrot.slane %v667, 2
  %v7019 = vsel %vm5918, %v7016, %v7018
  %7024 = vmatprep.subr.mxu0 0.0
  %7025 = vmatpush1.msra.mxu0 0.0
  %7026 = vmatprep.subr.mxu0 0.0
  %7027 = vmatpush1.msra.mxu0 0.0
  %7028 = vmatprep.subr.mxu0 0.0
  %7029 = vmatpush1.msra.mxu0 0.0
  %7030 = vmatprep.subr.mxu0 0.0
  %7031 = vmatpush1.msra.mxu0 0.0
  %7032 = vmatprep.subr.mxu0 0.0
  %7033 = vmatpush1.msra.mxu0 0.0
  %7034 = vmatprep.subr.mxu0 0.0
  %7035 = vmatpush1.msra.mxu0 0.0
  %7036 = vmatprep.subr.mxu0 0.0
  %7037 = vmatpush1.msra.mxu0 0.0
  %7038 = vmatprep.subr.mxu0 0.0
  %7039 = vmatpush1.msra.mxu0 0.0
  %7040 = vmatprep.subr.mxu0 0.0
  %7041 = vmatpush1.msra.mxu0 0.0
  %7042 = vmatprep.subr.mxu0 0.0
  %7043 = vmatpush1.msra.mxu0 0.0
  %7044 = vmatprep.subr.mxu0 0.0
  %7045 = vmatpush1.msra.mxu0 0.0
  %7046 = vmatprep.subr.mxu0 0.0
  %7047 = vmatpush1.msra.mxu0 0.0
  %7048 = vmatprep.subr.mxu0 0.0
  %7049 = vmatpush1.msra.mxu0 %v7019
  %7050 = vmatprep.subr.mxu0 0.0
  %7051 = vmatpush1.msra.mxu0 %v7017
  %7052 = vmatprep.subr.mxu0 0.0
  %7053 = vmatpush1.msra.mxu0 %v7015
  %7054 = vmatprep.subr.mxu0 0.0
  %7055 = vmatpush1.msra.mxu0 %v7013
  %7056 = vmatprep.subr.mxu0 0.0
  %7057 = vmatpush2.msra.mxu0 0.0
  %7058 = vmatprep.subr.mxu0 0.0
  %7059 = vmatpush2.msra.mxu0 0.0
  %7060 = vmatprep.subr.mxu0 0.0
  %7061 = vmatpush2.msra.mxu0 0.0
  %7062 = vmatprep.subr.mxu0 0.0
  %7063 = vmatpush2.msra.mxu0 0.0
  %7064 = vmatprep.subr.mxu0 0.0
  %7065 = vmatpush2.msra.mxu0 0.0
  %7066 = vmatprep.subr.mxu0 0.0
  %7067 = vmatpush2.msra.mxu0 0.0
  %7068 = vmatprep.subr.mxu0 0.0
  %7069 = vmatpush2.msra.mxu0 0.0
  %7070 = vmatprep.subr.mxu0 0.0
  %7071 = vmatpush2.msra.mxu0 0.0
  %7072 = vmatprep.subr.mxu0 0.0
  %7073 = vmatpush2.msra.mxu0 0.0
  %7074 = vmatprep.subr.mxu0 0.0
  %7075 = vmatpush2.msra.mxu0 0.0
  %7076 = vmatprep.subr.mxu0 0.0
  %7077 = vmatpush2.msra.mxu0 0.0
  %7078 = vmatprep.subr.mxu0 0.0
  %7079 = vmatpush2.msra.mxu0 0.0
  %7080 = vmatprep.subr.mxu0 0.0
  %7081 = vmatpush2.msra.mxu0 0.0
  %7082 = vmatprep.subr.mxu0 0.0
  %7083 = vmatpush2.msra.mxu0 0.0
  %7084 = vmatprep.subr.mxu0 0.0
  %7085 = vmatpush2.msra.mxu0 0.0
  %7086 = vmatprep.subr.mxu0 0.0
  %7087 = vmatpush2.msra.mxu0 0.0
  %7088 = vmatprep.mubr.f32.mxu0 0.0
  %7089 = vmatmul.mubr.f32.gmra.mxu0 %v830
  %v7090 = vpop.f32.mrf.mxu0
  %v7091 = vadd.f32 0.0, %v7090
  %v7092 = vpop.f32.mrf.mxu0
  %7093 = vmatprep.mubr.f32.mxu0 0.0
  %7094 = vmatmul.mubr.f32.gmra.mxu0 %v833
  %v7095 = vpop.f32.mrf.mxu0
  %v7096 = vadd.f32 0.0, %v7095
  %v7097 = vpop.f32.mrf.mxu0
  %7098 = vmatprep.mubr.f32.mxu0 0.0
  %7099 = vmatmul.mubr.f32.gmra.mxu0 %v836
  %v7100 = vpop.f32.mrf.mxu0
  %v7101 = vadd.f32 0.0, %v7100
  %v7102 = vpop.f32.mrf.mxu0
  %7103 = vmatprep.mubr.f32.mxu0 0.0
  %7104 = vmatmul.mubr.f32.gmra.mxu0 %v839
  %v7105 = vpop.f32.mrf.mxu0
  %v7106 = vadd.f32 0.0, %v7105
  %v7107 = vpop.f32.mrf.mxu0
  %7108 = vmatprep.mubr.f32.mxu0 0.0
  %7109 = vmatmul.mubr.f32.gmra.mxu0 %v842
  %v7110 = vpop.f32.mrf.mxu0
  %v7111 = vadd.f32 0.0, %v7110
  %v7112 = vpop.f32.mrf.mxu0
  %7113 = vmatprep.mubr.f32.mxu0 0.0
  %7114 = vmatmul.mubr.f32.gmra.mxu0 %v845
  %v7115 = vpop.f32.mrf.mxu0
  %v7116 = vadd.f32 0.0, %v7115
  %v7117 = vpop.f32.mrf.mxu0
  %7118 = vmatprep.mubr.f32.mxu0 0.0
  %7119 = vmatmul.mubr.f32.gmra.mxu0 %v848
  %v7120 = vpop.f32.mrf.mxu0
  %v7121 = vadd.f32 0.0, %v7120
  %v7122 = vpop.f32.mrf.mxu0
  %7123 = vmatprep.mubr.f32.mxu0 0.0
  %7124 = vmatmul.mubr.f32.gmra.mxu0 %v851
  %v7125 = vpop.f32.mrf.mxu0
  %v7126 = vadd.f32 0.0, %v7125
  %v7127 = vpop.f32.mrf.mxu0
  %7128 = vmatprep.mubr.f32.mxu0 0.0
  %7129 = vmatmul.mubr.f32.gmra.mxu0 %v854
  %v7130 = vpop.f32.mrf.mxu0
  %v7131 = vadd.f32 0.0, %v7130
  %v7132 = vpop.f32.mrf.mxu0
  %7133 = vmatprep.mubr.f32.mxu0 0.0
  %7134 = vmatmul.mubr.f32.gmra.mxu0 %v857
  %v7135 = vpop.f32.mrf.mxu0
  %v7136 = vadd.f32 0.0, %v7135
  %v7137 = vpop.f32.mrf.mxu0
  %7138 = vmatprep.mubr.f32.mxu0 0.0
  %7139 = vmatmul.mubr.f32.gmra.mxu0 %v860
  %v7140 = vpop.f32.mrf.mxu0
  %v7141 = vadd.f32 0.0, %v7140
  %v7142 = vpop.f32.mrf.mxu0
  %7143 = vmatprep.mubr.f32.mxu0 0.0
  %7144 = vmatmul.mubr.f32.gmra.mxu0 %v863
  %v7145 = vpop.f32.mrf.mxu0
  %v7146 = vadd.f32 0.0, %v7145
  %v7147 = vpop.f32.mrf.mxu0
  %7148 = vmatprep.mubr.f32.mxu0 0.0
  %7149 = vmatmul.mubr.f32.gmra.mxu0 %v866
  %v7150 = vpop.f32.mrf.mxu0
  %v7151 = vadd.f32 0.0, %v7150
  %v7152 = vpop.f32.mrf.mxu0
  %7153 = vmatprep.mubr.f32.mxu0 0.0
  %7154 = vmatmul.mubr.f32.gmra.mxu0 %v869
  %v7155 = vpop.f32.mrf.mxu0
  %v7156 = vadd.f32 0.0, %v7155
  %v7157 = vpop.f32.mrf.mxu0
  %7158 = vmatprep.mubr.f32.mxu0 0.0
  %7159 = vmatmul.mubr.f32.gmra.mxu0 %v872
  %v7160 = vpop.f32.mrf.mxu0
  %v7161 = vadd.f32 0.0, %v7160
  %v7162 = vpop.f32.mrf.mxu0
  %7163 = vmatprep.mubr.f32.mxu0 0.0
  %7164 = vmatmul.mubr.f32.gmra.mxu0 %v875
  %v7165 = vpop.f32.mrf.mxu0
  %v7166 = vadd.f32 0.0, %v7165
  %v7167 = vpop.f32.mrf.mxu0
  %7168 = vmatprep.mubr.f32.mxu0 0.0
  %7169 = vmatmul.mubr.f32.gmra.mxu0 %v878
  %v7170 = vpop.f32.mrf.mxu0
  %v7171 = vadd.f32 0.0, %v7170
  %v7172 = vpop.f32.mrf.mxu0
  %7173 = vmatprep.mubr.f32.mxu0 0.0
  %7174 = vmatmul.mubr.f32.gmra.mxu0 %v881
  %v7175 = vpop.f32.mrf.mxu0
  %v7176 = vadd.f32 0.0, %v7175
  %v7177 = vpop.f32.mrf.mxu0
  %7178 = vmatprep.mubr.f32.mxu0 0.0
  %7179 = vmatmul.mubr.f32.gmra.mxu0 %v884
  %v7180 = vpop.f32.mrf.mxu0
  %v7181 = vadd.f32 0.0, %v7180
  %v7182 = vpop.f32.mrf.mxu0
  %7183 = vmatprep.mubr.f32.mxu0 0.0
  %7184 = vmatmul.mubr.f32.gmra.mxu0 %v887
  %v7185 = vpop.f32.mrf.mxu0
  %v7186 = vadd.f32 0.0, %v7185
  %v7187 = vpop.f32.mrf.mxu0
  %7188 = vmatprep.mubr.f32.mxu0 0.0
  %7189 = vmatmul.mubr.f32.gmra.mxu0 %v890
  %v7190 = vpop.f32.mrf.mxu0
  %v7191 = vadd.f32 0.0, %v7190
  %v7192 = vpop.f32.mrf.mxu0
  %7193 = vmatprep.mubr.f32.mxu0 0.0
  %7194 = vmatmul.mubr.f32.gmra.mxu0 %v893
  %v7195 = vpop.f32.mrf.mxu0
  %v7196 = vadd.f32 0.0, %v7195
  %v7197 = vpop.f32.mrf.mxu0
  %7198 = vmatprep.mubr.f32.mxu0 0.0
  %7199 = vmatmul.mubr.f32.gmra.mxu0 %v896
  %v7200 = vpop.f32.mrf.mxu0
  %v7201 = vadd.f32 0.0, %v7200
  %v7202 = vpop.f32.mrf.mxu0
  %7203 = vmatprep.mubr.f32.mxu0 0.0
  %7204 = vmatmul.mubr.f32.gmra.mxu0 %v899
  %v7205 = vpop.f32.mrf.mxu0
  %v7206 = vadd.f32 0.0, %v7205
  %v7207 = vpop.f32.mrf.mxu0
  %7208 = vmatprep.mubr.f32.mxu0 0.0
  %7209 = vmatmul.mubr.f32.gmra.mxu0 %v902
  %v7210 = vpop.f32.mrf.mxu0
  %v7211 = vadd.f32 0.0, %v7210
  %v7212 = vpop.f32.mrf.mxu0
  %7213 = vmatprep.mubr.f32.mxu0 0.0
  %7214 = vmatmul.mubr.f32.gmra.mxu0 %v905
  %v7215 = vpop.f32.mrf.mxu0
  %v7216 = vadd.f32 0.0, %v7215
  %v7217 = vpop.f32.mrf.mxu0
  %7218 = vmatprep.mubr.f32.mxu0 0.0
  %7219 = vmatmul.mubr.f32.gmra.mxu0 %v908
  %v7220 = vpop.f32.mrf.mxu0
  %v7221 = vadd.f32 0.0, %v7220
  %v7222 = vpop.f32.mrf.mxu0
  %7223 = vmatprep.mubr.f32.mxu0 0.0
  %7224 = vmatmul.mubr.f32.gmra.mxu0 %v911
  %v7225 = vpop.f32.mrf.mxu0
  %v7226 = vadd.f32 0.0, %v7225
  %v7227 = vpop.f32.mrf.mxu0
  %7228 = vmatprep.mubr.f32.mxu0 0.0
  %7229 = vmatmul.mubr.f32.gmra.mxu0 %v914
  %v7230 = vpop.f32.mrf.mxu0
  %v7231 = vadd.f32 0.0, %v7230
  %v7232 = vpop.f32.mrf.mxu0
  %7233 = vmatprep.mubr.f32.mxu0 0.0
  %7234 = vmatmul.mubr.f32.gmra.mxu0 %v917
  %v7235 = vpop.f32.mrf.mxu0
  %v7236 = vadd.f32 0.0, %v7235
  %v7237 = vpop.f32.mrf.mxu0
  %7238 = vmatprep.mubr.f32.mxu0 0.0
  %7239 = vmatmul.mubr.f32.gmra.mxu0 %v920
  %v7240 = vpop.f32.mrf.mxu0
  %v7241 = vadd.f32 0.0, %v7240
  %v7242 = vpop.f32.mrf.mxu0
  %7243 = vmatprep.mubr.f32.mxu0 0.0
  %7244 = vmatmul.mubr.f32.gmra.mxu0 %v923
  %v7245 = vpop.f32.mrf.mxu0
  %v7246 = vadd.f32 0.0, %v7245
  %v7247 = vpop.f32.mrf.mxu0
  %7248 = vmatprep.mubr.f32.mxu0 0.0
  %7249 = vmatmul.mubr.f32.gmra.mxu0 %v926
  %v7250 = vpop.f32.mrf.mxu0
  %v7251 = vadd.f32 0.0, %v7250
  %v7252 = vpop.f32.mrf.mxu0
  %7253 = vmatprep.mubr.f32.mxu0 0.0
  %7254 = vmatmul.mubr.f32.gmra.mxu0 %v929
  %v7255 = vpop.f32.mrf.mxu0
  %v7256 = vadd.f32 0.0, %v7255
  %v7257 = vpop.f32.mrf.mxu0
  %7258 = vmatprep.mubr.f32.mxu0 0.0
  %7259 = vmatmul.mubr.f32.gmra.mxu0 %v932
  %v7260 = vpop.f32.mrf.mxu0
  %v7261 = vadd.f32 0.0, %v7260
  %v7262 = vpop.f32.mrf.mxu0
  %7263 = vmatprep.mubr.f32.mxu0 0.0
  %7264 = vmatmul.mubr.f32.gmra.mxu0 %v935
  %v7265 = vpop.f32.mrf.mxu0
  %v7266 = vadd.f32 0.0, %v7265
  %v7267 = vpop.f32.mrf.mxu0
  %7268 = vmatprep.mubr.f32.mxu0 0.0
  %7269 = vmatmul.mubr.f32.gmra.mxu0 %v938
  %v7270 = vpop.f32.mrf.mxu0
  %v7271 = vadd.f32 0.0, %v7270
  %v7272 = vpop.f32.mrf.mxu0
  %7273 = vmatprep.mubr.f32.mxu0 0.0
  %7274 = vmatmul.mubr.f32.gmra.mxu0 %v941
  %v7275 = vpop.f32.mrf.mxu0
  %v7276 = vadd.f32 0.0, %v7275
  %v7277 = vpop.f32.mrf.mxu0
  %7278 = vmatprep.mubr.f32.mxu0 0.0
  %7279 = vmatmul.mubr.f32.gmra.mxu0 %v944
  %v7280 = vpop.f32.mrf.mxu0
  %v7281 = vadd.f32 0.0, %v7280
  %v7282 = vpop.f32.mrf.mxu0
  %7283 = vmatprep.mubr.f32.mxu0 0.0
  %7284 = vmatmul.mubr.f32.gmra.mxu0 %v947
  %v7285 = vpop.f32.mrf.mxu0
  %v7286 = vadd.f32 0.0, %v7285
  %v7287 = vpop.f32.mrf.mxu0
  %7288 = vmatprep.mubr.f32.mxu0 0.0
  %7289 = vmatmul.mubr.f32.gmra.mxu0 %v950
  %v7290 = vpop.f32.mrf.mxu0
  %v7291 = vadd.f32 0.0, %v7290
  %v7292 = vpop.f32.mrf.mxu0
  %7293 = vmatprep.mubr.f32.mxu0 0.0
  %7294 = vmatmul.mubr.f32.gmra.mxu0 %v953
  %v7295 = vpop.f32.mrf.mxu0
  %v7296 = vadd.f32 0.0, %v7295
  %v7297 = vpop.f32.mrf.mxu0
  %7298 = vmatprep.mubr.f32.mxu0 0.0
  %7299 = vmatmul.mubr.f32.gmra.mxu0 %v956
  %v7300 = vpop.f32.mrf.mxu0
  %v7301 = vadd.f32 0.0, %v7300
  %v7302 = vpop.f32.mrf.mxu0
  %7303 = vmatprep.mubr.f32.mxu0 0.0
  %7304 = vmatmul.mubr.f32.gmra.mxu0 %v959
  %v7305 = vpop.f32.mrf.mxu0
  %v7306 = vadd.f32 0.0, %v7305
  %v7307 = vpop.f32.mrf.mxu0
  %7308 = vmatprep.mubr.f32.mxu0 0.0
  %7309 = vmatmul.mubr.f32.gmra.mxu0 %v962
  %v7310 = vpop.f32.mrf.mxu0
  %v7311 = vadd.f32 0.0, %v7310
  %v7312 = vpop.f32.mrf.mxu0
  %7313 = vmatprep.mubr.f32.mxu0 0.0
  %7314 = vmatmul.mubr.f32.gmra.mxu0 %v965
  %v7315 = vpop.f32.mrf.mxu0
  %v7316 = vadd.f32 0.0, %v7315
  %v7317 = vpop.f32.mrf.mxu0
  %7318 = vmatprep.mubr.f32.mxu0 0.0
  %7319 = vmatmul.mubr.f32.gmra.mxu0 %v968
  %v7320 = vpop.f32.mrf.mxu0
  %v7321 = vadd.f32 0.0, %v7320
  %v7322 = vpop.f32.mrf.mxu0
  %7323 = vmatprep.mubr.f32.mxu0 0.0
  %7324 = vmatmul.mubr.f32.gmra.mxu0 %v971
  %v7325 = vpop.f32.mrf.mxu0
  %v7326 = vadd.f32 0.0, %v7325
  %v7327 = vpop.f32.mrf.mxu0
  %7328 = vmatprep.mubr.f32.mxu0 0.0
  %7329 = vmatmul.mubr.f32.gmra.mxu0 %v974
  %v7330 = vpop.f32.mrf.mxu0
  %v7331 = vadd.f32 0.0, %v7330
  %v7332 = vpop.f32.mrf.mxu0
  %7333 = vmatprep.mubr.f32.mxu0 0.0
  %7334 = vmatmul.mubr.f32.gmra.mxu0 %v977
  %v7335 = vpop.f32.mrf.mxu0
  %v7336 = vadd.f32 0.0, %v7335
  %v7337 = vpop.f32.mrf.mxu0
  %7338 = vmatprep.mubr.f32.mxu0 0.0
  %7339 = vmatmul.mubr.f32.gmra.mxu0 %v980
  %v7340 = vpop.f32.mrf.mxu0
  %v7341 = vadd.f32 0.0, %v7340
  %v7342 = vpop.f32.mrf.mxu0
  %7343 = vmatprep.mubr.f32.mxu0 0.0
  %7344 = vmatmul.mubr.f32.gmra.mxu0 %v983
  %v7345 = vpop.f32.mrf.mxu0
  %v7346 = vadd.f32 0.0, %v7345
  %v7347 = vpop.f32.mrf.mxu0
  %7348 = vmatprep.mubr.f32.mxu0 0.0
  %7349 = vmatmul.mubr.f32.gmra.mxu0 %v986
  %v7350 = vpop.f32.mrf.mxu0
  %v7351 = vadd.f32 0.0, %v7350
  %v7352 = vpop.f32.mrf.mxu0
  %7353 = vmatprep.mubr.f32.mxu0 0.0
  %7354 = vmatmul.mubr.f32.gmra.mxu0 %v989
  %v7355 = vpop.f32.mrf.mxu0
  %v7356 = vadd.f32 0.0, %v7355
  %v7357 = vpop.f32.mrf.mxu0
  %7358 = vmatprep.mubr.f32.mxu0 0.0
  %7359 = vmatmul.mubr.f32.gmra.mxu0 %v992
  %v7360 = vpop.f32.mrf.mxu0
  %v7361 = vadd.f32 0.0, %v7360
  %v7362 = vpop.f32.mrf.mxu0
  %7363 = vmatprep.mubr.f32.mxu0 0.0
  %7364 = vmatmul.mubr.f32.gmra.mxu0 %v995
  %v7365 = vpop.f32.mrf.mxu0
  %v7366 = vadd.f32 0.0, %v7365
  %v7367 = vpop.f32.mrf.mxu0
  %7368 = vmatprep.mubr.f32.mxu0 0.0
  %7369 = vmatmul.mubr.f32.gmra.mxu0 %v998
  %v7370 = vpop.f32.mrf.mxu0
  %v7371 = vadd.f32 0.0, %v7370
  %v7372 = vpop.f32.mrf.mxu0
  %7373 = vmatprep.mubr.f32.mxu0 0.0
  %7374 = vmatmul.mubr.f32.gmra.mxu0 %v1001
  %v7375 = vpop.f32.mrf.mxu0
  %v7376 = vadd.f32 0.0, %v7375
  %v7377 = vpop.f32.mrf.mxu0
  %7378 = vmatprep.mubr.f32.mxu0 0.0
  %7379 = vmatmul.mubr.f32.gmra.mxu0 %v1004
  %v7380 = vpop.f32.mrf.mxu0
  %v7381 = vadd.f32 0.0, %v7380
  %v7382 = vpop.f32.mrf.mxu0
  %7383 = vmatprep.mubr.f32.mxu0 0.0
  %7384 = vmatmul.mubr.f32.gmra.mxu0 %v1007
  %v7385 = vpop.f32.mrf.mxu0
  %v7386 = vadd.f32 0.0, %v7385
  %v7387 = vpop.f32.mrf.mxu0
  %7388 = vmatprep.mubr.f32.mxu0 0.0
  %7389 = vmatmul.mubr.f32.gmra.mxu0 %v1010
  %v7390 = vpop.f32.mrf.mxu0
  %v7391 = vadd.f32 0.0, %v7390
  %v7392 = vpop.f32.mrf.mxu0
  %7393 = vmatprep.mubr.f32.mxu0 0.0
  %7394 = vmatmul.mubr.f32.gmra.mxu0 %v1013
  %v7395 = vpop.f32.mrf.mxu0
  %v7396 = vadd.f32 0.0, %v7395
  %v7397 = vpop.f32.mrf.mxu0
  %7398 = vmatprep.mubr.f32.mxu0 0.0
  %7399 = vmatmul.mubr.f32.gmra.mxu0 %v1016
  %v7400 = vpop.f32.mrf.mxu0
  %v7401 = vadd.f32 0.0, %v7400
  %v7402 = vpop.f32.mrf.mxu0
  %7403 = vmatprep.mubr.f32.mxu0 0.0
  %7404 = vmatmul.mubr.f32.gmra.mxu0 %v1019
  %v7405 = vpop.f32.mrf.mxu0
  %v7406 = vadd.f32 0.0, %v7405
  %v7407 = vpop.f32.mrf.mxu0
  %7408 = vmatprep.mubr.f32.mxu0 0.0
  %7409 = vmatmul.mubr.f32.gmra.mxu0 %v1022
  %v7410 = vpop.f32.mrf.mxu0
  %v7411 = vadd.f32 0.0, %v7410
  %v7412 = vpop.f32.mrf.mxu0
  %7413 = vmatprep.mubr.f32.mxu0 0.0
  %7414 = vmatmul.mubr.f32.gmra.mxu0 %v1025
  %v7415 = vpop.f32.mrf.mxu0
  %v7416 = vadd.f32 0.0, %v7415
  %v7417 = vpop.f32.mrf.mxu0
  %7418 = vmatprep.mubr.f32.mxu0 0.0
  %7419 = vmatmul.mubr.f32.gmra.mxu0 %v1028
  %v7420 = vpop.f32.mrf.mxu0
  %v7421 = vadd.f32 0.0, %v7420
  %v7422 = vpop.f32.mrf.mxu0
  %7423 = vmatprep.mubr.f32.mxu0 0.0
  %7424 = vmatmul.mubr.f32.gmra.mxu0 %v1031
  %v7425 = vpop.f32.mrf.mxu0
  %v7426 = vadd.f32 0.0, %v7425
  %v7427 = vpop.f32.mrf.mxu0
  %7428 = vmatprep.mubr.f32.mxu0 0.0
  %7429 = vmatmul.mubr.f32.gmra.mxu0 %v1034
  %v7430 = vpop.f32.mrf.mxu0
  %v7431 = vadd.f32 0.0, %v7430
  %v7432 = vpop.f32.mrf.mxu0
  %7433 = vmatprep.mubr.f32.mxu0 0.0
  %7434 = vmatmul.mubr.f32.gmra.mxu0 %v1037
  %v7435 = vpop.f32.mrf.mxu0
  %v7436 = vadd.f32 0.0, %v7435
  %v7437 = vpop.f32.mrf.mxu0
  %7438 = vmatprep.mubr.f32.mxu0 0.0
  %7439 = vmatmul.mubr.f32.gmra.mxu0 %v1040
  %v7440 = vpop.f32.mrf.mxu0
  %v7441 = vadd.f32 0.0, %v7440
  %v7442 = vpop.f32.mrf.mxu0
  %7443 = vmatprep.mubr.f32.mxu0 0.0
  %7444 = vmatmul.mubr.f32.gmra.mxu0 %v1043
  %v7445 = vpop.f32.mrf.mxu0
  %v7446 = vadd.f32 0.0, %v7445
  %v7447 = vpop.f32.mrf.mxu0
  %7448 = vmatprep.mubr.f32.mxu0 0.0
  %7449 = vmatmul.mubr.f32.gmra.mxu0 %v1046
  %v7450 = vpop.f32.mrf.mxu0
  %v7451 = vadd.f32 0.0, %v7450
  %v7452 = vpop.f32.mrf.mxu0
  %7453 = vmatprep.mubr.f32.mxu0 0.0
  %7454 = vmatmul.mubr.f32.gmra.mxu0 %v1049
  %v7455 = vpop.f32.mrf.mxu0
  %v7456 = vadd.f32 0.0, %v7455
  %v7457 = vpop.f32.mrf.mxu0
  %7458 = vmatprep.mubr.f32.mxu0 0.0
  %7459 = vmatmul.mubr.f32.gmra.mxu0 %v1052
  %v7460 = vpop.f32.mrf.mxu0
  %v7461 = vadd.f32 0.0, %v7460
  %v7462 = vpop.f32.mrf.mxu0
  %7463 = vmatprep.mubr.f32.mxu0 0.0
  %7464 = vmatmul.mubr.f32.gmra.mxu0 %v1055
  %v7465 = vpop.f32.mrf.mxu0
  %v7466 = vadd.f32 0.0, %v7465
  %v7467 = vpop.f32.mrf.mxu0
  %7468 = vmatprep.mubr.f32.mxu0 0.0
  %7469 = vmatmul.mubr.f32.gmra.mxu0 %v1058
  %v7470 = vpop.f32.mrf.mxu0
  %v7471 = vadd.f32 0.0, %v7470
  %v7472 = vpop.f32.mrf.mxu0
  %7473 = vmatprep.mubr.f32.mxu0 0.0
  %7474 = vmatmul.mubr.f32.gmra.mxu0 %v1061
  %v7475 = vpop.f32.mrf.mxu0
  %v7476 = vadd.f32 0.0, %v7475
  %v7477 = vpop.f32.mrf.mxu0
  %7478 = vmatprep.mubr.f32.mxu0 0.0
  %7479 = vmatmul.mubr.f32.gmra.mxu0 %v1064
  %v7480 = vpop.f32.mrf.mxu0
  %v7481 = vadd.f32 0.0, %v7480
  %v7482 = vpop.f32.mrf.mxu0
  %7483 = vmatprep.mubr.f32.mxu0 0.0
  %7484 = vmatmul.mubr.f32.gmra.mxu0 %v1067
  %v7485 = vpop.f32.mrf.mxu0
  %v7486 = vadd.f32 0.0, %v7485
  %v7487 = vpop.f32.mrf.mxu0
  %7488 = vmatprep.mubr.f32.mxu0 0.0
  %7489 = vmatmul.mubr.f32.gmra.mxu0 %v1070
  %v7490 = vpop.f32.mrf.mxu0
  %v7491 = vadd.f32 0.0, %v7490
  %v7492 = vpop.f32.mrf.mxu0
  %7493 = vmatprep.mubr.f32.mxu0 0.0
  %7494 = vmatmul.mubr.f32.gmra.mxu0 %v1073
  %v7495 = vpop.f32.mrf.mxu0
  %v7496 = vadd.f32 0.0, %v7495
  %v7497 = vpop.f32.mrf.mxu0
  %7498 = vmatprep.mubr.f32.mxu0 0.0
  %7499 = vmatmul.mubr.f32.gmra.mxu0 %v1076
  %v7500 = vpop.f32.mrf.mxu0
  %v7501 = vadd.f32 0.0, %v7500
  %v7502 = vpop.f32.mrf.mxu0
  %7503 = vmatprep.mubr.f32.mxu0 0.0
  %7504 = vmatmul.mubr.f32.gmra.mxu0 %v1079
  %v7505 = vpop.f32.mrf.mxu0
  %v7506 = vadd.f32 0.0, %v7505
  %v7507 = vpop.f32.mrf.mxu0
  %7508 = vmatprep.mubr.f32.mxu0 0.0
  %7509 = vmatmul.mubr.f32.gmra.mxu0 %v1082
  %v7510 = vpop.f32.mrf.mxu0
  %v7511 = vadd.f32 0.0, %v7510
  %v7512 = vpop.f32.mrf.mxu0
  %7513 = vmatprep.mubr.f32.mxu0 0.0
  %7514 = vmatmul.mubr.f32.gmra.mxu0 %v1085
  %v7515 = vpop.f32.mrf.mxu0
  %v7516 = vadd.f32 0.0, %v7515
  %v7517 = vpop.f32.mrf.mxu0
  %7518 = vmatprep.mubr.f32.mxu0 0.0
  %7519 = vmatmul.mubr.f32.gmra.mxu0 %v1088
  %v7520 = vpop.f32.mrf.mxu0
  %v7521 = vadd.f32 0.0, %v7520
  %v7522 = vpop.f32.mrf.mxu0
  %7523 = vmatprep.mubr.f32.mxu0 0.0
  %7524 = vmatmul.mubr.f32.gmra.mxu0 %v1091
  %v7525 = vpop.f32.mrf.mxu0
  %v7526 = vadd.f32 0.0, %v7525
  %v7527 = vpop.f32.mrf.mxu0
  %7528 = vmatprep.mubr.f32.mxu0 0.0
  %7529 = vmatmul.mubr.f32.gmra.mxu0 %v1094
  %v7530 = vpop.f32.mrf.mxu0
  %v7531 = vadd.f32 0.0, %v7530
  %v7532 = vpop.f32.mrf.mxu0
  %7533 = vmatprep.mubr.f32.mxu0 0.0
  %7534 = vmatmul.mubr.f32.gmra.mxu0 %v1097
  %v7535 = vpop.f32.mrf.mxu0
  %v7536 = vadd.f32 0.0, %v7535
  %v7537 = vpop.f32.mrf.mxu0
  %7538 = vmatprep.mubr.f32.mxu0 0.0
  %7539 = vmatmul.mubr.f32.gmra.mxu0 %v1100
  %v7540 = vpop.f32.mrf.mxu0
  %v7541 = vadd.f32 0.0, %v7540
  %v7542 = vpop.f32.mrf.mxu0
  %7543 = vmatprep.mubr.f32.mxu0 0.0
  %7544 = vmatmul.mubr.f32.gmra.mxu0 %v1103
  %v7545 = vpop.f32.mrf.mxu0
  %v7546 = vadd.f32 0.0, %v7545
  %v7547 = vpop.f32.mrf.mxu0
  %7548 = vmatprep.mubr.f32.mxu0 0.0
  %7549 = vmatmul.mubr.f32.gmra.mxu0 %v1106
  %v7550 = vpop.f32.mrf.mxu0
  %v7551 = vadd.f32 0.0, %v7550
  %v7552 = vpop.f32.mrf.mxu0
  %7553 = vmatprep.mubr.f32.mxu0 0.0
  %7554 = vmatmul.mubr.f32.gmra.mxu0 %v1109
  %v7555 = vpop.f32.mrf.mxu0
  %v7556 = vadd.f32 0.0, %v7555
  %v7557 = vpop.f32.mrf.mxu0
  %7558 = vmatprep.mubr.f32.mxu0 0.0
  %7559 = vmatmul.mubr.f32.gmra.mxu0 %v1112
  %v7560 = vpop.f32.mrf.mxu0
  %v7561 = vadd.f32 0.0, %v7560
  %v7562 = vpop.f32.mrf.mxu0
  %7563 = vmatprep.mubr.f32.mxu0 0.0
  %7564 = vmatmul.mubr.f32.gmra.mxu0 %v1115
  %v7565 = vpop.f32.mrf.mxu0
  %v7566 = vadd.f32 0.0, %v7565
  %v7567 = vpop.f32.mrf.mxu0
  %7568 = vmatprep.mubr.f32.mxu0 0.0
  %7569 = vmatmul.mubr.f32.gmra.mxu0 %v1118
  %v7570 = vpop.f32.mrf.mxu0
  %v7571 = vadd.f32 0.0, %v7570
  %v7572 = vpop.f32.mrf.mxu0
  %7573 = vmatprep.mubr.f32.mxu0 0.0
  %7574 = vmatmul.mubr.f32.gmra.mxu0 %v1121
  %v7575 = vpop.f32.mrf.mxu0
  %v7576 = vadd.f32 0.0, %v7575
  %v7577 = vpop.f32.mrf.mxu0
  %7578 = vmatprep.mubr.f32.mxu0 0.0
  %7579 = vmatmul.mubr.f32.gmra.mxu0 %v1124
  %v7580 = vpop.f32.mrf.mxu0
  %v7581 = vadd.f32 0.0, %v7580
  %v7582 = vpop.f32.mrf.mxu0
  %7583 = vmatprep.mubr.f32.mxu0 0.0
  %7584 = vmatmul.mubr.f32.gmra.mxu0 %v1127
  %v7585 = vpop.f32.mrf.mxu0
  %v7586 = vadd.f32 0.0, %v7585
  %v7587 = vpop.f32.mrf.mxu0
  %7588 = vmatprep.mubr.f32.mxu0 0.0
  %7589 = vmatmul.mubr.f32.gmra.mxu0 %v1130
  %v7590 = vpop.f32.mrf.mxu0
  %v7591 = vadd.f32 0.0, %v7590
  %v7592 = vpop.f32.mrf.mxu0
  %7593 = vmatprep.mubr.f32.mxu0 0.0
  %7594 = vmatmul.mubr.f32.gmra.mxu0 %v1133
  %v7595 = vpop.f32.mrf.mxu0
  %v7596 = vadd.f32 0.0, %v7595
  %v7597 = vpop.f32.mrf.mxu0
  %7598 = vmatprep.mubr.f32.mxu0 0.0
  %7599 = vmatmul.mubr.f32.gmra.mxu0 %v1136
  %v7600 = vpop.f32.mrf.mxu0
  %v7601 = vadd.f32 0.0, %v7600
  %v7602 = vpop.f32.mrf.mxu0
  %7603 = vmatprep.mubr.f32.mxu0 0.0
  %7604 = vmatmul.mubr.f32.gmra.mxu0 %v1139
  %v7605 = vpop.f32.mrf.mxu0
  %v7606 = vadd.f32 0.0, %v7605
  %v7607 = vpop.f32.mrf.mxu0
  %7608 = vmatprep.mubr.f32.mxu0 0.0
  %7609 = vmatmul.mubr.f32.gmra.mxu0 %v1142
  %v7610 = vpop.f32.mrf.mxu0
  %v7611 = vadd.f32 0.0, %v7610
  %v7612 = vpop.f32.mrf.mxu0
  %7613 = vmatprep.mubr.f32.mxu0 0.0
  %7614 = vmatmul.mubr.f32.gmra.mxu0 %v1145
  %v7615 = vpop.f32.mrf.mxu0
  %v7616 = vadd.f32 0.0, %v7615
  %v7617 = vpop.f32.mrf.mxu0
  %7618 = vmatprep.mubr.f32.mxu0 0.0
  %7619 = vmatmul.mubr.f32.gmra.mxu0 %v1148
  %v7620 = vpop.f32.mrf.mxu0
  %v7621 = vadd.f32 0.0, %v7620
  %v7622 = vpop.f32.mrf.mxu0
  %7623 = vmatprep.mubr.f32.mxu0 0.0
  %7624 = vmatmul.mubr.f32.gmra.mxu0 %v1151
  %v7625 = vpop.f32.mrf.mxu0
  %v7626 = vadd.f32 0.0, %v7625
  %v7627 = vpop.f32.mrf.mxu0
  %7628 = vdwg.mxu0
  %v7629 = vmul.f32 %v7091, %v2970
  %v7630 = vmul.f32 %v7096, %v2970
  %v7631 = vmul.f32 %v7101, %v2970
  %v7632 = vmul.f32 %v7106, %v2970
  %v7633 = vadd.f32 %v7629, 0.0
  %v7634 = vadd.f32 %v7630, 0.0
  %v7635 = vadd.f32 %v7631, 0.0
  %v7636 = vadd.f32 %v7632, 0.0
  %v7637 = vmul.f32 %v7111, %v2982
  %v7638 = vmul.f32 %v7116, %v2982
  %v7639 = vmul.f32 %v7121, %v2982
  %v7640 = vmul.f32 %v7126, %v2982
  %v7641 = vadd.f32 %v7633, %v7637
  %v7642 = vadd.f32 %v7634, %v7638
  %v7643 = vadd.f32 %v7635, %v7639
  %v7644 = vadd.f32 %v7636, %v7640
  %v7645 = vmul.f32 %v7131, %v2994
  %v7646 = vmul.f32 %v7136, %v2994
  %v7647 = vmul.f32 %v7141, %v2994
  %v7648 = vmul.f32 %v7146, %v2994
  %v7649 = vadd.f32 %v7641, %v7645
  %v7650 = vadd.f32 %v7642, %v7646
  %v7651 = vadd.f32 %v7643, %v7647
  %v7652 = vadd.f32 %v7644, %v7648
  %v7653 = vmul.f32 %v7151, %v3006
  %v7654 = vmul.f32 %v7156, %v3006
  %v7655 = vmul.f32 %v7161, %v3006
  %v7656 = vmul.f32 %v7166, %v3006
  %v7657 = vadd.f32 %v7649, %v7653
  %v7658 = vadd.f32 %v7650, %v7654
  %v7659 = vadd.f32 %v7651, %v7655
  %v7660 = vadd.f32 %v7652, %v7656
  %v7661 = vmul.f32 %v7171, %v3018
  %v7662 = vmul.f32 %v7176, %v3018
  %v7663 = vmul.f32 %v7181, %v3018
  %v7664 = vmul.f32 %v7186, %v3018
  %v7665 = vadd.f32 %v7657, %v7661
  %v7666 = vadd.f32 %v7658, %v7662
  %v7667 = vadd.f32 %v7659, %v7663
  %v7668 = vadd.f32 %v7660, %v7664
  %v7669 = vmul.f32 %v7191, %v3030
  %v7670 = vmul.f32 %v7196, %v3030
  %v7671 = vmul.f32 %v7201, %v3030
  %v7672 = vmul.f32 %v7206, %v3030
  %v7673 = vadd.f32 %v7665, %v7669
  %v7674 = vadd.f32 %v7666, %v7670
  %v7675 = vadd.f32 %v7667, %v7671
  %v7676 = vadd.f32 %v7668, %v7672
  %v7677 = vmul.f32 %v7211, %v3042
  %v7678 = vmul.f32 %v7216, %v3042
  %v7679 = vmul.f32 %v7221, %v3042
  %v7680 = vmul.f32 %v7226, %v3042
  %v7681 = vadd.f32 %v7673, %v7677
  %v7682 = vadd.f32 %v7674, %v7678
  %v7683 = vadd.f32 %v7675, %v7679
  %v7684 = vadd.f32 %v7676, %v7680
  %v7685 = vmul.f32 %v7231, %v3054
  %v7686 = vmul.f32 %v7236, %v3054
  %v7687 = vmul.f32 %v7241, %v3054
  %v7688 = vmul.f32 %v7246, %v3054
  %v7689 = vadd.f32 %v7681, %v7685
  %v7690 = vadd.f32 %v7682, %v7686
  %v7691 = vadd.f32 %v7683, %v7687
  %v7692 = vadd.f32 %v7684, %v7688
  %v7693 = vmul.f32 %v7251, %v3066
  %v7694 = vmul.f32 %v7256, %v3066
  %v7695 = vmul.f32 %v7261, %v3066
  %v7696 = vmul.f32 %v7266, %v3066
  %v7697 = vadd.f32 %v7689, %v7693
  %v7698 = vadd.f32 %v7690, %v7694
  %v7699 = vadd.f32 %v7691, %v7695
  %v7700 = vadd.f32 %v7692, %v7696
  %v7701 = vmul.f32 %v7271, %v3078
  %v7702 = vmul.f32 %v7276, %v3078
  %v7703 = vmul.f32 %v7281, %v3078
  %v7704 = vmul.f32 %v7286, %v3078
  %v7705 = vadd.f32 %v7697, %v7701
  %v7706 = vadd.f32 %v7698, %v7702
  %v7707 = vadd.f32 %v7699, %v7703
  %v7708 = vadd.f32 %v7700, %v7704
  %v7709 = vmul.f32 %v7291, %v3090
  %v7710 = vmul.f32 %v7296, %v3090
  %v7711 = vmul.f32 %v7301, %v3090
  %v7712 = vmul.f32 %v7306, %v3090
  %v7713 = vadd.f32 %v7705, %v7709
  %v7714 = vadd.f32 %v7706, %v7710
  %v7715 = vadd.f32 %v7707, %v7711
  %v7716 = vadd.f32 %v7708, %v7712
  %v7717 = vmul.f32 %v7311, %v3102
  %v7718 = vmul.f32 %v7316, %v3102
  %v7719 = vmul.f32 %v7321, %v3102
  %v7720 = vmul.f32 %v7326, %v3102
  %v7721 = vadd.f32 %v7713, %v7717
  %v7722 = vadd.f32 %v7714, %v7718
  %v7723 = vadd.f32 %v7715, %v7719
  %v7724 = vadd.f32 %v7716, %v7720
  %v7725 = vmul.f32 %v7331, %v3114
  %v7726 = vmul.f32 %v7336, %v3114
  %v7727 = vmul.f32 %v7341, %v3114
  %v7728 = vmul.f32 %v7346, %v3114
  %v7729 = vadd.f32 %v7721, %v7725
  %v7730 = vadd.f32 %v7722, %v7726
  %v7731 = vadd.f32 %v7723, %v7727
  %v7732 = vadd.f32 %v7724, %v7728
  %v7733 = vmul.f32 %v7351, %v3126
  %v7734 = vmul.f32 %v7356, %v3126
  %v7735 = vmul.f32 %v7361, %v3126
  %v7736 = vmul.f32 %v7366, %v3126
  %v7737 = vadd.f32 %v7729, %v7733
  %v7738 = vadd.f32 %v7730, %v7734
  %v7739 = vadd.f32 %v7731, %v7735
  %v7740 = vadd.f32 %v7732, %v7736
  %v7741 = vmul.f32 %v7371, %v3138
  %v7742 = vmul.f32 %v7376, %v3138
  %v7743 = vmul.f32 %v7381, %v3138
  %v7744 = vmul.f32 %v7386, %v3138
  %v7745 = vadd.f32 %v7737, %v7741
  %v7746 = vadd.f32 %v7738, %v7742
  %v7747 = vadd.f32 %v7739, %v7743
  %v7748 = vadd.f32 %v7740, %v7744
  %v7749 = vmul.f32 %v7391, %v3150
  %v7750 = vmul.f32 %v7396, %v3150
  %v7751 = vmul.f32 %v7401, %v3150
  %v7752 = vmul.f32 %v7406, %v3150
  %v7753 = vadd.f32 %v7745, %v7749
  %v7754 = vadd.f32 %v7746, %v7750
  %v7755 = vadd.f32 %v7747, %v7751
  %v7756 = vadd.f32 %v7748, %v7752
  %v7757 = vmul.f32 %v7411, %v3162
  %v7758 = vmul.f32 %v7416, %v3162
  %v7759 = vmul.f32 %v7421, %v3162
  %v7760 = vmul.f32 %v7426, %v3162
  %v7761 = vadd.f32 %v7753, %v7757
  %v7762 = vadd.f32 %v7754, %v7758
  %v7763 = vadd.f32 %v7755, %v7759
  %v7764 = vadd.f32 %v7756, %v7760
  %v7765 = vmul.f32 %v7431, %v3174
  %v7766 = vmul.f32 %v7436, %v3174
  %v7767 = vmul.f32 %v7441, %v3174
  %v7768 = vmul.f32 %v7446, %v3174
  %v7769 = vadd.f32 %v7761, %v7765
  %v7770 = vadd.f32 %v7762, %v7766
  %v7771 = vadd.f32 %v7763, %v7767
  %v7772 = vadd.f32 %v7764, %v7768
  %v7773 = vmul.f32 %v7451, %v3186
  %v7774 = vmul.f32 %v7456, %v3186
  %v7775 = vmul.f32 %v7461, %v3186
  %v7776 = vmul.f32 %v7466, %v3186
  %v7777 = vadd.f32 %v7769, %v7773
  %v7778 = vadd.f32 %v7770, %v7774
  %v7779 = vadd.f32 %v7771, %v7775
  %v7780 = vadd.f32 %v7772, %v7776
  %v7781 = vmul.f32 %v7471, %v3198
  %v7782 = vmul.f32 %v7476, %v3198
  %v7783 = vmul.f32 %v7481, %v3198
  %v7784 = vmul.f32 %v7486, %v3198
  %v7785 = vadd.f32 %v7777, %v7781
  %v7786 = vadd.f32 %v7778, %v7782
  %v7787 = vadd.f32 %v7779, %v7783
  %v7788 = vadd.f32 %v7780, %v7784
  %v7789 = vmul.f32 %v7491, %v3210
  %v7790 = vmul.f32 %v7496, %v3210
  %v7791 = vmul.f32 %v7501, %v3210
  %v7792 = vmul.f32 %v7506, %v3210
  %v7793 = vadd.f32 %v7785, %v7789
  %v7794 = vadd.f32 %v7786, %v7790
  %v7795 = vadd.f32 %v7787, %v7791
  %v7796 = vadd.f32 %v7788, %v7792
  %v7797 = vmul.f32 %v7511, %v3222
  %v7798 = vmul.f32 %v7516, %v3222
  %v7799 = vmul.f32 %v7521, %v3222
  %v7800 = vmul.f32 %v7526, %v3222
  %v7801 = vadd.f32 %v7793, %v7797
  %v7802 = vadd.f32 %v7794, %v7798
  %v7803 = vadd.f32 %v7795, %v7799
  %v7804 = vadd.f32 %v7796, %v7800
  %v7805 = vmul.f32 %v7531, %v3234
  %v7806 = vmul.f32 %v7536, %v3234
  %v7807 = vmul.f32 %v7541, %v3234
  %v7808 = vmul.f32 %v7546, %v3234
  %v7809 = vadd.f32 %v7801, %v7805
  %v7810 = vadd.f32 %v7802, %v7806
  %v7811 = vadd.f32 %v7803, %v7807
  %v7812 = vadd.f32 %v7804, %v7808
  %v7813 = vmul.f32 %v7551, %v3246
  %v7814 = vmul.f32 %v7556, %v3246
  %v7815 = vmul.f32 %v7561, %v3246
  %v7816 = vmul.f32 %v7566, %v3246
  %v7817 = vadd.f32 %v7809, %v7813
  %v7818 = vadd.f32 %v7810, %v7814
  %v7819 = vadd.f32 %v7811, %v7815
  %v7820 = vadd.f32 %v7812, %v7816
  %v7821 = vmul.f32 %v7571, %v3258
  %v7822 = vmul.f32 %v7576, %v3258
  %v7823 = vmul.f32 %v7581, %v3258
  %v7824 = vmul.f32 %v7586, %v3258
  %v7825 = vadd.f32 %v7817, %v7821
  %v7826 = vadd.f32 %v7818, %v7822
  %v7827 = vadd.f32 %v7819, %v7823
  %v7828 = vadd.f32 %v7820, %v7824
  %v7829 = vmul.f32 %v7591, %v3270
  %v7830 = vmul.f32 %v7596, %v3270
  %v7831 = vmul.f32 %v7601, %v3270
  %v7832 = vmul.f32 %v7606, %v3270
  %v7833 = vadd.f32 %v7825, %v7829
  %v7834 = vadd.f32 %v7826, %v7830
  %v7835 = vadd.f32 %v7827, %v7831
  %v7836 = vadd.f32 %v7828, %v7832
  %v7837 = vmul.f32 %v7611, %v3282
  %v7838 = vmul.f32 %v7616, %v3282
  %v7839 = vmul.f32 %v7621, %v3282
  %v7840 = vmul.f32 %v7626, %v3282
  %v7841 = vadd.f32 %v7833, %v7837
  %v7842 = vadd.f32 %v7834, %v7838
  %v7843 = vadd.f32 %v7835, %v7839
  %v7844 = vadd.f32 %v7836, %v7840
  %v7850 = vrot.slane %v7841, 7
  %v7851 = vrot.slane %v7842, 7
  %v7852 = vsel %vm2086, %v7850, %v7851
  %v7853 = vrot.slane %v7843, 7
  %v7854 = vsel %vm2086, %v7851, %v7853
  %v7855 = vrot.slane %v7844, 7
  %v7856 = vsel %vm2086, %v7853, %v7855
  %v7862 = vsel %vm2086, %v2356, %v7850
  %v7864 = vsel %vm254, %v7862, 0
  %v7866 = vsel %vm254, %v7852, 0
  %v7868 = vsel %vm254, %v7854, 0
  %v7870 = vsel %vm254, %v7856, 0
  %v7872 = vsel %vm254, %v7855, 0
  %7874 = vmatprep.subr.mxu0 0.0
  %7875 = vmatpush1.msra.mxu0 0.0
  %7876 = vmatprep.subr.mxu0 0.0
  %7877 = vmatpush1.msra.mxu0 0.0
  %7878 = vmatprep.subr.mxu0 0.0
  %7879 = vmatpush1.msra.mxu0 0.0
  %7880 = vmatprep.subr.mxu0 0.0
  %7881 = vmatpush1.msra.mxu0 0.0
  %7882 = vmatprep.subr.mxu0 0.0
  %7883 = vmatpush1.msra.mxu0 0.0
  %7884 = vmatprep.subr.mxu0 0.0
  %7885 = vmatpush1.msra.mxu0 0.0
  %7886 = vmatprep.subr.mxu0 0.0
  %7887 = vmatpush1.msra.mxu0 0.0
  %7888 = vmatprep.subr.mxu0 0.0
  %7889 = vmatpush1.msra.mxu0 0.0
  %7890 = vmatprep.subr.mxu0 0.0
  %7891 = vmatpush1.msra.mxu0 0.0
  %7892 = vmatprep.subr.mxu0 0.0
  %7893 = vmatpush1.msra.mxu0 0.0
  %7894 = vmatprep.subr.mxu0 0.0
  %7895 = vmatpush1.msra.mxu0 0.0
  %7896 = vmatprep.subr.mxu0 0.0
  %7897 = vmatpush1.msra.mxu0 0.0
  %7898 = vmatprep.subr.mxu0 0.0
  %7899 = vmatpush1.msra.mxu0 %v179
  %7900 = vmatprep.subr.mxu0 0.0
  %7901 = vmatpush1.msra.mxu0 %v178
  %7902 = vmatprep.subr.mxu0 0.0
  %7903 = vmatpush1.msra.mxu0 %v177
  %7904 = vmatprep.subr.mxu0 0.0
  %7905 = vmatpush1.msra.mxu0 %v176
  %7906 = vmatprep.subr.mxu0 0.0
  %7907 = vmatpush2.msra.mxu0 0.0
  %7908 = vmatprep.subr.mxu0 0.0
  %7909 = vmatpush2.msra.mxu0 0.0
  %7910 = vmatprep.subr.mxu0 0.0
  %7911 = vmatpush2.msra.mxu0 0.0
  %7912 = vmatprep.subr.mxu0 0.0
  %7913 = vmatpush2.msra.mxu0 0.0
  %7914 = vmatprep.subr.mxu0 0.0
  %7915 = vmatpush2.msra.mxu0 0.0
  %7916 = vmatprep.subr.mxu0 0.0
  %7917 = vmatpush2.msra.mxu0 0.0
  %7918 = vmatprep.subr.mxu0 0.0
  %7919 = vmatpush2.msra.mxu0 0.0
  %7920 = vmatprep.subr.mxu0 0.0
  %7921 = vmatpush2.msra.mxu0 0.0
  %7922 = vmatprep.subr.mxu0 0.0
  %7923 = vmatpush2.msra.mxu0 0.0
  %7924 = vmatprep.subr.mxu0 0.0
  %7925 = vmatpush2.msra.mxu0 0.0
  %7926 = vmatprep.subr.mxu0 0.0
  %7927 = vmatpush2.msra.mxu0 0.0
  %7928 = vmatprep.subr.mxu0 0.0
  %7929 = vmatpush2.msra.mxu0 0.0
  %7930 = vmatprep.subr.mxu0 0.0
  %7931 = vmatpush2.msra.mxu0 0.0
  %7932 = vmatprep.subr.mxu0 0.0
  %7933 = vmatpush2.msra.mxu0 0.0
  %7934 = vmatprep.subr.mxu0 0.0
  %7935 = vmatpush2.msra.mxu0 0.0
  %7936 = vmatprep.subr.mxu0 0.0
  %7937 = vmatpush2.msra.mxu0 0.0
  %7938 = vmatprep.mubr.f32.mxu0 0.0
  %7939 = vmatmul.mubr.f32.gmra.mxu0 %v7864
  %v7940 = vpop.f32.mrf.mxu0
  %v7941 = vadd.f32 0.0, %v7940
  %v7942 = vpop.f32.mrf.mxu0
  %7943 = vmatprep.mubr.f32.mxu0 0.0
  %7944 = vmatmul.mubr.f32.gmra.mxu0 %v7866
  %v7945 = vpop.f32.mrf.mxu0
  %v7946 = vadd.f32 0.0, %v7945
  %v7947 = vpop.f32.mrf.mxu0
  %7948 = vmatprep.mubr.f32.mxu0 0.0
  %7949 = vmatmul.mubr.f32.gmra.mxu0 %v7868
  %v7950 = vpop.f32.mrf.mxu0
  %v7951 = vadd.f32 0.0, %v7950
  %v7952 = vpop.f32.mrf.mxu0
  %7953 = vmatprep.mubr.f32.mxu0 0.0
  %7954 = vmatmul.mubr.f32.gmra.mxu0 %v7870
  %v7955 = vpop.f32.mrf.mxu0
  %v7956 = vadd.f32 0.0, %v7955
  %v7957 = vpop.f32.mrf.mxu0
  %7958 = vmatprep.mubr.f32.mxu0 0.0
  %7959 = vmatmul.mubr.f32.gmra.mxu0 %v7872
  %v7960 = vpop.f32.mrf.mxu0
  %v7961 = vadd.f32 0.0, %v7960
  %v7962 = vpop.f32.mrf.mxu0
  %7963 = vdwg.mxu0
  %v7964 = vsub.f32 %v7862, %v7941
  %v7965 = vsub.f32 %v7852, %v7946
  %v7966 = vsub.f32 %v7854, %v7951
  %v7967 = vsub.f32 %v7856, %v7956
  %v7968 = vsub.f32 %v7855, %v7961
  %v7969 = vmul.f32 %v7964, %v7964
  %v7970 = vmul.f32 %v7965, %v7965
  %v7971 = vmul.f32 %v7966, %v7966
  %v7972 = vmul.f32 %v7967, %v7967
  %v7973 = vmul.f32 %v7968, %v7968
  %v7975 = vsel %vm254, %v7969, 0
  %v7978 = vsel %vm254, %v7970, 0
  %v7981 = vsel %vm254, %v7971, 0
  %v7984 = vsel %vm254, %v7972, 0
  %v7987 = vsel %vm254, %v7973, 0
  %7989 = vmatprep.subr.mxu0 0.0
  %7990 = vmatpush1.msra.mxu0 0.0
  %7991 = vmatprep.subr.mxu0 0.0
  %7992 = vmatpush1.msra.mxu0 0.0
  %7993 = vmatprep.subr.mxu0 0.0
  %7994 = vmatpush1.msra.mxu0 0.0
  %7995 = vmatprep.subr.mxu0 0.0
  %7996 = vmatpush1.msra.mxu0 0.0
  %7997 = vmatprep.subr.mxu0 0.0
  %7998 = vmatpush1.msra.mxu0 0.0
  %7999 = vmatprep.subr.mxu0 0.0
  %8000 = vmatpush1.msra.mxu0 0.0
  %8001 = vmatprep.subr.mxu0 0.0
  %8002 = vmatpush1.msra.mxu0 0.0
  %8003 = vmatprep.subr.mxu0 0.0
  %8004 = vmatpush1.msra.mxu0 0.0
  %8005 = vmatprep.subr.mxu0 0.0
  %8006 = vmatpush1.msra.mxu0 0.0
  %8007 = vmatprep.subr.mxu0 0.0
  %8008 = vmatpush1.msra.mxu0 0.0
  %8009 = vmatprep.subr.mxu0 0.0
  %8010 = vmatpush1.msra.mxu0 0.0
  %8011 = vmatprep.subr.mxu0 0.0
  %8012 = vmatpush1.msra.mxu0 0.0
  %8013 = vmatprep.subr.mxu0 0.0
  %8014 = vmatpush1.msra.mxu0 %v179
  %8015 = vmatprep.subr.mxu0 0.0
  %8016 = vmatpush1.msra.mxu0 %v178
  %8017 = vmatprep.subr.mxu0 0.0
  %8018 = vmatpush1.msra.mxu0 %v177
  %8019 = vmatprep.subr.mxu0 0.0
  %8020 = vmatpush1.msra.mxu0 %v176
  %8021 = vmatprep.subr.mxu0 0.0
  %8022 = vmatpush2.msra.mxu0 0.0
  %8023 = vmatprep.subr.mxu0 0.0
  %8024 = vmatpush2.msra.mxu0 0.0
  %8025 = vmatprep.subr.mxu0 0.0
  %8026 = vmatpush2.msra.mxu0 0.0
  %8027 = vmatprep.subr.mxu0 0.0
  %8028 = vmatpush2.msra.mxu0 0.0
  %8029 = vmatprep.subr.mxu0 0.0
  %8030 = vmatpush2.msra.mxu0 0.0
  %8031 = vmatprep.subr.mxu0 0.0
  %8032 = vmatpush2.msra.mxu0 0.0
  %8033 = vmatprep.subr.mxu0 0.0
  %8034 = vmatpush2.msra.mxu0 0.0
  %8035 = vmatprep.subr.mxu0 0.0
  %8036 = vmatpush2.msra.mxu0 0.0
  %8037 = vmatprep.subr.mxu0 0.0
  %8038 = vmatpush2.msra.mxu0 0.0
  %8039 = vmatprep.subr.mxu0 0.0
  %8040 = vmatpush2.msra.mxu0 0.0
  %8041 = vmatprep.subr.mxu0 0.0
  %8042 = vmatpush2.msra.mxu0 0.0
  %8043 = vmatprep.subr.mxu0 0.0
  %8044 = vmatpush2.msra.mxu0 0.0
  %8045 = vmatprep.subr.mxu0 0.0
  %8046 = vmatpush2.msra.mxu0 0.0
  %8047 = vmatprep.subr.mxu0 0.0
  %8048 = vmatpush2.msra.mxu0 0.0
  %8049 = vmatprep.subr.mxu0 0.0
  %8050 = vmatpush2.msra.mxu0 0.0
  %8051 = vmatprep.subr.mxu0 0.0
  %8052 = vmatpush2.msra.mxu0 0.0
  %8053 = vmatprep.mubr.f32.mxu0 0.0
  %8054 = vmatmul.mubr.f32.gmra.mxu0 %v7975
  %v8055 = vpop.f32.mrf.mxu0
  %v8056 = vadd.f32 1e-05, %v8055
  %v8057 = vpop.f32.mrf.mxu0
  %8058 = vmatprep.mubr.f32.mxu0 0.0
  %8059 = vmatmul.mubr.f32.gmra.mxu0 %v7978
  %v8060 = vpop.f32.mrf.mxu0
  %v8061 = vadd.f32 1e-05, %v8060
  %v8062 = vpop.f32.mrf.mxu0
  %8063 = vmatprep.mubr.f32.mxu0 0.0
  %8064 = vmatmul.mubr.f32.gmra.mxu0 %v7981
  %v8065 = vpop.f32.mrf.mxu0
  %v8066 = vadd.f32 1e-05, %v8065
  %v8067 = vpop.f32.mrf.mxu0
  %8068 = vmatprep.mubr.f32.mxu0 0.0
  %8069 = vmatmul.mubr.f32.gmra.mxu0 %v7984
  %v8070 = vpop.f32.mrf.mxu0
  %v8071 = vadd.f32 1e-05, %v8070
  %v8072 = vpop.f32.mrf.mxu0
  %8073 = vmatprep.mubr.f32.mxu0 0.0
  %8074 = vmatmul.mubr.f32.gmra.mxu0 %v7987
  %v8075 = vpop.f32.mrf.mxu0
  %v8076 = vadd.f32 1e-05, %v8075
  %v8077 = vpop.f32.mrf.mxu0
  %8078 = vdwg.mxu0
  %v8079 = vrsqrt.pop %v8056
  %v8080 = vrsqrt.pop %v8061
  %v8081 = vrsqrt.pop %v8066
  %v8082 = vrsqrt.pop %v8071
  %v8083 = vrsqrt.pop %v8076
  %v8084 = vmul.f32 %v7964, %v8079
  %v8085 = vmul.f32 %v7965, %v8080
  %v8086 = vmul.f32 %v7966, %v8081
  %v8087 = vmul.f32 %v7967, %v8082
  %v8088 = vmul.f32 %v7968, %v8083
  %v8089 = vmul.f32 %v8084, %v3537
  %v8090 = vmul.f32 %v8085, %v3537
  %v8091 = vmul.f32 %v8086, %v3537
  %v8092 = vmul.f32 %v8087, %v3537
  %v8093 = vmul.f32 %v8088, %v3537
  %v8094 = vadd.f32 %v8089, %v3546
  %v8095 = vadd.f32 %v8090, %v3546
  %v8096 = vadd.f32 %v8091, %v3546
  %v8097 = vadd.f32 %v8092, %v3546
  %v8098 = vadd.f32 %v8093, %v3546
  %v8103 = vrot.slane %v767, 2
  %v8104 = vrot.slane %v772, 2
  %v8105 = vsel %vm5918, %v8103, %v8104
  %v8106 = vrot.slane %v777, 2
  %v8107 = vsel %vm5918, %v8104, %v8106
  %v8108 = vrot.slane %v782, 2
  %v8109 = vsel %vm5918, %v8106, %v8108
  %v8110 = vrot.slane %v787, 2
  %v8111 = vsel %vm5918, %v8108, %v8110
  %8116 = vmatprep.subr.mxu0 0.0
  %8117 = vmatpush1.msra.mxu0 0.0
  %8118 = vmatprep.subr.mxu0 0.0
  %8119 = vmatpush1.msra.mxu0 0.0
  %8120 = vmatprep.subr.mxu0 0.0
  %8121 = vmatpush1.msra.mxu0 0.0
  %8122 = vmatprep.subr.mxu0 0.0
  %8123 = vmatpush1.msra.mxu0 0.0
  %8124 = vmatprep.subr.mxu0 0.0
  %8125 = vmatpush1.msra.mxu0 0.0
  %8126 = vmatprep.subr.mxu0 0.0
  %8127 = vmatpush1.msra.mxu0 0.0
  %8128 = vmatprep.subr.mxu0 0.0
  %8129 = vmatpush1.msra.mxu0 0.0
  %8130 = vmatprep.subr.mxu0 0.0
  %8131 = vmatpush1.msra.mxu0 0.0
  %8132 = vmatprep.subr.mxu0 0.0
  %8133 = vmatpush1.msra.mxu0 0.0
  %8134 = vmatprep.subr.mxu0 0.0
  %8135 = vmatpush1.msra.mxu0 0.0
  %8136 = vmatprep.subr.mxu0 0.0
  %8137 = vmatpush1.msra.mxu0 0.0
  %8138 = vmatprep.subr.mxu0 0.0
  %8139 = vmatpush1.msra.mxu0 0.0
  %8140 = vmatprep.subr.mxu0 0.0
  %8141 = vmatpush1.msra.mxu0 %v8111
  %8142 = vmatprep.subr.mxu0 0.0
  %8143 = vmatpush1.msra.mxu0 %v8109
  %8144 = vmatprep.subr.mxu0 0.0
  %8145 = vmatpush1.msra.mxu0 %v8107
  %8146 = vmatprep.subr.mxu0 0.0
  %8147 = vmatpush1.msra.mxu0 %v8105
  %8148 = vmatprep.subr.mxu0 0.0
  %8149 = vmatpush2.msra.mxu0 0.0
  %8150 = vmatprep.subr.mxu0 0.0
  %8151 = vmatpush2.msra.mxu0 0.0
  %8152 = vmatprep.subr.mxu0 0.0
  %8153 = vmatpush2.msra.mxu0 0.0
  %8154 = vmatprep.subr.mxu0 0.0
  %8155 = vmatpush2.msra.mxu0 0.0
  %8156 = vmatprep.subr.mxu0 0.0
  %8157 = vmatpush2.msra.mxu0 0.0
  %8158 = vmatprep.subr.mxu0 0.0
  %8159 = vmatpush2.msra.mxu0 0.0
  %8160 = vmatprep.subr.mxu0 0.0
  %8161 = vmatpush2.msra.mxu0 0.0
  %8162 = vmatprep.subr.mxu0 0.0
  %8163 = vmatpush2.msra.mxu0 0.0
  %8164 = vmatprep.subr.mxu0 0.0
  %8165 = vmatpush2.msra.mxu0 0.0
  %8166 = vmatprep.subr.mxu0 0.0
  %8167 = vmatpush2.msra.mxu0 0.0
  %8168 = vmatprep.subr.mxu0 0.0
  %8169 = vmatpush2.msra.mxu0 0.0
  %8170 = vmatprep.subr.mxu0 0.0
  %8171 = vmatpush2.msra.mxu0 0.0
  %8172 = vmatprep.subr.mxu0 0.0
  %8173 = vmatpush2.msra.mxu0 0.0
  %8174 = vmatprep.subr.mxu0 0.0
  %8175 = vmatpush2.msra.mxu0 0.0
  %8176 = vmatprep.subr.mxu0 0.0
  %8177 = vmatpush2.msra.mxu0 0.0
  %8178 = vmatprep.subr.mxu0 0.0
  %8179 = vmatpush2.msra.mxu0 0.0
  %8180 = vmatprep.mubr.f32.mxu0 0.0
  %8181 = vmatmul.mubr.f32.gmra.mxu0 %v830
  %v8182 = vpop.f32.mrf.mxu0
  %v8183 = vadd.f32 0.0, %v8182
  %v8184 = vpop.f32.mrf.mxu0
  %8185 = vmatprep.mubr.f32.mxu0 0.0
  %8186 = vmatmul.mubr.f32.gmra.mxu0 %v833
  %v8187 = vpop.f32.mrf.mxu0
  %v8188 = vadd.f32 0.0, %v8187
  %v8189 = vpop.f32.mrf.mxu0
  %8190 = vmatprep.mubr.f32.mxu0 0.0
  %8191 = vmatmul.mubr.f32.gmra.mxu0 %v836
  %v8192 = vpop.f32.mrf.mxu0
  %v8193 = vadd.f32 0.0, %v8192
  %v8194 = vpop.f32.mrf.mxu0
  %8195 = vmatprep.mubr.f32.mxu0 0.0
  %8196 = vmatmul.mubr.f32.gmra.mxu0 %v839
  %v8197 = vpop.f32.mrf.mxu0
  %v8198 = vadd.f32 0.0, %v8197
  %v8199 = vpop.f32.mrf.mxu0
  %8200 = vmatprep.mubr.f32.mxu0 0.0
  %8201 = vmatmul.mubr.f32.gmra.mxu0 %v842
  %v8202 = vpop.f32.mrf.mxu0
  %v8203 = vadd.f32 0.0, %v8202
  %v8204 = vpop.f32.mrf.mxu0
  %8205 = vmatprep.mubr.f32.mxu0 0.0
  %8206 = vmatmul.mubr.f32.gmra.mxu0 %v845
  %v8207 = vpop.f32.mrf.mxu0
  %v8208 = vadd.f32 0.0, %v8207
  %v8209 = vpop.f32.mrf.mxu0
  %8210 = vmatprep.mubr.f32.mxu0 0.0
  %8211 = vmatmul.mubr.f32.gmra.mxu0 %v848
  %v8212 = vpop.f32.mrf.mxu0
  %v8213 = vadd.f32 0.0, %v8212
  %v8214 = vpop.f32.mrf.mxu0
  %8215 = vmatprep.mubr.f32.mxu0 0.0
  %8216 = vmatmul.mubr.f32.gmra.mxu0 %v851
  %v8217 = vpop.f32.mrf.mxu0
  %v8218 = vadd.f32 0.0, %v8217
  %v8219 = vpop.f32.mrf.mxu0
  %8220 = vmatprep.mubr.f32.mxu0 0.0
  %8221 = vmatmul.mubr.f32.gmra.mxu0 %v854
  %v8222 = vpop.f32.mrf.mxu0
  %v8223 = vadd.f32 0.0, %v8222
  %v8224 = vpop.f32.mrf.mxu0
  %8225 = vmatprep.mubr.f32.mxu0 0.0
  %8226 = vmatmul.mubr.f32.gmra.mxu0 %v857
  %v8227 = vpop.f32.mrf.mxu0
  %v8228 = vadd.f32 0.0, %v8227
  %v8229 = vpop.f32.mrf.mxu0
  %8230 = vmatprep.mubr.f32.mxu0 0.0
  %8231 = vmatmul.mubr.f32.gmra.mxu0 %v860
  %v8232 = vpop.f32.mrf.mxu0
  %v8233 = vadd.f32 0.0, %v8232
  %v8234 = vpop.f32.mrf.mxu0
  %8235 = vmatprep.mubr.f32.mxu0 0.0
  %8236 = vmatmul.mubr.f32.gmra.mxu0 %v863
  %v8237 = vpop.f32.mrf.mxu0
  %v8238 = vadd.f32 0.0, %v8237
  %v8239 = vpop.f32.mrf.mxu0
  %8240 = vmatprep.mubr.f32.mxu0 0.0
  %8241 = vmatmul.mubr.f32.gmra.mxu0 %v866
  %v8242 = vpop.f32.mrf.mxu0
  %v8243 = vadd.f32 0.0, %v8242
  %v8244 = vpop.f32.mrf.mxu0
  %8245 = vmatprep.mubr.f32.mxu0 0.0
  %8246 = vmatmul.mubr.f32.gmra.mxu0 %v869
  %v8247 = vpop.f32.mrf.mxu0
  %v8248 = vadd.f32 0.0, %v8247
  %v8249 = vpop.f32.mrf.mxu0
  %8250 = vmatprep.mubr.f32.mxu0 0.0
  %8251 = vmatmul.mubr.f32.gmra.mxu0 %v872
  %v8252 = vpop.f32.mrf.mxu0
  %v8253 = vadd.f32 0.0, %v8252
  %v8254 = vpop.f32.mrf.mxu0
  %8255 = vmatprep.mubr.f32.mxu0 0.0
  %8256 = vmatmul.mubr.f32.gmra.mxu0 %v875
  %v8257 = vpop.f32.mrf.mxu0
  %v8258 = vadd.f32 0.0, %v8257
  %v8259 = vpop.f32.mrf.mxu0
  %8260 = vmatprep.mubr.f32.mxu0 0.0
  %8261 = vmatmul.mubr.f32.gmra.mxu0 %v878
  %v8262 = vpop.f32.mrf.mxu0
  %v8263 = vadd.f32 0.0, %v8262
  %v8264 = vpop.f32.mrf.mxu0
  %8265 = vmatprep.mubr.f32.mxu0 0.0
  %8266 = vmatmul.mubr.f32.gmra.mxu0 %v881
  %v8267 = vpop.f32.mrf.mxu0
  %v8268 = vadd.f32 0.0, %v8267
  %v8269 = vpop.f32.mrf.mxu0
  %8270 = vmatprep.mubr.f32.mxu0 0.0
  %8271 = vmatmul.mubr.f32.gmra.mxu0 %v884
  %v8272 = vpop.f32.mrf.mxu0
  %v8273 = vadd.f32 0.0, %v8272
  %v8274 = vpop.f32.mrf.mxu0
  %8275 = vmatprep.mubr.f32.mxu0 0.0
  %8276 = vmatmul.mubr.f32.gmra.mxu0 %v887
  %v8277 = vpop.f32.mrf.mxu0
  %v8278 = vadd.f32 0.0, %v8277
  %v8279 = vpop.f32.mrf.mxu0
  %8280 = vmatprep.mubr.f32.mxu0 0.0
  %8281 = vmatmul.mubr.f32.gmra.mxu0 %v890
  %v8282 = vpop.f32.mrf.mxu0
  %v8283 = vadd.f32 0.0, %v8282
  %v8284 = vpop.f32.mrf.mxu0
  %8285 = vmatprep.mubr.f32.mxu0 0.0
  %8286 = vmatmul.mubr.f32.gmra.mxu0 %v893
  %v8287 = vpop.f32.mrf.mxu0
  %v8288 = vadd.f32 0.0, %v8287
  %v8289 = vpop.f32.mrf.mxu0
  %8290 = vmatprep.mubr.f32.mxu0 0.0
  %8291 = vmatmul.mubr.f32.gmra.mxu0 %v896
  %v8292 = vpop.f32.mrf.mxu0
  %v8293 = vadd.f32 0.0, %v8292
  %v8294 = vpop.f32.mrf.mxu0
  %8295 = vmatprep.mubr.f32.mxu0 0.0
  %8296 = vmatmul.mubr.f32.gmra.mxu0 %v899
  %v8297 = vpop.f32.mrf.mxu0
  %v8298 = vadd.f32 0.0, %v8297
  %v8299 = vpop.f32.mrf.mxu0
  %8300 = vmatprep.mubr.f32.mxu0 0.0
  %8301 = vmatmul.mubr.f32.gmra.mxu0 %v902
  %v8302 = vpop.f32.mrf.mxu0
  %v8303 = vadd.f32 0.0, %v8302
  %v8304 = vpop.f32.mrf.mxu0
  %8305 = vmatprep.mubr.f32.mxu0 0.0
  %8306 = vmatmul.mubr.f32.gmra.mxu0 %v905
  %v8307 = vpop.f32.mrf.mxu0
  %v8308 = vadd.f32 0.0, %v8307
  %v8309 = vpop.f32.mrf.mxu0
  %8310 = vmatprep.mubr.f32.mxu0 0.0
  %8311 = vmatmul.mubr.f32.gmra.mxu0 %v908
  %v8312 = vpop.f32.mrf.mxu0
  %v8313 = vadd.f32 0.0, %v8312
  %v8314 = vpop.f32.mrf.mxu0
  %8315 = vmatprep.mubr.f32.mxu0 0.0
  %8316 = vmatmul.mubr.f32.gmra.mxu0 %v911
  %v8317 = vpop.f32.mrf.mxu0
  %v8318 = vadd.f32 0.0, %v8317
  %v8319 = vpop.f32.mrf.mxu0
  %8320 = vmatprep.mubr.f32.mxu0 0.0
  %8321 = vmatmul.mubr.f32.gmra.mxu0 %v914
  %v8322 = vpop.f32.mrf.mxu0
  %v8323 = vadd.f32 0.0, %v8322
  %v8324 = vpop.f32.mrf.mxu0
  %8325 = vmatprep.mubr.f32.mxu0 0.0
  %8326 = vmatmul.mubr.f32.gmra.mxu0 %v917
  %v8327 = vpop.f32.mrf.mxu0
  %v8328 = vadd.f32 0.0, %v8327
  %v8329 = vpop.f32.mrf.mxu0
  %8330 = vmatprep.mubr.f32.mxu0 0.0
  %8331 = vmatmul.mubr.f32.gmra.mxu0 %v920
  %v8332 = vpop.f32.mrf.mxu0
  %v8333 = vadd.f32 0.0, %v8332
  %v8334 = vpop.f32.mrf.mxu0
  %8335 = vmatprep.mubr.f32.mxu0 0.0
  %8336 = vmatmul.mubr.f32.gmra.mxu0 %v923
  %v8337 = vpop.f32.mrf.mxu0
  %v8338 = vadd.f32 0.0, %v8337
  %v8339 = vpop.f32.mrf.mxu0
  %8340 = vmatprep.mubr.f32.mxu0 0.0
  %8341 = vmatmul.mubr.f32.gmra.mxu0 %v926
  %v8342 = vpop.f32.mrf.mxu0
  %v8343 = vadd.f32 0.0, %v8342
  %v8344 = vpop.f32.mrf.mxu0
  %8345 = vmatprep.mubr.f32.mxu0 0.0
  %8346 = vmatmul.mubr.f32.gmra.mxu0 %v929
  %v8347 = vpop.f32.mrf.mxu0
  %v8348 = vadd.f32 0.0, %v8347
  %v8349 = vpop.f32.mrf.mxu0
  %8350 = vmatprep.mubr.f32.mxu0 0.0
  %8351 = vmatmul.mubr.f32.gmra.mxu0 %v932
  %v8352 = vpop.f32.mrf.mxu0
  %v8353 = vadd.f32 0.0, %v8352
  %v8354 = vpop.f32.mrf.mxu0
  %8355 = vmatprep.mubr.f32.mxu0 0.0
  %8356 = vmatmul.mubr.f32.gmra.mxu0 %v935
  %v8357 = vpop.f32.mrf.mxu0
  %v8358 = vadd.f32 0.0, %v8357
  %v8359 = vpop.f32.mrf.mxu0
  %8360 = vmatprep.mubr.f32.mxu0 0.0
  %8361 = vmatmul.mubr.f32.gmra.mxu0 %v938
  %v8362 = vpop.f32.mrf.mxu0
  %v8363 = vadd.f32 0.0, %v8362
  %v8364 = vpop.f32.mrf.mxu0
  %8365 = vmatprep.mubr.f32.mxu0 0.0
  %8366 = vmatmul.mubr.f32.gmra.mxu0 %v941
  %v8367 = vpop.f32.mrf.mxu0
  %v8368 = vadd.f32 0.0, %v8367
  %v8369 = vpop.f32.mrf.mxu0
  %8370 = vmatprep.mubr.f32.mxu0 0.0
  %8371 = vmatmul.mubr.f32.gmra.mxu0 %v944
  %v8372 = vpop.f32.mrf.mxu0
  %v8373 = vadd.f32 0.0, %v8372
  %v8374 = vpop.f32.mrf.mxu0
  %8375 = vmatprep.mubr.f32.mxu0 0.0
  %8376 = vmatmul.mubr.f32.gmra.mxu0 %v947
  %v8377 = vpop.f32.mrf.mxu0
  %v8378 = vadd.f32 0.0, %v8377
  %v8379 = vpop.f32.mrf.mxu0
  %8380 = vmatprep.mubr.f32.mxu0 0.0
  %8381 = vmatmul.mubr.f32.gmra.mxu0 %v950
  %v8382 = vpop.f32.mrf.mxu0
  %v8383 = vadd.f32 0.0, %v8382
  %v8384 = vpop.f32.mrf.mxu0
  %8385 = vmatprep.mubr.f32.mxu0 0.0
  %8386 = vmatmul.mubr.f32.gmra.mxu0 %v953
  %v8387 = vpop.f32.mrf.mxu0
  %v8388 = vadd.f32 0.0, %v8387
  %v8389 = vpop.f32.mrf.mxu0
  %8390 = vmatprep.mubr.f32.mxu0 0.0
  %8391 = vmatmul.mubr.f32.gmra.mxu0 %v956
  %v8392 = vpop.f32.mrf.mxu0
  %v8393 = vadd.f32 0.0, %v8392
  %v8394 = vpop.f32.mrf.mxu0
  %8395 = vmatprep.mubr.f32.mxu0 0.0
  %8396 = vmatmul.mubr.f32.gmra.mxu0 %v959
  %v8397 = vpop.f32.mrf.mxu0
  %v8398 = vadd.f32 0.0, %v8397
  %v8399 = vpop.f32.mrf.mxu0
  %8400 = vmatprep.mubr.f32.mxu0 0.0
  %8401 = vmatmul.mubr.f32.gmra.mxu0 %v962
  %v8402 = vpop.f32.mrf.mxu0
  %v8403 = vadd.f32 0.0, %v8402
  %v8404 = vpop.f32.mrf.mxu0
  %8405 = vmatprep.mubr.f32.mxu0 0.0
  %8406 = vmatmul.mubr.f32.gmra.mxu0 %v965
  %v8407 = vpop.f32.mrf.mxu0
  %v8408 = vadd.f32 0.0, %v8407
  %v8409 = vpop.f32.mrf.mxu0
  %8410 = vmatprep.mubr.f32.mxu0 0.0
  %8411 = vmatmul.mubr.f32.gmra.mxu0 %v968
  %v8412 = vpop.f32.mrf.mxu0
  %v8413 = vadd.f32 0.0, %v8412
  %v8414 = vpop.f32.mrf.mxu0
  %8415 = vmatprep.mubr.f32.mxu0 0.0
  %8416 = vmatmul.mubr.f32.gmra.mxu0 %v971
  %v8417 = vpop.f32.mrf.mxu0
  %v8418 = vadd.f32 0.0, %v8417
  %v8419 = vpop.f32.mrf.mxu0
  %8420 = vmatprep.mubr.f32.mxu0 0.0
  %8421 = vmatmul.mubr.f32.gmra.mxu0 %v974
  %v8422 = vpop.f32.mrf.mxu0
  %v8423 = vadd.f32 0.0, %v8422
  %v8424 = vpop.f32.mrf.mxu0
  %8425 = vmatprep.mubr.f32.mxu0 0.0
  %8426 = vmatmul.mubr.f32.gmra.mxu0 %v977
  %v8427 = vpop.f32.mrf.mxu0
  %v8428 = vadd.f32 0.0, %v8427
  %v8429 = vpop.f32.mrf.mxu0
  %8430 = vmatprep.mubr.f32.mxu0 0.0
  %8431 = vmatmul.mubr.f32.gmra.mxu0 %v980
  %v8432 = vpop.f32.mrf.mxu0
  %v8433 = vadd.f32 0.0, %v8432
  %v8434 = vpop.f32.mrf.mxu0
  %8435 = vmatprep.mubr.f32.mxu0 0.0
  %8436 = vmatmul.mubr.f32.gmra.mxu0 %v983
  %v8437 = vpop.f32.mrf.mxu0
  %v8438 = vadd.f32 0.0, %v8437
  %v8439 = vpop.f32.mrf.mxu0
  %8440 = vmatprep.mubr.f32.mxu0 0.0
  %8441 = vmatmul.mubr.f32.gmra.mxu0 %v986
  %v8442 = vpop.f32.mrf.mxu0
  %v8443 = vadd.f32 0.0, %v8442
  %v8444 = vpop.f32.mrf.mxu0
  %8445 = vmatprep.mubr.f32.mxu0 0.0
  %8446 = vmatmul.mubr.f32.gmra.mxu0 %v989
  %v8447 = vpop.f32.mrf.mxu0
  %v8448 = vadd.f32 0.0, %v8447
  %v8449 = vpop.f32.mrf.mxu0
  %8450 = vmatprep.mubr.f32.mxu0 0.0
  %8451 = vmatmul.mubr.f32.gmra.mxu0 %v992
  %v8452 = vpop.f32.mrf.mxu0
  %v8453 = vadd.f32 0.0, %v8452
  %v8454 = vpop.f32.mrf.mxu0
  %8455 = vmatprep.mubr.f32.mxu0 0.0
  %8456 = vmatmul.mubr.f32.gmra.mxu0 %v995
  %v8457 = vpop.f32.mrf.mxu0
  %v8458 = vadd.f32 0.0, %v8457
  %v8459 = vpop.f32.mrf.mxu0
  %8460 = vmatprep.mubr.f32.mxu0 0.0
  %8461 = vmatmul.mubr.f32.gmra.mxu0 %v998
  %v8462 = vpop.f32.mrf.mxu0
  %v8463 = vadd.f32 0.0, %v8462
  %v8464 = vpop.f32.mrf.mxu0
  %8465 = vmatprep.mubr.f32.mxu0 0.0
  %8466 = vmatmul.mubr.f32.gmra.mxu0 %v1001
  %v8467 = vpop.f32.mrf.mxu0
  %v8468 = vadd.f32 0.0, %v8467
  %v8469 = vpop.f32.mrf.mxu0
  %8470 = vmatprep.mubr.f32.mxu0 0.0
  %8471 = vmatmul.mubr.f32.gmra.mxu0 %v1004
  %v8472 = vpop.f32.mrf.mxu0
  %v8473 = vadd.f32 0.0, %v8472
  %v8474 = vpop.f32.mrf.mxu0
  %8475 = vmatprep.mubr.f32.mxu0 0.0
  %8476 = vmatmul.mubr.f32.gmra.mxu0 %v1007
  %v8477 = vpop.f32.mrf.mxu0
  %v8478 = vadd.f32 0.0, %v8477
  %v8479 = vpop.f32.mrf.mxu0
  %8480 = vmatprep.mubr.f32.mxu0 0.0
  %8481 = vmatmul.mubr.f32.gmra.mxu0 %v1010
  %v8482 = vpop.f32.mrf.mxu0
  %v8483 = vadd.f32 0.0, %v8482
  %v8484 = vpop.f32.mrf.mxu0
  %8485 = vmatprep.mubr.f32.mxu0 0.0
  %8486 = vmatmul.mubr.f32.gmra.mxu0 %v1013
  %v8487 = vpop.f32.mrf.mxu0
  %v8488 = vadd.f32 0.0, %v8487
  %v8489 = vpop.f32.mrf.mxu0
  %8490 = vmatprep.mubr.f32.mxu0 0.0
  %8491 = vmatmul.mubr.f32.gmra.mxu0 %v1016
  %v8492 = vpop.f32.mrf.mxu0
  %v8493 = vadd.f32 0.0, %v8492
  %v8494 = vpop.f32.mrf.mxu0
  %8495 = vmatprep.mubr.f32.mxu0 0.0
  %8496 = vmatmul.mubr.f32.gmra.mxu0 %v1019
  %v8497 = vpop.f32.mrf.mxu0
  %v8498 = vadd.f32 0.0, %v8497
  %v8499 = vpop.f32.mrf.mxu0
  %8500 = vmatprep.mubr.f32.mxu0 0.0
  %8501 = vmatmul.mubr.f32.gmra.mxu0 %v1022
  %v8502 = vpop.f32.mrf.mxu0
  %v8503 = vadd.f32 0.0, %v8502
  %v8504 = vpop.f32.mrf.mxu0
  %8505 = vmatprep.mubr.f32.mxu0 0.0
  %8506 = vmatmul.mubr.f32.gmra.mxu0 %v1025
  %v8507 = vpop.f32.mrf.mxu0
  %v8508 = vadd.f32 0.0, %v8507
  %v8509 = vpop.f32.mrf.mxu0
  %8510 = vmatprep.mubr.f32.mxu0 0.0
  %8511 = vmatmul.mubr.f32.gmra.mxu0 %v1028
  %v8512 = vpop.f32.mrf.mxu0
  %v8513 = vadd.f32 0.0, %v8512
  %v8514 = vpop.f32.mrf.mxu0
  %8515 = vmatprep.mubr.f32.mxu0 0.0
  %8516 = vmatmul.mubr.f32.gmra.mxu0 %v1031
  %v8517 = vpop.f32.mrf.mxu0
  %v8518 = vadd.f32 0.0, %v8517
  %v8519 = vpop.f32.mrf.mxu0
  %8520 = vmatprep.mubr.f32.mxu0 0.0
  %8521 = vmatmul.mubr.f32.gmra.mxu0 %v1034
  %v8522 = vpop.f32.mrf.mxu0
  %v8523 = vadd.f32 0.0, %v8522
  %v8524 = vpop.f32.mrf.mxu0
  %8525 = vmatprep.mubr.f32.mxu0 0.0
  %8526 = vmatmul.mubr.f32.gmra.mxu0 %v1037
  %v8527 = vpop.f32.mrf.mxu0
  %v8528 = vadd.f32 0.0, %v8527
  %v8529 = vpop.f32.mrf.mxu0
  %8530 = vmatprep.mubr.f32.mxu0 0.0
  %8531 = vmatmul.mubr.f32.gmra.mxu0 %v1040
  %v8532 = vpop.f32.mrf.mxu0
  %v8533 = vadd.f32 0.0, %v8532
  %v8534 = vpop.f32.mrf.mxu0
  %8535 = vmatprep.mubr.f32.mxu0 0.0
  %8536 = vmatmul.mubr.f32.gmra.mxu0 %v1043
  %v8537 = vpop.f32.mrf.mxu0
  %v8538 = vadd.f32 0.0, %v8537
  %v8539 = vpop.f32.mrf.mxu0
  %8540 = vmatprep.mubr.f32.mxu0 0.0
  %8541 = vmatmul.mubr.f32.gmra.mxu0 %v1046
  %v8542 = vpop.f32.mrf.mxu0
  %v8543 = vadd.f32 0.0, %v8542
  %v8544 = vpop.f32.mrf.mxu0
  %8545 = vmatprep.mubr.f32.mxu0 0.0
  %8546 = vmatmul.mubr.f32.gmra.mxu0 %v1049
  %v8547 = vpop.f32.mrf.mxu0
  %v8548 = vadd.f32 0.0, %v8547
  %v8549 = vpop.f32.mrf.mxu0
  %8550 = vmatprep.mubr.f32.mxu0 0.0
  %8551 = vmatmul.mubr.f32.gmra.mxu0 %v1052
  %v8552 = vpop.f32.mrf.mxu0
  %v8553 = vadd.f32 0.0, %v8552
  %v8554 = vpop.f32.mrf.mxu0
  %8555 = vmatprep.mubr.f32.mxu0 0.0
  %8556 = vmatmul.mubr.f32.gmra.mxu0 %v1055
  %v8557 = vpop.f32.mrf.mxu0
  %v8558 = vadd.f32 0.0, %v8557
  %v8559 = vpop.f32.mrf.mxu0
  %8560 = vmatprep.mubr.f32.mxu0 0.0
  %8561 = vmatmul.mubr.f32.gmra.mxu0 %v1058
  %v8562 = vpop.f32.mrf.mxu0
  %v8563 = vadd.f32 0.0, %v8562
  %v8564 = vpop.f32.mrf.mxu0
  %8565 = vmatprep.mubr.f32.mxu0 0.0
  %8566 = vmatmul.mubr.f32.gmra.mxu0 %v1061
  %v8567 = vpop.f32.mrf.mxu0
  %v8568 = vadd.f32 0.0, %v8567
  %v8569 = vpop.f32.mrf.mxu0
  %8570 = vmatprep.mubr.f32.mxu0 0.0
  %8571 = vmatmul.mubr.f32.gmra.mxu0 %v1064
  %v8572 = vpop.f32.mrf.mxu0
  %v8573 = vadd.f32 0.0, %v8572
  %v8574 = vpop.f32.mrf.mxu0
  %8575 = vmatprep.mubr.f32.mxu0 0.0
  %8576 = vmatmul.mubr.f32.gmra.mxu0 %v1067
  %v8577 = vpop.f32.mrf.mxu0
  %v8578 = vadd.f32 0.0, %v8577
  %v8579 = vpop.f32.mrf.mxu0
  %8580 = vmatprep.mubr.f32.mxu0 0.0
  %8581 = vmatmul.mubr.f32.gmra.mxu0 %v1070
  %v8582 = vpop.f32.mrf.mxu0
  %v8583 = vadd.f32 0.0, %v8582
  %v8584 = vpop.f32.mrf.mxu0
  %8585 = vmatprep.mubr.f32.mxu0 0.0
  %8586 = vmatmul.mubr.f32.gmra.mxu0 %v1073
  %v8587 = vpop.f32.mrf.mxu0
  %v8588 = vadd.f32 0.0, %v8587
  %v8589 = vpop.f32.mrf.mxu0
  %8590 = vmatprep.mubr.f32.mxu0 0.0
  %8591 = vmatmul.mubr.f32.gmra.mxu0 %v1076
  %v8592 = vpop.f32.mrf.mxu0
  %v8593 = vadd.f32 0.0, %v8592
  %v8594 = vpop.f32.mrf.mxu0
  %8595 = vmatprep.mubr.f32.mxu0 0.0
  %8596 = vmatmul.mubr.f32.gmra.mxu0 %v1079
  %v8597 = vpop.f32.mrf.mxu0
  %v8598 = vadd.f32 0.0, %v8597
  %v8599 = vpop.f32.mrf.mxu0
  %8600 = vmatprep.mubr.f32.mxu0 0.0
  %8601 = vmatmul.mubr.f32.gmra.mxu0 %v1082
  %v8602 = vpop.f32.mrf.mxu0
  %v8603 = vadd.f32 0.0, %v8602
  %v8604 = vpop.f32.mrf.mxu0
  %8605 = vmatprep.mubr.f32.mxu0 0.0
  %8606 = vmatmul.mubr.f32.gmra.mxu0 %v1085
  %v8607 = vpop.f32.mrf.mxu0
  %v8608 = vadd.f32 0.0, %v8607
  %v8609 = vpop.f32.mrf.mxu0
  %8610 = vmatprep.mubr.f32.mxu0 0.0
  %8611 = vmatmul.mubr.f32.gmra.mxu0 %v1088
  %v8612 = vpop.f32.mrf.mxu0
  %v8613 = vadd.f32 0.0, %v8612
  %v8614 = vpop.f32.mrf.mxu0
  %8615 = vmatprep.mubr.f32.mxu0 0.0
  %8616 = vmatmul.mubr.f32.gmra.mxu0 %v1091
  %v8617 = vpop.f32.mrf.mxu0
  %v8618 = vadd.f32 0.0, %v8617
  %v8619 = vpop.f32.mrf.mxu0
  %8620 = vmatprep.mubr.f32.mxu0 0.0
  %8621 = vmatmul.mubr.f32.gmra.mxu0 %v1094
  %v8622 = vpop.f32.mrf.mxu0
  %v8623 = vadd.f32 0.0, %v8622
  %v8624 = vpop.f32.mrf.mxu0
  %8625 = vmatprep.mubr.f32.mxu0 0.0
  %8626 = vmatmul.mubr.f32.gmra.mxu0 %v1097
  %v8627 = vpop.f32.mrf.mxu0
  %v8628 = vadd.f32 0.0, %v8627
  %v8629 = vpop.f32.mrf.mxu0
  %8630 = vmatprep.mubr.f32.mxu0 0.0
  %8631 = vmatmul.mubr.f32.gmra.mxu0 %v1100
  %v8632 = vpop.f32.mrf.mxu0
  %v8633 = vadd.f32 0.0, %v8632
  %v8634 = vpop.f32.mrf.mxu0
  %8635 = vmatprep.mubr.f32.mxu0 0.0
  %8636 = vmatmul.mubr.f32.gmra.mxu0 %v1103
  %v8637 = vpop.f32.mrf.mxu0
  %v8638 = vadd.f32 0.0, %v8637
  %v8639 = vpop.f32.mrf.mxu0
  %8640 = vmatprep.mubr.f32.mxu0 0.0
  %8641 = vmatmul.mubr.f32.gmra.mxu0 %v1106
  %v8642 = vpop.f32.mrf.mxu0
  %v8643 = vadd.f32 0.0, %v8642
  %v8644 = vpop.f32.mrf.mxu0
  %8645 = vmatprep.mubr.f32.mxu0 0.0
  %8646 = vmatmul.mubr.f32.gmra.mxu0 %v1109
  %v8647 = vpop.f32.mrf.mxu0
  %v8648 = vadd.f32 0.0, %v8647
  %v8649 = vpop.f32.mrf.mxu0
  %8650 = vmatprep.mubr.f32.mxu0 0.0
  %8651 = vmatmul.mubr.f32.gmra.mxu0 %v1112
  %v8652 = vpop.f32.mrf.mxu0
  %v8653 = vadd.f32 0.0, %v8652
  %v8654 = vpop.f32.mrf.mxu0
  %8655 = vmatprep.mubr.f32.mxu0 0.0
  %8656 = vmatmul.mubr.f32.gmra.mxu0 %v1115
  %v8657 = vpop.f32.mrf.mxu0
  %v8658 = vadd.f32 0.0, %v8657
  %v8659 = vpop.f32.mrf.mxu0
  %8660 = vmatprep.mubr.f32.mxu0 0.0
  %8661 = vmatmul.mubr.f32.gmra.mxu0 %v1118
  %v8662 = vpop.f32.mrf.mxu0
  %v8663 = vadd.f32 0.0, %v8662
  %v8664 = vpop.f32.mrf.mxu0
  %8665 = vmatprep.mubr.f32.mxu0 0.0
  %8666 = vmatmul.mubr.f32.gmra.mxu0 %v1121
  %v8667 = vpop.f32.mrf.mxu0
  %v8668 = vadd.f32 0.0, %v8667
  %v8669 = vpop.f32.mrf.mxu0
  %8670 = vmatprep.mubr.f32.mxu0 0.0
  %8671 = vmatmul.mubr.f32.gmra.mxu0 %v1124
  %v8672 = vpop.f32.mrf.mxu0
  %v8673 = vadd.f32 0.0, %v8672
  %v8674 = vpop.f32.mrf.mxu0
  %8675 = vmatprep.mubr.f32.mxu0 0.0
  %8676 = vmatmul.mubr.f32.gmra.mxu0 %v1127
  %v8677 = vpop.f32.mrf.mxu0
  %v8678 = vadd.f32 0.0, %v8677
  %v8679 = vpop.f32.mrf.mxu0
  %8680 = vmatprep.mubr.f32.mxu0 0.0
  %8681 = vmatmul.mubr.f32.gmra.mxu0 %v1130
  %v8682 = vpop.f32.mrf.mxu0
  %v8683 = vadd.f32 0.0, %v8682
  %v8684 = vpop.f32.mrf.mxu0
  %8685 = vmatprep.mubr.f32.mxu0 0.0
  %8686 = vmatmul.mubr.f32.gmra.mxu0 %v1133
  %v8687 = vpop.f32.mrf.mxu0
  %v8688 = vadd.f32 0.0, %v8687
  %v8689 = vpop.f32.mrf.mxu0
  %8690 = vmatprep.mubr.f32.mxu0 0.0
  %8691 = vmatmul.mubr.f32.gmra.mxu0 %v1136
  %v8692 = vpop.f32.mrf.mxu0
  %v8693 = vadd.f32 0.0, %v8692
  %v8694 = vpop.f32.mrf.mxu0
  %8695 = vmatprep.mubr.f32.mxu0 0.0
  %8696 = vmatmul.mubr.f32.gmra.mxu0 %v1139
  %v8697 = vpop.f32.mrf.mxu0
  %v8698 = vadd.f32 0.0, %v8697
  %v8699 = vpop.f32.mrf.mxu0
  %8700 = vmatprep.mubr.f32.mxu0 0.0
  %8701 = vmatmul.mubr.f32.gmra.mxu0 %v1142
  %v8702 = vpop.f32.mrf.mxu0
  %v8703 = vadd.f32 0.0, %v8702
  %v8704 = vpop.f32.mrf.mxu0
  %8705 = vmatprep.mubr.f32.mxu0 0.0
  %8706 = vmatmul.mubr.f32.gmra.mxu0 %v1145
  %v8707 = vpop.f32.mrf.mxu0
  %v8708 = vadd.f32 0.0, %v8707
  %v8709 = vpop.f32.mrf.mxu0
  %8710 = vmatprep.mubr.f32.mxu0 0.0
  %8711 = vmatmul.mubr.f32.gmra.mxu0 %v1148
  %v8712 = vpop.f32.mrf.mxu0
  %v8713 = vadd.f32 0.0, %v8712
  %v8714 = vpop.f32.mrf.mxu0
  %8715 = vmatprep.mubr.f32.mxu0 0.0
  %8716 = vmatmul.mubr.f32.gmra.mxu0 %v1151
  %v8717 = vpop.f32.mrf.mxu0
  %v8718 = vadd.f32 0.0, %v8717
  %v8719 = vpop.f32.mrf.mxu0
  %8720 = vdwg.mxu0
  %v8721 = vmul.f32 %v8183, %v4178
  %v8722 = vmul.f32 %v8188, %v4178
  %v8723 = vmul.f32 %v8193, %v4178
  %v8724 = vmul.f32 %v8198, %v4178
  %v8725 = vadd.f32 %v8721, 0.0
  %v8726 = vadd.f32 %v8722, 0.0
  %v8727 = vadd.f32 %v8723, 0.0
  %v8728 = vadd.f32 %v8724, 0.0
  %v8729 = vmul.f32 %v8203, %v4190
  %v8730 = vmul.f32 %v8208, %v4190
  %v8731 = vmul.f32 %v8213, %v4190
  %v8732 = vmul.f32 %v8218, %v4190
  %v8733 = vadd.f32 %v8725, %v8729
  %v8734 = vadd.f32 %v8726, %v8730
  %v8735 = vadd.f32 %v8727, %v8731
  %v8736 = vadd.f32 %v8728, %v8732
  %v8737 = vmul.f32 %v8223, %v4202
  %v8738 = vmul.f32 %v8228, %v4202
  %v8739 = vmul.f32 %v8233, %v4202
  %v8740 = vmul.f32 %v8238, %v4202
  %v8741 = vadd.f32 %v8733, %v8737
  %v8742 = vadd.f32 %v8734, %v8738
  %v8743 = vadd.f32 %v8735, %v8739
  %v8744 = vadd.f32 %v8736, %v8740
  %v8745 = vmul.f32 %v8243, %v4214
  %v8746 = vmul.f32 %v8248, %v4214
  %v8747 = vmul.f32 %v8253, %v4214
  %v8748 = vmul.f32 %v8258, %v4214
  %v8749 = vadd.f32 %v8741, %v8745
  %v8750 = vadd.f32 %v8742, %v8746
  %v8751 = vadd.f32 %v8743, %v8747
  %v8752 = vadd.f32 %v8744, %v8748
  %v8753 = vmul.f32 %v8263, %v4226
  %v8754 = vmul.f32 %v8268, %v4226
  %v8755 = vmul.f32 %v8273, %v4226
  %v8756 = vmul.f32 %v8278, %v4226
  %v8757 = vadd.f32 %v8749, %v8753
  %v8758 = vadd.f32 %v8750, %v8754
  %v8759 = vadd.f32 %v8751, %v8755
  %v8760 = vadd.f32 %v8752, %v8756
  %v8761 = vmul.f32 %v8283, %v4238
  %v8762 = vmul.f32 %v8288, %v4238
  %v8763 = vmul.f32 %v8293, %v4238
  %v8764 = vmul.f32 %v8298, %v4238
  %v8765 = vadd.f32 %v8757, %v8761
  %v8766 = vadd.f32 %v8758, %v8762
  %v8767 = vadd.f32 %v8759, %v8763
  %v8768 = vadd.f32 %v8760, %v8764
  %v8769 = vmul.f32 %v8303, %v4250
  %v8770 = vmul.f32 %v8308, %v4250
  %v8771 = vmul.f32 %v8313, %v4250
  %v8772 = vmul.f32 %v8318, %v4250
  %v8773 = vadd.f32 %v8765, %v8769
  %v8774 = vadd.f32 %v8766, %v8770
  %v8775 = vadd.f32 %v8767, %v8771
  %v8776 = vadd.f32 %v8768, %v8772
  %v8777 = vmul.f32 %v8323, %v4262
  %v8778 = vmul.f32 %v8328, %v4262
  %v8779 = vmul.f32 %v8333, %v4262
  %v8780 = vmul.f32 %v8338, %v4262
  %v8781 = vadd.f32 %v8773, %v8777
  %v8782 = vadd.f32 %v8774, %v8778
  %v8783 = vadd.f32 %v8775, %v8779
  %v8784 = vadd.f32 %v8776, %v8780
  %v8785 = vmul.f32 %v8343, %v4274
  %v8786 = vmul.f32 %v8348, %v4274
  %v8787 = vmul.f32 %v8353, %v4274
  %v8788 = vmul.f32 %v8358, %v4274
  %v8789 = vadd.f32 %v8781, %v8785
  %v8790 = vadd.f32 %v8782, %v8786
  %v8791 = vadd.f32 %v8783, %v8787
  %v8792 = vadd.f32 %v8784, %v8788
  %v8793 = vmul.f32 %v8363, %v4286
  %v8794 = vmul.f32 %v8368, %v4286
  %v8795 = vmul.f32 %v8373, %v4286
  %v8796 = vmul.f32 %v8378, %v4286
  %v8797 = vadd.f32 %v8789, %v8793
  %v8798 = vadd.f32 %v8790, %v8794
  %v8799 = vadd.f32 %v8791, %v8795
  %v8800 = vadd.f32 %v8792, %v8796
  %v8801 = vmul.f32 %v8383, %v4298
  %v8802 = vmul.f32 %v8388, %v4298
  %v8803 = vmul.f32 %v8393, %v4298
  %v8804 = vmul.f32 %v8398, %v4298
  %v8805 = vadd.f32 %v8797, %v8801
  %v8806 = vadd.f32 %v8798, %v8802
  %v8807 = vadd.f32 %v8799, %v8803
  %v8808 = vadd.f32 %v8800, %v8804
  %v8809 = vmul.f32 %v8403, %v4310
  %v8810 = vmul.f32 %v8408, %v4310
  %v8811 = vmul.f32 %v8413, %v4310
  %v8812 = vmul.f32 %v8418, %v4310
  %v8813 = vadd.f32 %v8805, %v8809
  %v8814 = vadd.f32 %v8806, %v8810
  %v8815 = vadd.f32 %v8807, %v8811
  %v8816 = vadd.f32 %v8808, %v8812
  %v8817 = vmul.f32 %v8423, %v4322
  %v8818 = vmul.f32 %v8428, %v4322
  %v8819 = vmul.f32 %v8433, %v4322
  %v8820 = vmul.f32 %v8438, %v4322
  %v8821 = vadd.f32 %v8813, %v8817
  %v8822 = vadd.f32 %v8814, %v8818
  %v8823 = vadd.f32 %v8815, %v8819
  %v8824 = vadd.f32 %v8816, %v8820
  %v8825 = vmul.f32 %v8443, %v4334
  %v8826 = vmul.f32 %v8448, %v4334
  %v8827 = vmul.f32 %v8453, %v4334
  %v8828 = vmul.f32 %v8458, %v4334
  %v8829 = vadd.f32 %v8821, %v8825
  %v8830 = vadd.f32 %v8822, %v8826
  %v8831 = vadd.f32 %v8823, %v8827
  %v8832 = vadd.f32 %v8824, %v8828
  %v8833 = vmul.f32 %v8463, %v4346
  %v8834 = vmul.f32 %v8468, %v4346
  %v8835 = vmul.f32 %v8473, %v4346
  %v8836 = vmul.f32 %v8478, %v4346
  %v8837 = vadd.f32 %v8829, %v8833
  %v8838 = vadd.f32 %v8830, %v8834
  %v8839 = vadd.f32 %v8831, %v8835
  %v8840 = vadd.f32 %v8832, %v8836
  %v8841 = vmul.f32 %v8483, %v4358
  %v8842 = vmul.f32 %v8488, %v4358
  %v8843 = vmul.f32 %v8493, %v4358
  %v8844 = vmul.f32 %v8498, %v4358
  %v8845 = vadd.f32 %v8837, %v8841
  %v8846 = vadd.f32 %v8838, %v8842
  %v8847 = vadd.f32 %v8839, %v8843
  %v8848 = vadd.f32 %v8840, %v8844
  %v8849 = vmul.f32 %v8503, %v4370
  %v8850 = vmul.f32 %v8508, %v4370
  %v8851 = vmul.f32 %v8513, %v4370
  %v8852 = vmul.f32 %v8518, %v4370
  %v8853 = vadd.f32 %v8845, %v8849
  %v8854 = vadd.f32 %v8846, %v8850
  %v8855 = vadd.f32 %v8847, %v8851
  %v8856 = vadd.f32 %v8848, %v8852
  %v8857 = vmul.f32 %v8523, %v4382
  %v8858 = vmul.f32 %v8528, %v4382
  %v8859 = vmul.f32 %v8533, %v4382
  %v8860 = vmul.f32 %v8538, %v4382
  %v8861 = vadd.f32 %v8853, %v8857
  %v8862 = vadd.f32 %v8854, %v8858
  %v8863 = vadd.f32 %v8855, %v8859
  %v8864 = vadd.f32 %v8856, %v8860
  %v8865 = vmul.f32 %v8543, %v4394
  %v8866 = vmul.f32 %v8548, %v4394
  %v8867 = vmul.f32 %v8553, %v4394
  %v8868 = vmul.f32 %v8558, %v4394
  %v8869 = vadd.f32 %v8861, %v8865
  %v8870 = vadd.f32 %v8862, %v8866
  %v8871 = vadd.f32 %v8863, %v8867
  %v8872 = vadd.f32 %v8864, %v8868
  %v8873 = vmul.f32 %v8563, %v4406
  %v8874 = vmul.f32 %v8568, %v4406
  %v8875 = vmul.f32 %v8573, %v4406
  %v8876 = vmul.f32 %v8578, %v4406
  %v8877 = vadd.f32 %v8869, %v8873
  %v8878 = vadd.f32 %v8870, %v8874
  %v8879 = vadd.f32 %v8871, %v8875
  %v8880 = vadd.f32 %v8872, %v8876
  %v8881 = vmul.f32 %v8583, %v4418
  %v8882 = vmul.f32 %v8588, %v4418
  %v8883 = vmul.f32 %v8593, %v4418
  %v8884 = vmul.f32 %v8598, %v4418
  %v8885 = vadd.f32 %v8877, %v8881
  %v8886 = vadd.f32 %v8878, %v8882
  %v8887 = vadd.f32 %v8879, %v8883
  %v8888 = vadd.f32 %v8880, %v8884
  %v8889 = vmul.f32 %v8603, %v4430
  %v8890 = vmul.f32 %v8608, %v4430
  %v8891 = vmul.f32 %v8613, %v4430
  %v8892 = vmul.f32 %v8618, %v4430
  %v8893 = vadd.f32 %v8885, %v8889
  %v8894 = vadd.f32 %v8886, %v8890
  %v8895 = vadd.f32 %v8887, %v8891
  %v8896 = vadd.f32 %v8888, %v8892
  %v8897 = vmul.f32 %v8623, %v4442
  %v8898 = vmul.f32 %v8628, %v4442
  %v8899 = vmul.f32 %v8633, %v4442
  %v8900 = vmul.f32 %v8638, %v4442
  %v8901 = vadd.f32 %v8893, %v8897
  %v8902 = vadd.f32 %v8894, %v8898
  %v8903 = vadd.f32 %v8895, %v8899
  %v8904 = vadd.f32 %v8896, %v8900
  %v8905 = vmul.f32 %v8643, %v4454
  %v8906 = vmul.f32 %v8648, %v4454
  %v8907 = vmul.f32 %v8653, %v4454
  %v8908 = vmul.f32 %v8658, %v4454
  %v8909 = vadd.f32 %v8901, %v8905
  %v8910 = vadd.f32 %v8902, %v8906
  %v8911 = vadd.f32 %v8903, %v8907
  %v8912 = vadd.f32 %v8904, %v8908
  %v8913 = vmul.f32 %v8663, %v4466
  %v8914 = vmul.f32 %v8668, %v4466
  %v8915 = vmul.f32 %v8673, %v4466
  %v8916 = vmul.f32 %v8678, %v4466
  %v8917 = vadd.f32 %v8909, %v8913
  %v8918 = vadd.f32 %v8910, %v8914
  %v8919 = vadd.f32 %v8911, %v8915
  %v8920 = vadd.f32 %v8912, %v8916
  %v8921 = vmul.f32 %v8683, %v4478
  %v8922 = vmul.f32 %v8688, %v4478
  %v8923 = vmul.f32 %v8693, %v4478
  %v8924 = vmul.f32 %v8698, %v4478
  %v8925 = vadd.f32 %v8917, %v8921
  %v8926 = vadd.f32 %v8918, %v8922
  %v8927 = vadd.f32 %v8919, %v8923
  %v8928 = vadd.f32 %v8920, %v8924
  %v8929 = vmul.f32 %v8703, %v4490
  %v8930 = vmul.f32 %v8708, %v4490
  %v8931 = vmul.f32 %v8713, %v4490
  %v8932 = vmul.f32 %v8718, %v4490
  %v8933 = vadd.f32 %v8925, %v8929
  %v8934 = vadd.f32 %v8926, %v8930
  %v8935 = vadd.f32 %v8927, %v8931
  %v8936 = vadd.f32 %v8928, %v8932
  %v8942 = vrot.slane %v8933, 7
  %v8943 = vrot.slane %v8934, 7
  %v8944 = vsel %vm2086, %v8942, %v8943
  %v8945 = vrot.slane %v8935, 7
  %v8946 = vsel %vm2086, %v8943, %v8945
  %v8947 = vrot.slane %v8936, 7
  %v8948 = vsel %vm2086, %v8945, %v8947
  %v8954 = vsel %vm2086, %v3564, %v8942
  %v8956 = vsel %vm254, %v8954, 0
  %v8958 = vsel %vm254, %v8944, 0
  %v8960 = vsel %vm254, %v8946, 0
  %v8962 = vsel %vm254, %v8948, 0
  %v8964 = vsel %vm254, %v8947, 0
  %8966 = vmatprep.subr.mxu0 0.0
  %8967 = vmatpush1.msra.mxu0 0.0
  %8968 = vmatprep.subr.mxu0 0.0
  %8969 = vmatpush1.msra.mxu0 0.0
  %8970 = vmatprep.subr.mxu0 0.0
  %8971 = vmatpush1.msra.mxu0 0.0
  %8972 = vmatprep.subr.mxu0 0.0
  %8973 = vmatpush1.msra.mxu0 0.0
  %8974 = vmatprep.subr.mxu0 0.0
  %8975 = vmatpush1.msra.mxu0 0.0
  %8976 = vmatprep.subr.mxu0 0.0
  %8977 = vmatpush1.msra.mxu0 0.0
  %8978 = vmatprep.subr.mxu0 0.0
  %8979 = vmatpush1.msra.mxu0 0.0
  %8980 = vmatprep.subr.mxu0 0.0
  %8981 = vmatpush1.msra.mxu0 0.0
  %8982 = vmatprep.subr.mxu0 0.0
  %8983 = vmatpush1.msra.mxu0 0.0
  %8984 = vmatprep.subr.mxu0 0.0
  %8985 = vmatpush1.msra.mxu0 0.0
  %8986 = vmatprep.subr.mxu0 0.0
  %8987 = vmatpush1.msra.mxu0 0.0
  %8988 = vmatprep.subr.mxu0 0.0
  %8989 = vmatpush1.msra.mxu0 0.0
  %8990 = vmatprep.subr.mxu0 0.0
  %8991 = vmatpush1.msra.mxu0 %v179
  %8992 = vmatprep.subr.mxu0 0.0
  %8993 = vmatpush1.msra.mxu0 %v178
  %8994 = vmatprep.subr.mxu0 0.0
  %8995 = vmatpush1.msra.mxu0 %v177
  %8996 = vmatprep.subr.mxu0 0.0
  %8997 = vmatpush1.msra.mxu0 %v176
  %8998 = vmatprep.subr.mxu0 0.0
  %8999 = vmatpush2.msra.mxu0 0.0
  %9000 = vmatprep.subr.mxu0 0.0
  %9001 = vmatpush2.msra.mxu0 0.0
  %9002 = vmatprep.subr.mxu0 0.0
  %9003 = vmatpush2.msra.mxu0 0.0
  %9004 = vmatprep.subr.mxu0 0.0
  %9005 = vmatpush2.msra.mxu0 0.0
  %9006 = vmatprep.subr.mxu0 0.0
  %9007 = vmatpush2.msra.mxu0 0.0
  %9008 = vmatprep.subr.mxu0 0.0
  %9009 = vmatpush2.msra.mxu0 0.0
  %9010 = vmatprep.subr.mxu0 0.0
  %9011 = vmatpush2.msra.mxu0 0.0
  %9012 = vmatprep.subr.mxu0 0.0
  %9013 = vmatpush2.msra.mxu0 0.0
  %9014 = vmatprep.subr.mxu0 0.0
  %9015 = vmatpush2.msra.mxu0 0.0
  %9016 = vmatprep.subr.mxu0 0.0
  %9017 = vmatpush2.msra.mxu0 0.0
  %9018 = vmatprep.subr.mxu0 0.0
  %9019 = vmatpush2.msra.mxu0 0.0
  %9020 = vmatprep.subr.mxu0 0.0
  %9021 = vmatpush2.msra.mxu0 0.0
  %9022 = vmatprep.subr.mxu0 0.0
  %9023 = vmatpush2.msra.mxu0 0.0
  %9024 = vmatprep.subr.mxu0 0.0
  %9025 = vmatpush2.msra.mxu0 0.0
  %9026 = vmatprep.subr.mxu0 0.0
  %9027 = vmatpush2.msra.mxu0 0.0
  %9028 = vmatprep.subr.mxu0 0.0
  %9029 = vmatpush2.msra.mxu0 0.0
  %9030 = vmatprep.mubr.f32.mxu0 0.0
  %9031 = vmatmul.mubr.f32.gmra.mxu0 %v8956
  %v9032 = vpop.f32.mrf.mxu0
  %v9033 = vadd.f32 0.0, %v9032
  %v9034 = vpop.f32.mrf.mxu0
  %9035 = vmatprep.mubr.f32.mxu0 0.0
  %9036 = vmatmul.mubr.f32.gmra.mxu0 %v8958
  %v9037 = vpop.f32.mrf.mxu0
  %v9038 = vadd.f32 0.0, %v9037
  %v9039 = vpop.f32.mrf.mxu0
  %9040 = vmatprep.mubr.f32.mxu0 0.0
  %9041 = vmatmul.mubr.f32.gmra.mxu0 %v8960
  %v9042 = vpop.f32.mrf.mxu0
  %v9043 = vadd.f32 0.0, %v9042
  %v9044 = vpop.f32.mrf.mxu0
  %9045 = vmatprep.mubr.f32.mxu0 0.0
  %9046 = vmatmul.mubr.f32.gmra.mxu0 %v8962
  %v9047 = vpop.f32.mrf.mxu0
  %v9048 = vadd.f32 0.0, %v9047
  %v9049 = vpop.f32.mrf.mxu0
  %9050 = vmatprep.mubr.f32.mxu0 0.0
  %9051 = vmatmul.mubr.f32.gmra.mxu0 %v8964
  %v9052 = vpop.f32.mrf.mxu0
  %v9053 = vadd.f32 0.0, %v9052
  %v9054 = vpop.f32.mrf.mxu0
  %9055 = vdwg.mxu0
  %v9056 = vsub.f32 %v8954, %v9033
  %v9057 = vsub.f32 %v8944, %v9038
  %v9058 = vsub.f32 %v8946, %v9043
  %v9059 = vsub.f32 %v8948, %v9048
  %v9060 = vsub.f32 %v8947, %v9053
  %v9061 = vmul.f32 %v9056, %v9056
  %v9062 = vmul.f32 %v9057, %v9057
  %v9063 = vmul.f32 %v9058, %v9058
  %v9064 = vmul.f32 %v9059, %v9059
  %v9065 = vmul.f32 %v9060, %v9060
  %v9067 = vsel %vm254, %v9061, 0
  %v9070 = vsel %vm254, %v9062, 0
  %v9073 = vsel %vm254, %v9063, 0
  %v9076 = vsel %vm254, %v9064, 0
  %v9079 = vsel %vm254, %v9065, 0
  %9081 = vmatprep.subr.mxu0 0.0
  %9082 = vmatpush1.msra.mxu0 0.0
  %9083 = vmatprep.subr.mxu0 0.0
  %9084 = vmatpush1.msra.mxu0 0.0
  %9085 = vmatprep.subr.mxu0 0.0
  %9086 = vmatpush1.msra.mxu0 0.0
  %9087 = vmatprep.subr.mxu0 0.0
  %9088 = vmatpush1.msra.mxu0 0.0
  %9089 = vmatprep.subr.mxu0 0.0
  %9090 = vmatpush1.msra.mxu0 0.0
  %9091 = vmatprep.subr.mxu0 0.0
  %9092 = vmatpush1.msra.mxu0 0.0
  %9093 = vmatprep.subr.mxu0 0.0
  %9094 = vmatpush1.msra.mxu0 0.0
  %9095 = vmatprep.subr.mxu0 0.0
  %9096 = vmatpush1.msra.mxu0 0.0
  %9097 = vmatprep.subr.mxu0 0.0
  %9098 = vmatpush1.msra.mxu0 0.0
  %9099 = vmatprep.subr.mxu0 0.0
  %9100 = vmatpush1.msra.mxu0 0.0
  %9101 = vmatprep.subr.mxu0 0.0
  %9102 = vmatpush1.msra.mxu0 0.0
  %9103 = vmatprep.subr.mxu0 0.0
  %9104 = vmatpush1.msra.mxu0 0.0
  %9105 = vmatprep.subr.mxu0 0.0
  %9106 = vmatpush1.msra.mxu0 %v179
  %9107 = vmatprep.subr.mxu0 0.0
  %9108 = vmatpush1.msra.mxu0 %v178
  %9109 = vmatprep.subr.mxu0 0.0
  %9110 = vmatpush1.msra.mxu0 %v177
  %9111 = vmatprep.subr.mxu0 0.0
  %9112 = vmatpush1.msra.mxu0 %v176
  %9113 = vmatprep.subr.mxu0 0.0
  %9114 = vmatpush2.msra.mxu0 0.0
  %9115 = vmatprep.subr.mxu0 0.0
  %9116 = vmatpush2.msra.mxu0 0.0
  %9117 = vmatprep.subr.mxu0 0.0
  %9118 = vmatpush2.msra.mxu0 0.0
  %9119 = vmatprep.subr.mxu0 0.0
  %9120 = vmatpush2.msra.mxu0 0.0
  %9121 = vmatprep.subr.mxu0 0.0
  %9122 = vmatpush2.msra.mxu0 0.0
  %9123 = vmatprep.subr.mxu0 0.0
  %9124 = vmatpush2.msra.mxu0 0.0
  %9125 = vmatprep.subr.mxu0 0.0
  %9126 = vmatpush2.msra.mxu0 0.0
  %9127 = vmatprep.subr.mxu0 0.0
  %9128 = vmatpush2.msra.mxu0 0.0
  %9129 = vmatprep.subr.mxu0 0.0
  %9130 = vmatpush2.msra.mxu0 0.0
  %9131 = vmatprep.subr.mxu0 0.0
  %9132 = vmatpush2.msra.mxu0 0.0
  %9133 = vmatprep.subr.mxu0 0.0
  %9134 = vmatpush2.msra.mxu0 0.0
  %9135 = vmatprep.subr.mxu0 0.0
  %9136 = vmatpush2.msra.mxu0 0.0
  %9137 = vmatprep.subr.mxu0 0.0
  %9138 = vmatpush2.msra.mxu0 0.0
  %9139 = vmatprep.subr.mxu0 0.0
  %9140 = vmatpush2.msra.mxu0 0.0
  %9141 = vmatprep.subr.mxu0 0.0
  %9142 = vmatpush2.msra.mxu0 0.0
  %9143 = vmatprep.subr.mxu0 0.0
  %9144 = vmatpush2.msra.mxu0 0.0
  %9145 = vmatprep.mubr.f32.mxu0 0.0
  %9146 = vmatmul.mubr.f32.gmra.mxu0 %v9067
  %v9147 = vpop.f32.mrf.mxu0
  %v9148 = vadd.f32 1e-05, %v9147
  %v9149 = vpop.f32.mrf.mxu0
  %9150 = vmatprep.mubr.f32.mxu0 0.0
  %9151 = vmatmul.mubr.f32.gmra.mxu0 %v9070
  %v9152 = vpop.f32.mrf.mxu0
  %v9153 = vadd.f32 1e-05, %v9152
  %v9154 = vpop.f32.mrf.mxu0
  %9155 = vmatprep.mubr.f32.mxu0 0.0
  %9156 = vmatmul.mubr.f32.gmra.mxu0 %v9073
  %v9157 = vpop.f32.mrf.mxu0
  %v9158 = vadd.f32 1e-05, %v9157
  %v9159 = vpop.f32.mrf.mxu0
  %9160 = vmatprep.mubr.f32.mxu0 0.0
  %9161 = vmatmul.mubr.f32.gmra.mxu0 %v9076
  %v9162 = vpop.f32.mrf.mxu0
  %v9163 = vadd.f32 1e-05, %v9162
  %v9164 = vpop.f32.mrf.mxu0
  %9165 = vmatprep.mubr.f32.mxu0 0.0
  %9166 = vmatmul.mubr.f32.gmra.mxu0 %v9079
  %v9167 = vpop.f32.mrf.mxu0
  %v9168 = vadd.f32 1e-05, %v9167
  %v9169 = vpop.f32.mrf.mxu0
  %9170 = vdwg.mxu0
  %v9171 = vrsqrt.pop %v9148
  %v9172 = vrsqrt.pop %v9153
  %v9173 = vrsqrt.pop %v9158
  %v9174 = vrsqrt.pop %v9163
  %v9175 = vrsqrt.pop %v9168
  %v9176 = vmul.f32 %v9056, %v9171
  %v9177 = vmul.f32 %v9057, %v9172
  %v9178 = vmul.f32 %v9058, %v9173
  %v9179 = vmul.f32 %v9059, %v9174
  %v9180 = vmul.f32 %v9060, %v9175
  %v9181 = vmul.f32 %v9176, %v4745
  %v9182 = vmul.f32 %v9177, %v4745
  %v9183 = vmul.f32 %v9178, %v4745
  %v9184 = vmul.f32 %v9179, %v4745
  %v9185 = vmul.f32 %v9180, %v4745
  %v9186 = vadd.f32 %v9181, %v4754
  %v9187 = vadd.f32 %v9182, %v4754
  %v9188 = vadd.f32 %v9183, %v4754
  %v9189 = vadd.f32 %v9184, %v4754
  %v9190 = vadd.f32 %v9185, %v4754
  %v9191 = vmul.f32 %v7002, 0.35355338
  %v9192 = vmul.f32 %v7003, 0.35355338
  %v9193 = vmul.f32 %v7004, 0.35355338
  %v9194 = vmul.f32 %v7005, 0.35355338
  %v9195 = vmul.f32 %v7006, 0.35355338
  %v9196 = vmul.f32 %v8094, %v217
  %v9197 = vmul.f32 %v8095, %v217
  %v9198 = vmul.f32 %v8096, %v217
  %v9199 = vmul.f32 %v8097, %v217
  %v9200 = vmul.f32 %v8098, %v217
  %v9202 = vsel %vm254, %v9191, 0
  %v9205 = vsel %vm254, %v9192, 0
  %v9208 = vsel %vm254, %v9193, 0
  %v9211 = vsel %vm254, %v9194, 0
  %v9214 = vsel %vm254, %v9195, 0
  %v9217 = vsel %vm254, %v9196, 0
  %v9220 = vsel %vm254, %v9197, 0
  %v9223 = vsel %vm254, %v9198, 0
  %v9226 = vsel %vm254, %v9199, 0
  %v9229 = vsel %vm254, %v9200, 0
  %9231 = vmatprep.subr.mxu0 0.0
  %9232 = vmatpush1.xpose.msra.mxu0 0.0
  %9233 = vmatprep.subr.mxu0 0.0
  %9234 = vmatpush1.xpose.msra.mxu0 0.0
  %9235 = vmatprep.subr.mxu0 0.0
  %9236 = vmatpush1.xpose.msra.mxu0 0.0
  %9237 = vmatprep.subr.mxu0 0.0
  %9238 = vmatpush1.xpose.msra.mxu0 0.0
  %9239 = vmatprep.subr.mxu0 0.0
  %9240 = vmatpush1.xpose.msra.mxu0 0.0
  %9241 = vmatprep.subr.mxu0 0.0
  %9242 = vmatpush1.xpose.msra.mxu0 0.0
  %9243 = vmatprep.subr.mxu0 0.0
  %9244 = vmatpush1.xpose.msra.mxu0 0.0
  %9245 = vmatprep.subr.mxu0 0.0
  %9246 = vmatpush1.xpose.msra.mxu0 0.0
  %9247 = vmatprep.subr.mxu0 0.0
  %9248 = vmatpush1.xpose.msra.mxu0 0.0
  %9249 = vmatprep.subr.mxu0 0.0
  %9250 = vmatpush1.xpose.msra.mxu0 0.0
  %9251 = vmatprep.subr.mxu0 0.0
  %9252 = vmatpush1.xpose.msra.mxu0 0.0
  %9253 = vmatprep.subr.mxu0 0.0
  %9254 = vmatpush1.xpose.msra.mxu0 %v9229
  %9255 = vmatprep.subr.mxu0 0.0
  %9256 = vmatpush1.xpose.msra.mxu0 %v9226
  %9257 = vmatprep.subr.mxu0 0.0
  %9258 = vmatpush1.xpose.msra.mxu0 %v9223
  %9259 = vmatprep.subr.mxu0 0.0
  %9260 = vmatpush1.xpose.msra.mxu0 %v9220
  %9261 = vmatprep.subr.mxu0 0.0
  %9262 = vmatpush1.xpose.msra.mxu0 %v9217
  %9263 = vmatprep.subr.mxu0 0.0
  %9264 = vmatpush2.xpose.msra.mxu0 0.0
  %9265 = vmatprep.subr.mxu0 0.0
  %9266 = vmatpush2.xpose.msra.mxu0 0.0
  %9267 = vmatprep.subr.mxu0 0.0
  %9268 = vmatpush2.xpose.msra.mxu0 0.0
  %9269 = vmatprep.subr.mxu0 0.0
  %9270 = vmatpush2.xpose.msra.mxu0 0.0
  %9271 = vmatprep.subr.mxu0 0.0
  %9272 = vmatpush2.xpose.msra.mxu0 0.0
  %9273 = vmatprep.subr.mxu0 0.0
  %9274 = vmatpush2.xpose.msra.mxu0 0.0
  %9275 = vmatprep.subr.mxu0 0.0
  %9276 = vmatpush2.xpose.msra.mxu0 0.0
  %9277 = vmatprep.subr.mxu0 0.0
  %9278 = vmatpush2.xpose.msra.mxu0 0.0
  %9279 = vmatprep.subr.mxu0 0.0
  %9280 = vmatpush2.xpose.msra.mxu0 0.0
  %9281 = vmatprep.subr.mxu0 0.0
  %9282 = vmatpush2.xpose.msra.mxu0 0.0
  %9283 = vmatprep.subr.mxu0 0.0
  %9284 = vmatpush2.xpose.msra.mxu0 0.0
  %9285 = vmatprep.subr.mxu0 0.0
  %9286 = vmatpush2.xpose.msra.mxu0 0.0
  %9287 = vmatprep.subr.mxu0 0.0
  %9288 = vmatpush2.xpose.msra.mxu0 0.0
  %9289 = vmatprep.subr.mxu0 0.0
  %9290 = vmatpush2.xpose.msra.mxu0 0.0
  %9291 = vmatprep.subr.mxu0 0.0
  %9292 = vmatpush2.xpose.msra.mxu0 0.0
  %9293 = vmatprep.subr.mxu0 0.0
  %9294 = vmatpush2.xpose.msra.mxu0 0.0
  %9295 = vmatprep.mubr.f32.mxu0 0.0
  %9296 = vmatmul.mubr.f32.gmra.mxu0 %v9202
  %v9297 = vpop.f32.mrf.mxu0
  %v9298 = vadd.f32 0.0, %v9297
  %v9299 = vpop.f32.mrf.mxu0
  %9300 = vmatprep.mubr.f32.mxu0 0.0
  %9301 = vmatmul.mubr.f32.gmra.mxu0 %v9205
  %v9302 = vpop.f32.mrf.mxu0
  %v9303 = vadd.f32 0.0, %v9302
  %v9304 = vpop.f32.mrf.mxu0
  %9305 = vmatprep.mubr.f32.mxu0 0.0
  %9306 = vmatmul.mubr.f32.gmra.mxu0 %v9208
  %v9307 = vpop.f32.mrf.mxu0
  %v9308 = vadd.f32 0.0, %v9307
  %v9309 = vpop.f32.mrf.mxu0
  %9310 = vmatprep.mubr.f32.mxu0 0.0
  %9311 = vmatmul.mubr.f32.gmra.mxu0 %v9211
  %v9312 = vpop.f32.mrf.mxu0
  %v9313 = vadd.f32 0.0, %v9312
  %v9314 = vpop.f32.mrf.mxu0
  %9315 = vmatprep.mubr.f32.mxu0 0.0
  %9316 = vmatmul.mubr.f32.gmra.mxu0 %v9214
  %v9317 = vpop.f32.mrf.mxu0
  %v9318 = vadd.f32 0.0, %v9317
  %v9319 = vpop.f32.mrf.mxu0
  %9320 = vdwg.mxu0
  %v9321 = vsel %vm4890, %v9298, -inf
  %9322 = vmax.xlane.f32.xlu0 %v9321
  %v9323 = vpop.xlane.xlu0 %9322
  %v9324 = vsel %vm4890, %v9303, -inf
  %9325 = vmax.xlane.f32.xlu0 %v9324
  %v9326 = vpop.xlane.xlu0 %9325
  %v9327 = vsel %vm4890, %v9308, -inf
  %9328 = vmax.xlane.f32.xlu0 %v9327
  %v9329 = vpop.xlane.xlu0 %9328
  %v9330 = vsel %vm4890, %v9313, -inf
  %9331 = vmax.xlane.f32.xlu0 %v9330
  %v9332 = vpop.xlane.xlu0 %9331
  %v9333 = vsel %vm4903, %v9318, -inf
  %9334 = vmax.xlane.f32.xlu0 %v9333
  %v9335 = vpop.xlane.xlu0 %9334
  %v9336 = vsub.f32 %v9298, %v9323
  %v9337 = vsub.f32 %v9303, %v9326
  %v9338 = vsub.f32 %v9308, %v9329
  %v9339 = vsub.f32 %v9313, %v9332
  %v9340 = vsub.f32 %v9318, %v9335
  %v9341 = vmul.f32 %v9336, 1.442695
  %v9342 = vpow.pop %v9341
  %v9343 = vmul.f32 %v9337, 1.442695
  %v9344 = vpow.pop %v9343
  %v9345 = vmul.f32 %v9338, 1.442695
  %v9346 = vpow.pop %v9345
  %v9347 = vmul.f32 %v9339, 1.442695
  %v9348 = vpow.pop %v9347
  %v9349 = vmul.f32 %v9340, 1.442695
  %v9350 = vpow.pop %v9349
  %v9351 = vsel %vm4890, %v9342, 0.0
  %9352 = vadd.xlane.f32.xlu0 %v9351
  %v9353 = vpop.xlane.xlu0 %9352
  %v9354 = vsel %vm4890, %v9344, 0.0
  %9355 = vadd.xlane.f32.xlu0 %v9354
  %v9356 = vpop.xlane.xlu0 %9355
  %v9357 = vsel %vm4890, %v9346, 0.0
  %9358 = vadd.xlane.f32.xlu0 %v9357
  %v9359 = vpop.xlane.xlu0 %9358
  %v9360 = vsel %vm4890, %v9348, 0.0
  %9361 = vadd.xlane.f32.xlu0 %v9360
  %v9362 = vpop.xlane.xlu0 %9361
  %v9363 = vsel %vm4903, %v9350, 0.0
  %9364 = vadd.xlane.f32.xlu0 %v9363
  %v9365 = vpop.xlane.xlu0 %9364
  %v9366 = vrcp.pop %v9353
  %v9367 = vrcp.pop %v9356
  %v9368 = vrcp.pop %v9359
  %v9369 = vrcp.pop %v9362
  %v9370 = vrcp.pop %v9365
  %v9371 = vmul.f32 %v9342, %v9366
  %v9372 = vmul.f32 %v9344, %v9367
  %v9373 = vmul.f32 %v9346, %v9368
  %v9374 = vmul.f32 %v9348, %v9369
  %v9375 = vmul.f32 %v9350, %v9370
  %v9376 = vmul.f32 %v9186, %v217
  %v9377 = vmul.f32 %v9187, %v217
  %v9378 = vmul.f32 %v9188, %v217
  %v9379 = vmul.f32 %v9189, %v217
  %v9380 = vmul.f32 %v9190, %v217
  %v9381 = vmul.f32 %v8094, %v222
  %v9382 = vmul.f32 %v8095, %v222
  %v9383 = vmul.f32 %v8096, %v222
  %v9384 = vmul.f32 %v8097, %v222
  %v9385 = vmul.f32 %v8098, %v222
  %v9387 = vsel %vm254, %v9381, 0
  %v9390 = vsel %vm254, %v9382, 0
  %v9393 = vsel %vm254, %v9383, 0
  %v9396 = vsel %vm254, %v9384, 0
  %v9399 = vsel %vm254, %v9385, 0
  %9401 = vmatprep.subr.mxu0 0.0
  %9402 = vmatpush1.xpose.msra.mxu0 0.0
  %9403 = vmatprep.subr.mxu0 0.0
  %9404 = vmatpush1.xpose.msra.mxu0 0.0
  %9405 = vmatprep.subr.mxu0 0.0
  %9406 = vmatpush1.xpose.msra.mxu0 0.0
  %9407 = vmatprep.subr.mxu0 0.0
  %9408 = vmatpush1.xpose.msra.mxu0 0.0
  %9409 = vmatprep.subr.mxu0 0.0
  %9410 = vmatpush1.xpose.msra.mxu0 0.0
  %9411 = vmatprep.subr.mxu0 0.0
  %9412 = vmatpush1.xpose.msra.mxu0 0.0
  %9413 = vmatprep.subr.mxu0 0.0
  %9414 = vmatpush1.xpose.msra.mxu0 0.0
  %9415 = vmatprep.subr.mxu0 0.0
  %9416 = vmatpush1.xpose.msra.mxu0 0.0
  %9417 = vmatprep.subr.mxu0 0.0
  %9418 = vmatpush1.xpose.msra.mxu0 0.0
  %9419 = vmatprep.subr.mxu0 0.0
  %9420 = vmatpush1.xpose.msra.mxu0 0.0
  %9421 = vmatprep.subr.mxu0 0.0
  %9422 = vmatpush1.xpose.msra.mxu0 0.0
  %9423 = vmatprep.subr.mxu0 0.0
  %9424 = vmatpush1.xpose.msra.mxu0 %v9399
  %9425 = vmatprep.subr.mxu0 0.0
  %9426 = vmatpush1.xpose.msra.mxu0 %v9396
  %9427 = vmatprep.subr.mxu0 0.0
  %9428 = vmatpush1.xpose.msra.mxu0 %v9393
  %9429 = vmatprep.subr.mxu0 0.0
  %9430 = vmatpush1.xpose.msra.mxu0 %v9390
  %9431 = vmatprep.subr.mxu0 0.0
  %9432 = vmatpush1.xpose.msra.mxu0 %v9387
  %9433 = vmatprep.subr.mxu0 0.0
  %9434 = vmatpush2.xpose.msra.mxu0 0.0
  %9435 = vmatprep.subr.mxu0 0.0
  %9436 = vmatpush2.xpose.msra.mxu0 0.0
  %9437 = vmatprep.subr.mxu0 0.0
  %9438 = vmatpush2.xpose.msra.mxu0 0.0
  %9439 = vmatprep.subr.mxu0 0.0
  %9440 = vmatpush2.xpose.msra.mxu0 0.0
  %9441 = vmatprep.subr.mxu0 0.0
  %9442 = vmatpush2.xpose.msra.mxu0 0.0
  %9443 = vmatprep.subr.mxu0 0.0
  %9444 = vmatpush2.xpose.msra.mxu0 0.0
  %9445 = vmatprep.subr.mxu0 0.0
  %9446 = vmatpush2.xpose.msra.mxu0 0.0
  %9447 = vmatprep.subr.mxu0 0.0
  %9448 = vmatpush2.xpose.msra.mxu0 0.0
  %9449 = vmatprep.subr.mxu0 0.0
  %9450 = vmatpush2.xpose.msra.mxu0 0.0
  %9451 = vmatprep.subr.mxu0 0.0
  %9452 = vmatpush2.xpose.msra.mxu0 0.0
  %9453 = vmatprep.subr.mxu0 0.0
  %9454 = vmatpush2.xpose.msra.mxu0 0.0
  %9455 = vmatprep.subr.mxu0 0.0
  %9456 = vmatpush2.xpose.msra.mxu0 0.0
  %9457 = vmatprep.subr.mxu0 0.0
  %9458 = vmatpush2.xpose.msra.mxu0 0.0
  %9459 = vmatprep.subr.mxu0 0.0
  %9460 = vmatpush2.xpose.msra.mxu0 0.0
  %9461 = vmatprep.subr.mxu0 0.0
  %9462 = vmatpush2.xpose.msra.mxu0 0.0
  %9463 = vmatprep.subr.mxu0 0.0
  %9464 = vmatpush2.xpose.msra.mxu0 0.0
  %9465 = vmatprep.mubr.f32.mxu0 0.0
  %9466 = vmatmul.mubr.f32.gmra.mxu0 %v9202
  %v9467 = vpop.f32.mrf.mxu0
  %v9468 = vadd.f32 0.0, %v9467
  %v9469 = vpop.f32.mrf.mxu0
  %9470 = vmatprep.mubr.f32.mxu0 0.0
  %9471 = vmatmul.mubr.f32.gmra.mxu0 %v9205
  %v9472 = vpop.f32.mrf.mxu0
  %v9473 = vadd.f32 0.0, %v9472
  %v9474 = vpop.f32.mrf.mxu0
  %9475 = vmatprep.mubr.f32.mxu0 0.0
  %9476 = vmatmul.mubr.f32.gmra.mxu0 %v9208
  %v9477 = vpop.f32.mrf.mxu0
  %v9478 = vadd.f32 0.0, %v9477
  %v9479 = vpop.f32.mrf.mxu0
  %9480 = vmatprep.mubr.f32.mxu0 0.0
  %9481 = vmatmul.mubr.f32.gmra.mxu0 %v9211
  %v9482 = vpop.f32.mrf.mxu0
  %v9483 = vadd.f32 0.0, %v9482
  %v9484 = vpop.f32.mrf.mxu0
  %9485 = vmatprep.mubr.f32.mxu0 0.0
  %9486 = vmatmul.mubr.f32.gmra.mxu0 %v9214
  %v9487 = vpop.f32.mrf.mxu0
  %v9488 = vadd.f32 0.0, %v9487
  %v9489 = vpop.f32.mrf.mxu0
  %9490 = vdwg.mxu0
  %v9491 = vsel %vm4890, %v9468, -inf
  %9492 = vmax.xlane.f32.xlu0 %v9491
  %v9493 = vpop.xlane.xlu0 %9492
  %v9494 = vsel %vm4890, %v9473, -inf
  %9495 = vmax.xlane.f32.xlu0 %v9494
  %v9496 = vpop.xlane.xlu0 %9495
  %v9497 = vsel %vm4890, %v9478, -inf
  %9498 = vmax.xlane.f32.xlu0 %v9497
  %v9499 = vpop.xlane.xlu0 %9498
  %v9500 = vsel %vm4890, %v9483, -inf
  %9501 = vmax.xlane.f32.xlu0 %v9500
  %v9502 = vpop.xlane.xlu0 %9501
  %v9503 = vsel %vm4903, %v9488, -inf
  %9504 = vmax.xlane.f32.xlu0 %v9503
  %v9505 = vpop.xlane.xlu0 %9504
  %v9506 = vsub.f32 %v9468, %v9493
  %v9507 = vsub.f32 %v9473, %v9496
  %v9508 = vsub.f32 %v9478, %v9499
  %v9509 = vsub.f32 %v9483, %v9502
  %v9510 = vsub.f32 %v9488, %v9505
  %v9511 = vmul.f32 %v9506, 1.442695
  %v9512 = vpow.pop %v9511
  %v9513 = vmul.f32 %v9507, 1.442695
  %v9514 = vpow.pop %v9513
  %v9515 = vmul.f32 %v9508, 1.442695
  %v9516 = vpow.pop %v9515
  %v9517 = vmul.f32 %v9509, 1.442695
  %v9518 = vpow.pop %v9517
  %v9519 = vmul.f32 %v9510, 1.442695
  %v9520 = vpow.pop %v9519
  %v9521 = vsel %vm4890, %v9512, 0.0
  %9522 = vadd.xlane.f32.xlu0 %v9521
  %v9523 = vpop.xlane.xlu0 %9522
  %v9524 = vsel %vm4890, %v9514, 0.0
  %9525 = vadd.xlane.f32.xlu0 %v9524
  %v9526 = vpop.xlane.xlu0 %9525
  %v9527 = vsel %vm4890, %v9516, 0.0
  %9528 = vadd.xlane.f32.xlu0 %v9527
  %v9529 = vpop.xlane.xlu0 %9528
  %v9530 = vsel %vm4890, %v9518, 0.0
  %9531 = vadd.xlane.f32.xlu0 %v9530
  %v9532 = vpop.xlane.xlu0 %9531
  %v9533 = vsel %vm4903, %v9520, 0.0
  %9534 = vadd.xlane.f32.xlu0 %v9533
  %v9535 = vpop.xlane.xlu0 %9534
  %v9536 = vrcp.pop %v9523
  %v9537 = vrcp.pop %v9526
  %v9538 = vrcp.pop %v9529
  %v9539 = vrcp.pop %v9532
  %v9540 = vrcp.pop %v9535
  %v9541 = vmul.f32 %v9512, %v9536
  %v9542 = vmul.f32 %v9514, %v9537
  %v9543 = vmul.f32 %v9516, %v9538
  %v9544 = vmul.f32 %v9518, %v9539
  %v9545 = vmul.f32 %v9520, %v9540
  %v9546 = vmul.f32 %v9186, %v222
  %v9547 = vmul.f32 %v9187, %v222
  %v9548 = vmul.f32 %v9188, %v222
  %v9549 = vmul.f32 %v9189, %v222
  %v9550 = vmul.f32 %v9190, %v222
  %v9552 = vsel %vm4890, %v9541, 0
  %v9555 = vsel %vm4890, %v9542, 0
  %v9558 = vsel %vm4890, %v9543, 0
  %v9561 = vsel %vm4890, %v9544, 0
  %v9564 = vsel %vm4890, %v9545, 0
  %v9567 = vsel %vm2086, %v9550, 0
  %9569 = vmatprep.subr.mxu0 0.0
  %9570 = vmatpush1.msra.mxu0 0.0
  %9571 = vmatprep.subr.mxu0 0.0
  %9572 = vmatpush1.msra.mxu0 0.0
  %9573 = vmatprep.subr.mxu0 0.0
  %9574 = vmatpush1.msra.mxu0 0.0
  %9575 = vmatprep.subr.mxu0 0.0
  %9576 = vmatpush1.msra.mxu0 0.0
  %9577 = vmatprep.subr.mxu0 0.0
  %9578 = vmatpush1.msra.mxu0 0.0
  %9579 = vmatprep.subr.mxu0 0.0
  %9580 = vmatpush1.msra.mxu0 0.0
  %9581 = vmatprep.subr.mxu0 0.0
  %9582 = vmatpush1.msra.mxu0 0.0
  %9583 = vmatprep.subr.mxu0 0.0
  %9584 = vmatpush1.msra.mxu0 0.0
  %9585 = vmatprep.subr.mxu0 0.0
  %9586 = vmatpush1.msra.mxu0 0.0
  %9587 = vmatprep.subr.mxu0 0.0
  %9588 = vmatpush1.msra.mxu0 0.0
  %9589 = vmatprep.subr.mxu0 0.0
  %9590 = vmatpush1.msra.mxu0 0.0
  %9591 = vmatprep.subr.mxu0 0.0
  %9592 = vmatpush1.msra.mxu0 %v9567
  %9593 = vmatprep.subr.mxu0 0.0
  %9594 = vmatpush1.msra.mxu0 %v9549
  %9595 = vmatprep.subr.mxu0 0.0
  %9596 = vmatpush1.msra.mxu0 %v9548
  %9597 = vmatprep.subr.mxu0 0.0
  %9598 = vmatpush1.msra.mxu0 %v9547
  %9599 = vmatprep.subr.mxu0 0.0
  %9600 = vmatpush1.msra.mxu0 %v9546
  %9601 = vmatprep.subr.mxu0 0.0
  %9602 = vmatpush2.msra.mxu0 0.0
  %9603 = vmatprep.subr.mxu0 0.0
  %9604 = vmatpush2.msra.mxu0 0.0
  %9605 = vmatprep.subr.mxu0 0.0
  %9606 = vmatpush2.msra.mxu0 0.0
  %9607 = vmatprep.subr.mxu0 0.0
  %9608 = vmatpush2.msra.mxu0 0.0
  %9609 = vmatprep.subr.mxu0 0.0
  %9610 = vmatpush2.msra.mxu0 0.0
  %9611 = vmatprep.subr.mxu0 0.0
  %9612 = vmatpush2.msra.mxu0 0.0
  %9613 = vmatprep.subr.mxu0 0.0
  %9614 = vmatpush2.msra.mxu0 0.0
  %9615 = vmatprep.subr.mxu0 0.0
  %9616 = vmatpush2.msra.mxu0 0.0
  %9617 = vmatprep.subr.mxu0 0.0
  %9618 = vmatpush2.msra.mxu0 0.0
  %9619 = vmatprep.subr.mxu0 0.0
  %9620 = vmatpush2.msra.mxu0 0.0
  %9621 = vmatprep.subr.mxu0 0.0
  %9622 = vmatpush2.msra.mxu0 0.0
  %9623 = vmatprep.subr.mxu0 0.0
  %9624 = vmatpush2.msra.mxu0 0.0
  %9625 = vmatprep.subr.mxu0 0.0
  %9626 = vmatpush2.msra.mxu0 0.0
  %9627 = vmatprep.subr.mxu0 0.0
  %9628 = vmatpush2.msra.mxu0 0.0
  %9629 = vmatprep.subr.mxu0 0.0
  %9630 = vmatpush2.msra.mxu0 0.0
  %9631 = vmatprep.subr.mxu0 0.0
  %9632 = vmatpush2.msra.mxu0 0.0
  %9633 = vmatprep.mubr.f32.mxu0 0.0
  %9634 = vmatmul.mubr.f32.gmra.mxu0 %v9552
  %v9635 = vpop.f32.mrf.mxu0
  %v9636 = vadd.f32 0.0, %v9635
  %v9637 = vpop.f32.mrf.mxu0
  %9638 = vmatprep.mubr.f32.mxu0 0.0
  %9639 = vmatmul.mubr.f32.gmra.mxu0 %v9555
  %v9640 = vpop.f32.mrf.mxu0
  %v9641 = vadd.f32 0.0, %v9640
  %v9642 = vpop.f32.mrf.mxu0
  %9643 = vmatprep.mubr.f32.mxu0 0.0
  %9644 = vmatmul.mubr.f32.gmra.mxu0 %v9558
  %v9645 = vpop.f32.mrf.mxu0
  %v9646 = vadd.f32 0.0, %v9645
  %v9647 = vpop.f32.mrf.mxu0
  %9648 = vmatprep.mubr.f32.mxu0 0.0
  %9649 = vmatmul.mubr.f32.gmra.mxu0 %v9561
  %v9650 = vpop.f32.mrf.mxu0
  %v9651 = vadd.f32 0.0, %v9650
  %v9652 = vpop.f32.mrf.mxu0
  %9653 = vmatprep.mubr.f32.mxu0 0.0
  %9654 = vmatmul.mubr.f32.gmra.mxu0 %v9564
  %v9655 = vpop.f32.mrf.mxu0
  %v9656 = vadd.f32 0.0, %v9655
  %v9657 = vpop.f32.mrf.mxu0
  %9658 = vdwg.mxu0
  %v9660 = vsel %vm4890, %v9371, 0
  %v9663 = vsel %vm4890, %v9372, 0
  %v9666 = vsel %vm4890, %v9373, 0
  %v9669 = vsel %vm4890, %v9374, 0
  %v9672 = vsel %vm4890, %v9375, 0
  %v9675 = vsel %vm2086, %v9380, 0
  %9677 = vmatprep.subr.mxu0 0.0
  %9678 = vmatpush1.msra.mxu0 0.0
  %9679 = vmatprep.subr.mxu0 0.0
  %9680 = vmatpush1.msra.mxu0 0.0
  %9681 = vmatprep.subr.mxu0 0.0
  %9682 = vmatpush1.msra.mxu0 0.0
  %9683 = vmatprep.subr.mxu0 0.0
  %9684 = vmatpush1.msra.mxu0 0.0
  %9685 = vmatprep.subr.mxu0 0.0
  %9686 = vmatpush1.msra.mxu0 0.0
  %9687 = vmatprep.subr.mxu0 0.0
  %9688 = vmatpush1.msra.mxu0 0.0
  %9689 = vmatprep.subr.mxu0 0.0
  %9690 = vmatpush1.msra.mxu0 0.0
  %9691 = vmatprep.subr.mxu0 0.0
  %9692 = vmatpush1.msra.mxu0 0.0
  %9693 = vmatprep.subr.mxu0 0.0
  %9694 = vmatpush1.msra.mxu0 0.0
  %9695 = vmatprep.subr.mxu0 0.0
  %9696 = vmatpush1.msra.mxu0 0.0
  %9697 = vmatprep.subr.mxu0 0.0
  %9698 = vmatpush1.msra.mxu0 0.0
  %9699 = vmatprep.subr.mxu0 0.0
  %9700 = vmatpush1.msra.mxu0 %v9675
  %9701 = vmatprep.subr.mxu0 0.0
  %9702 = vmatpush1.msra.mxu0 %v9379
  %9703 = vmatprep.subr.mxu0 0.0
  %9704 = vmatpush1.msra.mxu0 %v9378
  %9705 = vmatprep.subr.mxu0 0.0
  %9706 = vmatpush1.msra.mxu0 %v9377
  %9707 = vmatprep.subr.mxu0 0.0
  %9708 = vmatpush1.msra.mxu0 %v9376
  %9709 = vmatprep.subr.mxu0 0.0
  %9710 = vmatpush2.msra.mxu0 0.0
  %9711 = vmatprep.subr.mxu0 0.0
  %9712 = vmatpush2.msra.mxu0 0.0
  %9713 = vmatprep.subr.mxu0 0.0
  %9714 = vmatpush2.msra.mxu0 0.0
  %9715 = vmatprep.subr.mxu0 0.0
  %9716 = vmatpush2.msra.mxu0 0.0
  %9717 = vmatprep.subr.mxu0 0.0
  %9718 = vmatpush2.msra.mxu0 0.0
  %9719 = vmatprep.subr.mxu0 0.0
  %9720 = vmatpush2.msra.mxu0 0.0
  %9721 = vmatprep.subr.mxu0 0.0
  %9722 = vmatpush2.msra.mxu0 0.0
  %9723 = vmatprep.subr.mxu0 0.0
  %9724 = vmatpush2.msra.mxu0 0.0
  %9725 = vmatprep.subr.mxu0 0.0
  %9726 = vmatpush2.msra.mxu0 0.0
  %9727 = vmatprep.subr.mxu0 0.0
  %9728 = vmatpush2.msra.mxu0 0.0
  %9729 = vmatprep.subr.mxu0 0.0
  %9730 = vmatpush2.msra.mxu0 0.0
  %9731 = vmatprep.subr.mxu0 0.0
  %9732 = vmatpush2.msra.mxu0 0.0
  %9733 = vmatprep.subr.mxu0 0.0
  %9734 = vmatpush2.msra.mxu0 0.0
  %9735 = vmatprep.subr.mxu0 0.0
  %9736 = vmatpush2.msra.mxu0 0.0
  %9737 = vmatprep.subr.mxu0 0.0
  %9738 = vmatpush2.msra.mxu0 0.0
  %9739 = vmatprep.subr.mxu0 0.0
  %9740 = vmatpush2.msra.mxu0 0.0
  %9741 = vmatprep.mubr.f32.mxu0 0.0
  %9742 = vmatmul.mubr.f32.gmra.mxu0 %v9660
  %v9743 = vpop.f32.mrf.mxu0
  %v9744 = vadd.f32 %v9636, %v9743
  %v9745 = vpop.f32.mrf.mxu0
  %9746 = vmatprep.mubr.f32.mxu0 0.0
  %9747 = vmatmul.mubr.f32.gmra.mxu0 %v9663
  %v9748 = vpop.f32.mrf.mxu0
  %v9749 = vadd.f32 %v9641, %v9748
  %v9750 = vpop.f32.mrf.mxu0
  %9751 = vmatprep.mubr.f32.mxu0 0.0
  %9752 = vmatmul.mubr.f32.gmra.mxu0 %v9666
  %v9753 = vpop.f32.mrf.mxu0
  %v9754 = vadd.f32 %v9646, %v9753
  %v9755 = vpop.f32.mrf.mxu0
  %9756 = vmatprep.mubr.f32.mxu0 0.0
  %9757 = vmatmul.mubr.f32.gmra.mxu0 %v9669
  %v9758 = vpop.f32.mrf.mxu0
  %v9759 = vadd.f32 %v9651, %v9758
  %v9760 = vpop.f32.mrf.mxu0
  %9761 = vmatprep.mubr.f32.mxu0 0.0
  %9762 = vmatmul.mubr.f32.gmra.mxu0 %v9672
  %v9763 = vpop.f32.mrf.mxu0
  %v9764 = vadd.f32 %v9656, %v9763
  %v9765 = vpop.f32.mrf.mxu0
  %9766 = vdwg.mxu0
  %v9767 = vmul.f32 %v8094, %v227
  %v9768 = vmul.f32 %v8095, %v227
  %v9769 = vmul.f32 %v8096, %v227
  %v9770 = vmul.f32 %v8097, %v227
  %v9771 = vmul.f32 %v8098, %v227
  %v9773 = vsel %vm254, %v9767, 0
  %v9776 = vsel %vm254, %v9768, 0
  %v9779 = vsel %vm254, %v9769, 0
  %v9782 = vsel %vm254, %v9770, 0
  %v9785 = vsel %vm254, %v9771, 0
  %9787 = vmatprep.subr.mxu0 0.0
  %9788 = vmatpush1.xpose.msra.mxu0 0.0
  %9789 = vmatprep.subr.mxu0 0.0
  %9790 = vmatpush1.xpose.msra.mxu0 0.0
  %9791 = vmatprep.subr.mxu0 0.0
  %9792 = vmatpush1.xpose.msra.mxu0 0.0
  %9793 = vmatprep.subr.mxu0 0.0
  %9794 = vmatpush1.xpose.msra.mxu0 0.0
  %9795 = vmatprep.subr.mxu0 0.0
  %9796 = vmatpush1.xpose.msra.mxu0 0.0
  %9797 = vmatprep.subr.mxu0 0.0
  %9798 = vmatpush1.xpose.msra.mxu0 0.0
  %9799 = vmatprep.subr.mxu0 0.0
  %9800 = vmatpush1.xpose.msra.mxu0 0.0
  %9801 = vmatprep.subr.mxu0 0.0
  %9802 = vmatpush1.xpose.msra.mxu0 0.0
  %9803 = vmatprep.subr.mxu0 0.0
  %9804 = vmatpush1.xpose.msra.mxu0 0.0
  %9805 = vmatprep.subr.mxu0 0.0
  %9806 = vmatpush1.xpose.msra.mxu0 0.0
  %9807 = vmatprep.subr.mxu0 0.0
  %9808 = vmatpush1.xpose.msra.mxu0 0.0
  %9809 = vmatprep.subr.mxu0 0.0
  %9810 = vmatpush1.xpose.msra.mxu0 %v9785
  %9811 = vmatprep.subr.mxu0 0.0
  %9812 = vmatpush1.xpose.msra.mxu0 %v9782
  %9813 = vmatprep.subr.mxu0 0.0
  %9814 = vmatpush1.xpose.msra.mxu0 %v9779
  %9815 = vmatprep.subr.mxu0 0.0
  %9816 = vmatpush1.xpose.msra.mxu0 %v9776
  %9817 = vmatprep.subr.mxu0 0.0
  %9818 = vmatpush1.xpose.msra.mxu0 %v9773
  %9819 = vmatprep.subr.mxu0 0.0
  %9820 = vmatpush2.xpose.msra.mxu0 0.0
  %9821 = vmatprep.subr.mxu0 0.0
  %9822 = vmatpush2.xpose.msra.mxu0 0.0
  %9823 = vmatprep.subr.mxu0 0.0
  %9824 = vmatpush2.xpose.msra.mxu0 0.0
  %9825 = vmatprep.subr.mxu0 0.0
  %9826 = vmatpush2.xpose.msra.mxu0 0.0
  %9827 = vmatprep.subr.mxu0 0.0
  %9828 = vmatpush2.xpose.msra.mxu0 0.0
  %9829 = vmatprep.subr.mxu0 0.0
  %9830 = vmatpush2.xpose.msra.mxu0 0.0
  %9831 = vmatprep.subr.mxu0 0.0
  %9832 = vmatpush2.xpose.msra.mxu0 0.0
  %9833 = vmatprep.subr.mxu0 0.0
  %9834 = vmatpush2.xpose.msra.mxu0 0.0
  %9835 = vmatprep.subr.mxu0 0.0
  %9836 = vmatpush2.xpose.msra.mxu0 0.0
  %9837 = vmatprep.subr.mxu0 0.0
  %9838 = vmatpush2.xpose.msra.mxu0 0.0
  %9839 = vmatprep.subr.mxu0 0.0
  %9840 = vmatpush2.xpose.msra.mxu0 0.0
  %9841 = vmatprep.subr.mxu0 0.0
  %9842 = vmatpush2.xpose.msra.mxu0 0.0
  %9843 = vmatprep.subr.mxu0 0.0
  %9844 = vmatpush2.xpose.msra.mxu0 0.0
  %9845 = vmatprep.subr.mxu0 0.0
  %9846 = vmatpush2.xpose.msra.mxu0 0.0
  %9847 = vmatprep.subr.mxu0 0.0
  %9848 = vmatpush2.xpose.msra.mxu0 0.0
  %9849 = vmatprep.subr.mxu0 0.0
  %9850 = vmatpush2.xpose.msra.mxu0 0.0
  %9851 = vmatprep.mubr.f32.mxu0 0.0
  %9852 = vmatmul.mubr.f32.gmra.mxu0 %v9202
  %v9853 = vpop.f32.mrf.mxu0
  %v9854 = vadd.f32 0.0, %v9853
  %v9855 = vpop.f32.mrf.mxu0
  %9856 = vmatprep.mubr.f32.mxu0 0.0
  %9857 = vmatmul.mubr.f32.gmra.mxu0 %v9205
  %v9858 = vpop.f32.mrf.mxu0
  %v9859 = vadd.f32 0.0, %v9858
  %v9860 = vpop.f32.mrf.mxu0
  %9861 = vmatprep.mubr.f32.mxu0 0.0
  %9862 = vmatmul.mubr.f32.gmra.mxu0 %v9208
  %v9863 = vpop.f32.mrf.mxu0
  %v9864 = vadd.f32 0.0, %v9863
  %v9865 = vpop.f32.mrf.mxu0
  %9866 = vmatprep.mubr.f32.mxu0 0.0
  %9867 = vmatmul.mubr.f32.gmra.mxu0 %v9211
  %v9868 = vpop.f32.mrf.mxu0
  %v9869 = vadd.f32 0.0, %v9868
  %v9870 = vpop.f32.mrf.mxu0
  %9871 = vmatprep.mubr.f32.mxu0 0.0
  %9872 = vmatmul.mubr.f32.gmra.mxu0 %v9214
  %v9873 = vpop.f32.mrf.mxu0
  %v9874 = vadd.f32 0.0, %v9873
  %v9875 = vpop.f32.mrf.mxu0
  %9876 = vdwg.mxu0
  %v9877 = vsel %vm4890, %v9854, -inf
  %9878 = vmax.xlane.f32.xlu0 %v9877
  %v9879 = vpop.xlane.xlu0 %9878
  %v9880 = vsel %vm4890, %v9859, -inf
  %9881 = vmax.xlane.f32.xlu0 %v9880
  %v9882 = vpop.xlane.xlu0 %9881
  %v9883 = vsel %vm4890, %v9864, -inf
  %9884 = vmax.xlane.f32.xlu0 %v9883
  %v9885 = vpop.xlane.xlu0 %9884
  %v9886 = vsel %vm4890, %v9869, -inf
  %9887 = vmax.xlane.f32.xlu0 %v9886
  %v9888 = vpop.xlane.xlu0 %9887
  %v9889 = vsel %vm4903, %v9874, -inf
  %9890 = vmax.xlane.f32.xlu0 %v9889
  %v9891 = vpop.xlane.xlu0 %9890
  %v9892 = vsub.f32 %v9854, %v9879
  %v9893 = vsub.f32 %v9859, %v9882
  %v9894 = vsub.f32 %v9864, %v9885
  %v9895 = vsub.f32 %v9869, %v9888
  %v9896 = vsub.f32 %v9874, %v9891
  %v9897 = vmul.f32 %v9892, 1.442695
  %v9898 = vpow.pop %v9897
  %v9899 = vmul.f32 %v9893, 1.442695
  %v9900 = vpow.pop %v9899
  %v9901 = vmul.f32 %v9894, 1.442695
  %v9902 = vpow.pop %v9901
  %v9903 = vmul.f32 %v9895, 1.442695
  %v9904 = vpow.pop %v9903
  %v9905 = vmul.f32 %v9896, 1.442695
  %v9906 = vpow.pop %v9905
  %v9907 = vsel %vm4890, %v9898, 0.0
  %9908 = vadd.xlane.f32.xlu0 %v9907
  %v9909 = vpop.xlane.xlu0 %9908
  %v9910 = vsel %vm4890, %v9900, 0.0
  %9911 = vadd.xlane.f32.xlu0 %v9910
  %v9912 = vpop.xlane.xlu0 %9911
  %v9913 = vsel %vm4890, %v9902, 0.0
  %9914 = vadd.xlane.f32.xlu0 %v9913
  %v9915 = vpop.xlane.xlu0 %9914
  %v9916 = vsel %vm4890, %v9904, 0.0
  %9917 = vadd.xlane.f32.xlu0 %v9916
  %v9918 = vpop.xlane.xlu0 %9917
  %v9919 = vsel %vm4903, %v9906, 0.0
  %9920 = vadd.xlane.f32.xlu0 %v9919
  %v9921 = vpop.xlane.xlu0 %9920
  %v9922 = vrcp.pop %v9909
  %v9923 = vrcp.pop %v9912
  %v9924 = vrcp.pop %v9915
  %v9925 = vrcp.pop %v9918
  %v9926 = vrcp.pop %v9921
  %v9927 = vmul.f32 %v9898, %v9922
  %v9928 = vmul.f32 %v9900, %v9923
  %v9929 = vmul.f32 %v9902, %v9924
  %v9930 = vmul.f32 %v9904, %v9925
  %v9931 = vmul.f32 %v9906, %v9926
  %v9932 = vmul.f32 %v9186, %v227
  %v9933 = vmul.f32 %v9187, %v227
  %v9934 = vmul.f32 %v9188, %v227
  %v9935 = vmul.f32 %v9189, %v227
  %v9936 = vmul.f32 %v9190, %v227
  %v9938 = vsel %vm4890, %v9927, 0
  %v9941 = vsel %vm4890, %v9928, 0
  %v9944 = vsel %vm4890, %v9929, 0
  %v9947 = vsel %vm4890, %v9930, 0
  %v9950 = vsel %vm4890, %v9931, 0
  %v9953 = vsel %vm2086, %v9936, 0
  %9955 = vmatprep.subr.mxu0 0.0
  %9956 = vmatpush1.msra.mxu0 0.0
  %9957 = vmatprep.subr.mxu0 0.0
  %9958 = vmatpush1.msra.mxu0 0.0
  %9959 = vmatprep.subr.mxu0 0.0
  %9960 = vmatpush1.msra.mxu0 0.0
  %9961 = vmatprep.subr.mxu0 0.0
  %9962 = vmatpush1.msra.mxu0 0.0
  %9963 = vmatprep.subr.mxu0 0.0
  %9964 = vmatpush1.msra.mxu0 0.0
  %9965 = vmatprep.subr.mxu0 0.0
  %9966 = vmatpush1.msra.mxu0 0.0
  %9967 = vmatprep.subr.mxu0 0.0
  %9968 = vmatpush1.msra.mxu0 0.0
  %9969 = vmatprep.subr.mxu0 0.0
  %9970 = vmatpush1.msra.mxu0 0.0
  %9971 = vmatprep.subr.mxu0 0.0
  %9972 = vmatpush1.msra.mxu0 0.0
  %9973 = vmatprep.subr.mxu0 0.0
  %9974 = vmatpush1.msra.mxu0 0.0
  %9975 = vmatprep.subr.mxu0 0.0
  %9976 = vmatpush1.msra.mxu0 0.0
  %9977 = vmatprep.subr.mxu0 0.0
  %9978 = vmatpush1.msra.mxu0 %v9953
  %9979 = vmatprep.subr.mxu0 0.0
  %9980 = vmatpush1.msra.mxu0 %v9935
  %9981 = vmatprep.subr.mxu0 0.0
  %9982 = vmatpush1.msra.mxu0 %v9934
  %9983 = vmatprep.subr.mxu0 0.0
  %9984 = vmatpush1.msra.mxu0 %v9933
  %9985 = vmatprep.subr.mxu0 0.0
  %9986 = vmatpush1.msra.mxu0 %v9932
  %9987 = vmatprep.subr.mxu0 0.0
  %9988 = vmatpush2.msra.mxu0 0.0
  %9989 = vmatprep.subr.mxu0 0.0
  %9990 = vmatpush2.msra.mxu0 0.0
  %9991 = vmatprep.subr.mxu0 0.0
  %9992 = vmatpush2.msra.mxu0 0.0
  %9993 = vmatprep.subr.mxu0 0.0
  %9994 = vmatpush2.msra.mxu0 0.0
  %9995 = vmatprep.subr.mxu0 0.0
  %9996 = vmatpush2.msra.mxu0 0.0
  %9997 = vmatprep.subr.mxu0 0.0
  %9998 = vmatpush2.msra.mxu0 0.0
  %9999 = vmatprep.subr.mxu0 0.0
  %10000 = vmatpush2.msra.mxu0 0.0
  %10001 = vmatprep.subr.mxu0 0.0
  %10002 = vmatpush2.msra.mxu0 0.0
  %10003 = vmatprep.subr.mxu0 0.0
  %10004 = vmatpush2.msra.mxu0 0.0
  %10005 = vmatprep.subr.mxu0 0.0
  %10006 = vmatpush2.msra.mxu0 0.0
  %10007 = vmatprep.subr.mxu0 0.0
  %10008 = vmatpush2.msra.mxu0 0.0
  %10009 = vmatprep.subr.mxu0 0.0
  %10010 = vmatpush2.msra.mxu0 0.0
  %10011 = vmatprep.subr.mxu0 0.0
  %10012 = vmatpush2.msra.mxu0 0.0
  %10013 = vmatprep.subr.mxu0 0.0
  %10014 = vmatpush2.msra.mxu0 0.0
  %10015 = vmatprep.subr.mxu0 0.0
  %10016 = vmatpush2.msra.mxu0 0.0
  %10017 = vmatprep.subr.mxu0 0.0
  %10018 = vmatpush2.msra.mxu0 0.0
  %10019 = vmatprep.mubr.f32.mxu0 0.0
  %10020 = vmatmul.mubr.f32.gmra.mxu0 %v9938
  %v10021 = vpop.f32.mrf.mxu0
  %v10022 = vadd.f32 0.0, %v10021
  %v10023 = vpop.f32.mrf.mxu0
  %10024 = vmatprep.mubr.f32.mxu0 0.0
  %10025 = vmatmul.mubr.f32.gmra.mxu0 %v9941
  %v10026 = vpop.f32.mrf.mxu0
  %v10027 = vadd.f32 0.0, %v10026
  %v10028 = vpop.f32.mrf.mxu0
  %10029 = vmatprep.mubr.f32.mxu0 0.0
  %10030 = vmatmul.mubr.f32.gmra.mxu0 %v9944
  %v10031 = vpop.f32.mrf.mxu0
  %v10032 = vadd.f32 0.0, %v10031
  %v10033 = vpop.f32.mrf.mxu0
  %10034 = vmatprep.mubr.f32.mxu0 0.0
  %10035 = vmatmul.mubr.f32.gmra.mxu0 %v9947
  %v10036 = vpop.f32.mrf.mxu0
  %v10037 = vadd.f32 0.0, %v10036
  %v10038 = vpop.f32.mrf.mxu0
  %10039 = vmatprep.mubr.f32.mxu0 0.0
  %10040 = vmatmul.mubr.f32.gmra.mxu0 %v9950
  %v10041 = vpop.f32.mrf.mxu0
  %v10042 = vadd.f32 0.0, %v10041
  %v10043 = vpop.f32.mrf.mxu0
  %10044 = vdwg.mxu0
  %v10045 = vadd.f32 %v9744, %v10022
  %v10046 = vadd.f32 %v9749, %v10027
  %v10047 = vadd.f32 %v9754, %v10032
  %v10048 = vadd.f32 %v9759, %v10037
  %v10049 = vadd.f32 %v9764, %v10042
  %v10050 = vmul.f32 %v8094, %v232
  %v10051 = vmul.f32 %v8095, %v232
  %v10052 = vmul.f32 %v8096, %v232
  %v10053 = vmul.f32 %v8097, %v232
  %v10054 = vmul.f32 %v8098, %v232
  %v10056 = vsel %vm254, %v10050, 0
  %v10059 = vsel %vm254, %v10051, 0
  %v10062 = vsel %vm254, %v10052, 0
  %v10065 = vsel %vm254, %v10053, 0
  %v10068 = vsel %vm254, %v10054, 0
  %10070 = vmatprep.subr.mxu0 0.0
  %10071 = vmatpush1.xpose.msra.mxu0 0.0
  %10072 = vmatprep.subr.mxu0 0.0
  %10073 = vmatpush1.xpose.msra.mxu0 0.0
  %10074 = vmatprep.subr.mxu0 0.0
  %10075 = vmatpush1.xpose.msra.mxu0 0.0
  %10076 = vmatprep.subr.mxu0 0.0
  %10077 = vmatpush1.xpose.msra.mxu0 0.0
  %10078 = vmatprep.subr.mxu0 0.0
  %10079 = vmatpush1.xpose.msra.mxu0 0.0
  %10080 = vmatprep.subr.mxu0 0.0
  %10081 = vmatpush1.xpose.msra.mxu0 0.0
  %10082 = vmatprep.subr.mxu0 0.0
  %10083 = vmatpush1.xpose.msra.mxu0 0.0
  %10084 = vmatprep.subr.mxu0 0.0
  %10085 = vmatpush1.xpose.msra.mxu0 0.0
  %10086 = vmatprep.subr.mxu0 0.0
  %10087 = vmatpush1.xpose.msra.mxu0 0.0
  %10088 = vmatprep.subr.mxu0 0.0
  %10089 = vmatpush1.xpose.msra.mxu0 0.0
  %10090 = vmatprep.subr.mxu0 0.0
  %10091 = vmatpush1.xpose.msra.mxu0 0.0
  %10092 = vmatprep.subr.mxu0 0.0
  %10093 = vmatpush1.xpose.msra.mxu0 %v10068
  %10094 = vmatprep.subr.mxu0 0.0
  %10095 = vmatpush1.xpose.msra.mxu0 %v10065
  %10096 = vmatprep.subr.mxu0 0.0
  %10097 = vmatpush1.xpose.msra.mxu0 %v10062
  %10098 = vmatprep.subr.mxu0 0.0
  %10099 = vmatpush1.xpose.msra.mxu0 %v10059
  %10100 = vmatprep.subr.mxu0 0.0
  %10101 = vmatpush1.xpose.msra.mxu0 %v10056
  %10102 = vmatprep.subr.mxu0 0.0
  %10103 = vmatpush2.xpose.msra.mxu0 0.0
  %10104 = vmatprep.subr.mxu0 0.0
  %10105 = vmatpush2.xpose.msra.mxu0 0.0
  %10106 = vmatprep.subr.mxu0 0.0
  %10107 = vmatpush2.xpose.msra.mxu0 0.0
  %10108 = vmatprep.subr.mxu0 0.0
  %10109 = vmatpush2.xpose.msra.mxu0 0.0
  %10110 = vmatprep.subr.mxu0 0.0
  %10111 = vmatpush2.xpose.msra.mxu0 0.0
  %10112 = vmatprep.subr.mxu0 0.0
  %10113 = vmatpush2.xpose.msra.mxu0 0.0
  %10114 = vmatprep.subr.mxu0 0.0
  %10115 = vmatpush2.xpose.msra.mxu0 0.0
  %10116 = vmatprep.subr.mxu0 0.0
  %10117 = vmatpush2.xpose.msra.mxu0 0.0
  %10118 = vmatprep.subr.mxu0 0.0
  %10119 = vmatpush2.xpose.msra.mxu0 0.0
  %10120 = vmatprep.subr.mxu0 0.0
  %10121 = vmatpush2.xpose.msra.mxu0 0.0
  %10122 = vmatprep.subr.mxu0 0.0
  %10123 = vmatpush2.xpose.msra.mxu0 0.0
  %10124 = vmatprep.subr.mxu0 0.0
  %10125 = vmatpush2.xpose.msra.mxu0 0.0
  %10126 = vmatprep.subr.mxu0 0.0
  %10127 = vmatpush2.xpose.msra.mxu0 0.0
  %10128 = vmatprep.subr.mxu0 0.0
  %10129 = vmatpush2.xpose.msra.mxu0 0.0
  %10130 = vmatprep.subr.mxu0 0.0
  %10131 = vmatpush2.xpose.msra.mxu0 0.0
  %10132 = vmatprep.subr.mxu0 0.0
  %10133 = vmatpush2.xpose.msra.mxu0 0.0
  %10134 = vmatprep.mubr.f32.mxu0 0.0
  %10135 = vmatmul.mubr.f32.gmra.mxu0 %v9202
  %v10136 = vpop.f32.mrf.mxu0
  %v10137 = vadd.f32 0.0, %v10136
  %v10138 = vpop.f32.mrf.mxu0
  %10139 = vmatprep.mubr.f32.mxu0 0.0
  %10140 = vmatmul.mubr.f32.gmra.mxu0 %v9205
  %v10141 = vpop.f32.mrf.mxu0
  %v10142 = vadd.f32 0.0, %v10141
  %v10143 = vpop.f32.mrf.mxu0
  %10144 = vmatprep.mubr.f32.mxu0 0.0
  %10145 = vmatmul.mubr.f32.gmra.mxu0 %v9208
  %v10146 = vpop.f32.mrf.mxu0
  %v10147 = vadd.f32 0.0, %v10146
  %v10148 = vpop.f32.mrf.mxu0
  %10149 = vmatprep.mubr.f32.mxu0 0.0
  %10150 = vmatmul.mubr.f32.gmra.mxu0 %v9211
  %v10151 = vpop.f32.mrf.mxu0
  %v10152 = vadd.f32 0.0, %v10151
  %v10153 = vpop.f32.mrf.mxu0
  %10154 = vmatprep.mubr.f32.mxu0 0.0
  %10155 = vmatmul.mubr.f32.gmra.mxu0 %v9214
  %v10156 = vpop.f32.mrf.mxu0
  %v10157 = vadd.f32 0.0, %v10156
  %v10158 = vpop.f32.mrf.mxu0
  %10159 = vdwg.mxu0
  %v10160 = vsel %vm4890, %v10137, -inf
  %10161 = vmax.xlane.f32.xlu0 %v10160
  %v10162 = vpop.xlane.xlu0 %10161
  %v10163 = vsel %vm4890, %v10142, -inf
  %10164 = vmax.xlane.f32.xlu0 %v10163
  %v10165 = vpop.xlane.xlu0 %10164
  %v10166 = vsel %vm4890, %v10147, -inf
  %10167 = vmax.xlane.f32.xlu0 %v10166
  %v10168 = vpop.xlane.xlu0 %10167
  %v10169 = vsel %vm4890, %v10152, -inf
  %10170 = vmax.xlane.f32.xlu0 %v10169
  %v10171 = vpop.xlane.xlu0 %10170
  %v10172 = vsel %vm4903, %v10157, -inf
  %10173 = vmax.xlane.f32.xlu0 %v10172
  %v10174 = vpop.xlane.xlu0 %10173
  %v10175 = vsub.f32 %v10137, %v10162
  %v10176 = vsub.f32 %v10142, %v10165
  %v10177 = vsub.f32 %v10147, %v10168
  %v10178 = vsub.f32 %v10152, %v10171
  %v10179 = vsub.f32 %v10157, %v10174
  %v10180 = vmul.f32 %v10175, 1.442695
  %v10181 = vpow.pop %v10180
  %v10182 = vmul.f32 %v10176, 1.442695
  %v10183 = vpow.pop %v10182
  %v10184 = vmul.f32 %v10177, 1.442695
  %v10185 = vpow.pop %v10184
  %v10186 = vmul.f32 %v10178, 1.442695
  %v10187 = vpow.pop %v10186
  %v10188 = vmul.f32 %v10179, 1.442695
  %v10189 = vpow.pop %v10188
  %v10190 = vsel %vm4890, %v10181, 0.0
  %10191 = vadd.xlane.f32.xlu0 %v10190
  %v10192 = vpop.xlane.xlu0 %10191
  %v10193 = vsel %vm4890, %v10183, 0.0
  %10194 = vadd.xlane.f32.xlu0 %v10193
  %v10195 = vpop.xlane.xlu0 %10194
  %v10196 = vsel %vm4890, %v10185, 0.0
  %10197 = vadd.xlane.f32.xlu0 %v10196
  %v10198 = vpop.xlane.xlu0 %10197
  %v10199 = vsel %vm4890, %v10187, 0.0
  %10200 = vadd.xlane.f32.xlu0 %v10199
  %v10201 = vpop.xlane.xlu0 %10200
  %v10202 = vsel %vm4903, %v10189, 0.0
  %10203 = vadd.xlane.f32.xlu0 %v10202
  %v10204 = vpop.xlane.xlu0 %10203
  %v10205 = vrcp.pop %v10192
  %v10206 = vrcp.pop %v10195
  %v10207 = vrcp.pop %v10198
  %v10208 = vrcp.pop %v10201
  %v10209 = vrcp.pop %v10204
  %v10210 = vmul.f32 %v10181, %v10205
  %v10211 = vmul.f32 %v10183, %v10206
  %v10212 = vmul.f32 %v10185, %v10207
  %v10213 = vmul.f32 %v10187, %v10208
  %v10214 = vmul.f32 %v10189, %v10209
  %v10215 = vmul.f32 %v9186, %v232
  %v10216 = vmul.f32 %v9187, %v232
  %v10217 = vmul.f32 %v9188, %v232
  %v10218 = vmul.f32 %v9189, %v232
  %v10219 = vmul.f32 %v9190, %v232
  %v10221 = vsel %vm4890, %v10210, 0
  %v10224 = vsel %vm4890, %v10211, 0
  %v10227 = vsel %vm4890, %v10212, 0
  %v10230 = vsel %vm4890, %v10213, 0
  %v10233 = vsel %vm4890, %v10214, 0
  %v10236 = vsel %vm2086, %v10219, 0
  %10238 = vmatprep.subr.mxu0 0.0
  %10239 = vmatpush1.msra.mxu0 0.0
  %10240 = vmatprep.subr.mxu0 0.0
  %10241 = vmatpush1.msra.mxu0 0.0
  %10242 = vmatprep.subr.mxu0 0.0
  %10243 = vmatpush1.msra.mxu0 0.0
  %10244 = vmatprep.subr.mxu0 0.0
  %10245 = vmatpush1.msra.mxu0 0.0
  %10246 = vmatprep.subr.mxu0 0.0
  %10247 = vmatpush1.msra.mxu0 0.0
  %10248 = vmatprep.subr.mxu0 0.0
  %10249 = vmatpush1.msra.mxu0 0.0
  %10250 = vmatprep.subr.mxu0 0.0
  %10251 = vmatpush1.msra.mxu0 0.0
  %10252 = vmatprep.subr.mxu0 0.0
  %10253 = vmatpush1.msra.mxu0 0.0
  %10254 = vmatprep.subr.mxu0 0.0
  %10255 = vmatpush1.msra.mxu0 0.0
  %10256 = vmatprep.subr.mxu0 0.0
  %10257 = vmatpush1.msra.mxu0 0.0
  %10258 = vmatprep.subr.mxu0 0.0
  %10259 = vmatpush1.msra.mxu0 0.0
  %10260 = vmatprep.subr.mxu0 0.0
  %10261 = vmatpush1.msra.mxu0 %v10236
  %10262 = vmatprep.subr.mxu0 0.0
  %10263 = vmatpush1.msra.mxu0 %v10218
  %10264 = vmatprep.subr.mxu0 0.0
  %10265 = vmatpush1.msra.mxu0 %v10217
  %10266 = vmatprep.subr.mxu0 0.0
  %10267 = vmatpush1.msra.mxu0 %v10216
  %10268 = vmatprep.subr.mxu0 0.0
  %10269 = vmatpush1.msra.mxu0 %v10215
  %10270 = vmatprep.subr.mxu0 0.0
  %10271 = vmatpush2.msra.mxu0 0.0
  %10272 = vmatprep.subr.mxu0 0.0
  %10273 = vmatpush2.msra.mxu0 0.0
  %10274 = vmatprep.subr.mxu0 0.0
  %10275 = vmatpush2.msra.mxu0 0.0
  %10276 = vmatprep.subr.mxu0 0.0
  %10277 = vmatpush2.msra.mxu0 0.0
  %10278 = vmatprep.subr.mxu0 0.0
  %10279 = vmatpush2.msra.mxu0 0.0
  %10280 = vmatprep.subr.mxu0 0.0
  %10281 = vmatpush2.msra.mxu0 0.0
  %10282 = vmatprep.subr.mxu0 0.0
  %10283 = vmatpush2.msra.mxu0 0.0
  %10284 = vmatprep.subr.mxu0 0.0
  %10285 = vmatpush2.msra.mxu0 0.0
  %10286 = vmatprep.subr.mxu0 0.0
  %10287 = vmatpush2.msra.mxu0 0.0
  %10288 = vmatprep.subr.mxu0 0.0
  %10289 = vmatpush2.msra.mxu0 0.0
  %10290 = vmatprep.subr.mxu0 0.0
  %10291 = vmatpush2.msra.mxu0 0.0
  %10292 = vmatprep.subr.mxu0 0.0
  %10293 = vmatpush2.msra.mxu0 0.0
  %10294 = vmatprep.subr.mxu0 0.0
  %10295 = vmatpush2.msra.mxu0 0.0
  %10296 = vmatprep.subr.mxu0 0.0
  %10297 = vmatpush2.msra.mxu0 0.0
  %10298 = vmatprep.subr.mxu0 0.0
  %10299 = vmatpush2.msra.mxu0 0.0
  %10300 = vmatprep.subr.mxu0 0.0
  %10301 = vmatpush2.msra.mxu0 0.0
  %10302 = vmatprep.mubr.f32.mxu0 0.0
  %10303 = vmatmul.mubr.f32.gmra.mxu0 %v10221
  %v10304 = vpop.f32.mrf.mxu0
  %v10305 = vadd.f32 0.0, %v10304
  %v10306 = vpop.f32.mrf.mxu0
  %10307 = vmatprep.mubr.f32.mxu0 0.0
  %10308 = vmatmul.mubr.f32.gmra.mxu0 %v10224
  %v10309 = vpop.f32.mrf.mxu0
  %v10310 = vadd.f32 0.0, %v10309
  %v10311 = vpop.f32.mrf.mxu0
  %10312 = vmatprep.mubr.f32.mxu0 0.0
  %10313 = vmatmul.mubr.f32.gmra.mxu0 %v10227
  %v10314 = vpop.f32.mrf.mxu0
  %v10315 = vadd.f32 0.0, %v10314
  %v10316 = vpop.f32.mrf.mxu0
  %10317 = vmatprep.mubr.f32.mxu0 0.0
  %10318 = vmatmul.mubr.f32.gmra.mxu0 %v10230
  %v10319 = vpop.f32.mrf.mxu0
  %v10320 = vadd.f32 0.0, %v10319
  %v10321 = vpop.f32.mrf.mxu0
  %10322 = vmatprep.mubr.f32.mxu0 0.0
  %10323 = vmatmul.mubr.f32.gmra.mxu0 %v10233
  %v10324 = vpop.f32.mrf.mxu0
  %v10325 = vadd.f32 0.0, %v10324
  %v10326 = vpop.f32.mrf.mxu0
  %10327 = vdwg.mxu0
  %v10328 = vadd.f32 %v10045, %v10305
  %v10329 = vadd.f32 %v10046, %v10310
  %v10330 = vadd.f32 %v10047, %v10315
  %v10331 = vadd.f32 %v10048, %v10320
  %v10332 = vadd.f32 %v10049, %v10325
  %v10333 = vmul.f32 %v249, %v7002
  %v10334 = vmul.f32 %v250, %v7003
  %v10335 = vmul.f32 %v251, %v7004
  %v10336 = vmul.f32 %v252, %v7005
  %v10337 = vmul.f32 %v253, %v7006
  %v10338 = vadd.f32 %v10328, %v10333
  %v10339 = vadd.f32 %v10329, %v10334
  %v10340 = vadd.f32 %v10330, %v10335
  %v10341 = vadd.f32 %v10331, %v10336
  %v10342 = vadd.f32 %v10332, %v10337
  %v10348 = vrot.slane %v10338, 7
  %v10349 = vrot.slane %v10339, 7
  %v10350 = vsel %vm2086, %v10348, %v10349
  %v10351 = vrot.slane %v10340, 7
  %v10352 = vsel %vm2086, %v10349, %v10351
  %v10353 = vrot.slane %v10341, 7
  %v10354 = vsel %vm2086, %v10351, %v10353
  %v10355 = vrot.slane %v10342, 7
  %v10356 = vsel %vm2086, %v10353, %v10355
  %v10358 = vsel %vm2086, %v5913, %v10348
  %v10360 = vsel %vm254, %v5909, 0
  %v10363 = vsel %vm254, %v5910, 0
  %v10366 = vsel %vm254, %v5911, 0
  %v10369 = vsel %vm254, %v5912, 0
  %v10372 = vsel %vm254, %v10358, 0
  %v10374 = vsel %vm254, %v10350, 0
  %v10376 = vsel %vm254, %v10352, 0
  %v10378 = vsel %vm254, %v10354, 0
  %v10380 = vsel %vm254, %v10356, 0
  %10382 = vmatprep.subr.mxu0 0.0
  %10383 = vmatpush1.msra.mxu0 0.0
  %10384 = vmatprep.subr.mxu0 0.0
  %10385 = vmatpush1.msra.mxu0 0.0
  %10386 = vmatprep.subr.mxu0 0.0
  %10387 = vmatpush1.msra.mxu0 0.0
  %10388 = vmatprep.subr.mxu0 0.0
  %10389 = vmatpush1.msra.mxu0 0.0
  %10390 = vmatprep.subr.mxu0 0.0
  %10391 = vmatpush1.msra.mxu0 0.0
  %10392 = vmatprep.subr.mxu0 0.0
  %10393 = vmatpush1.msra.mxu0 0.0
  %10394 = vmatprep.subr.mxu0 0.0
  %10395 = vmatpush1.msra.mxu0 0.0
  %10396 = vmatprep.subr.mxu0 0.0
  %10397 = vmatpush1.msra.mxu0 0.0
  %10398 = vmatprep.subr.mxu0 0.0
  %10399 = vmatpush1.msra.mxu0 0.0
  %10400 = vmatprep.subr.mxu0 0.0
  %10401 = vmatpush1.msra.mxu0 0.0
  %10402 = vmatprep.subr.mxu0 0.0
  %10403 = vmatpush1.msra.mxu0 0.0
  %10404 = vmatprep.subr.mxu0 0.0
  %10405 = vmatpush1.msra.mxu0 0.0
  %10406 = vmatprep.subr.mxu0 0.0
  %10407 = vmatpush1.msra.mxu0 %v185
  %10408 = vmatprep.subr.mxu0 0.0
  %10409 = vmatpush1.msra.mxu0 %v184
  %10410 = vmatprep.subr.mxu0 0.0
  %10411 = vmatpush1.msra.mxu0 %v183
  %10412 = vmatprep.subr.mxu0 0.0
  %10413 = vmatpush1.msra.mxu0 %v182
  %10414 = vmatprep.subr.mxu0 0.0
  %10415 = vmatpush2.msra.mxu0 0.0
  %10416 = vmatprep.subr.mxu0 0.0
  %10417 = vmatpush2.msra.mxu0 0.0
  %10418 = vmatprep.subr.mxu0 0.0
  %10419 = vmatpush2.msra.mxu0 0.0
  %10420 = vmatprep.subr.mxu0 0.0
  %10421 = vmatpush2.msra.mxu0 0.0
  %10422 = vmatprep.subr.mxu0 0.0
  %10423 = vmatpush2.msra.mxu0 0.0
  %10424 = vmatprep.subr.mxu0 0.0
  %10425 = vmatpush2.msra.mxu0 0.0
  %10426 = vmatprep.subr.mxu0 0.0
  %10427 = vmatpush2.msra.mxu0 0.0
  %10428 = vmatprep.subr.mxu0 0.0
  %10429 = vmatpush2.msra.mxu0 0.0
  %10430 = vmatprep.subr.mxu0 0.0
  %10431 = vmatpush2.msra.mxu0 0.0
  %10432 = vmatprep.subr.mxu0 0.0
  %10433 = vmatpush2.msra.mxu0 0.0
  %10434 = vmatprep.subr.mxu0 0.0
  %10435 = vmatpush2.msra.mxu0 0.0
  %10436 = vmatprep.subr.mxu0 0.0
  %10437 = vmatpush2.msra.mxu0 0.0
  %10438 = vmatprep.subr.mxu0 0.0
  %10439 = vmatpush2.msra.mxu0 0.0
  %10440 = vmatprep.subr.mxu0 0.0
  %10441 = vmatpush2.msra.mxu0 0.0
  %10442 = vmatprep.subr.mxu0 0.0
  %10443 = vmatpush2.msra.mxu0 0.0
  %10444 = vmatprep.subr.mxu0 0.0
  %10445 = vmatpush2.msra.mxu0 0.0
  %10446 = vmatprep.mubr.f32.mxu0 0.0
  %10447 = vmatmul.mubr.f32.gmra.mxu0 %v10360
  %v10448 = vpop.f32.mrf.mxu0
  %v10449 = vadd.f32 0.0, %v10448
  %v10450 = vpop.f32.mrf.mxu0
  %10451 = vmatprep.mubr.f32.mxu0 0.0
  %10452 = vmatmul.mubr.f32.gmra.mxu0 %v10363
  %v10453 = vpop.f32.mrf.mxu0
  %v10454 = vadd.f32 0.0, %v10453
  %v10455 = vpop.f32.mrf.mxu0
  %10456 = vmatprep.mubr.f32.mxu0 0.0
  %10457 = vmatmul.mubr.f32.gmra.mxu0 %v10366
  %v10458 = vpop.f32.mrf.mxu0
  %v10459 = vadd.f32 0.0, %v10458
  %v10460 = vpop.f32.mrf.mxu0
  %10461 = vmatprep.mubr.f32.mxu0 0.0
  %10462 = vmatmul.mubr.f32.gmra.mxu0 %v10369
  %v10463 = vpop.f32.mrf.mxu0
  %v10464 = vadd.f32 0.0, %v10463
  %v10465 = vpop.f32.mrf.mxu0
  %10466 = vmatprep.mubr.f32.mxu0 0.0
  %10467 = vmatmul.mubr.f32.gmra.mxu0 %v10372
  %v10468 = vpop.f32.mrf.mxu0
  %v10469 = vadd.f32 0.0, %v10468
  %v10470 = vpop.f32.mrf.mxu0
  %10471 = vmatprep.mubr.f32.mxu0 0.0
  %10472 = vmatmul.mubr.f32.gmra.mxu0 %v10374
  %v10473 = vpop.f32.mrf.mxu0
  %v10474 = vadd.f32 0.0, %v10473
  %v10475 = vpop.f32.mrf.mxu0
  %10476 = vmatprep.mubr.f32.mxu0 0.0
  %10477 = vmatmul.mubr.f32.gmra.mxu0 %v10376
  %v10478 = vpop.f32.mrf.mxu0
  %v10479 = vadd.f32 0.0, %v10478
  %v10480 = vpop.f32.mrf.mxu0
  %10481 = vmatprep.mubr.f32.mxu0 0.0
  %10482 = vmatmul.mubr.f32.gmra.mxu0 %v10378
  %v10483 = vpop.f32.mrf.mxu0
  %v10484 = vadd.f32 0.0, %v10483
  %v10485 = vpop.f32.mrf.mxu0
  %10486 = vmatprep.mubr.f32.mxu0 0.0
  %10487 = vmatmul.mubr.f32.gmra.mxu0 %v10380
  %v10488 = vpop.f32.mrf.mxu0
  %v10489 = vadd.f32 0.0, %v10488
  %v10490 = vpop.f32.mrf.mxu0
  %10491 = vdwg.mxu0
  %v10492 = vadd.f32 %v59, %v10449
  %v10493 = vadd.f32 %v60, %v10454
  %v10494 = vadd.f32 %v61, %v10459
  %v10495 = vadd.f32 %v62, %v10464
  %v10496 = vadd.f32 %v63, %v10469
  %v10497 = vadd.f32 %v64, %v10474
  %v10498 = vadd.f32 %v65, %v10479
  %v10499 = vadd.f32 %v66, %v10484
  %v10500 = vadd.f32 %v67, %v10489
  %v10502 = vlaneseq
  %v10503 = vshrl.u32 %v10502, 7
  %v10504 = vsub.s32 0, %v10503
  %v10505 = vrot.slane %v186, %v10504
  %v10507 = vadd.f32 %v10492, %v10505
  %v10508 = vadd.f32 %v10493, %v10505
  %v10509 = vadd.f32 %v10494, %v10505
  %v10510 = vadd.f32 %v10495, %v10505
  %v10511 = vadd.f32 %v10496, %v10505
  %v10512 = vadd.f32 %v10497, %v10505
  %v10513 = vadd.f32 %v10498, %v10505
  %v10514 = vadd.f32 %v10499, %v10505
  %v10515 = vadd.f32 %v10500, %v10505
  %v10516 = vsel %vm254, %v10507, 0.0
  %10517 = vadd.xlane.f32.xlu0 %v10516
  %v10518 = vpop.xlane.xlu0 %10517
  %v10519 = vsel %vm254, %v10508, 0.0
  %10520 = vadd.xlane.f32.xlu0 %v10519
  %v10521 = vpop.xlane.xlu0 %10520
  %v10522 = vsel %vm254, %v10509, 0.0
  %10523 = vadd.xlane.f32.xlu0 %v10522
  %v10524 = vpop.xlane.xlu0 %10523
  %v10525 = vsel %vm254, %v10510, 0.0
  %10526 = vadd.xlane.f32.xlu0 %v10525
  %v10527 = vpop.xlane.xlu0 %10526
  %v10528 = vsel %vm254, %v10511, 0.0
  %10529 = vadd.xlane.f32.xlu0 %v10528
  %v10530 = vpop.xlane.xlu0 %10529
  %v10531 = vsel %vm254, %v10512, 0.0
  %10532 = vadd.xlane.f32.xlu0 %v10531
  %v10533 = vpop.xlane.xlu0 %10532
  %v10534 = vsel %vm254, %v10513, 0.0
  %10535 = vadd.xlane.f32.xlu0 %v10534
  %v10536 = vpop.xlane.xlu0 %10535
  %v10537 = vsel %vm254, %v10514, 0.0
  %10538 = vadd.xlane.f32.xlu0 %v10537
  %v10539 = vpop.xlane.xlu0 %10538
  %v10540 = vsel %vm279, %v10515, 0.0
  %10541 = vadd.xlane.f32.xlu0 %v10540
  %v10542 = vpop.xlane.xlu0 %10541
  %v10543 = vmul.f32 %v10518, %v283
  %v10544 = vmul.f32 %v10521, %v283
  %v10545 = vmul.f32 %v10524, %v283
  %v10546 = vmul.f32 %v10527, %v283
  %v10547 = vmul.f32 %v10530, %v283
  %v10548 = vmul.f32 %v10533, %v283
  %v10549 = vmul.f32 %v10536, %v283
  %v10550 = vmul.f32 %v10539, %v283
  %v10551 = vmul.f32 %v10542, %v283
  %v10552 = vsub.f32 %v10507, %v10543
  %v10553 = vsub.f32 %v10508, %v10544
  %v10554 = vsub.f32 %v10509, %v10545
  %v10555 = vsub.f32 %v10510, %v10546
  %v10556 = vsub.f32 %v10511, %v10547
  %v10557 = vsub.f32 %v10512, %v10548
  %v10558 = vsub.f32 %v10513, %v10549
  %v10559 = vsub.f32 %v10514, %v10550
  %v10560 = vsub.f32 %v10515, %v10551
  %v10561 = vmul.f32 %v10552, %v10552
  %v10562 = vmul.f32 %v10553, %v10553
  %v10563 = vmul.f32 %v10554, %v10554
  %v10564 = vmul.f32 %v10555, %v10555
  %v10565 = vmul.f32 %v10556, %v10556
  %v10566 = vmul.f32 %v10557, %v10557
  %v10567 = vmul.f32 %v10558, %v10558
  %v10568 = vmul.f32 %v10559, %v10559
  %v10569 = vmul.f32 %v10560, %v10560
  %v10570 = vsel %vm254, %v10561, 0.0
  %10571 = vadd.xlane.f32.xlu0 %v10570
  %v10572 = vpop.xlane.xlu0 %10571
  %v10573 = vsel %vm254, %v10562, 0.0
  %10574 = vadd.xlane.f32.xlu0 %v10573
  %v10575 = vpop.xlane.xlu0 %10574
  %v10576 = vsel %vm254, %v10563, 0.0
  %10577 = vadd.xlane.f32.xlu0 %v10576
  %v10578 = vpop.xlane.xlu0 %10577
  %v10579 = vsel %vm254, %v10564, 0.0
  %10580 = vadd.xlane.f32.xlu0 %v10579
  %v10581 = vpop.xlane.xlu0 %10580
  %v10582 = vsel %vm254, %v10565, 0.0
  %10583 = vadd.xlane.f32.xlu0 %v10582
  %v10584 = vpop.xlane.xlu0 %10583
  %v10585 = vsel %vm254, %v10566, 0.0
  %10586 = vadd.xlane.f32.xlu0 %v10585
  %v10587 = vpop.xlane.xlu0 %10586
  %v10588 = vsel %vm254, %v10567, 0.0
  %10589 = vadd.xlane.f32.xlu0 %v10588
  %v10590 = vpop.xlane.xlu0 %10589
  %v10591 = vsel %vm254, %v10568, 0.0
  %10592 = vadd.xlane.f32.xlu0 %v10591
  %v10593 = vpop.xlane.xlu0 %10592
  %v10594 = vsel %vm279, %v10569, 0.0
  %10595 = vadd.xlane.f32.xlu0 %v10594
  %v10596 = vpop.xlane.xlu0 %10595
  %v10597 = vmul.f32 %v10572, %v283
  %v10598 = vmul.f32 %v10575, %v283
  %v10599 = vmul.f32 %v10578, %v283
  %v10600 = vmul.f32 %v10581, %v283
  %v10601 = vmul.f32 %v10584, %v283
  %v10602 = vmul.f32 %v10587, %v283
  %v10603 = vmul.f32 %v10590, %v283
  %v10604 = vmul.f32 %v10593, %v283
  %v10605 = vmul.f32 %v10596, %v283
  %v10606 = vadd.f32 %v10597, 1e-05
  %v10607 = vadd.f32 %v10598, 1e-05
  %v10608 = vadd.f32 %v10599, 1e-05
  %v10609 = vadd.f32 %v10600, 1e-05
  %v10610 = vadd.f32 %v10601, 1e-05
  %v10611 = vadd.f32 %v10602, 1e-05
  %v10612 = vadd.f32 %v10603, 1e-05
  %v10613 = vadd.f32 %v10604, 1e-05
  %v10614 = vadd.f32 %v10605, 1e-05
  %v10615 = vrsqrt.pop %v10606
  %v10616 = vrsqrt.pop %v10607
  %v10617 = vrsqrt.pop %v10608
  %v10618 = vrsqrt.pop %v10609
  %v10619 = vrsqrt.pop %v10610
  %v10620 = vrsqrt.pop %v10611
  %v10621 = vrsqrt.pop %v10612
  %v10622 = vrsqrt.pop %v10613
  %v10623 = vrsqrt.pop %v10614
  %v10624 = vmul.f32 %v10552, %v10615
  %v10625 = vmul.f32 %v10553, %v10616
  %v10626 = vmul.f32 %v10554, %v10617
  %v10627 = vmul.f32 %v10555, %v10618
  %v10628 = vmul.f32 %v10556, %v10619
  %v10629 = vmul.f32 %v10557, %v10620
  %v10630 = vmul.f32 %v10558, %v10621
  %v10631 = vmul.f32 %v10559, %v10622
  %v10632 = vmul.f32 %v10560, %v10623
  %v10634 = vlaneseq
  %v10635 = vshrl.u32 %v10634, 7
  %v10636 = vsub.s32 0, %v10635
  %v10637 = vrot.slane %v187, %v10636
  %v10639 = vmul.f32 %v10624, %v10637
  %v10640 = vmul.f32 %v10625, %v10637
  %v10641 = vmul.f32 %v10626, %v10637
  %v10642 = vmul.f32 %v10627, %v10637
  %v10643 = vmul.f32 %v10628, %v10637
  %v10644 = vmul.f32 %v10629, %v10637
  %v10645 = vmul.f32 %v10630, %v10637
  %v10646 = vmul.f32 %v10631, %v10637
  %v10647 = vmul.f32 %v10632, %v10637
  %v10649 = vlaneseq
  %v10650 = vshrl.u32 %v10649, 7
  %v10651 = vsub.s32 0, %v10650
  %v10652 = vrot.slane %v188, %v10651
  %v10654 = vadd.f32 %v10639, %v10652
  %v10655 = vadd.f32 %v10640, %v10652
  %v10656 = vadd.f32 %v10641, %v10652
  %v10657 = vadd.f32 %v10642, %v10652
  %v10658 = vadd.f32 %v10643, %v10652
  %v10659 = vadd.f32 %v10644, %v10652
  %v10660 = vadd.f32 %v10645, %v10652
  %v10661 = vadd.f32 %v10646, %v10652
  %v10662 = vadd.f32 %v10647, %v10652
  %v10664 = vlaneseq
  %v10665 = vshrl.u32 %v10664, 7
  %v10666 = vsub.s32 0, %v10665
  %v10667 = vrot.slane %v193, %v10666
  %v10670 = vsel %vm254, %v10654, 0
  %v10673 = vsel %vm254, %v10655, 0
  %v10676 = vsel %vm254, %v10656, 0
  %v10679 = vsel %vm254, %v10657, 0
  %v10682 = vsel %vm254, %v10658, 0
  %v10685 = vsel %vm254, %v10659, 0
  %v10688 = vsel %vm254, %v10660, 0
  %v10691 = vsel %vm254, %v10661, 0
  %v10694 = vsel %vm254, %v10662, 0
  %10696 = vmatprep.subr.mxu0 0.0
  %10697 = vmatpush1.msra.mxu0 0.0
  %10698 = vmatprep.subr.mxu0 0.0
  %10699 = vmatpush1.msra.mxu0 0.0
  %10700 = vmatprep.subr.mxu0 0.0
  %10701 = vmatpush1.msra.mxu0 0.0
  %10702 = vmatprep.subr.mxu0 0.0
  %10703 = vmatpush1.msra.mxu0 0.0
  %10704 = vmatprep.subr.mxu0 0.0
  %10705 = vmatpush1.msra.mxu0 0.0
  %10706 = vmatprep.subr.mxu0 0.0
  %10707 = vmatpush1.msra.mxu0 0.0
  %10708 = vmatprep.subr.mxu0 0.0
  %10709 = vmatpush1.msra.mxu0 0.0
  %10710 = vmatprep.subr.mxu0 0.0
  %10711 = vmatpush1.msra.mxu0 0.0
  %10712 = vmatprep.subr.mxu0 0.0
  %10713 = vmatpush1.msra.mxu0 0.0
  %10714 = vmatprep.subr.mxu0 0.0
  %10715 = vmatpush1.msra.mxu0 0.0
  %10716 = vmatprep.subr.mxu0 0.0
  %10717 = vmatpush1.msra.mxu0 0.0
  %10718 = vmatprep.subr.mxu0 0.0
  %10719 = vmatpush1.msra.mxu0 0.0
  %10720 = vmatprep.subr.mxu0 0.0
  %10721 = vmatpush1.msra.mxu0 %v192
  %10722 = vmatprep.subr.mxu0 0.0
  %10723 = vmatpush1.msra.mxu0 %v191
  %10724 = vmatprep.subr.mxu0 0.0
  %10725 = vmatpush1.msra.mxu0 %v190
  %10726 = vmatprep.subr.mxu0 0.0
  %10727 = vmatpush1.msra.mxu0 %v189
  %10728 = vmatprep.subr.mxu0 0.0
  %10729 = vmatpush2.msra.mxu0 0.0
  %10730 = vmatprep.subr.mxu0 0.0
  %10731 = vmatpush2.msra.mxu0 0.0
  %10732 = vmatprep.subr.mxu0 0.0
  %10733 = vmatpush2.msra.mxu0 0.0
  %10734 = vmatprep.subr.mxu0 0.0
  %10735 = vmatpush2.msra.mxu0 0.0
  %10736 = vmatprep.subr.mxu0 0.0
  %10737 = vmatpush2.msra.mxu0 0.0
  %10738 = vmatprep.subr.mxu0 0.0
  %10739 = vmatpush2.msra.mxu0 0.0
  %10740 = vmatprep.subr.mxu0 0.0
  %10741 = vmatpush2.msra.mxu0 0.0
  %10742 = vmatprep.subr.mxu0 0.0
  %10743 = vmatpush2.msra.mxu0 0.0
  %10744 = vmatprep.subr.mxu0 0.0
  %10745 = vmatpush2.msra.mxu0 0.0
  %10746 = vmatprep.subr.mxu0 0.0
  %10747 = vmatpush2.msra.mxu0 0.0
  %10748 = vmatprep.subr.mxu0 0.0
  %10749 = vmatpush2.msra.mxu0 0.0
  %10750 = vmatprep.subr.mxu0 0.0
  %10751 = vmatpush2.msra.mxu0 0.0
  %10752 = vmatprep.subr.mxu0 0.0
  %10753 = vmatpush2.msra.mxu0 0.0
  %10754 = vmatprep.subr.mxu0 0.0
  %10755 = vmatpush2.msra.mxu0 0.0
  %10756 = vmatprep.subr.mxu0 0.0
  %10757 = vmatpush2.msra.mxu0 0.0
  %10758 = vmatprep.subr.mxu0 0.0
  %10759 = vmatpush2.msra.mxu0 0.0
  %10760 = vmatprep.mubr.f32.mxu0 0.0
  %10761 = vmatmul.mubr.f32.gmra.mxu0 %v10670
  %v10762 = vpop.f32.mrf.mxu0
  %v10763 = vadd.f32 %v10667, %v10762
  %v10764 = vpop.f32.mrf.mxu0
  %10765 = vmatprep.mubr.f32.mxu0 0.0
  %10766 = vmatmul.mubr.f32.gmra.mxu0 %v10673
  %v10767 = vpop.f32.mrf.mxu0
  %v10768 = vadd.f32 %v10667, %v10767
  %v10769 = vpop.f32.mrf.mxu0
  %10770 = vmatprep.mubr.f32.mxu0 0.0
  %10771 = vmatmul.mubr.f32.gmra.mxu0 %v10676
  %v10772 = vpop.f32.mrf.mxu0
  %v10773 = vadd.f32 %v10667, %v10772
  %v10774 = vpop.f32.mrf.mxu0
  %10775 = vmatprep.mubr.f32.mxu0 0.0
  %10776 = vmatmul.mubr.f32.gmra.mxu0 %v10679
  %v10777 = vpop.f32.mrf.mxu0
  %v10778 = vadd.f32 %v10667, %v10777
  %v10779 = vpop.f32.mrf.mxu0
  %10780 = vmatprep.mubr.f32.mxu0 0.0
  %10781 = vmatmul.mubr.f32.gmra.mxu0 %v10682
  %v10782 = vpop.f32.mrf.mxu0
  %v10783 = vadd.f32 %v10667, %v10782
  %v10784 = vpop.f32.mrf.mxu0
  %10785 = vmatprep.mubr.f32.mxu0 0.0
  %10786 = vmatmul.mubr.f32.gmra.mxu0 %v10685
  %v10787 = vpop.f32.mrf.mxu0
  %v10788 = vadd.f32 %v10667, %v10787
  %v10789 = vpop.f32.mrf.mxu0
  %10790 = vmatprep.mubr.f32.mxu0 0.0
  %10791 = vmatmul.mubr.f32.gmra.mxu0 %v10688
  %v10792 = vpop.f32.mrf.mxu0
  %v10793 = vadd.f32 %v10667, %v10792
  %v10794 = vpop.f32.mrf.mxu0
  %10795 = vmatprep.mubr.f32.mxu0 0.0
  %10796 = vmatmul.mubr.f32.gmra.mxu0 %v10691
  %v10797 = vpop.f32.mrf.mxu0
  %v10798 = vadd.f32 %v10667, %v10797
  %v10799 = vpop.f32.mrf.mxu0
  %10800 = vmatprep.mubr.f32.mxu0 0.0
  %10801 = vmatmul.mubr.f32.gmra.mxu0 %v10694
  %v10802 = vpop.f32.mrf.mxu0
  %v10803 = vadd.f32 %v10667, %v10802
  %v10804 = vpop.f32.mrf.mxu0
  %10805 = vdwg.mxu0
  %v10806 = vmul.f32 %v10763, %v10763
  %v10807 = vmul.f32 %v10768, %v10768
  %v10808 = vmul.f32 %v10773, %v10773
  %v10809 = vmul.f32 %v10778, %v10778
  %v10810 = vmul.f32 %v10783, %v10783
  %v10811 = vmul.f32 %v10788, %v10788
  %v10812 = vmul.f32 %v10793, %v10793
  %v10813 = vmul.f32 %v10798, %v10798
  %v10814 = vmul.f32 %v10803, %v10803
  %v10815 = vmul.f32 %v10763, %v10806
  %v10816 = vmul.f32 %v10768, %v10807
  %v10817 = vmul.f32 %v10773, %v10808
  %v10818 = vmul.f32 %v10778, %v10809
  %v10819 = vmul.f32 %v10783, %v10810
  %v10820 = vmul.f32 %v10788, %v10811
  %v10821 = vmul.f32 %v10793, %v10812
  %v10822 = vmul.f32 %v10798, %v10813
  %v10823 = vmul.f32 %v10803, %v10814
  %v10824 = vmul.f32 %v10815, 0.044715
  %v10825 = vmul.f32 %v10816, 0.044715
  %v10826 = vmul.f32 %v10817, 0.044715
  %v10827 = vmul.f32 %v10818, 0.044715
  %v10828 = vmul.f32 %v10819, 0.044715
  %v10829 = vmul.f32 %v10820, 0.044715
  %v10830 = vmul.f32 %v10821, 0.044715
  %v10831 = vmul.f32 %v10822, 0.044715
  %v10832 = vmul.f32 %v10823, 0.044715
  %v10833 = vadd.f32 %v10763, %v10824
  %v10834 = vadd.f32 %v10768, %v10825
  %v10835 = vadd.f32 %v10773, %v10826
  %v10836 = vadd.f32 %v10778, %v10827
  %v10837 = vadd.f32 %v10783, %v10828
  %v10838 = vadd.f32 %v10788, %v10829
  %v10839 = vadd.f32 %v10793, %v10830
  %v10840 = vadd.f32 %v10798, %v10831
  %v10841 = vadd.f32 %v10803, %v10832
  %v10842 = vmul.f32 %v10833, 0.7978846
  %v10843 = vmul.f32 %v10834, 0.7978846
  %v10844 = vmul.f32 %v10835, 0.7978846
  %v10845 = vmul.f32 %v10836, 0.7978846
  %v10846 = vmul.f32 %v10837, 0.7978846
  %v10847 = vmul.f32 %v10838, 0.7978846
  %v10848 = vmul.f32 %v10839, 0.7978846
  %v10849 = vmul.f32 %v10840, 0.7978846
  %v10850 = vmul.f32 %v10841, 0.7978846
  %v10851 = vtanh.pop %v10842
  %v10852 = vtanh.pop %v10843
  %v10853 = vtanh.pop %v10844
  %v10854 = vtanh.pop %v10845
  %v10855 = vtanh.pop %v10846
  %v10856 = vtanh.pop %v10847
  %v10857 = vtanh.pop %v10848
  %v10858 = vtanh.pop %v10849
  %v10859 = vtanh.pop %v10850
  %v10860 = vadd.f32 %v10851, 1.0
  %v10861 = vadd.f32 %v10852, 1.0
  %v10862 = vadd.f32 %v10853, 1.0
  %v10863 = vadd.f32 %v10854, 1.0
  %v10864 = vadd.f32 %v10855, 1.0
  %v10865 = vadd.f32 %v10856, 1.0
  %v10866 = vadd.f32 %v10857, 1.0
  %v10867 = vadd.f32 %v10858, 1.0
  %v10868 = vadd.f32 %v10859, 1.0
  %v10869 = vmul.f32 %v10860, 0.5
  %v10870 = vmul.f32 %v10861, 0.5
  %v10871 = vmul.f32 %v10862, 0.5
  %v10872 = vmul.f32 %v10863, 0.5
  %v10873 = vmul.f32 %v10864, 0.5
  %v10874 = vmul.f32 %v10865, 0.5
  %v10875 = vmul.f32 %v10866, 0.5
  %v10876 = vmul.f32 %v10867, 0.5
  %v10877 = vmul.f32 %v10868, 0.5
  %v10878 = vmul.f32 %v10763, %v10869
  %v10879 = vmul.f32 %v10768, %v10870
  %v10880 = vmul.f32 %v10773, %v10871
  %v10881 = vmul.f32 %v10778, %v10872
  %v10882 = vmul.f32 %v10783, %v10873
  %v10883 = vmul.f32 %v10788, %v10874
  %v10884 = vmul.f32 %v10793, %v10875
  %v10885 = vmul.f32 %v10798, %v10876
  %v10886 = vmul.f32 %v10803, %v10877
  %10887 = vmatprep.subr.mxu0 0.0
  %10888 = vmatpush1.msra.mxu0 %v209
  %10889 = vmatprep.subr.mxu0 0.0
  %10890 = vmatpush1.msra.mxu0 %v208
  %10891 = vmatprep.subr.mxu0 0.0
  %10892 = vmatpush1.msra.mxu0 %v207
  %10893 = vmatprep.subr.mxu0 0.0
  %10894 = vmatpush1.msra.mxu0 %v206
  %10895 = vmatprep.subr.mxu0 0.0
  %10896 = vmatpush1.msra.mxu0 %v205
  %10897 = vmatprep.subr.mxu0 0.0
  %10898 = vmatpush1.msra.mxu0 %v204
  %10899 = vmatprep.subr.mxu0 0.0
  %10900 = vmatpush1.msra.mxu0 %v203
  %10901 = vmatprep.subr.mxu0 0.0
  %10902 = vmatpush1.msra.mxu0 %v202
  %10903 = vmatprep.subr.mxu0 0.0
  %10904 = vmatpush1.msra.mxu0 %v201
  %10905 = vmatprep.subr.mxu0 0.0
  %10906 = vmatpush1.msra.mxu0 %v200
  %10907 = vmatprep.subr.mxu0 0.0
  %10908 = vmatpush1.msra.mxu0 %v199
  %10909 = vmatprep.subr.mxu0 0.0
  %10910 = vmatpush1.msra.mxu0 %v198
  %10911 = vmatprep.subr.mxu0 0.0
  %10912 = vmatpush1.msra.mxu0 %v197
  %10913 = vmatprep.subr.mxu0 0.0
  %10914 = vmatpush1.msra.mxu0 %v196
  %10915 = vmatprep.subr.mxu0 0.0
  %10916 = vmatpush1.msra.mxu0 %v195
  %10917 = vmatprep.subr.mxu0 0.0
  %10918 = vmatpush1.msra.mxu0 %v194
  %10919 = vmatprep.subr.mxu0 0.0
  %10920 = vmatpush2.msra.mxu0 0.0
  %10921 = vmatprep.subr.mxu0 0.0
  %10922 = vmatpush2.msra.mxu0 0.0
  %10923 = vmatprep.subr.mxu0 0.0
  %10924 = vmatpush2.msra.mxu0 0.0
  %10925 = vmatprep.subr.mxu0 0.0
  %10926 = vmatpush2.msra.mxu0 0.0
  %10927 = vmatprep.subr.mxu0 0.0
  %10928 = vmatpush2.msra.mxu0 0.0
  %10929 = vmatprep.subr.mxu0 0.0
  %10930 = vmatpush2.msra.mxu0 0.0
  %10931 = vmatprep.subr.mxu0 0.0
  %10932 = vmatpush2.msra.mxu0 0.0
  %10933 = vmatprep.subr.mxu0 0.0
  %10934 = vmatpush2.msra.mxu0 0.0
  %10935 = vmatprep.subr.mxu0 0.0
  %10936 = vmatpush2.msra.mxu0 0.0
  %10937 = vmatprep.subr.mxu0 0.0
  %10938 = vmatpush2.msra.mxu0 0.0
  %10939 = vmatprep.subr.mxu0 0.0
  %10940 = vmatpush2.msra.mxu0 0.0
  %10941 = vmatprep.subr.mxu0 0.0
  %10942 = vmatpush2.msra.mxu0 0.0
  %10943 = vmatprep.subr.mxu0 0.0
  %10944 = vmatpush2.msra.mxu0 0.0
  %10945 = vmatprep.subr.mxu0 0.0
  %10946 = vmatpush2.msra.mxu0 0.0
  %10947 = vmatprep.subr.mxu0 0.0
  %10948 = vmatpush2.msra.mxu0 0.0
  %10949 = vmatprep.subr.mxu0 0.0
  %10950 = vmatpush2.msra.mxu0 0.0
  %10951 = vmatprep.mubr.f32.mxu0 0.0
  %10952 = vmatmul.mubr.f32.gmra.mxu0 %v10878
  %v10953 = vpop.f32.mrf.mxu0
  %v10954 = vadd.f32 0.0, %v10953
  %v10955 = vpop.f32.mrf.mxu0
  %10956 = vmatprep.mubr.f32.mxu0 0.0
  %10957 = vmatmul.mubr.f32.gmra.mxu0 %v10879
  %v10958 = vpop.f32.mrf.mxu0
  %v10959 = vadd.f32 0.0, %v10958
  %v10960 = vpop.f32.mrf.mxu0
  %10961 = vmatprep.mubr.f32.mxu0 0.0
  %10962 = vmatmul.mubr.f32.gmra.mxu0 %v10880
  %v10963 = vpop.f32.mrf.mxu0
  %v10964 = vadd.f32 0.0, %v10963
  %v10965 = vpop.f32.mrf.mxu0
  %10966 = vmatprep.mubr.f32.mxu0 0.0
  %10967 = vmatmul.mubr.f32.gmra.mxu0 %v10881
  %v10968 = vpop.f32.mrf.mxu0
  %v10969 = vadd.f32 0.0, %v10968
  %v10970 = vpop.f32.mrf.mxu0
  %10971 = vmatprep.mubr.f32.mxu0 0.0
  %10972 = vmatmul.mubr.f32.gmra.mxu0 %v10882
  %v10973 = vpop.f32.mrf.mxu0
  %v10974 = vadd.f32 0.0, %v10973
  %v10975 = vpop.f32.mrf.mxu0
  %10976 = vmatprep.mubr.f32.mxu0 0.0
  %10977 = vmatmul.mubr.f32.gmra.mxu0 %v10883
  %v10978 = vpop.f32.mrf.mxu0
  %v10979 = vadd.f32 0.0, %v10978
  %v10980 = vpop.f32.mrf.mxu0
  %10981 = vmatprep.mubr.f32.mxu0 0.0
  %10982 = vmatmul.mubr.f32.gmra.mxu0 %v10884
  %v10983 = vpop.f32.mrf.mxu0
  %v10984 = vadd.f32 0.0, %v10983
  %v10985 = vpop.f32.mrf.mxu0
  %10986 = vmatprep.mubr.f32.mxu0 0.0
  %10987 = vmatmul.mubr.f32.gmra.mxu0 %v10885
  %v10988 = vpop.f32.mrf.mxu0
  %v10989 = vadd.f32 0.0, %v10988
  %v10990 = vpop.f32.mrf.mxu0
  %10991 = vmatprep.mubr.f32.mxu0 0.0
  %10992 = vmatmul.mubr.f32.gmra.mxu0 %v10886
  %v10993 = vpop.f32.mrf.mxu0
  %v10994 = vadd.f32 0.0, %v10993
  %v10995 = vpop.f32.mrf.mxu0
  %10996 = vdwg.mxu0
  %v10997 = vadd.f32 %v10507, %v10954
  %v10998 = vadd.f32 %v10508, %v10959
  %v10999 = vadd.f32 %v10509, %v10964
  %v11000 = vadd.f32 %v10510, %v10969
  %v11001 = vadd.f32 %v10511, %v10974
  %v11002 = vadd.f32 %v10512, %v10979
  %v11003 = vadd.f32 %v10513, %v10984
  %v11004 = vadd.f32 %v10514, %v10989
  %v11005 = vadd.f32 %v10515, %v10994
  %v11007 = vlaneseq
  %v11008 = vshrl.u32 %v11007, 7
  %v11009 = vsub.s32 0, %v11008
  %v11010 = vrot.slane %v210, %v11009
  %v11012 = vadd.f32 %v10997, %v11010
  %v11013 = vadd.f32 %v10998, %v11010
  %v11014 = vadd.f32 %v10999, %v11010
  %v11015 = vadd.f32 %v11000, %v11010
  %v11016 = vadd.f32 %v11001, %v11010
  %v11017 = vadd.f32 %v11002, %v11010
  %v11018 = vadd.f32 %v11003, %v11010
  %v11019 = vadd.f32 %v11004, %v11010
  %v11020 = vadd.f32 %v11005, %v11010
  %11021 = vst.msk [vmem:[%s18] sm:$0xff] %vm254, %v11012
  %11022 = vst.msk [vmem:[%s18 + $0x8] sm:$0xff] %vm254, %v11013
  %11023 = vst.msk [vmem:[%s18 + $0x10] sm:$0xff] %vm254, %v11014
  %11024 = vst.msk [vmem:[%s18 + $0x18] sm:$0xff] %vm254, %v11015
  %11025 = vst.msk [vmem:[%s18 + $0x20] sm:$0xff] %vm254, %v11016
  %11026 = vst.msk [vmem:[%s18 + $0x28] sm:$0xff] %vm254, %v11017
  %11027 = vst.msk [vmem:[%s18 + $0x30] sm:$0xff] %vm254, %v11018
  %11028 = vst.msk [vmem:[%s18 + $0x38] sm:$0xff] %vm254, %v11019
  %11029 = vst.msk [vmem:[%s18 + $0x40] sm:$0x3] %vm279, %v11020
  // Predicated region
  $region74: #{tpu_custom_call.1} parent=0 // pred_check
    _
  $region75: #{tpu_custom_call.1} parent=0 // pred_check_branch
    %11031 = sbr.rel (0) target = $region77
  $region76: #{tpu_custom_call.1} parent=0 // pred_region
    _
  $region77: #{tpu_custom_call.1} parent=0 // pred_fallthru
    _
  // Predicated region
  $region78: #{tpu_custom_call.1} parent=0 // pred_check
    _
  $region79: #{tpu_custom_call.1} parent=0 // pred_check_branch
    %11033 = sbr.rel (0) target = $region81
  $region80: #{tpu_custom_call.1} parent=0 // pred_region
    _
  $region81: #{tpu_custom_call.1} parent=0 // pred_fallthru
    _

</llo_original>
